<compile_context>
chip_gen: v5e
topology: v5e:2x2
jax: 0.10.0
libtpu: 0.0.40
codegen_flags: <defaults>
</compile_context>

<pallas_src>
import functools
import math

import jax
import jax.numpy as jnp
from jax.experimental import pallas as pl
from jax.experimental.pallas import tpu as pltpu


# ------------------------------ fused kernel --------------------------------

def _res_unit_kernel(x_ref, gb1_ref, gbsc_ref, gb2_ref, gb3_ref,
                     m1_ref, m2_ref, m3_ref,
                     w1_ref, w2_ref, w3_ref, scw_ref, scb_ref,
                     o_ref,
                     pad1, patch1, pad2, patch2, pad3, patch3,
                     *, H, W, eps, k1, k2, k3,
                     inv_cnt1, inv_cnt2, inv_cnt3, identity_sc):
    """Fused ResUnit forward for one batch element.

    x_ref:       (1, H, W, Cin)          input tile (NHWC, channels on lanes)
    gb*_ref:     (2, C)                  [gamma; beta] per GroupNorm
    m*_ref:      (C, G)                  one-hot group membership masks
    w*_ref:      (K*K*Cin, Cout)         conv weights, im2col layout
    scw/scb_ref: (Cin, Cout), (1, Cout)  shortcut 1x1 conv weight / bias
    pad*/patch*: VMEM scratch (padded activation / im2col patch) per conv
    """
    f32 = jnp.float32

    def gn_stats(x2, m_ref, inv_cnt):
        # x2: (HW, C) f32 -> per-channel broadcast mean / inv-std, each (1, C).
        m = m_ref[...].astype(f32)                                  # (C, G)
        csum = jnp.sum(x2, axis=0, keepdims=True)                   # (1, C)
        csq = jnp.sum(x2 * x2, axis=0, keepdims=True)               # (1, C)
        gsum = jnp.dot(csum, m, preferred_element_type=f32)         # (1, G)
        gsq = jnp.dot(csq, m, preferred_element_type=f32)           # (1, G)
        mean = jnp.dot(gsum, m.T, preferred_element_type=f32) * inv_cnt
        msq = jnp.dot(gsq, m.T, preferred_element_type=f32) * inv_cnt
        var = jnp.maximum(msq - mean * mean, 0.0)                   # guard E[x^2]-m^2
        inv = jax.lax.rsqrt(var + eps)
        return mean, inv

    def gn_apply_relu(x2, mean, inv, gb_ref):
        gb = gb_ref[...].astype(f32)                                # (2, C)
        y = (x2 - mean) * inv * gb[0:1, :] + gb[1:2, :]
        return jnp.maximum(y, 0.0)

    def conv_same(act2, k, w_ref, pad_ref, patch_ref):
        # act2: (HW, Cin) f32. Same-padded stride-1 conv as one fat MXU matmul.
        cin = act2.shape[-1]
        p = k // 2
        pad_ref[...] = jnp.zeros_like(pad_ref)                      # zero halo
        pad_ref[pl.ds(p, H), pl.ds(p, W), :] = act2.reshape(H, W, cin)
        xp = pad_ref[...]                                           # (H+2p, W+2p, cin)
        col = 0
        for kh in range(k):
            for kw in range(k):
                patch_ref[:, pl.ds(col, cin)] = (
                    xp[kh:kh + H, kw:kw + W, :].reshape(H * W, cin))
                col += cin
        return jnp.dot(patch_ref[...], w_ref[...].astype(f32),
                       preferred_element_type=f32)                  # (HW, Cout)

    x2 = x_ref[0].astype(f32).reshape(H * W, x_ref.shape[-1])       # (HW, Cin)

    # GroupNorm statistics of x are shared by norm1 and the shortcut norm
    # (same channel count and group count) -> computed once.
    mean1, inv1 = gn_stats(x2, m1_ref, inv_cnt1)

    if identity_sc:
        sc = x2
    else:
        sc_act = gn_apply_relu(x2, mean1, inv1, gbsc_ref)
        sc = jnp.dot(sc_act, scw_ref[...].astype(f32),
                     preferred_element_type=f32)
        sc = sc + scb_ref[...].astype(f32)                          # (HW, Cout)

    a1 = gn_apply_relu(x2, mean1, inv1, gb1_ref)
    h1 = conv_same(a1, k1, w1_ref, pad1, patch1)
    mean2, inv2 = gn_stats(h1, m2_ref, inv_cnt2)
    a2 = gn_apply_relu(h1, mean2, inv2, gb2_ref)
    h2 = conv_same(a2, k2, w2_ref, pad2, patch2)
    mean3, inv3 = gn_stats(h2, m3_ref, inv_cnt3)
    a3 = gn_apply_relu(h2, mean3, inv3, gb3_ref)
    h3 = conv_same(a3, k3, w3_ref, pad3, patch3)

    out = h3 + sc
    o_ref[...] = out.reshape(1, H, W, out.shape[-1]).astype(o_ref.dtype)


# -------------------------------- wrapper ------------------------------------

def res_unit_forward(x_nchw, p):
    """ResUnit forward. x_nchw: (N, in_ch, H, W) -> (N, ch[-1], H, W)."""
    N, Cin, H, W = x_nchw.shape
    k1, _, wc1, C0 = p["w1"].shape
    k2, _, wc2, C1 = p["w2"].shape
    k3, _, wc3, C2 = p["w3"].shape
    assert (wc1, wc2, wc3) == (Cin, C0, C1), "conv weight channel mismatch"
    for k in (k1, k2, k3):
        if k % 2 != 1:
            raise NotImplementedError("even kernel sizes need asymmetric SAME pad")

    G1, G2, G3 = p["groups1"], p["groups2"], p["groups3"]

    def mk_mask(C, G):
        gs = C // G
        return (jnp.arange(C)[:, None] // gs ==
                jnp.arange(G)[None, :]).astype(jnp.float32)

    identity_sc = "sc_w" not in p
    if identity_sc and Cin != C2:
        raise ValueError("identity shortcut requires in_ch == ch[-1]")

    gb1 = jnp.stack([p["g1"], p["b1"]]).astype(jnp.float32)          # (2, Cin)
    gb2 = jnp.stack([p["g2"], p["b2"]]).astype(jnp.float32)          # (2, C0)
    gb3 = jnp.stack([p["g3"], p["b3"]]).astype(jnp.float32)          # (2, C1)
    if identity_sc:
        gbsc = jnp.zeros((2, Cin), jnp.float32)
        scw = jnp.zeros((Cin, C2), jnp.float32)
        scb = jnp.zeros((1, C2), jnp.float32)
    else:
        gbsc = jnp.stack([p["sc_gamma"], p["sc_beta"]]).astype(jnp.float32)
        scw = p["sc_w"].reshape(Cin, C2)
        scb = p["sc_b"].reshape(1, C2)

    # im2col weight layout: (KH, KW, Cin, Cout) -> (KH*KW*Cin, Cout),
    # matching the [kh major, kw, channel minor] patch column order in-kernel.
    w1 = p["w1"].reshape(k1 * k1 * Cin, C0)
    w2 = p["w2"].reshape(k2 * k2 * C0, C1)
    w3 = p["w3"].reshape(k3 * k3 * C1, C2)
    m1, m2, m3 = mk_mask(Cin, G1), mk_mask(C0, G2), mk_mask(C1, G3)

    x = jnp.transpose(x_nchw, (0, 2, 3, 1))                          # NCHW -> NHWC

    kernel = functools.partial(
        _res_unit_kernel, H=H, W=W, eps=1e-5,
        k1=k1, k2=k2, k3=k3,
        inv_cnt1=1.0 / ((Cin // G1) * H * W),
        inv_cnt2=1.0 / ((C0 // G2) * H * W),
        inv_cnt3=1.0 / ((C1 // G3) * H * W),
        identity_sc=identity_sc)

    const = lambda n: (0, 0)
    out = pl.pallas_call(
        kernel,
        out_shape=jax.ShapeDtypeStruct((N, H, W, C2), x.dtype),
        grid=(N,),
        in_specs=[
            pl.BlockSpec((1, H, W, Cin), lambda n: (n, 0, 0, 0)),
            pl.BlockSpec((2, Cin), const),
            pl.BlockSpec((2, Cin), const),
            pl.BlockSpec((2, C0), const),
            pl.BlockSpec((2, C1), const),
            pl.BlockSpec((Cin, G1), const),
            pl.BlockSpec((C0, G2), const),
            pl.BlockSpec((C1, G3), const),
            pl.BlockSpec((k1 * k1 * Cin, C0), const),
            pl.BlockSpec((k2 * k2 * C0, C1), const),
            pl.BlockSpec((k3 * k3 * C1, C2), const),
            pl.BlockSpec((Cin, C2), const),
            pl.BlockSpec((1, C2), const),
        ],
        out_specs=pl.BlockSpec((1, H, W, C2), lambda n: (n, 0, 0, 0)),
        scratch_shapes=[
            pltpu.VMEM((H + 2 * (k1 // 2), W + 2 * (k1 // 2), Cin), jnp.float32),
            pltpu.VMEM((H * W, k1 * k1 * Cin), jnp.float32),
            pltpu.VMEM((H + 2 * (k2 // 2), W + 2 * (k2 // 2), C0), jnp.float32),
            pltpu.VMEM((H * W, k2 * k2 * C0), jnp.float32),
            pltpu.VMEM((H + 2 * (k3 // 2), W + 2 * (k3 // 2), C1), jnp.float32),
            pltpu.VMEM((H * W, k3 * k3 * C1), jnp.float32),
        ],
        compiler_params=pltpu.CompilerParams(
            dimension_semantics=("parallel",)),
    )(x, gb1, gbsc, gb2, gb3, m1, m2, m3, w1, w2, w3, scw, scb)

    return jnp.transpose(out, (0, 3, 1, 2))                          # NHWC -> NCHW


# --------------------------- pure-JAX reference ------------------------------

def _gn_relu_ref(x, gamma, beta, G, eps=1e-5):
    N, H, W, C = x.shape
    xg = x.reshape(N, H, W, G, C // G)
    mean = xg.mean(axis=(1, 2, 4), keepdims=True)
    var = ((xg - mean) ** 2).mean(axis=(1, 2, 4), keepdims=True)
    xn = ((xg - mean) / jnp.sqrt(var + eps)).reshape(N, H, W, C)
    return jnp.maximum(xn * gamma + beta, 0.0)


def _conv_ref(x, w, b=None):
    y = jax.lax.conv_general_dilated(
        x, w, window_strides=(1, 1), padding="SAME",
        dimension_numbers=("NHWC", "HWIO", "NHWC"))
    return y if b is None else y + b


def _res_unit_ref(x_nchw, p):
    x = jnp.transpose(x_nchw, (0, 2, 3, 1))
    if "sc_w" in p:
        sc = _conv_ref(_gn_relu_ref(x, p["sc_gamma"], p["sc_beta"], p["sc_groups"]),
                       p["sc_w"], p["sc_b"])
    else:
        sc = x
    f = _conv_ref(_gn_relu_ref(x, p["g1"], p["b1"], p["groups1"]), p["w1"])
    f = _conv_ref(_gn_relu_ref(f, p["g2"], p["b2"], p["groups2"]), p["w2"])
    f = _conv_ref(_gn_relu_ref(f, p["g3"], p["b3"], p["groups3"]), p["w3"])
    return jnp.transpose(f + sc, (0, 3, 1, 2))


# ----------------------------------- main -------------------------------------

if __name__ == "__main__":
    key = jax.random.PRNGKey(0)
    keys = jax.random.split(key, 8)

    N, in_ch, H, W = 2, 8, 16, 16
    ksize = (3, 3, 3)
    ch = (8, 8, 16)        # in_ch != ch[-1] => shortcut branch active

    def kaiming(k, shape):  # fan_out, relu (matches weights_init)
        kh, kw, cin, cout = shape
        return jax.random.normal(k, shape, jnp.float32) * math.sqrt(2.0 / (kh * kw * cout))

    params = dict(
        groups1=in_ch // 4, g1=jnp.ones((in_ch,), jnp.float32), b1=jnp.zeros((in_ch,), jnp.float32),
        w1=kaiming(keys[0], (ksize[0], ksize[0], in_ch, ch[0])),
        groups2=ch[0] // 4, g2=jnp.ones((ch[0],), jnp.float32), b2=jnp.zeros((ch[0],), jnp.float32),
        w2=kaiming(keys[1], (ksize[1], ksize[1], ch[0], ch[1])),
        groups3=ch[1] // 4, g3=jnp.ones((ch[1],), jnp.float32), b3=jnp.zeros((ch[1],), jnp.float32),
        w3=kaiming(keys[2], (ksize[2], ksize[2], ch[1], ch[2])),
        sc_groups=in_ch // 4,
        sc_gamma=jnp.ones((in_ch,), jnp.float32), sc_beta=jnp.zeros((in_ch,), jnp.float32),
        sc_w=kaiming(keys[3], (1, 1, in_ch, ch[2])),
        sc_b=0.01 * jax.random.normal(keys[4], (ch[2],), jnp.float32),
    )

    x = jax.random.normal(keys[5], (N, in_ch, H, W), jnp.float32)

    out = jax.block_until_ready(res_unit_forward(x, params))
    ref = jax.block_until_ready(_res_unit_ref(x, params))

    assert out.shape == (N, ch[2], H, W), out.shape
    err = float(jnp.max(jnp.abs(out - ref)))
    assert jnp.allclose(out, ref, atol=5e-4, rtol=5e-4), f"max abs err {err}"
    print("KERNEL_OK")
</pallas_src>

<mosaic_0001>
module attributes {stable_mosaic.version = 11 : i64} {
  func.func @_res_unit_kernel(%arg0: i32, %arg1: memref<1x16x16x8xf32, #tpu.memory_space<vmem>>, %arg2: memref<2x8xf32, #tpu.memory_space<vmem>>, %arg3: memref<2x8xf32, #tpu.memory_space<vmem>>, %arg4: memref<2x8xf32, #tpu.memory_space<vmem>>, %arg5: memref<2x8xf32, #tpu.memory_space<vmem>>, %arg6: memref<8x2xf32, #tpu.memory_space<vmem>>, %arg7: memref<8x2xf32, #tpu.memory_space<vmem>>, %arg8: memref<8x2xf32, #tpu.memory_space<vmem>>, %arg9: memref<72x8xf32, #tpu.memory_space<vmem>>, %arg10: memref<72x8xf32, #tpu.memory_space<vmem>>, %arg11: memref<72x16xf32, #tpu.memory_space<vmem>>, %arg12: memref<8x16xf32, #tpu.memory_space<vmem>>, %arg13: memref<1x16xf32, #tpu.memory_space<vmem>>, %arg14: memref<1x16x16x16xf32, #tpu.memory_space<vmem>>, %arg15: memref<18x18x8xf32, #tpu.memory_space<vmem>>, %arg16: memref<256x72xf32, #tpu.memory_space<vmem>>, %arg17: memref<18x18x8xf32, #tpu.memory_space<vmem>>, %arg18: memref<256x72xf32, #tpu.memory_space<vmem>>, %arg19: memref<18x18x8xf32, #tpu.memory_space<vmem>>, %arg20: memref<256x72xf32, #tpu.memory_space<vmem>>) attributes {dimension_semantics = [#tpu.dimension_semantics<parallel>], iteration_bounds = array<i64: 2>, scalar_prefetch = 0 : i64, scratch_operands = 6 : i64, tpu.core_type = #tpu.core_type<tc>, window_params = [{transform_indices = @transform_0, window_bounds = array<i64: 1, 16, 16, 8>}, {pipeline_mode = #tpu.pipeline_mode<synchronous>, transform_indices = @transform_1, window_bounds = array<i64: 2, 8>}, {pipeline_mode = #tpu.pipeline_mode<synchronous>, transform_indices = @transform_2, window_bounds = array<i64: 2, 8>}, {pipeline_mode = #tpu.pipeline_mode<synchronous>, transform_indices = @transform_3, window_bounds = array<i64: 2, 8>}, {pipeline_mode = #tpu.pipeline_mode<synchronous>, transform_indices = @transform_4, window_bounds = array<i64: 2, 8>}, {pipeline_mode = #tpu.pipeline_mode<synchronous>, transform_indices = @transform_5, window_bounds = array<i64: 8, 2>}, {pipeline_mode = #tpu.pipeline_mode<synchronous>, transform_indices = @transform_6, window_bounds = array<i64: 8, 2>}, {pipeline_mode = #tpu.pipeline_mode<synchronous>, transform_indices = @transform_7, window_bounds = array<i64: 8, 2>}, {pipeline_mode = #tpu.pipeline_mode<synchronous>, transform_indices = @transform_8, window_bounds = array<i64: 72, 8>}, {pipeline_mode = #tpu.pipeline_mode<synchronous>, transform_indices = @transform_9, window_bounds = array<i64: 72, 8>}, {pipeline_mode = #tpu.pipeline_mode<synchronous>, transform_indices = @transform_10, window_bounds = array<i64: 72, 16>}, {pipeline_mode = #tpu.pipeline_mode<synchronous>, transform_indices = @transform_11, window_bounds = array<i64: 8, 16>}, {pipeline_mode = #tpu.pipeline_mode<synchronous>, transform_indices = @transform_12, window_bounds = array<i64: 1, 16>}, {transform_indices = @transform_13, window_bounds = array<i64: 1, 16, 16, 16>}]} {
    %c0 = arith.constant 0 : index
    %c0_0 = arith.constant 0 : index
    %c0_1 = arith.constant 0 : index
    %c0_2 = arith.constant 0 : index
    %0 = vector.load %arg1[%c0, %c0_0, %c0_1, %c0_2] : memref<1x16x16x8xf32, #tpu.memory_space<vmem>>, vector<1x16x16x8xf32>
    %1 = vector.shape_cast %0 : vector<1x16x16x8xf32> to vector<16x16x8xf32>
    %2 = vector.shape_cast %1 : vector<16x16x8xf32> to vector<256x8xf32>
    %c0_3 = arith.constant 0 : index
    %c0_4 = arith.constant 0 : index
    %3 = vector.load %arg6[%c0_3, %c0_4] : memref<8x2xf32, #tpu.memory_space<vmem>>, vector<8x2xf32>
    %cst = arith.constant dense<0.000000e+00> : vector<8xf32>
    %4 = vector.multi_reduction <add>, %2, %cst [0] : vector<256x8xf32> to vector<8xf32>
    %5 = vector.shape_cast %4 : vector<8xf32> to vector<1x8xf32>
    %6 = arith.mulf %2, %2 : vector<256x8xf32>
    %cst_5 = arith.constant dense<0.000000e+00> : vector<8xf32>
    %7 = vector.multi_reduction <add>, %6, %cst_5 [0] : vector<256x8xf32> to vector<8xf32>
    %8 = vector.shape_cast %7 : vector<8xf32> to vector<1x8xf32>
    %cst_6 = arith.constant dense<0.000000e+00> : vector<1x2xf32>
    %9 = tpu.matmul %5, %3, %cst_6 {dimension_numbers = #tpu.dot_dimension_numbers<[1], [0], [0], [1], [0, 0, 1, 1], [], []>} : vector<1x8xf32>, vector<8x2xf32>, vector<1x2xf32> -> vector<1x2xf32>
    %cst_7 = arith.constant dense<0.000000e+00> : vector<1x2xf32>
    %10 = tpu.matmul %8, %3, %cst_7 {dimension_numbers = #tpu.dot_dimension_numbers<[1], [0], [0], [1], [0, 0, 1, 1], [], []>} : vector<1x8xf32>, vector<8x2xf32>, vector<1x2xf32> -> vector<1x2xf32>
    %11 = tpu.transpose %3, [1, 0] : vector<8x2xf32> -> vector<2x8xf32>
    %cst_8 = arith.constant dense<0.000000e+00> : vector<1x8xf32>
    %12 = tpu.matmul %9, %11, %cst_8 {dimension_numbers = #tpu.dot_dimension_numbers<[1], [0], [0], [1], [0, 0, 1, 1], [], []>} : vector<1x2xf32>, vector<2x8xf32>, vector<1x8xf32> -> vector<1x8xf32>
    %cst_9 = arith.constant 9.765625E-4 : f32
    %13 = vector.broadcast %cst_9 : f32 to vector<1x8xf32>
    %14 = arith.mulf %12, %13 : vector<1x8xf32>
    %15 = tpu.transpose %3, [1, 0] : vector<8x2xf32> -> vector<2x8xf32>
    %cst_10 = arith.constant dense<0.000000e+00> : vector<1x8xf32>
    %16 = tpu.matmul %10, %15, %cst_10 {dimension_numbers = #tpu.dot_dimension_numbers<[1], [0], [0], [1], [0, 0, 1, 1], [], []>} : vector<1x2xf32>, vector<2x8xf32>, vector<1x8xf32> -> vector<1x8xf32>
    %cst_11 = arith.constant 9.765625E-4 : f32
    %17 = vector.broadcast %cst_11 : f32 to vector<1x8xf32>
    %18 = arith.mulf %16, %17 : vector<1x8xf32>
    %19 = arith.mulf %14, %14 : vector<1x8xf32>
    %20 = arith.subf %18, %19 : vector<1x8xf32>
    %cst_12 = arith.constant 0.000000e+00 : f32
    %21 = vector.broadcast %cst_12 : f32 to vector<1x8xf32>
    %22 = arith.maximumf %20, %21 : vector<1x8xf32>
    %cst_13 = arith.constant 9.99999974E-6 : f32
    %23 = vector.broadcast %cst_13 : f32 to vector<1x8xf32>
    %24 = arith.addf %22, %23 : vector<1x8xf32>
    %25 = math.rsqrt %24 : vector<1x8xf32>
    %c0_14 = arith.constant 0 : index
    %c0_15 = arith.constant 0 : index
    %26 = vector.load %arg3[%c0_14, %c0_15] : memref<2x8xf32, #tpu.memory_space<vmem>>, vector<2x8xf32>
    %27 = vector.broadcast %14 : vector<1x8xf32> to vector<256x8xf32>
    %28 = arith.subf %2, %27 : vector<256x8xf32>
    %29 = vector.broadcast %25 : vector<1x8xf32> to vector<256x8xf32>
    %30 = arith.mulf %28, %29 : vector<256x8xf32>
    %31 = vector.extract_strided_slice %26 {offsets = [0, 0], sizes = [1, 8], strides = [1, 1]} : vector<2x8xf32> to vector<1x8xf32>
    %32 = vector.broadcast %31 : vector<1x8xf32> to vector<256x8xf32>
    %33 = arith.mulf %30, %32 : vector<256x8xf32>
    %34 = vector.extract_strided_slice %26 {offsets = [1, 0], sizes = [1, 8], strides = [1, 1]} : vector<2x8xf32> to vector<1x8xf32>
    %35 = vector.broadcast %34 : vector<1x8xf32> to vector<256x8xf32>
    %36 = arith.addf %33, %35 : vector<256x8xf32>
    %cst_16 = arith.constant 0.000000e+00 : f32
    %37 = vector.broadcast %cst_16 : f32 to vector<256x8xf32>
    %38 = arith.maximumf %36, %37 : vector<256x8xf32>
    %c0_17 = arith.constant 0 : index
    %c0_18 = arith.constant 0 : index
    %39 = vector.load %arg12[%c0_17, %c0_18] : memref<8x16xf32, #tpu.memory_space<vmem>>, vector<8x16xf32>
    %cst_19 = arith.constant dense<0.000000e+00> : vector<256x16xf32>
    %40 = tpu.matmul %38, %39, %cst_19 {dimension_numbers = #tpu.dot_dimension_numbers<[1], [0], [0], [1], [0, 0, 1, 1], [], []>} : vector<256x8xf32>, vector<8x16xf32>, vector<256x16xf32> -> vector<256x16xf32>
    %c0_20 = arith.constant 0 : index
    %c0_21 = arith.constant 0 : index
    %41 = vector.load %arg13[%c0_20, %c0_21] : memref<1x16xf32, #tpu.memory_space<vmem>>, vector<1x16xf32>
    %42 = vector.broadcast %41 : vector<1x16xf32> to vector<256x16xf32>
    %43 = arith.addf %40, %42 : vector<256x16xf32>
    %c0_22 = arith.constant 0 : index
    %c0_23 = arith.constant 0 : index
    %44 = vector.load %arg2[%c0_22, %c0_23] : memref<2x8xf32, #tpu.memory_space<vmem>>, vector<2x8xf32>
    %45 = vector.broadcast %14 : vector<1x8xf32> to vector<256x8xf32>
    %46 = arith.subf %2, %45 : vector<256x8xf32>
    %47 = vector.broadcast %25 : vector<1x8xf32> to vector<256x8xf32>
    %48 = arith.mulf %46, %47 : vector<256x8xf32>
    %49 = vector.extract_strided_slice %44 {offsets = [0, 0], sizes = [1, 8], strides = [1, 1]} : vector<2x8xf32> to vector<1x8xf32>
    %50 = vector.broadcast %49 : vector<1x8xf32> to vector<256x8xf32>
    %51 = arith.mulf %48, %50 : vector<256x8xf32>
    %52 = vector.extract_strided_slice %44 {offsets = [1, 0], sizes = [1, 8], strides = [1, 1]} : vector<2x8xf32> to vector<1x8xf32>
    %53 = vector.broadcast %52 : vector<1x8xf32> to vector<256x8xf32>
    %54 = arith.addf %51, %53 : vector<256x8xf32>
    %cst_24 = arith.constant 0.000000e+00 : f32
    %55 = vector.broadcast %cst_24 : f32 to vector<256x8xf32>
    %56 = arith.maximumf %54, %55 : vector<256x8xf32>
    %cst_25 = arith.constant 0.000000e+00 : f32
    %57 = vector.broadcast %cst_25 : f32 to vector<18x18x8xf32>
    %c0_26 = arith.constant 0 : index
    %c0_27 = arith.constant 0 : index
    %c0_28 = arith.constant 0 : index
    %58 = vector.load %arg15[%c0_26, %c0_27, %c0_28] : memref<18x18x8xf32, #tpu.memory_space<vmem>>, vector<18x18x8xf32>
    tpu.vector_store %arg15[%c0_26, %c0_27, %c0_28], %57 {strides = array<i32>} : memref<18x18x8xf32, #tpu.memory_space<vmem>>, vector<18x18x8xf32>,
    %59 = vector.shape_cast %56 : vector<256x8xf32> to vector<16x16x8xf32>
    %c1 = arith.constant 1 : index
    %c1_29 = arith.constant 1 : index
    %c0_30 = arith.constant 0 : index
    %60 = vector.load %arg15[%c1, %c1_29, %c0_30] : memref<18x18x8xf32, #tpu.memory_space<vmem>>, vector<16x16x8xf32>
    tpu.vector_store %arg15[%c1, %c1_29, %c0_30], %59 {strides = array<i32>} : memref<18x18x8xf32, #tpu.memory_space<vmem>>, vector<16x16x8xf32>,
    %c0_31 = arith.constant 0 : index
    %c0_32 = arith.constant 0 : index
    %c0_33 = arith.constant 0 : index
    %61 = vector.load %arg15[%c0_31, %c0_32, %c0_33] : memref<18x18x8xf32, #tpu.memory_space<vmem>>, vector<18x18x8xf32>
    %62 = vector.extract_strided_slice %61 {offsets = [0, 0, 0], sizes = [16, 16, 8], strides = [1, 1, 1]} : vector<18x18x8xf32> to vector<16x16x8xf32>
    %63 = vector.shape_cast %62 : vector<16x16x8xf32> to vector<256x8xf32>
    %c0_34 = arith.constant 0 : index
    %c0_35 = arith.constant 0 : index
    %64 = vector.load %arg16[%c0_34, %c0_35] : memref<256x72xf32, #tpu.memory_space<vmem>>, vector<256x8xf32>
    tpu.vector_store %arg16[%c0_34, %c0_35], %63 {strides = array<i32>} : memref<256x72xf32, #tpu.memory_space<vmem>>, vector<256x8xf32>,
    %65 = vector.extract_strided_slice %61 {offsets = [0, 1, 0], sizes = [16, 16, 8], strides = [1, 1, 1]} : vector<18x18x8xf32> to vector<16x16x8xf32>
    %66 = vector.shape_cast %65 : vector<16x16x8xf32> to vector<256x8xf32>
    %c0_36 = arith.constant 0 : index
    %c8 = arith.constant 8 : index
    %67 = vector.load %arg16[%c0_36, %c8] : memref<256x72xf32, #tpu.memory_space<vmem>>, vector<256x8xf32>
    tpu.vector_store %arg16[%c0_36, %c8], %66 {strides = array<i32>} : memref<256x72xf32, #tpu.memory_space<vmem>>, vector<256x8xf32>,
    %68 = vector.extract_strided_slice %61 {offsets = [0, 2, 0], sizes = [16, 16, 8], strides = [1, 1, 1]} : vector<18x18x8xf32> to vector<16x16x8xf32>
    %69 = vector.shape_cast %68 : vector<16x16x8xf32> to vector<256x8xf32>
    %c0_37 = arith.constant 0 : index
    %c16 = arith.constant 16 : index
    %70 = vector.load %arg16[%c0_37, %c16] : memref<256x72xf32, #tpu.memory_space<vmem>>, vector<256x8xf32>
    tpu.vector_store %arg16[%c0_37, %c16], %69 {strides = array<i32>} : memref<256x72xf32, #tpu.memory_space<vmem>>, vector<256x8xf32>,
    %71 = vector.extract_strided_slice %61 {offsets = [1, 0, 0], sizes = [16, 16, 8], strides = [1, 1, 1]} : vector<18x18x8xf32> to vector<16x16x8xf32>
    %72 = vector.shape_cast %71 : vector<16x16x8xf32> to vector<256x8xf32>
    %c0_38 = arith.constant 0 : index
    %c24 = arith.constant 24 : index
    %73 = vector.load %arg16[%c0_38, %c24] : memref<256x72xf32, #tpu.memory_space<vmem>>, vector<256x8xf32>
    tpu.vector_store %arg16[%c0_38, %c24], %72 {strides = array<i32>} : memref<256x72xf32, #tpu.memory_space<vmem>>, vector<256x8xf32>,
    %74 = vector.extract_strided_slice %61 {offsets = [1, 1, 0], sizes = [16, 16, 8], strides = [1, 1, 1]} : vector<18x18x8xf32> to vector<16x16x8xf32>
    %75 = vector.shape_cast %74 : vector<16x16x8xf32> to vector<256x8xf32>
    %c0_39 = arith.constant 0 : index
    %c32 = arith.constant 32 : index
    %76 = vector.load %arg16[%c0_39, %c32] : memref<256x72xf32, #tpu.memory_space<vmem>>, vector<256x8xf32>
    tpu.vector_store %arg16[%c0_39, %c32], %75 {strides = array<i32>} : memref<256x72xf32, #tpu.memory_space<vmem>>, vector<256x8xf32>,
    %77 = vector.extract_strided_slice %61 {offsets = [1, 2, 0], sizes = [16, 16, 8], strides = [1, 1, 1]} : vector<18x18x8xf32> to vector<16x16x8xf32>
    %78 = vector.shape_cast %77 : vector<16x16x8xf32> to vector<256x8xf32>
    %c0_40 = arith.constant 0 : index
    %c40 = arith.constant 40 : index
    %79 = vector.load %arg16[%c0_40, %c40] : memref<256x72xf32, #tpu.memory_space<vmem>>, vector<256x8xf32>
    tpu.vector_store %arg16[%c0_40, %c40], %78 {strides = array<i32>} : memref<256x72xf32, #tpu.memory_space<vmem>>, vector<256x8xf32>,
    %80 = vector.extract_strided_slice %61 {offsets = [2, 0, 0], sizes = [16, 16, 8], strides = [1, 1, 1]} : vector<18x18x8xf32> to vector<16x16x8xf32>
    %81 = vector.shape_cast %80 : vector<16x16x8xf32> to vector<256x8xf32>
    %c0_41 = arith.constant 0 : index
    %c48 = arith.constant 48 : index
    %82 = vector.load %arg16[%c0_41, %c48] : memref<256x72xf32, #tpu.memory_space<vmem>>, vector<256x8xf32>
    tpu.vector_store %arg16[%c0_41, %c48], %81 {strides = array<i32>} : memref<256x72xf32, #tpu.memory_space<vmem>>, vector<256x8xf32>,
    %83 = vector.extract_strided_slice %61 {offsets = [2, 1, 0], sizes = [16, 16, 8], strides = [1, 1, 1]} : vector<18x18x8xf32> to vector<16x16x8xf32>
    %84 = vector.shape_cast %83 : vector<16x16x8xf32> to vector<256x8xf32>
    %c0_42 = arith.constant 0 : index
    %c56 = arith.constant 56 : index
    %85 = vector.load %arg16[%c0_42, %c56] : memref<256x72xf32, #tpu.memory_space<vmem>>, vector<256x8xf32>
    tpu.vector_store %arg16[%c0_42, %c56], %84 {strides = array<i32>} : memref<256x72xf32, #tpu.memory_space<vmem>>, vector<256x8xf32>,
    %86 = vector.extract_strided_slice %61 {offsets = [2, 2, 0], sizes = [16, 16, 8], strides = [1, 1, 1]} : vector<18x18x8xf32> to vector<16x16x8xf32>
    %87 = vector.shape_cast %86 : vector<16x16x8xf32> to vector<256x8xf32>
    %c0_43 = arith.constant 0 : index
    %c64 = arith.constant 64 : index
    %88 = vector.load %arg16[%c0_43, %c64] : memref<256x72xf32, #tpu.memory_space<vmem>>, vector<256x8xf32>
    tpu.vector_store %arg16[%c0_43, %c64], %87 {strides = array<i32>} : memref<256x72xf32, #tpu.memory_space<vmem>>, vector<256x8xf32>,
    %c0_44 = arith.constant 0 : index
    %c0_45 = arith.constant 0 : index
    %89 = vector.load %arg16[%c0_44, %c0_45] : memref<256x72xf32, #tpu.memory_space<vmem>>, vector<256x72xf32>
    %c0_46 = arith.constant 0 : index
    %c0_47 = arith.constant 0 : index
    %90 = vector.load %arg9[%c0_46, %c0_47] : memref<72x8xf32, #tpu.memory_space<vmem>>, vector<72x8xf32>
    %cst_48 = arith.constant dense<0.000000e+00> : vector<256x8xf32>
    %91 = tpu.matmul %89, %90, %cst_48 {dimension_numbers = #tpu.dot_dimension_numbers<[1], [0], [0], [1], [0, 0, 1, 1], [], []>} : vector<256x72xf32>, vector<72x8xf32>, vector<256x8xf32> -> vector<256x8xf32>
    %c0_49 = arith.constant 0 : index
    %c0_50 = arith.constant 0 : index
    %92 = vector.load %arg7[%c0_49, %c0_50] : memref<8x2xf32, #tpu.memory_space<vmem>>, vector<8x2xf32>
    %cst_51 = arith.constant dense<0.000000e+00> : vector<8xf32>
    %93 = vector.multi_reduction <add>, %91, %cst_51 [0] : vector<256x8xf32> to vector<8xf32>
    %94 = vector.shape_cast %93 : vector<8xf32> to vector<1x8xf32>
    %95 = arith.mulf %91, %91 : vector<256x8xf32>
    %cst_52 = arith.constant dense<0.000000e+00> : vector<8xf32>
    %96 = vector.multi_reduction <add>, %95, %cst_52 [0] : vector<256x8xf32> to vector<8xf32>
    %97 = vector.shape_cast %96 : vector<8xf32> to vector<1x8xf32>
    %cst_53 = arith.constant dense<0.000000e+00> : vector<1x2xf32>
    %98 = tpu.matmul %94, %92, %cst_53 {dimension_numbers = #tpu.dot_dimension_numbers<[1], [0], [0], [1], [0, 0, 1, 1], [], []>} : vector<1x8xf32>, vector<8x2xf32>, vector<1x2xf32> -> vector<1x2xf32>
    %cst_54 = arith.constant dense<0.000000e+00> : vector<1x2xf32>
    %99 = tpu.matmul %97, %92, %cst_54 {dimension_numbers = #tpu.dot_dimension_numbers<[1], [0], [0], [1], [0, 0, 1, 1], [], []>} : vector<1x8xf32>, vector<8x2xf32>, vector<1x2xf32> -> vector<1x2xf32>
    %100 = tpu.transpose %92, [1, 0] : vector<8x2xf32> -> vector<2x8xf32>
    %cst_55 = arith.constant dense<0.000000e+00> : vector<1x8xf32>
    %101 = tpu.matmul %98, %100, %cst_55 {dimension_numbers = #tpu.dot_dimension_numbers<[1], [0], [0], [1], [0, 0, 1, 1], [], []>} : vector<1x2xf32>, vector<2x8xf32>, vector<1x8xf32> -> vector<1x8xf32>
    %cst_56 = arith.constant 9.765625E-4 : f32
    %102 = vector.broadcast %cst_56 : f32 to vector<1x8xf32>
    %103 = arith.mulf %101, %102 : vector<1x8xf32>
    %104 = tpu.transpose %92, [1, 0] : vector<8x2xf32> -> vector<2x8xf32>
    %cst_57 = arith.constant dense<0.000000e+00> : vector<1x8xf32>
    %105 = tpu.matmul %99, %104, %cst_57 {dimension_numbers = #tpu.dot_dimension_numbers<[1], [0], [0], [1], [0, 0, 1, 1], [], []>} : vector<1x2xf32>, vector<2x8xf32>, vector<1x8xf32> -> vector<1x8xf32>
    %cst_58 = arith.constant 9.765625E-4 : f32
    %106 = vector.broadcast %cst_58 : f32 to vector<1x8xf32>
    %107 = arith.mulf %105, %106 : vector<1x8xf32>
    %108 = arith.mulf %103, %103 : vector<1x8xf32>
    %109 = arith.subf %107, %108 : vector<1x8xf32>
    %cst_59 = arith.constant 0.000000e+00 : f32
    %110 = vector.broadcast %cst_59 : f32 to vector<1x8xf32>
    %111 = arith.maximumf %109, %110 : vector<1x8xf32>
    %cst_60 = arith.constant 9.99999974E-6 : f32
    %112 = vector.broadcast %cst_60 : f32 to vector<1x8xf32>
    %113 = arith.addf %111, %112 : vector<1x8xf32>
    %114 = math.rsqrt %113 : vector<1x8xf32>
    %c0_61 = arith.constant 0 : index
    %c0_62 = arith.constant 0 : index
    %115 = vector.load %arg4[%c0_61, %c0_62] : memref<2x8xf32, #tpu.memory_space<vmem>>, vector<2x8xf32>
    %116 = vector.broadcast %103 : vector<1x8xf32> to vector<256x8xf32>
    %117 = arith.subf %91, %116 : vector<256x8xf32>
    %118 = vector.broadcast %114 : vector<1x8xf32> to vector<256x8xf32>
    %119 = arith.mulf %117, %118 : vector<256x8xf32>
    %120 = vector.extract_strided_slice %115 {offsets = [0, 0], sizes = [1, 8], strides = [1, 1]} : vector<2x8xf32> to vector<1x8xf32>
    %121 = vector.broadcast %120 : vector<1x8xf32> to vector<256x8xf32>
    %122 = arith.mulf %119, %121 : vector<256x8xf32>
    %123 = vector.extract_strided_slice %115 {offsets = [1, 0], sizes = [1, 8], strides = [1, 1]} : vector<2x8xf32> to vector<1x8xf32>
    %124 = vector.broadcast %123 : vector<1x8xf32> to vector<256x8xf32>
    %125 = arith.addf %122, %124 : vector<256x8xf32>
    %cst_63 = arith.constant 0.000000e+00 : f32
    %126 = vector.broadcast %cst_63 : f32 to vector<256x8xf32>
    %127 = arith.maximumf %125, %126 : vector<256x8xf32>
    %cst_64 = arith.constant 0.000000e+00 : f32
    %128 = vector.broadcast %cst_64 : f32 to vector<18x18x8xf32>
    %c0_65 = arith.constant 0 : index
    %c0_66 = arith.constant 0 : index
    %c0_67 = arith.constant 0 : index
    %129 = vector.load %arg17[%c0_65, %c0_66, %c0_67] : memref<18x18x8xf32, #tpu.memory_space<vmem>>, vector<18x18x8xf32>
    tpu.vector_store %arg17[%c0_65, %c0_66, %c0_67], %128 {strides = array<i32>} : memref<18x18x8xf32, #tpu.memory_space<vmem>>, vector<18x18x8xf32>,
    %130 = vector.shape_cast %127 : vector<256x8xf32> to vector<16x16x8xf32>
    %c1_68 = arith.constant 1 : index
    %c1_69 = arith.constant 1 : index
    %c0_70 = arith.constant 0 : index
    %131 = vector.load %arg17[%c1_68, %c1_69, %c0_70] : memref<18x18x8xf32, #tpu.memory_space<vmem>>, vector<16x16x8xf32>
    tpu.vector_store %arg17[%c1_68, %c1_69, %c0_70], %130 {strides = array<i32>} : memref<18x18x8xf32, #tpu.memory_space<vmem>>, vector<16x16x8xf32>,
    %c0_71 = arith.constant 0 : index
    %c0_72 = arith.constant 0 : index
    %c0_73 = arith.constant 0 : index
    %132 = vector.load %arg17[%c0_71, %c0_72, %c0_73] : memref<18x18x8xf32, #tpu.memory_space<vmem>>, vector<18x18x8xf32>
    %133 = vector.extract_strided_slice %132 {offsets = [0, 0, 0], sizes = [16, 16, 8], strides = [1, 1, 1]} : vector<18x18x8xf32> to vector<16x16x8xf32>
    %134 = vector.shape_cast %133 : vector<16x16x8xf32> to vector<256x8xf32>
    %c0_74 = arith.constant 0 : index
    %c0_75 = arith.constant 0 : index
    %135 = vector.load %arg18[%c0_74, %c0_75] : memref<256x72xf32, #tpu.memory_space<vmem>>, vector<256x8xf32>
    tpu.vector_store %arg18[%c0_74, %c0_75], %134 {strides = array<i32>} : memref<256x72xf32, #tpu.memory_space<vmem>>, vector<256x8xf32>,
    %136 = vector.extract_strided_slice %132 {offsets = [0, 1, 0], sizes = [16, 16, 8], strides = [1, 1, 1]} : vector<18x18x8xf32> to vector<16x16x8xf32>
    %137 = vector.shape_cast %136 : vector<16x16x8xf32> to vector<256x8xf32>
    %c0_76 = arith.constant 0 : index
    %c8_77 = arith.constant 8 : index
    %138 = vector.load %arg18[%c0_76, %c8_77] : memref<256x72xf32, #tpu.memory_space<vmem>>, vector<256x8xf32>
    tpu.vector_store %arg18[%c0_76, %c8_77], %137 {strides = array<i32>} : memref<256x72xf32, #tpu.memory_space<vmem>>, vector<256x8xf32>,
    %139 = vector.extract_strided_slice %132 {offsets = [0, 2, 0], sizes = [16, 16, 8], strides = [1, 1, 1]} : vector<18x18x8xf32> to vector<16x16x8xf32>
    %140 = vector.shape_cast %139 : vector<16x16x8xf32> to vector<256x8xf32>
    %c0_78 = arith.constant 0 : index
    %c16_79 = arith.constant 16 : index
    %141 = vector.load %arg18[%c0_78, %c16_79] : memref<256x72xf32, #tpu.memory_space<vmem>>, vector<256x8xf32>
    tpu.vector_store %arg18[%c0_78, %c16_79], %140 {strides = array<i32>} : memref<256x72xf32, #tpu.memory_space<vmem>>, vector<256x8xf32>,
    %142 = vector.extract_strided_slice %132 {offsets = [1, 0, 0], sizes = [16, 16, 8], strides = [1, 1, 1]} : vector<18x18x8xf32> to vector<16x16x8xf32>
    %143 = vector.shape_cast %142 : vector<16x16x8xf32> to vector<256x8xf32>
    %c0_80 = arith.constant 0 : index
    %c24_81 = arith.constant 24 : index
    %144 = vector.load %arg18[%c0_80, %c24_81] : memref<256x72xf32, #tpu.memory_space<vmem>>, vector<256x8xf32>
    tpu.vector_store %arg18[%c0_80, %c24_81], %143 {strides = array<i32>} : memref<256x72xf32, #tpu.memory_space<vmem>>, vector<256x8xf32>,
    %145 = vector.extract_strided_slice %132 {offsets = [1, 1, 0], sizes = [16, 16, 8], strides = [1, 1, 1]} : vector<18x18x8xf32> to vector<16x16x8xf32>
    %146 = vector.shape_cast %145 : vector<16x16x8xf32> to vector<256x8xf32>
    %c0_82 = arith.constant 0 : index
    %c32_83 = arith.constant 32 : index
    %147 = vector.load %arg18[%c0_82, %c32_83] : memref<256x72xf32, #tpu.memory_space<vmem>>, vector<256x8xf32>
    tpu.vector_store %arg18[%c0_82, %c32_83], %146 {strides = array<i32>} : memref<256x72xf32, #tpu.memory_space<vmem>>, vector<256x8xf32>,
    %148 = vector.extract_strided_slice %132 {offsets = [1, 2, 0], sizes = [16, 16, 8], strides = [1, 1, 1]} : vector<18x18x8xf32> to vector<16x16x8xf32>
    %149 = vector.shape_cast %148 : vector<16x16x8xf32> to vector<256x8xf32>
    %c0_84 = arith.constant 0 : index
    %c40_85 = arith.constant 40 : index
    %150 = vector.load %arg18[%c0_84, %c40_85] : memref<256x72xf32, #tpu.memory_space<vmem>>, vector<256x8xf32>
    tpu.vector_store %arg18[%c0_84, %c40_85], %149 {strides = array<i32>} : memref<256x72xf32, #tpu.memory_space<vmem>>, vector<256x8xf32>,
    %151 = vector.extract_strided_slice %132 {offsets = [2, 0, 0], sizes = [16, 16, 8], strides = [1, 1, 1]} : vector<18x18x8xf32> to vector<16x16x8xf32>
    %152 = vector.shape_cast %151 : vector<16x16x8xf32> to vector<256x8xf32>
    %c0_86 = arith.constant 0 : index
    %c48_87 = arith.constant 48 : index
    %153 = vector.load %arg18[%c0_86, %c48_87] : memref<256x72xf32, #tpu.memory_space<vmem>>, vector<256x8xf32>
    tpu.vector_store %arg18[%c0_86, %c48_87], %152 {strides = array<i32>} : memref<256x72xf32, #tpu.memory_space<vmem>>, vector<256x8xf32>,
    %154 = vector.extract_strided_slice %132 {offsets = [2, 1, 0], sizes = [16, 16, 8], strides = [1, 1, 1]} : vector<18x18x8xf32> to vector<16x16x8xf32>
    %155 = vector.shape_cast %154 : vector<16x16x8xf32> to vector<256x8xf32>
    %c0_88 = arith.constant 0 : index
    %c56_89 = arith.constant 56 : index
    %156 = vector.load %arg18[%c0_88, %c56_89] : memref<256x72xf32, #tpu.memory_space<vmem>>, vector<256x8xf32>
    tpu.vector_store %arg18[%c0_88, %c56_89], %155 {strides = array<i32>} : memref<256x72xf32, #tpu.memory_space<vmem>>, vector<256x8xf32>,
    %157 = vector.extract_strided_slice %132 {offsets = [2, 2, 0], sizes = [16, 16, 8], strides = [1, 1, 1]} : vector<18x18x8xf32> to vector<16x16x8xf32>
    %158 = vector.shape_cast %157 : vector<16x16x8xf32> to vector<256x8xf32>
    %c0_90 = arith.constant 0 : index
    %c64_91 = arith.constant 64 : index
    %159 = vector.load %arg18[%c0_90, %c64_91] : memref<256x72xf32, #tpu.memory_space<vmem>>, vector<256x8xf32>
    tpu.vector_store %arg18[%c0_90, %c64_91], %158 {strides = array<i32>} : memref<256x72xf32, #tpu.memory_space<vmem>>, vector<256x8xf32>,
    %c0_92 = arith.constant 0 : index
    %c0_93 = arith.constant 0 : index
    %160 = vector.load %arg18[%c0_92, %c0_93] : memref<256x72xf32, #tpu.memory_space<vmem>>, vector<256x72xf32>
    %c0_94 = arith.constant 0 : index
    %c0_95 = arith.constant 0 : index
    %161 = vector.load %arg10[%c0_94, %c0_95] : memref<72x8xf32, #tpu.memory_space<vmem>>, vector<72x8xf32>
    %cst_96 = arith.constant dense<0.000000e+00> : vector<256x8xf32>
    %162 = tpu.matmul %160, %161, %cst_96 {dimension_numbers = #tpu.dot_dimension_numbers<[1], [0], [0], [1], [0, 0, 1, 1], [], []>} : vector<256x72xf32>, vector<72x8xf32>, vector<256x8xf32> -> vector<256x8xf32>
    %c0_97 = arith.constant 0 : index
    %c0_98 = arith.constant 0 : index
    %163 = vector.load %arg8[%c0_97, %c0_98] : memref<8x2xf32, #tpu.memory_space<vmem>>, vector<8x2xf32>
    %cst_99 = arith.constant dense<0.000000e+00> : vector<8xf32>
    %164 = vector.multi_reduction <add>, %162, %cst_99 [0] : vector<256x8xf32> to vector<8xf32>
    %165 = vector.shape_cast %164 : vector<8xf32> to vector<1x8xf32>
    %166 = arith.mulf %162, %162 : vector<256x8xf32>
    %cst_100 = arith.constant dense<0.000000e+00> : vector<8xf32>
    %167 = vector.multi_reduction <add>, %166, %cst_100 [0] : vector<256x8xf32> to vector<8xf32>
    %168 = vector.shape_cast %167 : vector<8xf32> to vector<1x8xf32>
    %cst_101 = arith.constant dense<0.000000e+00> : vector<1x2xf32>
    %169 = tpu.matmul %165, %163, %cst_101 {dimension_numbers = #tpu.dot_dimension_numbers<[1], [0], [0], [1], [0, 0, 1, 1], [], []>} : vector<1x8xf32>, vector<8x2xf32>, vector<1x2xf32> -> vector<1x2xf32>
    %cst_102 = arith.constant dense<0.000000e+00> : vector<1x2xf32>
    %170 = tpu.matmul %168, %163, %cst_102 {dimension_numbers = #tpu.dot_dimension_numbers<[1], [0], [0], [1], [0, 0, 1, 1], [], []>} : vector<1x8xf32>, vector<8x2xf32>, vector<1x2xf32> -> vector<1x2xf32>
    %171 = tpu.transpose %163, [1, 0] : vector<8x2xf32> -> vector<2x8xf32>
    %cst_103 = arith.constant dense<0.000000e+00> : vector<1x8xf32>
    %172 = tpu.matmul %169, %171, %cst_103 {dimension_numbers = #tpu.dot_dimension_numbers<[1], [0], [0], [1], [0, 0, 1, 1], [], []>} : vector<1x2xf32>, vector<2x8xf32>, vector<1x8xf32> -> vector<1x8xf32>
    %cst_104 = arith.constant 9.765625E-4 : f32
    %173 = vector.broadcast %cst_104 : f32 to vector<1x8xf32>
    %174 = arith.mulf %172, %173 : vector<1x8xf32>
    %175 = tpu.transpose %163, [1, 0] : vector<8x2xf32> -> vector<2x8xf32>
    %cst_105 = arith.constant dense<0.000000e+00> : vector<1x8xf32>
    %176 = tpu.matmul %170, %175, %cst_105 {dimension_numbers = #tpu.dot_dimension_numbers<[1], [0], [0], [1], [0, 0, 1, 1], [], []>} : vector<1x2xf32>, vector<2x8xf32>, vector<1x8xf32> -> vector<1x8xf32>
    %cst_106 = arith.constant 9.765625E-4 : f32
    %177 = vector.broadcast %cst_106 : f32 to vector<1x8xf32>
    %178 = arith.mulf %176, %177 : vector<1x8xf32>
    %179 = arith.mulf %174, %174 : vector<1x8xf32>
    %180 = arith.subf %178, %179 : vector<1x8xf32>
    %cst_107 = arith.constant 0.000000e+00 : f32
    %181 = vector.broadcast %cst_107 : f32 to vector<1x8xf32>
    %182 = arith.maximumf %180, %181 : vector<1x8xf32>
    %cst_108 = arith.constant 9.99999974E-6 : f32
    %183 = vector.broadcast %cst_108 : f32 to vector<1x8xf32>
    %184 = arith.addf %182, %183 : vector<1x8xf32>
    %185 = math.rsqrt %184 : vector<1x8xf32>
    %c0_109 = arith.constant 0 : index
    %c0_110 = arith.constant 0 : index
    %186 = vector.load %arg5[%c0_109, %c0_110] : memref<2x8xf32, #tpu.memory_space<vmem>>, vector<2x8xf32>
    %187 = vector.broadcast %174 : vector<1x8xf32> to vector<256x8xf32>
    %188 = arith.subf %162, %187 : vector<256x8xf32>
    %189 = vector.broadcast %185 : vector<1x8xf32> to vector<256x8xf32>
    %190 = arith.mulf %188, %189 : vector<256x8xf32>
    %191 = vector.extract_strided_slice %186 {offsets = [0, 0], sizes = [1, 8], strides = [1, 1]} : vector<2x8xf32> to vector<1x8xf32>
    %192 = vector.broadcast %191 : vector<1x8xf32> to vector<256x8xf32>
    %193 = arith.mulf %190, %192 : vector<256x8xf32>
    %194 = vector.extract_strided_slice %186 {offsets = [1, 0], sizes = [1, 8], strides = [1, 1]} : vector<2x8xf32> to vector<1x8xf32>
    %195 = vector.broadcast %194 : vector<1x8xf32> to vector<256x8xf32>
    %196 = arith.addf %193, %195 : vector<256x8xf32>
    %cst_111 = arith.constant 0.000000e+00 : f32
    %197 = vector.broadcast %cst_111 : f32 to vector<256x8xf32>
    %198 = arith.maximumf %196, %197 : vector<256x8xf32>
    %cst_112 = arith.constant 0.000000e+00 : f32
    %199 = vector.broadcast %cst_112 : f32 to vector<18x18x8xf32>
    %c0_113 = arith.constant 0 : index
    %c0_114 = arith.constant 0 : index
    %c0_115 = arith.constant 0 : index
    %200 = vector.load %arg19[%c0_113, %c0_114, %c0_115] : memref<18x18x8xf32, #tpu.memory_space<vmem>>, vector<18x18x8xf32>
    tpu.vector_store %arg19[%c0_113, %c0_114, %c0_115], %199 {strides = array<i32>} : memref<18x18x8xf32, #tpu.memory_space<vmem>>, vector<18x18x8xf32>,
    %201 = vector.shape_cast %198 : vector<256x8xf32> to vector<16x16x8xf32>
    %c1_116 = arith.constant 1 : index
    %c1_117 = arith.constant 1 : index
    %c0_118 = arith.constant 0 : index
    %202 = vector.load %arg19[%c1_116, %c1_117, %c0_118] : memref<18x18x8xf32, #tpu.memory_space<vmem>>, vector<16x16x8xf32>
    tpu.vector_store %arg19[%c1_116, %c1_117, %c0_118], %201 {strides = array<i32>} : memref<18x18x8xf32, #tpu.memory_space<vmem>>, vector<16x16x8xf32>,
    %c0_119 = arith.constant 0 : index
    %c0_120 = arith.constant 0 : index
    %c0_121 = arith.constant 0 : index
    %203 = vector.load %arg19[%c0_119, %c0_120, %c0_121] : memref<18x18x8xf32, #tpu.memory_space<vmem>>, vector<18x18x8xf32>
    %204 = vector.extract_strided_slice %203 {offsets = [0, 0, 0], sizes = [16, 16, 8], strides = [1, 1, 1]} : vector<18x18x8xf32> to vector<16x16x8xf32>
    %205 = vector.shape_cast %204 : vector<16x16x8xf32> to vector<256x8xf32>
    %c0_122 = arith.constant 0 : index
    %c0_123 = arith.constant 0 : index
    %206 = vector.load %arg20[%c0_122, %c0_123] : memref<256x72xf32, #tpu.memory_space<vmem>>, vector<256x8xf32>
    tpu.vector_store %arg20[%c0_122, %c0_123], %205 {strides = array<i32>} : memref<256x72xf32, #tpu.memory_space<vmem>>, vector<256x8xf32>,
    %207 = vector.extract_strided_slice %203 {offsets = [0, 1, 0], sizes = [16, 16, 8], strides = [1, 1, 1]} : vector<18x18x8xf32> to vector<16x16x8xf32>
    %208 = vector.shape_cast %207 : vector<16x16x8xf32> to vector<256x8xf32>
    %c0_124 = arith.constant 0 : index
    %c8_125 = arith.constant 8 : index
    %209 = vector.load %arg20[%c0_124, %c8_125] : memref<256x72xf32, #tpu.memory_space<vmem>>, vector<256x8xf32>
    tpu.vector_store %arg20[%c0_124, %c8_125], %208 {strides = array<i32>} : memref<256x72xf32, #tpu.memory_space<vmem>>, vector<256x8xf32>,
    %210 = vector.extract_strided_slice %203 {offsets = [0, 2, 0], sizes = [16, 16, 8], strides = [1, 1, 1]} : vector<18x18x8xf32> to vector<16x16x8xf32>
    %211 = vector.shape_cast %210 : vector<16x16x8xf32> to vector<256x8xf32>
    %c0_126 = arith.constant 0 : index
    %c16_127 = arith.constant 16 : index
    %212 = vector.load %arg20[%c0_126, %c16_127] : memref<256x72xf32, #tpu.memory_space<vmem>>, vector<256x8xf32>
    tpu.vector_store %arg20[%c0_126, %c16_127], %211 {strides = array<i32>} : memref<256x72xf32, #tpu.memory_space<vmem>>, vector<256x8xf32>,
    %213 = vector.extract_strided_slice %203 {offsets = [1, 0, 0], sizes = [16, 16, 8], strides = [1, 1, 1]} : vector<18x18x8xf32> to vector<16x16x8xf32>
    %214 = vector.shape_cast %213 : vector<16x16x8xf32> to vector<256x8xf32>
    %c0_128 = arith.constant 0 : index
    %c24_129 = arith.constant 24 : index
    %215 = vector.load %arg20[%c0_128, %c24_129] : memref<256x72xf32, #tpu.memory_space<vmem>>, vector<256x8xf32>
    tpu.vector_store %arg20[%c0_128, %c24_129], %214 {strides = array<i32>} : memref<256x72xf32, #tpu.memory_space<vmem>>, vector<256x8xf32>,
    %216 = vector.extract_strided_slice %203 {offsets = [1, 1, 0], sizes = [16, 16, 8], strides = [1, 1, 1]} : vector<18x18x8xf32> to vector<16x16x8xf32>
    %217 = vector.shape_cast %216 : vector<16x16x8xf32> to vector<256x8xf32>
    %c0_130 = arith.constant 0 : index
    %c32_131 = arith.constant 32 : index
    %218 = vector.load %arg20[%c0_130, %c32_131] : memref<256x72xf32, #tpu.memory_space<vmem>>, vector<256x8xf32>
    tpu.vector_store %arg20[%c0_130, %c32_131], %217 {strides = array<i32>} : memref<256x72xf32, #tpu.memory_space<vmem>>, vector<256x8xf32>,
    %219 = vector.extract_strided_slice %203 {offsets = [1, 2, 0], sizes = [16, 16, 8], strides = [1, 1, 1]} : vector<18x18x8xf32> to vector<16x16x8xf32>
    %220 = vector.shape_cast %219 : vector<16x16x8xf32> to vector<256x8xf32>
    %c0_132 = arith.constant 0 : index
    %c40_133 = arith.constant 40 : index
    %221 = vector.load %arg20[%c0_132, %c40_133] : memref<256x72xf32, #tpu.memory_space<vmem>>, vector<256x8xf32>
    tpu.vector_store %arg20[%c0_132, %c40_133], %220 {strides = array<i32>} : memref<256x72xf32, #tpu.memory_space<vmem>>, vector<256x8xf32>,
    %222 = vector.extract_strided_slice %203 {offsets = [2, 0, 0], sizes = [16, 16, 8], strides = [1, 1, 1]} : vector<18x18x8xf32> to vector<16x16x8xf32>
    %223 = vector.shape_cast %222 : vector<16x16x8xf32> to vector<256x8xf32>
    %c0_134 = arith.constant 0 : index
    %c48_135 = arith.constant 48 : index
    %224 = vector.load %arg20[%c0_134, %c48_135] : memref<256x72xf32, #tpu.memory_space<vmem>>, vector<256x8xf32>
    tpu.vector_store %arg20[%c0_134, %c48_135], %223 {strides = array<i32>} : memref<256x72xf32, #tpu.memory_space<vmem>>, vector<256x8xf32>,
    %225 = vector.extract_strided_slice %203 {offsets = [2, 1, 0], sizes = [16, 16, 8], strides = [1, 1, 1]} : vector<18x18x8xf32> to vector<16x16x8xf32>
    %226 = vector.shape_cast %225 : vector<16x16x8xf32> to vector<256x8xf32>
    %c0_136 = arith.constant 0 : index
    %c56_137 = arith.constant 56 : index
    %227 = vector.load %arg20[%c0_136, %c56_137] : memref<256x72xf32, #tpu.memory_space<vmem>>, vector<256x8xf32>
    tpu.vector_store %arg20[%c0_136, %c56_137], %226 {strides = array<i32>} : memref<256x72xf32, #tpu.memory_space<vmem>>, vector<256x8xf32>,
    %228 = vector.extract_strided_slice %203 {offsets = [2, 2, 0], sizes = [16, 16, 8], strides = [1, 1, 1]} : vector<18x18x8xf32> to vector<16x16x8xf32>
    %229 = vector.shape_cast %228 : vector<16x16x8xf32> to vector<256x8xf32>
    %c0_138 = arith.constant 0 : index
    %c64_139 = arith.constant 64 : index
    %230 = vector.load %arg20[%c0_138, %c64_139] : memref<256x72xf32, #tpu.memory_space<vmem>>, vector<256x8xf32>
    tpu.vector_store %arg20[%c0_138, %c64_139], %229 {strides = array<i32>} : memref<256x72xf32, #tpu.memory_space<vmem>>, vector<256x8xf32>,
    %c0_140 = arith.constant 0 : index
    %c0_141 = arith.constant 0 : index
    %231 = vector.load %arg20[%c0_140, %c0_141] : memref<256x72xf32, #tpu.memory_space<vmem>>, vector<256x72xf32>
    %c0_142 = arith.constant 0 : index
    %c0_143 = arith.constant 0 : index
    %232 = vector.load %arg11[%c0_142, %c0_143] : memref<72x16xf32, #tpu.memory_space<vmem>>, vector<72x16xf32>
    %cst_144 = arith.constant dense<0.000000e+00> : vector<256x16xf32>
    %233 = tpu.matmul %231, %232, %cst_144 {dimension_numbers = #tpu.dot_dimension_numbers<[1], [0], [0], [1], [0, 0, 1, 1], [], []>} : vector<256x72xf32>, vector<72x16xf32>, vector<256x16xf32> -> vector<256x16xf32>
    %234 = arith.addf %233, %43 : vector<256x16xf32>
    %235 = vector.shape_cast %234 : vector<256x16xf32> to vector<1x16x16x16xf32>
    %c0_145 = arith.constant 0 : index
    %c0_146 = arith.constant 0 : index
    %c0_147 = arith.constant 0 : index
    %c0_148 = arith.constant 0 : index
    %236 = vector.load %arg14[%c0_145, %c0_146, %c0_147, %c0_148] : memref<1x16x16x16xf32, #tpu.memory_space<vmem>>, vector<1x16x16x16xf32>
    tpu.vector_store %arg14[%c0_145, %c0_146, %c0_147, %c0_148], %235 {strides = array<i32>} : memref<1x16x16x16xf32, #tpu.memory_space<vmem>>, vector<1x16x16x16xf32>,
    return
  }
  func.func @transform_0(%arg0: i32) -> (i32, i32, i32, i32) {
    %c0_i32 = arith.constant 0 : i32
    %c0_i32_0 = arith.constant 0 : i32
    %c0_i32_1 = arith.constant 0 : i32
    %c0_i32_2 = arith.constant 0 : i32
    return %arg0, %c0_i32, %c0_i32_0, %c0_i32_1 : i32, i32, i32, i32
  }
  func.func @transform_1(%arg0: i32) -> (i32, i32) {
    %c0_i32 = arith.constant 0 : i32
    %c0_i32_0 = arith.constant 0 : i32
    %c0_i32_1 = arith.constant 0 : i32
    return %c0_i32, %c0_i32_0 : i32, i32
  }
  func.func @transform_2(%arg0: i32) -> (i32, i32) {
    %c0_i32 = arith.constant 0 : i32
    %c0_i32_0 = arith.constant 0 : i32
    %c0_i32_1 = arith.constant 0 : i32
    return %c0_i32, %c0_i32_0 : i32, i32
  }
  func.func @transform_3(%arg0: i32) -> (i32, i32) {
    %c0_i32 = arith.constant 0 : i32
    %c0_i32_0 = arith.constant 0 : i32
    %c0_i32_1 = arith.constant 0 : i32
    return %c0_i32, %c0_i32_0 : i32, i32
  }
  func.func @transform_4(%arg0: i32) -> (i32, i32) {
    %c0_i32 = arith.constant 0 : i32
    %c0_i32_0 = arith.constant 0 : i32
    %c0_i32_1 = arith.constant 0 : i32
    return %c0_i32, %c0_i32_0 : i32, i32
  }
  func.func @transform_5(%arg0: i32) -> (i32, i32) {
    %c0_i32 = arith.constant 0 : i32
    %c0_i32_0 = arith.constant 0 : i32
    %c0_i32_1 = arith.constant 0 : i32
    return %c0_i32, %c0_i32_0 : i32, i32
  }
  func.func @transform_6(%arg0: i32) -> (i32, i32) {
    %c0_i32 = arith.constant 0 : i32
    %c0_i32_0 = arith.constant 0 : i32
    %c0_i32_1 = arith.constant 0 : i32
    return %c0_i32, %c0_i32_0 : i32, i32
  }
  func.func @transform_7(%arg0: i32) -> (i32, i32) {
    %c0_i32 = arith.constant 0 : i32
    %c0_i32_0 = arith.constant 0 : i32
    %c0_i32_1 = arith.constant 0 : i32
    return %c0_i32, %c0_i32_0 : i32, i32
  }
  func.func @transform_8(%arg0: i32) -> (i32, i32) {
    %c0_i32 = arith.constant 0 : i32
    %c0_i32_0 = arith.constant 0 : i32
    %c0_i32_1 = arith.constant 0 : i32
    return %c0_i32, %c0_i32_0 : i32, i32
  }
  func.func @transform_9(%arg0: i32) -> (i32, i32) {
    %c0_i32 = arith.constant 0 : i32
    %c0_i32_0 = arith.constant 0 : i32
    %c0_i32_1 = arith.constant 0 : i32
    return %c0_i32, %c0_i32_0 : i32, i32
  }
  func.func @transform_10(%arg0: i32) -> (i32, i32) {
    %c0_i32 = arith.constant 0 : i32
    %c0_i32_0 = arith.constant 0 : i32
    %c0_i32_1 = arith.constant 0 : i32
    return %c0_i32, %c0_i32_0 : i32, i32
  }
  func.func @transform_11(%arg0: i32) -> (i32, i32) {
    %c0_i32 = arith.constant 0 : i32
    %c0_i32_0 = arith.constant 0 : i32
    %c0_i32_1 = arith.constant 0 : i32
    return %c0_i32, %c0_i32_0 : i32, i32
  }
  func.func @transform_12(%arg0: i32) -> (i32, i32) {
    %c0_i32 = arith.constant 0 : i32
    %c0_i32_0 = arith.constant 0 : i32
    %c0_i32_1 = arith.constant 0 : i32
    return %c0_i32, %c0_i32_0 : i32, i32
  }
  func.func @transform_13(%arg0: i32) -> (i32, i32, i32, i32) {
    %c0_i32 = arith.constant 0 : i32
    %c0_i32_0 = arith.constant 0 : i32
    %c0_i32_1 = arith.constant 0 : i32
    %c0_i32_2 = arith.constant 0 : i32
    return %arg0, %c0_i32, %c0_i32_0, %c0_i32_1 : i32, i32, i32, i32
  }
}

</mosaic_0001>

<llo_original>
// kernel: tpu_custom_call.1
$region0: #{tpu_custom_call.1}
  #allocation0 [shape = 'u32[]', space=smem, size = 0x4, offset = 0x4, fixed_abs, tag = 'smem constant byte address 0x4 - core index']
  #allocation1 [shape = 'u32[72,128]{1,0:T(1,128)}', space=vmem, size = 0x9000, scoped, tag = 'internal scratch']
  #allocation2 [shape = 'f32[18,18,8]{2,1,0:T(8,128)}', space=vmem, size = 0x36000, scoped, tag = 'scratch operand']
  #allocation3 [shape = 'f32[256,72]{1,0:T(8,128)}', space=vmem, size = 0x20000, scoped, tag = 'scratch operand']
  #allocation4 [shape = 'f32[18,18,8]{2,1,0:T(8,128)}', space=vmem, size = 0x36000, scoped, tag = 'scratch operand']
  #allocation5 [shape = 'f32[256,72]{1,0:T(8,128)}', space=vmem, size = 0x20000, scoped, tag = 'scratch operand']
  #allocation6 [shape = 'f32[18,18,8]{2,1,0:T(8,128)}', space=vmem, size = 0x36000, scoped, tag = 'scratch operand']
  #allocation7 [shape = 'f32[256,72]{1,0:T(8,128)}', space=vmem, size = 0x20000, scoped, tag = 'scratch operand']
  %s0 = inlined_call_operand.vmem [shape: f32[2,16,16,8], index: 0, kind: input, shape index: {}]
  %s1 = inlined_call_operand.vmem [shape: f32[2,8], index: 1, kind: input, shape index: {}]
  %s2 = inlined_call_operand.vmem [shape: f32[2,8], index: 2, kind: input, shape index: {}]
  %s3 = inlined_call_operand.vmem [shape: f32[2,8], index: 3, kind: input, shape index: {}]
  %s4 = inlined_call_operand.vmem [shape: f32[2,8], index: 4, kind: input, shape index: {}]
  %s5 = inlined_call_operand.vmem [shape: f32[8,2], index: 5, kind: input, shape index: {}]
  %s6 = inlined_call_operand.vmem [shape: f32[8,2], index: 6, kind: input, shape index: {}]
  %s7 = inlined_call_operand.vmem [shape: f32[8,2], index: 7, kind: input, shape index: {}]
  %s8 = inlined_call_operand.vmem [shape: f32[72,8], index: 8, kind: input, shape index: {}]
  %s9 = inlined_call_operand.vmem [shape: f32[72,8], index: 9, kind: input, shape index: {}]
  %s10 = inlined_call_operand.vmem [shape: f32[72,16], index: 10, kind: input, shape index: {}]
  %s11 = inlined_call_operand.vmem [shape: f32[8,16], index: 11, kind: input, shape index: {}]
  %s12 = inlined_call_operand.vmem [shape: f32[1,16], index: 12, kind: input, shape index: {}]
  %s13 = inlined_call_operand.hbm [shape: f32[2,16,16,16], index: 13, kind: output, shape index: {}]
  %s14 = sld [smem:[#allocation0]]
  $region85: #{tpu_custom_call.1} parent=0
    _
  %s16 = ssub.s32 1, %s14
  %s17 = scalar_select 0, %s16, %s14
  $region1: #{tpu_custom_call.1} parent=0
    #allocation8 [shape = 'u8[262144]{0}', space=vmem, size = 0x40000, scoped, tag = 'output window, operand 0']
    #allocation9 [shape = 's32[2]{0}', space=sflag, size = 0x8, scoped, tag = 'scoped memory for tpu_custom_call.1']
    %18 = vsyncpa [#allocation9], 0
    %s19 = scalar_lea.sflag [#allocation9], 1
    %20 = vsyncpa %s19, 0
    loop: start=0, step=1, limit=4
    $region2: #{tpu_custom_call.1} parent=1 // loop_pre_header
      _
    $region3: #{tpu_custom_call.1} parent=1 // loop_header
      %s22 = sphi 0, %s26
      %p23 = scmp.ge.s32.totalorder %s22, 4
      %s32 = sphi 0, %s34
      %s35 = sphi 0, %s32
      %s36 = sphi 0, %s35
      %s52 = sphi 0, %s36
      %s56 = sphi 0, %s56
      %s58 = sphi 0, %s56
      %s59 = sphi 0, %s58
      %s73 = sphi 0, %s59
      %s77 = sphi 0, %s77
      %s79 = sphi 0, %s77
      %s80 = sphi 0, %s79
      %s94 = sphi 0, %s80
      %s98 = sphi 0, %s98
      %s100 = sphi 0, %s98
      %s101 = sphi 0, %s100
      %s115 = sphi 0, %s101
      %s119 = sphi 0, %s119
      %s121 = sphi 0, %s119
      %s122 = sphi 0, %s121
      %s136 = sphi 0, %s122
      %s140 = sphi 0, %s140
      %s142 = sphi 0, %s140
      %s143 = sphi 0, %s142
      %s157 = sphi 0, %s143
      %s161 = sphi 0, %s161
      %s163 = sphi 0, %s161
      %s164 = sphi 0, %s163
      %s178 = sphi 0, %s164
      %s182 = sphi 0, %s182
      %s184 = sphi 0, %s182
      %s185 = sphi 0, %s184
      %s199 = sphi 0, %s185
      %s203 = sphi 0, %s203
      %s205 = sphi 0, %s203
      %s206 = sphi 0, %s205
      %s220 = sphi 0, %s206
      %s224 = sphi 0, %s224
      %s226 = sphi 0, %s224
      %s227 = sphi 0, %s226
      %s241 = sphi 0, %s227
      %s245 = sphi 0, %s245
      %s247 = sphi 0, %s245
      %s248 = sphi 0, %s247
      %s262 = sphi 0, %s248
      %s266 = sphi 0, %s266
      %s268 = sphi 0, %s266
      %s269 = sphi 0, %s268
      %s283 = sphi 0, %s269
      %s287 = sphi 0, %s287
      %s289 = sphi 0, %s287
      %s290 = sphi 0, %s289
      %s304 = sphi 0, %s290
      %s310 = sphi 0, %s312
      %s313 = sphi 0, %s310
      %s314 = sphi 0, %s313
      %s330 = sphi 0, %s314
    $region4: #{tpu_custom_call.1} parent=1 // loop_header_branch
      %25 = sbr.rel (%p23) target = $region8
    $region5: #{tpu_custom_call.1} parent=1 // loop_body
      %s27 = ssub.s32 %s22, 1
      %s28 = ssub.s32 %s22, 2
      %s29 = sadd.s32 %s22, 1
      %s30 = ssub.s32 %s22, %s29
      %p31 = scmp.eq.s32.totalorder %s30, 0
      %s33 = sadd.s32 %s32, 1
      %s34 = scalar_select %p31, %s32, %s33
      %p37 = pneg %p31
      %p38 = scmp.eq.s32.totalorder %s22, 1
      %p39 = por %p37, %p38
      %p40 = scmp.ne.s32.totalorder %s32, %s35
      %p41 = scmp.eq.s32.totalorder %s22, 0
      %p42 = por %p40, %p41
      %p43 = scmp.ne.s32.totalorder %s32, %s35
      %p44 = scmp.eq.s32.totalorder %s27, 1
      %p45 = por %p43, %p44
      %p46 = scmp.ne.s32.totalorder %s35, %s36
      %p47 = scmp.eq.s32.totalorder %s27, 0
      %p48 = por %p46, %p47
      %p49 = scmp.ne.s32.totalorder %s35, %s36
      %p50 = scmp.eq.s32.totalorder %s28, 1
      %p51 = por %p49, %p50
      %p53 = scmp.ne.s32.totalorder %s36, %s52
      %p54 = scmp.eq.s32.totalorder %s28, 0
      %p55 = por %p53, %p54
      %s57 = sadd.s32 %s56, 1
      %p60 = scmp.eq.s32.totalorder %s22, 1
      %p61 = scmp.ne.s32.totalorder %s56, %s58
      %p62 = scmp.eq.s32.totalorder %s22, 0
      %p63 = por %p61, %p62
      %p64 = scmp.ne.s32.totalorder %s56, %s58
      %p65 = scmp.eq.s32.totalorder %s27, 1
      %p66 = por %p64, %p65
      %p67 = scmp.ne.s32.totalorder %s58, %s59
      %p68 = scmp.eq.s32.totalorder %s27, 0
      %p69 = por %p67, %p68
      %p70 = scmp.ne.s32.totalorder %s58, %s59
      %p71 = scmp.eq.s32.totalorder %s28, 1
      %p72 = por %p70, %p71
      %p74 = scmp.ne.s32.totalorder %s59, %s73
      %p75 = scmp.eq.s32.totalorder %s28, 0
      %p76 = por %p74, %p75
      %s78 = sadd.s32 %s77, 1
      %p81 = scmp.eq.s32.totalorder %s22, 1
      %p82 = scmp.ne.s32.totalorder %s77, %s79
      %p83 = scmp.eq.s32.totalorder %s22, 0
      %p84 = por %p82, %p83
      %p85 = scmp.ne.s32.totalorder %s77, %s79
      %p86 = scmp.eq.s32.totalorder %s27, 1
      %p87 = por %p85, %p86
      %p88 = scmp.ne.s32.totalorder %s79, %s80
      %p89 = scmp.eq.s32.totalorder %s27, 0
      %p90 = por %p88, %p89
      %p91 = scmp.ne.s32.totalorder %s79, %s80
      %p92 = scmp.eq.s32.totalorder %s28, 1
      %p93 = por %p91, %p92
      %p95 = scmp.ne.s32.totalorder %s80, %s94
      %p96 = scmp.eq.s32.totalorder %s28, 0
      %p97 = por %p95, %p96
      %s99 = sadd.s32 %s98, 1
      %p102 = scmp.eq.s32.totalorder %s22, 1
      %p103 = scmp.ne.s32.totalorder %s98, %s100
      %p104 = scmp.eq.s32.totalorder %s22, 0
      %p105 = por %p103, %p104
      %p106 = scmp.ne.s32.totalorder %s98, %s100
      %p107 = scmp.eq.s32.totalorder %s27, 1
      %p108 = por %p106, %p107
      %p109 = scmp.ne.s32.totalorder %s100, %s101
      %p110 = scmp.eq.s32.totalorder %s27, 0
      %p111 = por %p109, %p110
      %p112 = scmp.ne.s32.totalorder %s100, %s101
      %p113 = scmp.eq.s32.totalorder %s28, 1
      %p114 = por %p112, %p113
      %p116 = scmp.ne.s32.totalorder %s101, %s115
      %p117 = scmp.eq.s32.totalorder %s28, 0
      %p118 = por %p116, %p117
      %s120 = sadd.s32 %s119, 1
      %p123 = scmp.eq.s32.totalorder %s22, 1
      %p124 = scmp.ne.s32.totalorder %s119, %s121
      %p125 = scmp.eq.s32.totalorder %s22, 0
      %p126 = por %p124, %p125
      %p127 = scmp.ne.s32.totalorder %s119, %s121
      %p128 = scmp.eq.s32.totalorder %s27, 1
      %p129 = por %p127, %p128
      %p130 = scmp.ne.s32.totalorder %s121, %s122
      %p131 = scmp.eq.s32.totalorder %s27, 0
      %p132 = por %p130, %p131
      %p133 = scmp.ne.s32.totalorder %s121, %s122
      %p134 = scmp.eq.s32.totalorder %s28, 1
      %p135 = por %p133, %p134
      %p137 = scmp.ne.s32.totalorder %s122, %s136
      %p138 = scmp.eq.s32.totalorder %s28, 0
      %p139 = por %p137, %p138
      %s141 = sadd.s32 %s140, 1
      %p144 = scmp.eq.s32.totalorder %s22, 1
      %p145 = scmp.ne.s32.totalorder %s140, %s142
      %p146 = scmp.eq.s32.totalorder %s22, 0
      %p147 = por %p145, %p146
      %p148 = scmp.ne.s32.totalorder %s140, %s142
      %p149 = scmp.eq.s32.totalorder %s27, 1
      %p150 = por %p148, %p149
      %p151 = scmp.ne.s32.totalorder %s142, %s143
      %p152 = scmp.eq.s32.totalorder %s27, 0
      %p153 = por %p151, %p152
      %p154 = scmp.ne.s32.totalorder %s142, %s143
      %p155 = scmp.eq.s32.totalorder %s28, 1
      %p156 = por %p154, %p155
      %p158 = scmp.ne.s32.totalorder %s143, %s157
      %p159 = scmp.eq.s32.totalorder %s28, 0
      %p160 = por %p158, %p159
      %s162 = sadd.s32 %s161, 1
      %p165 = scmp.eq.s32.totalorder %s22, 1
      %p166 = scmp.ne.s32.totalorder %s161, %s163
      %p167 = scmp.eq.s32.totalorder %s22, 0
      %p168 = por %p166, %p167
      %p169 = scmp.ne.s32.totalorder %s161, %s163
      %p170 = scmp.eq.s32.totalorder %s27, 1
      %p171 = por %p169, %p170
      %p172 = scmp.ne.s32.totalorder %s163, %s164
      %p173 = scmp.eq.s32.totalorder %s27, 0
      %p174 = por %p172, %p173
      %p175 = scmp.ne.s32.totalorder %s163, %s164
      %p176 = scmp.eq.s32.totalorder %s28, 1
      %p177 = por %p175, %p176
      %p179 = scmp.ne.s32.totalorder %s164, %s178
      %p180 = scmp.eq.s32.totalorder %s28, 0
      %p181 = por %p179, %p180
      %s183 = sadd.s32 %s182, 1
      %p186 = scmp.eq.s32.totalorder %s22, 1
      %p187 = scmp.ne.s32.totalorder %s182, %s184
      %p188 = scmp.eq.s32.totalorder %s22, 0
      %p189 = por %p187, %p188
      %p190 = scmp.ne.s32.totalorder %s182, %s184
      %p191 = scmp.eq.s32.totalorder %s27, 1
      %p192 = por %p190, %p191
      %p193 = scmp.ne.s32.totalorder %s184, %s185
      %p194 = scmp.eq.s32.totalorder %s27, 0
      %p195 = por %p193, %p194
      %p196 = scmp.ne.s32.totalorder %s184, %s185
      %p197 = scmp.eq.s32.totalorder %s28, 1
      %p198 = por %p196, %p197
      %p200 = scmp.ne.s32.totalorder %s185, %s199
      %p201 = scmp.eq.s32.totalorder %s28, 0
      %p202 = por %p200, %p201
      %s204 = sadd.s32 %s203, 1
      %p207 = scmp.eq.s32.totalorder %s22, 1
      %p208 = scmp.ne.s32.totalorder %s203, %s205
      %p209 = scmp.eq.s32.totalorder %s22, 0
      %p210 = por %p208, %p209
      %p211 = scmp.ne.s32.totalorder %s203, %s205
      %p212 = scmp.eq.s32.totalorder %s27, 1
      %p213 = por %p211, %p212
      %p214 = scmp.ne.s32.totalorder %s205, %s206
      %p215 = scmp.eq.s32.totalorder %s27, 0
      %p216 = por %p214, %p215
      %p217 = scmp.ne.s32.totalorder %s205, %s206
      %p218 = scmp.eq.s32.totalorder %s28, 1
      %p219 = por %p217, %p218
      %p221 = scmp.ne.s32.totalorder %s206, %s220
      %p222 = scmp.eq.s32.totalorder %s28, 0
      %p223 = por %p221, %p222
      %s225 = sadd.s32 %s224, 1
      %p228 = scmp.eq.s32.totalorder %s22, 1
      %p229 = scmp.ne.s32.totalorder %s224, %s226
      %p230 = scmp.eq.s32.totalorder %s22, 0
      %p231 = por %p229, %p230
      %p232 = scmp.ne.s32.totalorder %s224, %s226
      %p233 = scmp.eq.s32.totalorder %s27, 1
      %p234 = por %p232, %p233
      %p235 = scmp.ne.s32.totalorder %s226, %s227
      %p236 = scmp.eq.s32.totalorder %s27, 0
      %p237 = por %p235, %p236
      %p238 = scmp.ne.s32.totalorder %s226, %s227
      %p239 = scmp.eq.s32.totalorder %s28, 1
      %p240 = por %p238, %p239
      %p242 = scmp.ne.s32.totalorder %s227, %s241
      %p243 = scmp.eq.s32.totalorder %s28, 0
      %p244 = por %p242, %p243
      %s246 = sadd.s32 %s245, 1
      %p249 = scmp.eq.s32.totalorder %s22, 1
      %p250 = scmp.ne.s32.totalorder %s245, %s247
      %p251 = scmp.eq.s32.totalorder %s22, 0
      %p252 = por %p250, %p251
      %p253 = scmp.ne.s32.totalorder %s245, %s247
      %p254 = scmp.eq.s32.totalorder %s27, 1
      %p255 = por %p253, %p254
      %p256 = scmp.ne.s32.totalorder %s247, %s248
      %p257 = scmp.eq.s32.totalorder %s27, 0
      %p258 = por %p256, %p257
      %p259 = scmp.ne.s32.totalorder %s247, %s248
      %p260 = scmp.eq.s32.totalorder %s28, 1
      %p261 = por %p259, %p260
      %p263 = scmp.ne.s32.totalorder %s248, %s262
      %p264 = scmp.eq.s32.totalorder %s28, 0
      %p265 = por %p263, %p264
      %s267 = sadd.s32 %s266, 1
      %p270 = scmp.eq.s32.totalorder %s22, 1
      %p271 = scmp.ne.s32.totalorder %s266, %s268
      %p272 = scmp.eq.s32.totalorder %s22, 0
      %p273 = por %p271, %p272
      %p274 = scmp.ne.s32.totalorder %s266, %s268
      %p275 = scmp.eq.s32.totalorder %s27, 1
      %p276 = por %p274, %p275
      %p277 = scmp.ne.s32.totalorder %s268, %s269
      %p278 = scmp.eq.s32.totalorder %s27, 0
      %p279 = por %p277, %p278
      %p280 = scmp.ne.s32.totalorder %s268, %s269
      %p281 = scmp.eq.s32.totalorder %s28, 1
      %p282 = por %p280, %p281
      %p284 = scmp.ne.s32.totalorder %s269, %s283
      %p285 = scmp.eq.s32.totalorder %s28, 0
      %p286 = por %p284, %p285
      %s288 = sadd.s32 %s287, 1
      %p291 = scmp.eq.s32.totalorder %s22, 1
      %p292 = scmp.ne.s32.totalorder %s287, %s289
      %p293 = scmp.eq.s32.totalorder %s22, 0
      %p294 = por %p292, %p293
      %p295 = scmp.ne.s32.totalorder %s287, %s289
      %p296 = scmp.eq.s32.totalorder %s27, 1
      %p297 = por %p295, %p296
      %p298 = scmp.ne.s32.totalorder %s289, %s290
      %p299 = scmp.eq.s32.totalorder %s27, 0
      %p300 = por %p298, %p299
      %p301 = scmp.ne.s32.totalorder %s289, %s290
      %p302 = scmp.eq.s32.totalorder %s28, 1
      %p303 = por %p301, %p302
      %p305 = scmp.ne.s32.totalorder %s290, %s304
      %p306 = scmp.eq.s32.totalorder %s28, 0
      %p307 = por %p305, %p306
      %s308 = ssub.s32 %s22, %s29
      %p309 = scmp.eq.s32.totalorder %s308, 0
      %s311 = sadd.s32 %s310, 1
      %s312 = scalar_select %p309, %s310, %s311
      %p315 = pneg %p309
      %p316 = scmp.eq.s32.totalorder %s22, 1
      %p317 = por %p315, %p316
      %p318 = scmp.ne.s32.totalorder %s310, %s313
      %p319 = scmp.eq.s32.totalorder %s22, 0
      %p320 = por %p318, %p319
      %p321 = scmp.ne.s32.totalorder %s310, %s313
      %p322 = scmp.eq.s32.totalorder %s27, 1
      %p323 = por %p321, %p322
      %p324 = scmp.ne.s32.totalorder %s313, %s314
      %p325 = scmp.eq.s32.totalorder %s27, 0
      %p326 = por %p324, %p325
      %p327 = scmp.ne.s32.totalorder %s313, %s314
      %p328 = scmp.eq.s32.totalorder %s28, 1
      %p329 = por %p327, %p328
      %p331 = scmp.ne.s32.totalorder %s314, %s330
      %p332 = scmp.eq.s32.totalorder %s28, 0
      %p333 = por %p331, %p332
      %p334 = scmp.le.s32.totalorder 1, %s22
      %p335 = scmp.lt.s32.totalorder %s22, 3
      %p336 = pnand %p334, %p335
      %p337 = pneg %p336
      // Predicated region
      $region9: #{tpu_custom_call.1} parent=5 // pred_check
        _
      $region10: #{tpu_custom_call.1} parent=5 // pred_check_branch
        %339 = sbr.rel (%p336) target = $region12
      $region11: #{tpu_custom_call.1} parent=5 // pred_region
        %s340 = ssub.s32 %s22, 1
        // Predicated region
        $region13: #{tpu_custom_call.1} parent=11 // pred_check
          %p341 = pneg %p69
        $region14: #{tpu_custom_call.1} parent=11 // pred_check_branch
          %343 = sbr.rel (%p341) target = $region16
        $region15: #{tpu_custom_call.1} parent=11 // pred_region
          _
        $region16: #{tpu_custom_call.1} parent=11 // pred_fallthru
          _
        // Predicated region
        $region17: #{tpu_custom_call.1} parent=11 // pred_check
          %p344 = pneg %p90
        $region18: #{tpu_custom_call.1} parent=11 // pred_check_branch
          %346 = sbr.rel (%p344) target = $region20
        $region19: #{tpu_custom_call.1} parent=11 // pred_region
          _
        $region20: #{tpu_custom_call.1} parent=11 // pred_fallthru
          _
        // Predicated region
        $region21: #{tpu_custom_call.1} parent=11 // pred_check
          %p347 = pneg %p111
        $region22: #{tpu_custom_call.1} parent=11 // pred_check_branch
          %349 = sbr.rel (%p347) target = $region24
        $region23: #{tpu_custom_call.1} parent=11 // pred_region
          _
        $region24: #{tpu_custom_call.1} parent=11 // pred_fallthru
          _
        // Predicated region
        $region25: #{tpu_custom_call.1} parent=11 // pred_check
          %p350 = pneg %p132
        $region26: #{tpu_custom_call.1} parent=11 // pred_check_branch
          %352 = sbr.rel (%p350) target = $region28
        $region27: #{tpu_custom_call.1} parent=11 // pred_region
          _
        $region28: #{tpu_custom_call.1} parent=11 // pred_fallthru
          _
        // Predicated region
        $region29: #{tpu_custom_call.1} parent=11 // pred_check
          %p353 = pneg %p153
        $region30: #{tpu_custom_call.1} parent=11 // pred_check_branch
          %355 = sbr.rel (%p353) target = $region32
        $region31: #{tpu_custom_call.1} parent=11 // pred_region
          _
        $region32: #{tpu_custom_call.1} parent=11 // pred_fallthru
          _
        // Predicated region
        $region33: #{tpu_custom_call.1} parent=11 // pred_check
          %p356 = pneg %p174
        $region34: #{tpu_custom_call.1} parent=11 // pred_check_branch
          %358 = sbr.rel (%p356) target = $region36
        $region35: #{tpu_custom_call.1} parent=11 // pred_region
          _
        $region36: #{tpu_custom_call.1} parent=11 // pred_fallthru
          _
        // Predicated region
        $region37: #{tpu_custom_call.1} parent=11 // pred_check
          %p359 = pneg %p195
        $region38: #{tpu_custom_call.1} parent=11 // pred_check_branch
          %361 = sbr.rel (%p359) target = $region40
        $region39: #{tpu_custom_call.1} parent=11 // pred_region
          _
        $region40: #{tpu_custom_call.1} parent=11 // pred_fallthru
          _
        // Predicated region
        $region41: #{tpu_custom_call.1} parent=11 // pred_check
          %p362 = pneg %p216
        $region42: #{tpu_custom_call.1} parent=11 // pred_check_branch
          %364 = sbr.rel (%p362) target = $region44
        $region43: #{tpu_custom_call.1} parent=11 // pred_region
          _
        $region44: #{tpu_custom_call.1} parent=11 // pred_fallthru
          _
        // Predicated region
        $region45: #{tpu_custom_call.1} parent=11 // pred_check
          %p365 = pneg %p237
        $region46: #{tpu_custom_call.1} parent=11 // pred_check_branch
          %367 = sbr.rel (%p365) target = $region48
        $region47: #{tpu_custom_call.1} parent=11 // pred_region
          _
        $region48: #{tpu_custom_call.1} parent=11 // pred_fallthru
          _
        // Predicated region
        $region49: #{tpu_custom_call.1} parent=11 // pred_check
          %p368 = pneg %p258
        $region50: #{tpu_custom_call.1} parent=11 // pred_check_branch
          %370 = sbr.rel (%p368) target = $region52
        $region51: #{tpu_custom_call.1} parent=11 // pred_region
          _
        $region52: #{tpu_custom_call.1} parent=11 // pred_fallthru
          _
        // Predicated region
        $region53: #{tpu_custom_call.1} parent=11 // pred_check
          %p371 = pneg %p279
        $region54: #{tpu_custom_call.1} parent=11 // pred_check_branch
          %373 = sbr.rel (%p371) target = $region56
        $region55: #{tpu_custom_call.1} parent=11 // pred_region
          _
        $region56: #{tpu_custom_call.1} parent=11 // pred_fallthru
          _
        // Predicated region
        $region57: #{tpu_custom_call.1} parent=11 // pred_check
          %p374 = pneg %p300
        $region58: #{tpu_custom_call.1} parent=11 // pred_check_branch
          %376 = sbr.rel (%p374) target = $region60
        $region59: #{tpu_custom_call.1} parent=11 // pred_region
          _
        $region60: #{tpu_custom_call.1} parent=11 // pred_fallthru
          _
      $region12: #{tpu_custom_call.1} parent=5 // pred_fallthru
        _
      %p377 = scmp.lt.s32.totalorder %s22, 2
      // Predicated region
      $region61: #{tpu_custom_call.1} parent=5 // pred_check
        %p378 = pneg %p377
      $region62: #{tpu_custom_call.1} parent=5 // pred_check_branch
        %380 = sbr.rel (%p378) target = $region64
      $region63: #{tpu_custom_call.1} parent=5 // pred_region
        // Predicated region
        $region65: #{tpu_custom_call.1} parent=63 // pred_check
          %p381 = pneg %p42
        $region66: #{tpu_custom_call.1} parent=63 // pred_check_branch
          %383 = sbr.rel (%p381) target = $region68
        $region67: #{tpu_custom_call.1} parent=63 // pred_region
          %p384 = scmp.lt.s32.totalorder %s22, 1
          %s385 = scalar_select %p384, %s22, 1
          %s386 = smul.addr %s385, 32
          %s387 = smul.addr %s386, 8
          %s388 = scalar_lea.vmem %s0, %s387
        $region68: #{tpu_custom_call.1} parent=63 // pred_fallthru
          _
      $region64: #{tpu_custom_call.1} parent=5 // pred_fallthru
        _
      %p389 = scmp.le.s32.totalorder 1, %s22
      %p390 = scmp.lt.s32.totalorder %s22, 3
      %p391 = pnand %p389, %p390
      %p392 = pneg %p391
      // Predicated region
      $region69: #{tpu_custom_call.1} parent=5 // pred_check
        _
      $region70: #{tpu_custom_call.1} parent=5 // pred_check_branch
        %394 = sbr.rel (%p391) target = $region72
      $region71: #{tpu_custom_call.1} parent=5 // pred_region
        %s395 = ssub.s32 %s22, 1
        %p396 = scmp.lt.s32.totalorder %s27, 1
        %s397 = scalar_select %p396, %s27, 1
        %s398 = smul.addr %s397, 32
        %s399 = smul.addr %s398, 8
        %s400 = scalar_lea.vmem %s0, %s399
        %p401 = pneg %p48
        %p402 = pneg %p45
        %p403 = pneg %p69
        %p404 = pneg %p66
        %p405 = pneg %p90
        %p406 = pneg %p87
        %p407 = pneg %p111
        %p408 = pneg %p108
        %p409 = pneg %p132
        %p410 = pneg %p129
        %p411 = pneg %p153
        %p412 = pneg %p150
        %p413 = pneg %p174
        %p414 = pneg %p171
        %p415 = pneg %p195
        %p416 = pneg %p192
        %p417 = pneg %p216
        %p418 = pneg %p213
        %p419 = pneg %p237
        %p420 = pneg %p234
        %p421 = pneg %p258
        %p422 = pneg %p255
        %p423 = pneg %p279
        %p424 = pneg %p276
        %p425 = pneg %p300
        %p426 = pneg %p297
        %p427 = pneg %p326
        %p428 = pneg %p323
        %s429 = sand.u32 %s313, 1
        %s430 = scalar_lea.sflag [#allocation9], %s429
        %s431 = sand.u32 %s313, 1
        %s432 = smul.addr %s431, 256
        %s433 = scalar_lea.vmem [#allocation8], %s432
        %p434 = scmp.lt.s32.totalorder %s27, 1
        %s435 = scalar_select %p434, %s27, 1
        %s436 = smul.addr %s435, 32
        %s437 = smul.addr %s436, 8
        %s438 = scalar_lea.vmem %s0, %s437
        %v439 = vld [vmem:[%s438] sm:$0xff]
        %v440 = vld [vmem:[%s438 + $0x8] sm:$0xff]
        %v441 = vld [vmem:[%s438 + $0x10] sm:$0xff]
        %v442 = vld [vmem:[%s438 + $0x18] sm:$0xff]
        %v443 = vld [vmem:[%s438 + $0x20] sm:$0xff]
        %v444 = vld [vmem:[%s438 + $0x28] sm:$0xff]
        %v445 = vld [vmem:[%s438 + $0x30] sm:$0xff]
        %v446 = vld [vmem:[%s438 + $0x38] sm:$0xff]
        %v447 = vld [vmem:[%s438 + $0x40] sm:$0xff]
        %v448 = vld [vmem:[%s438 + $0x48] sm:$0xff]
        %v449 = vld [vmem:[%s438 + $0x50] sm:$0xff]
        %v450 = vld [vmem:[%s438 + $0x58] sm:$0xff]
        %v451 = vld [vmem:[%s438 + $0x60] sm:$0xff]
        %v452 = vld [vmem:[%s438 + $0x68] sm:$0xff]
        %v453 = vld [vmem:[%s438 + $0x70] sm:$0xff]
        %v454 = vld [vmem:[%s438 + $0x78] sm:$0xff]
        %v455 = vld [vmem:[%s438 + $0x80] sm:$0xff]
        %v456 = vld [vmem:[%s438 + $0x88] sm:$0xff]
        %v457 = vld [vmem:[%s438 + $0x90] sm:$0xff]
        %v458 = vld [vmem:[%s438 + $0x98] sm:$0xff]
        %v459 = vld [vmem:[%s438 + $0xa0] sm:$0xff]
        %v460 = vld [vmem:[%s438 + $0xa8] sm:$0xff]
        %v461 = vld [vmem:[%s438 + $0xb0] sm:$0xff]
        %v462 = vld [vmem:[%s438 + $0xb8] sm:$0xff]
        %v463 = vld [vmem:[%s438 + $0xc0] sm:$0xff]
        %v464 = vld [vmem:[%s438 + $0xc8] sm:$0xff]
        %v465 = vld [vmem:[%s438 + $0xd0] sm:$0xff]
        %v466 = vld [vmem:[%s438 + $0xd8] sm:$0xff]
        %v467 = vld [vmem:[%s438 + $0xe0] sm:$0xff]
        %v468 = vld [vmem:[%s438 + $0xe8] sm:$0xff]
        %v469 = vld [vmem:[%s438 + $0xf0] sm:$0xff]
        %v470 = vld [vmem:[%s438 + $0xf8] sm:$0xff]
        %v471 = vld [vmem:[%s5] sm:$0xff]
        %vm472 = vcmask 64512
        %v473 = vsel %vm472, %v439, 0.0
        %v474 = vsel %vm472, %v440, 0.0
        %v475 = vadd.f32 %v473, %v474
        %v476 = vsel %vm472, %v441, 0.0
        %v477 = vadd.f32 %v475, %v476
        %v478 = vsel %vm472, %v442, 0.0
        %v479 = vadd.f32 %v477, %v478
        %v480 = vsel %vm472, %v443, 0.0
        %v481 = vadd.f32 %v479, %v480
        %v482 = vsel %vm472, %v444, 0.0
        %v483 = vadd.f32 %v481, %v482
        %v484 = vsel %vm472, %v445, 0.0
        %v485 = vadd.f32 %v483, %v484
        %v486 = vsel %vm472, %v446, 0.0
        %v487 = vadd.f32 %v485, %v486
        %v488 = vsel %vm472, %v447, 0.0
        %v489 = vadd.f32 %v487, %v488
        %v490 = vsel %vm472, %v448, 0.0
        %v491 = vadd.f32 %v489, %v490
        %v492 = vsel %vm472, %v449, 0.0
        %v493 = vadd.f32 %v491, %v492
        %v494 = vsel %vm472, %v450, 0.0
        %v495 = vadd.f32 %v493, %v494
        %v496 = vsel %vm472, %v451, 0.0
        %v497 = vadd.f32 %v495, %v496
        %v498 = vsel %vm472, %v452, 0.0
        %v499 = vadd.f32 %v497, %v498
        %v500 = vsel %vm472, %v453, 0.0
        %v501 = vadd.f32 %v499, %v500
        %v502 = vsel %vm472, %v454, 0.0
        %v503 = vadd.f32 %v501, %v502
        %v504 = vsel %vm472, %v455, 0.0
        %v505 = vadd.f32 %v503, %v504
        %v506 = vsel %vm472, %v456, 0.0
        %v507 = vadd.f32 %v505, %v506
        %v508 = vsel %vm472, %v457, 0.0
        %v509 = vadd.f32 %v507, %v508
        %v510 = vsel %vm472, %v458, 0.0
        %v511 = vadd.f32 %v509, %v510
        %v512 = vsel %vm472, %v459, 0.0
        %v513 = vadd.f32 %v511, %v512
        %v514 = vsel %vm472, %v460, 0.0
        %v515 = vadd.f32 %v513, %v514
        %v516 = vsel %vm472, %v461, 0.0
        %v517 = vadd.f32 %v515, %v516
        %v518 = vsel %vm472, %v462, 0.0
        %v519 = vadd.f32 %v517, %v518
        %v520 = vsel %vm472, %v463, 0.0
        %v521 = vadd.f32 %v519, %v520
        %v522 = vsel %vm472, %v464, 0.0
        %v523 = vadd.f32 %v521, %v522
        %v524 = vsel %vm472, %v465, 0.0
        %v525 = vadd.f32 %v523, %v524
        %v526 = vsel %vm472, %v466, 0.0
        %v527 = vadd.f32 %v525, %v526
        %v528 = vsel %vm472, %v467, 0.0
        %v529 = vadd.f32 %v527, %v528
        %v530 = vsel %vm472, %v468, 0.0
        %v531 = vadd.f32 %v529, %v530
        %v532 = vsel %vm472, %v469, 0.0
        %v533 = vadd.f32 %v531, %v532
        %v534 = vsel %vm472, %v470, 0.0
        %v535 = vadd.f32 %v533, %v534
        %v536 = vrot.slane %v535, 4
        %v537 = vadd.f32 %v535, %v536
        %v538 = vrot.slane %v537, 2
        %v539 = vadd.f32 %v537, %v538
        %v540 = vrot.slane %v539, 1
        %v541 = vadd.f32 %v539, %v540
        %v542 = vmul.f32 %v439, %v439
        %v543 = vmul.f32 %v440, %v440
        %v544 = vmul.f32 %v441, %v441
        %v545 = vmul.f32 %v442, %v442
        %v546 = vmul.f32 %v443, %v443
        %v547 = vmul.f32 %v444, %v444
        %v548 = vmul.f32 %v445, %v445
        %v549 = vmul.f32 %v446, %v446
        %v550 = vmul.f32 %v447, %v447
        %v551 = vmul.f32 %v448, %v448
        %v552 = vmul.f32 %v449, %v449
        %v553 = vmul.f32 %v450, %v450
        %v554 = vmul.f32 %v451, %v451
        %v555 = vmul.f32 %v452, %v452
        %v556 = vmul.f32 %v453, %v453
        %v557 = vmul.f32 %v454, %v454
        %v558 = vmul.f32 %v455, %v455
        %v559 = vmul.f32 %v456, %v456
        %v560 = vmul.f32 %v457, %v457
        %v561 = vmul.f32 %v458, %v458
        %v562 = vmul.f32 %v459, %v459
        %v563 = vmul.f32 %v460, %v460
        %v564 = vmul.f32 %v461, %v461
        %v565 = vmul.f32 %v462, %v462
        %v566 = vmul.f32 %v463, %v463
        %v567 = vmul.f32 %v464, %v464
        %v568 = vmul.f32 %v465, %v465
        %v569 = vmul.f32 %v466, %v466
        %v570 = vmul.f32 %v467, %v467
        %v571 = vmul.f32 %v468, %v468
        %v572 = vmul.f32 %v469, %v469
        %v573 = vmul.f32 %v470, %v470
        %v574 = vsel %vm472, %v542, 0.0
        %v575 = vsel %vm472, %v543, 0.0
        %v576 = vadd.f32 %v574, %v575
        %v577 = vsel %vm472, %v544, 0.0
        %v578 = vadd.f32 %v576, %v577
        %v579 = vsel %vm472, %v545, 0.0
        %v580 = vadd.f32 %v578, %v579
        %v581 = vsel %vm472, %v546, 0.0
        %v582 = vadd.f32 %v580, %v581
        %v583 = vsel %vm472, %v547, 0.0
        %v584 = vadd.f32 %v582, %v583
        %v585 = vsel %vm472, %v548, 0.0
        %v586 = vadd.f32 %v584, %v585
        %v587 = vsel %vm472, %v549, 0.0
        %v588 = vadd.f32 %v586, %v587
        %v589 = vsel %vm472, %v550, 0.0
        %v590 = vadd.f32 %v588, %v589
        %v591 = vsel %vm472, %v551, 0.0
        %v592 = vadd.f32 %v590, %v591
        %v593 = vsel %vm472, %v552, 0.0
        %v594 = vadd.f32 %v592, %v593
        %v595 = vsel %vm472, %v553, 0.0
        %v596 = vadd.f32 %v594, %v595
        %v597 = vsel %vm472, %v554, 0.0
        %v598 = vadd.f32 %v596, %v597
        %v599 = vsel %vm472, %v555, 0.0
        %v600 = vadd.f32 %v598, %v599
        %v601 = vsel %vm472, %v556, 0.0
        %v602 = vadd.f32 %v600, %v601
        %v603 = vsel %vm472, %v557, 0.0
        %v604 = vadd.f32 %v602, %v603
        %v605 = vsel %vm472, %v558, 0.0
        %v606 = vadd.f32 %v604, %v605
        %v607 = vsel %vm472, %v559, 0.0
        %v608 = vadd.f32 %v606, %v607
        %v609 = vsel %vm472, %v560, 0.0
        %v610 = vadd.f32 %v608, %v609
        %v611 = vsel %vm472, %v561, 0.0
        %v612 = vadd.f32 %v610, %v611
        %v613 = vsel %vm472, %v562, 0.0
        %v614 = vadd.f32 %v612, %v613
        %v615 = vsel %vm472, %v563, 0.0
        %v616 = vadd.f32 %v614, %v615
        %v617 = vsel %vm472, %v564, 0.0
        %v618 = vadd.f32 %v616, %v617
        %v619 = vsel %vm472, %v565, 0.0
        %v620 = vadd.f32 %v618, %v619
        %v621 = vsel %vm472, %v566, 0.0
        %v622 = vadd.f32 %v620, %v621
        %v623 = vsel %vm472, %v567, 0.0
        %v624 = vadd.f32 %v622, %v623
        %v625 = vsel %vm472, %v568, 0.0
        %v626 = vadd.f32 %v624, %v625
        %v627 = vsel %vm472, %v569, 0.0
        %v628 = vadd.f32 %v626, %v627
        %v629 = vsel %vm472, %v570, 0.0
        %v630 = vadd.f32 %v628, %v629
        %v631 = vsel %vm472, %v571, 0.0
        %v632 = vadd.f32 %v630, %v631
        %v633 = vsel %vm472, %v572, 0.0
        %v634 = vadd.f32 %v632, %v633
        %v635 = vsel %vm472, %v573, 0.0
        %v636 = vadd.f32 %v634, %v635
        %v637 = vrot.slane %v636, 4
        %v638 = vadd.f32 %v636, %v637
        %v639 = vrot.slane %v638, 2
        %v640 = vadd.f32 %v638, %v639
        %v641 = vrot.slane %v640, 1
        %v642 = vadd.f32 %v640, %v641
        %v644 = vsel %vm472, %v541, 0
        %646 = vmatpush.msra.mxu0 0.0
        %647 = vmatpush.msra.mxu0 0.0
        %648 = vmatpush.msra.mxu0 0.0
        %649 = vmatpush.msra.mxu0 0.0
        %650 = vmatpush.msra.mxu0 0.0
        %651 = vmatpush.msra.mxu0 0.0
        %652 = vmatpush.msra.mxu0 0.0
        %653 = vmatpush.msra.mxu0 0.0
        %654 = vmatpush.msra.mxu0 0.0
        %655 = vmatpush.msra.mxu0 0.0
        %656 = vmatpush.msra.mxu0 0.0
        %657 = vmatpush.msra.mxu0 0.0
        %658 = vmatpush.msra.mxu0 0.0
        %659 = vmatpush.msra.mxu0 0.0
        %660 = vmatpush.msra.mxu0 0.0
        %661 = vmatpush.msra.mxu0 %v471
        %662 = vmatmul.f32.gmra.mxu0 %v644
        %v663 = vpop.f32.mrf.mxu0
        %v664 = vadd.f32 0.0, %v663
        %665 = vdwg.mxu0
        %v667 = vsel %vm472, %v642, 0
        %669 = vmatpush.msra.mxu0 0.0
        %670 = vmatpush.msra.mxu0 0.0
        %671 = vmatpush.msra.mxu0 0.0
        %672 = vmatpush.msra.mxu0 0.0
        %673 = vmatpush.msra.mxu0 0.0
        %674 = vmatpush.msra.mxu0 0.0
        %675 = vmatpush.msra.mxu0 0.0
        %676 = vmatpush.msra.mxu0 0.0
        %677 = vmatpush.msra.mxu0 0.0
        %678 = vmatpush.msra.mxu0 0.0
        %679 = vmatpush.msra.mxu0 0.0
        %680 = vmatpush.msra.mxu0 0.0
        %681 = vmatpush.msra.mxu0 0.0
        %682 = vmatpush.msra.mxu0 0.0
        %683 = vmatpush.msra.mxu0 0.0
        %684 = vmatpush.msra.mxu0 %v471
        %685 = vmatmul.f32.gmra.mxu0 %v667
        %v686 = vpop.f32.mrf.mxu0
        %v687 = vadd.f32 0.0, %v686
        %688 = vdwg.mxu0
        %vm689 = vcmask 15360
        %v691 = vsel %vm689, %v664, 0
        %v694 = vsel %vm689, %v471, 0
        %696 = vmatpush.xpose.msra.mxu0 0.0
        %697 = vmatpush.xpose.msra.mxu0 0.0
        %698 = vmatpush.xpose.msra.mxu0 0.0
        %699 = vmatpush.xpose.msra.mxu0 0.0
        %700 = vmatpush.xpose.msra.mxu0 0.0
        %701 = vmatpush.xpose.msra.mxu0 0.0
        %702 = vmatpush.xpose.msra.mxu0 0.0
        %703 = vmatpush.xpose.msra.mxu0 0.0
        %704 = vmatpush.xpose.msra.mxu0 0.0
        %705 = vmatpush.xpose.msra.mxu0 0.0
        %706 = vmatpush.xpose.msra.mxu0 0.0
        %707 = vmatpush.xpose.msra.mxu0 0.0
        %708 = vmatpush.xpose.msra.mxu0 0.0
        %709 = vmatpush.xpose.msra.mxu0 0.0
        %710 = vmatpush.xpose.msra.mxu0 0.0
        %711 = vmatpush.xpose.msra.mxu0 %v694
        %712 = vmatmul.f32.gmra.mxu0 %v691
        %v713 = vpop.f32.mrf.mxu0
        %v714 = vadd.f32 0.0, %v713
        %715 = vdwg.mxu0
        %v716 = vmul.f32 %v714, 0.0009765625
        %v718 = vsel %vm689, %v687, 0
        %720 = vmatpush.xpose.msra.mxu0 0.0
        %721 = vmatpush.xpose.msra.mxu0 0.0
        %722 = vmatpush.xpose.msra.mxu0 0.0
        %723 = vmatpush.xpose.msra.mxu0 0.0
        %724 = vmatpush.xpose.msra.mxu0 0.0
        %725 = vmatpush.xpose.msra.mxu0 0.0
        %726 = vmatpush.xpose.msra.mxu0 0.0
        %727 = vmatpush.xpose.msra.mxu0 0.0
        %728 = vmatpush.xpose.msra.mxu0 0.0
        %729 = vmatpush.xpose.msra.mxu0 0.0
        %730 = vmatpush.xpose.msra.mxu0 0.0
        %731 = vmatpush.xpose.msra.mxu0 0.0
        %732 = vmatpush.xpose.msra.mxu0 0.0
        %733 = vmatpush.xpose.msra.mxu0 0.0
        %734 = vmatpush.xpose.msra.mxu0 0.0
        %735 = vmatpush.xpose.msra.mxu0 %v694
        %736 = vmatmul.f32.gmra.mxu0 %v718
        %v737 = vpop.f32.mrf.mxu0
        %v738 = vadd.f32 0.0, %v737
        %739 = vdwg.mxu0
        %v740 = vmul.f32 %v738, 0.0009765625
        %v741 = vmul.f32 %v716, %v716
        %v742 = vsub.f32 %v740, %v741
        %v743 = vmax.f32 %v742, 0.0
        %v744 = vadd.f32 %v743, 1e-05
        %v745 = vrsqrt.pop %v744
        %v746 = vmul.f32 %v745, %v744
        %v747 = vmul.f32 %v746, %v745
        %v748 = vmul.f32 0.5, %v747
        %v749 = vsub.f32 1.5, %v748
        %v750 = vmul.f32 %v745, %v749
        %vm751 = vweird.f32 %v744
        %vm752 = vweird.f32 %v745
        %vm753 = vmor %vm751, %vm752
        %v754 = vsel %vm753, %v745, %v750
        %v755 = vld [vmem:[%s2] sm:$0x3]
        %v756 = vperm.slane %v716, 0
        %v757 = vsub.f32 %v439, %v756
        %v758 = vsub.f32 %v440, %v756
        %v759 = vsub.f32 %v441, %v756
        %v760 = vsub.f32 %v442, %v756
        %v761 = vsub.f32 %v443, %v756
        %v762 = vsub.f32 %v444, %v756
        %v763 = vsub.f32 %v445, %v756
        %v764 = vsub.f32 %v446, %v756
        %v765 = vsub.f32 %v447, %v756
        %v766 = vsub.f32 %v448, %v756
        %v767 = vsub.f32 %v449, %v756
        %v768 = vsub.f32 %v450, %v756
        %v769 = vsub.f32 %v451, %v756
        %v770 = vsub.f32 %v452, %v756
        %v771 = vsub.f32 %v453, %v756
        %v772 = vsub.f32 %v454, %v756
        %v773 = vsub.f32 %v455, %v756
        %v774 = vsub.f32 %v456, %v756
        %v775 = vsub.f32 %v457, %v756
        %v776 = vsub.f32 %v458, %v756
        %v777 = vsub.f32 %v459, %v756
        %v778 = vsub.f32 %v460, %v756
        %v779 = vsub.f32 %v461, %v756
        %v780 = vsub.f32 %v462, %v756
        %v781 = vsub.f32 %v463, %v756
        %v782 = vsub.f32 %v464, %v756
        %v783 = vsub.f32 %v465, %v756
        %v784 = vsub.f32 %v466, %v756
        %v785 = vsub.f32 %v467, %v756
        %v786 = vsub.f32 %v468, %v756
        %v787 = vsub.f32 %v469, %v756
        %v788 = vsub.f32 %v470, %v756
        %v789 = vperm.slane %v754, 0
        %v790 = vmul.f32 %v757, %v789
        %v791 = vmul.f32 %v758, %v789
        %v792 = vmul.f32 %v759, %v789
        %v793 = vmul.f32 %v760, %v789
        %v794 = vmul.f32 %v761, %v789
        %v795 = vmul.f32 %v762, %v789
        %v796 = vmul.f32 %v763, %v789
        %v797 = vmul.f32 %v764, %v789
        %v798 = vmul.f32 %v765, %v789
        %v799 = vmul.f32 %v766, %v789
        %v800 = vmul.f32 %v767, %v789
        %v801 = vmul.f32 %v768, %v789
        %v802 = vmul.f32 %v769, %v789
        %v803 = vmul.f32 %v770, %v789
        %v804 = vmul.f32 %v771, %v789
        %v805 = vmul.f32 %v772, %v789
        %v806 = vmul.f32 %v773, %v789
        %v807 = vmul.f32 %v774, %v789
        %v808 = vmul.f32 %v775, %v789
        %v809 = vmul.f32 %v776, %v789
        %v810 = vmul.f32 %v777, %v789
        %v811 = vmul.f32 %v778, %v789
        %v812 = vmul.f32 %v779, %v789
        %v813 = vmul.f32 %v780, %v789
        %v814 = vmul.f32 %v781, %v789
        %v815 = vmul.f32 %v782, %v789
        %v816 = vmul.f32 %v783, %v789
        %v817 = vmul.f32 %v784, %v789
        %v818 = vmul.f32 %v785, %v789
        %v819 = vmul.f32 %v786, %v789
        %v820 = vmul.f32 %v787, %v789
        %v821 = vmul.f32 %v788, %v789
        %v822 = vperm.slane %v755, 0
        %v823 = vmul.f32 %v790, %v822
        %v824 = vmul.f32 %v791, %v822
        %v825 = vmul.f32 %v792, %v822
        %v826 = vmul.f32 %v793, %v822
        %v827 = vmul.f32 %v794, %v822
        %v828 = vmul.f32 %v795, %v822
        %v829 = vmul.f32 %v796, %v822
        %v830 = vmul.f32 %v797, %v822
        %v831 = vmul.f32 %v798, %v822
        %v832 = vmul.f32 %v799, %v822
        %v833 = vmul.f32 %v800, %v822
        %v834 = vmul.f32 %v801, %v822
        %v835 = vmul.f32 %v802, %v822
        %v836 = vmul.f32 %v803, %v822
        %v837 = vmul.f32 %v804, %v822
        %v838 = vmul.f32 %v805, %v822
        %v839 = vmul.f32 %v806, %v822
        %v840 = vmul.f32 %v807, %v822
        %v841 = vmul.f32 %v808, %v822
        %v842 = vmul.f32 %v809, %v822
        %v843 = vmul.f32 %v810, %v822
        %v844 = vmul.f32 %v811, %v822
        %v845 = vmul.f32 %v812, %v822
        %v846 = vmul.f32 %v813, %v822
        %v847 = vmul.f32 %v814, %v822
        %v848 = vmul.f32 %v815, %v822
        %v849 = vmul.f32 %v816, %v822
        %v850 = vmul.f32 %v817, %v822
        %v851 = vmul.f32 %v818, %v822
        %v852 = vmul.f32 %v819, %v822
        %v853 = vmul.f32 %v820, %v822
        %v854 = vmul.f32 %v821, %v822
        %v855 = vperm.slane %v755, 1
        %v856 = vadd.f32 %v823, %v855
        %v857 = vadd.f32 %v824, %v855
        %v858 = vadd.f32 %v825, %v855
        %v859 = vadd.f32 %v826, %v855
        %v860 = vadd.f32 %v827, %v855
        %v861 = vadd.f32 %v828, %v855
        %v862 = vadd.f32 %v829, %v855
        %v863 = vadd.f32 %v830, %v855
        %v864 = vadd.f32 %v831, %v855
        %v865 = vadd.f32 %v832, %v855
        %v866 = vadd.f32 %v833, %v855
        %v867 = vadd.f32 %v834, %v855
        %v868 = vadd.f32 %v835, %v855
        %v869 = vadd.f32 %v836, %v855
        %v870 = vadd.f32 %v837, %v855
        %v871 = vadd.f32 %v838, %v855
        %v872 = vadd.f32 %v839, %v855
        %v873 = vadd.f32 %v840, %v855
        %v874 = vadd.f32 %v841, %v855
        %v875 = vadd.f32 %v842, %v855
        %v876 = vadd.f32 %v843, %v855
        %v877 = vadd.f32 %v844, %v855
        %v878 = vadd.f32 %v845, %v855
        %v879 = vadd.f32 %v846, %v855
        %v880 = vadd.f32 %v847, %v855
        %v881 = vadd.f32 %v848, %v855
        %v882 = vadd.f32 %v849, %v855
        %v883 = vadd.f32 %v850, %v855
        %v884 = vadd.f32 %v851, %v855
        %v885 = vadd.f32 %v852, %v855
        %v886 = vadd.f32 %v853, %v855
        %v887 = vadd.f32 %v854, %v855
        %v888 = vmax.f32 %v856, 0.0
        %v889 = vmax.f32 %v857, 0.0
        %v890 = vmax.f32 %v858, 0.0
        %v891 = vmax.f32 %v859, 0.0
        %v892 = vmax.f32 %v860, 0.0
        %v893 = vmax.f32 %v861, 0.0
        %v894 = vmax.f32 %v862, 0.0
        %v895 = vmax.f32 %v863, 0.0
        %v896 = vmax.f32 %v864, 0.0
        %v897 = vmax.f32 %v865, 0.0
        %v898 = vmax.f32 %v866, 0.0
        %v899 = vmax.f32 %v867, 0.0
        %v900 = vmax.f32 %v868, 0.0
        %v901 = vmax.f32 %v869, 0.0
        %v902 = vmax.f32 %v870, 0.0
        %v903 = vmax.f32 %v871, 0.0
        %v904 = vmax.f32 %v872, 0.0
        %v905 = vmax.f32 %v873, 0.0
        %v906 = vmax.f32 %v874, 0.0
        %v907 = vmax.f32 %v875, 0.0
        %v908 = vmax.f32 %v876, 0.0
        %v909 = vmax.f32 %v877, 0.0
        %v910 = vmax.f32 %v878, 0.0
        %v911 = vmax.f32 %v879, 0.0
        %v912 = vmax.f32 %v880, 0.0
        %v913 = vmax.f32 %v881, 0.0
        %v914 = vmax.f32 %v882, 0.0
        %v915 = vmax.f32 %v883, 0.0
        %v916 = vmax.f32 %v884, 0.0
        %v917 = vmax.f32 %v885, 0.0
        %v918 = vmax.f32 %v886, 0.0
        %v919 = vmax.f32 %v887, 0.0
        %v920 = vld [vmem:[%s11] sm:$0xff]
        %v921 = vld [vmem:[%s12] sm:$0x1]
        %v923 = vperm.slane %v921, 0
        %v926 = vsel %vm472, %v888, 0
        %v929 = vsel %vm472, %v889, 0
        %v932 = vsel %vm472, %v890, 0
        %v935 = vsel %vm472, %v891, 0
        %v938 = vsel %vm472, %v892, 0
        %v941 = vsel %vm472, %v893, 0
        %v944 = vsel %vm472, %v894, 0
        %v947 = vsel %vm472, %v895, 0
        %v950 = vsel %vm472, %v896, 0
        %v953 = vsel %vm472, %v897, 0
        %v956 = vsel %vm472, %v898, 0
        %v959 = vsel %vm472, %v899, 0
        %v962 = vsel %vm472, %v900, 0
        %v965 = vsel %vm472, %v901, 0
        %v968 = vsel %vm472, %v902, 0
        %v971 = vsel %vm472, %v903, 0
        %v974 = vsel %vm472, %v904, 0
        %v977 = vsel %vm472, %v905, 0
        %v980 = vsel %vm472, %v906, 0
        %v983 = vsel %vm472, %v907, 0
        %v986 = vsel %vm472, %v908, 0
        %v989 = vsel %vm472, %v909, 0
        %v992 = vsel %vm472, %v910, 0
        %v995 = vsel %vm472, %v911, 0
        %v998 = vsel %vm472, %v912, 0
        %v1001 = vsel %vm472, %v913, 0
        %v1004 = vsel %vm472, %v914, 0
        %v1007 = vsel %vm472, %v915, 0
        %v1010 = vsel %vm472, %v916, 0
        %v1013 = vsel %vm472, %v917, 0
        %v1016 = vsel %vm472, %v918, 0
        %v1019 = vsel %vm472, %v919, 0
        %1021 = vmatpush.msra.mxu0 0.0
        %1022 = vmatpush.msra.mxu0 0.0
        %1023 = vmatpush.msra.mxu0 0.0
        %1024 = vmatpush.msra.mxu0 0.0
        %1025 = vmatpush.msra.mxu0 0.0
        %1026 = vmatpush.msra.mxu0 0.0
        %1027 = vmatpush.msra.mxu0 0.0
        %1028 = vmatpush.msra.mxu0 0.0
        %1029 = vmatpush.msra.mxu0 0.0
        %1030 = vmatpush.msra.mxu0 0.0
        %1031 = vmatpush.msra.mxu0 0.0
        %1032 = vmatpush.msra.mxu0 0.0
        %1033 = vmatpush.msra.mxu0 0.0
        %1034 = vmatpush.msra.mxu0 0.0
        %1035 = vmatpush.msra.mxu0 0.0
        %1036 = vmatpush.msra.mxu0 %v920
        %1037 = vmatmul.f32.gmra.mxu0 %v926
        %v1038 = vpop.f32.mrf.mxu0
        %v1039 = vadd.f32 %v923, %v1038
        %1040 = vmatmul.f32.gmra.mxu0 %v929
        %v1041 = vpop.f32.mrf.mxu0
        %v1042 = vadd.f32 %v923, %v1041
        %1043 = vmatmul.f32.gmra.mxu0 %v932
        %v1044 = vpop.f32.mrf.mxu0
        %v1045 = vadd.f32 %v923, %v1044
        %1046 = vmatmul.f32.gmra.mxu0 %v935
        %v1047 = vpop.f32.mrf.mxu0
        %v1048 = vadd.f32 %v923, %v1047
        %1049 = vmatmul.f32.gmra.mxu0 %v938
        %v1050 = vpop.f32.mrf.mxu0
        %v1051 = vadd.f32 %v923, %v1050
        %1052 = vmatmul.f32.gmra.mxu0 %v941
        %v1053 = vpop.f32.mrf.mxu0
        %v1054 = vadd.f32 %v923, %v1053
        %1055 = vmatmul.f32.gmra.mxu0 %v944
        %v1056 = vpop.f32.mrf.mxu0
        %v1057 = vadd.f32 %v923, %v1056
        %1058 = vmatmul.f32.gmra.mxu0 %v947
        %v1059 = vpop.f32.mrf.mxu0
        %v1060 = vadd.f32 %v923, %v1059
        %1061 = vmatmul.f32.gmra.mxu0 %v950
        %v1062 = vpop.f32.mrf.mxu0
        %v1063 = vadd.f32 %v923, %v1062
        %1064 = vmatmul.f32.gmra.mxu0 %v953
        %v1065 = vpop.f32.mrf.mxu0
        %v1066 = vadd.f32 %v923, %v1065
        %1067 = vmatmul.f32.gmra.mxu0 %v956
        %v1068 = vpop.f32.mrf.mxu0
        %v1069 = vadd.f32 %v923, %v1068
        %1070 = vmatmul.f32.gmra.mxu0 %v959
        %v1071 = vpop.f32.mrf.mxu0
        %v1072 = vadd.f32 %v923, %v1071
        %1073 = vmatmul.f32.gmra.mxu0 %v962
        %v1074 = vpop.f32.mrf.mxu0
        %v1075 = vadd.f32 %v923, %v1074
        %1076 = vmatmul.f32.gmra.mxu0 %v965
        %v1077 = vpop.f32.mrf.mxu0
        %v1078 = vadd.f32 %v923, %v1077
        %1079 = vmatmul.f32.gmra.mxu0 %v968
        %v1080 = vpop.f32.mrf.mxu0
        %v1081 = vadd.f32 %v923, %v1080
        %1082 = vmatmul.f32.gmra.mxu0 %v971
        %v1083 = vpop.f32.mrf.mxu0
        %v1084 = vadd.f32 %v923, %v1083
        %1085 = vmatmul.f32.gmra.mxu0 %v974
        %v1086 = vpop.f32.mrf.mxu0
        %v1087 = vadd.f32 %v923, %v1086
        %1088 = vmatmul.f32.gmra.mxu0 %v977
        %v1089 = vpop.f32.mrf.mxu0
        %v1090 = vadd.f32 %v923, %v1089
        %1091 = vmatmul.f32.gmra.mxu0 %v980
        %v1092 = vpop.f32.mrf.mxu0
        %v1093 = vadd.f32 %v923, %v1092
        %1094 = vmatmul.f32.gmra.mxu0 %v983
        %v1095 = vpop.f32.mrf.mxu0
        %v1096 = vadd.f32 %v923, %v1095
        %1097 = vmatmul.f32.gmra.mxu0 %v986
        %v1098 = vpop.f32.mrf.mxu0
        %v1099 = vadd.f32 %v923, %v1098
        %1100 = vmatmul.f32.gmra.mxu0 %v989
        %v1101 = vpop.f32.mrf.mxu0
        %v1102 = vadd.f32 %v923, %v1101
        %1103 = vmatmul.f32.gmra.mxu0 %v992
        %v1104 = vpop.f32.mrf.mxu0
        %v1105 = vadd.f32 %v923, %v1104
        %1106 = vmatmul.f32.gmra.mxu0 %v995
        %v1107 = vpop.f32.mrf.mxu0
        %v1108 = vadd.f32 %v923, %v1107
        %1109 = vmatmul.f32.gmra.mxu0 %v998
        %v1110 = vpop.f32.mrf.mxu0
        %v1111 = vadd.f32 %v923, %v1110
        %1112 = vmatmul.f32.gmra.mxu0 %v1001
        %v1113 = vpop.f32.mrf.mxu0
        %v1114 = vadd.f32 %v923, %v1113
        %1115 = vmatmul.f32.gmra.mxu0 %v1004
        %v1116 = vpop.f32.mrf.mxu0
        %v1117 = vadd.f32 %v923, %v1116
        %1118 = vmatmul.f32.gmra.mxu0 %v1007
        %v1119 = vpop.f32.mrf.mxu0
        %v1120 = vadd.f32 %v923, %v1119
        %1121 = vmatmul.f32.gmra.mxu0 %v1010
        %v1122 = vpop.f32.mrf.mxu0
        %v1123 = vadd.f32 %v923, %v1122
        %1124 = vmatmul.f32.gmra.mxu0 %v1013
        %v1125 = vpop.f32.mrf.mxu0
        %v1126 = vadd.f32 %v923, %v1125
        %1127 = vmatmul.f32.gmra.mxu0 %v1016
        %v1128 = vpop.f32.mrf.mxu0
        %v1129 = vadd.f32 %v923, %v1128
        %1130 = vmatmul.f32.gmra.mxu0 %v1019
        %v1131 = vpop.f32.mrf.mxu0
        %v1132 = vadd.f32 %v923, %v1131
        %1133 = vdwg.mxu0
        %v1134 = vld [vmem:[%s1] sm:$0x3]
        %v1135 = vperm.slane %v1134, 0
        %v1136 = vmul.f32 %v790, %v1135
        %v1137 = vmul.f32 %v791, %v1135
        %v1138 = vmul.f32 %v792, %v1135
        %v1139 = vmul.f32 %v793, %v1135
        %v1140 = vmul.f32 %v794, %v1135
        %v1141 = vmul.f32 %v795, %v1135
        %v1142 = vmul.f32 %v796, %v1135
        %v1143 = vmul.f32 %v797, %v1135
        %v1144 = vmul.f32 %v798, %v1135
        %v1145 = vmul.f32 %v799, %v1135
        %v1146 = vmul.f32 %v800, %v1135
        %v1147 = vmul.f32 %v801, %v1135
        %v1148 = vmul.f32 %v802, %v1135
        %v1149 = vmul.f32 %v803, %v1135
        %v1150 = vmul.f32 %v804, %v1135
        %v1151 = vmul.f32 %v805, %v1135
        %v1152 = vmul.f32 %v806, %v1135
        %v1153 = vmul.f32 %v807, %v1135
        %v1154 = vmul.f32 %v808, %v1135
        %v1155 = vmul.f32 %v809, %v1135
        %v1156 = vmul.f32 %v810, %v1135
        %v1157 = vmul.f32 %v811, %v1135
        %v1158 = vmul.f32 %v812, %v1135
        %v1159 = vmul.f32 %v813, %v1135
        %v1160 = vmul.f32 %v814, %v1135
        %v1161 = vmul.f32 %v815, %v1135
        %v1162 = vmul.f32 %v816, %v1135
        %v1163 = vmul.f32 %v817, %v1135
        %v1164 = vmul.f32 %v818, %v1135
        %v1165 = vmul.f32 %v819, %v1135
        %v1166 = vmul.f32 %v820, %v1135
        %v1167 = vmul.f32 %v821, %v1135
        %v1168 = vperm.slane %v1134, 1
        %v1169 = vadd.f32 %v1136, %v1168
        %v1170 = vadd.f32 %v1137, %v1168
        %v1171 = vadd.f32 %v1138, %v1168
        %v1172 = vadd.f32 %v1139, %v1168
        %v1173 = vadd.f32 %v1140, %v1168
        %v1174 = vadd.f32 %v1141, %v1168
        %v1175 = vadd.f32 %v1142, %v1168
        %v1176 = vadd.f32 %v1143, %v1168
        %v1177 = vadd.f32 %v1144, %v1168
        %v1178 = vadd.f32 %v1145, %v1168
        %v1179 = vadd.f32 %v1146, %v1168
        %v1180 = vadd.f32 %v1147, %v1168
        %v1181 = vadd.f32 %v1148, %v1168
        %v1182 = vadd.f32 %v1149, %v1168
        %v1183 = vadd.f32 %v1150, %v1168
        %v1184 = vadd.f32 %v1151, %v1168
        %v1185 = vadd.f32 %v1152, %v1168
        %v1186 = vadd.f32 %v1153, %v1168
        %v1187 = vadd.f32 %v1154, %v1168
        %v1188 = vadd.f32 %v1155, %v1168
        %v1189 = vadd.f32 %v1156, %v1168
        %v1190 = vadd.f32 %v1157, %v1168
        %v1191 = vadd.f32 %v1158, %v1168
        %v1192 = vadd.f32 %v1159, %v1168
        %v1193 = vadd.f32 %v1160, %v1168
        %v1194 = vadd.f32 %v1161, %v1168
        %v1195 = vadd.f32 %v1162, %v1168
        %v1196 = vadd.f32 %v1163, %v1168
        %v1197 = vadd.f32 %v1164, %v1168
        %v1198 = vadd.f32 %v1165, %v1168
        %v1199 = vadd.f32 %v1166, %v1168
        %v1200 = vadd.f32 %v1167, %v1168
        %v1201 = vmax.f32 %v1169, 0.0
        %v1202 = vmax.f32 %v1170, 0.0
        %v1203 = vmax.f32 %v1171, 0.0
        %v1204 = vmax.f32 %v1172, 0.0
        %v1205 = vmax.f32 %v1173, 0.0
        %v1206 = vmax.f32 %v1174, 0.0
        %v1207 = vmax.f32 %v1175, 0.0
        %v1208 = vmax.f32 %v1176, 0.0
        %v1209 = vmax.f32 %v1177, 0.0
        %v1210 = vmax.f32 %v1178, 0.0
        %v1211 = vmax.f32 %v1179, 0.0
        %v1212 = vmax.f32 %v1180, 0.0
        %v1213 = vmax.f32 %v1181, 0.0
        %v1214 = vmax.f32 %v1182, 0.0
        %v1215 = vmax.f32 %v1183, 0.0
        %v1216 = vmax.f32 %v1184, 0.0
        %v1217 = vmax.f32 %v1185, 0.0
        %v1218 = vmax.f32 %v1186, 0.0
        %v1219 = vmax.f32 %v1187, 0.0
        %v1220 = vmax.f32 %v1188, 0.0
        %v1221 = vmax.f32 %v1189, 0.0
        %v1222 = vmax.f32 %v1190, 0.0
        %v1223 = vmax.f32 %v1191, 0.0
        %v1224 = vmax.f32 %v1192, 0.0
        %v1225 = vmax.f32 %v1193, 0.0
        %v1226 = vmax.f32 %v1194, 0.0
        %v1227 = vmax.f32 %v1195, 0.0
        %v1228 = vmax.f32 %v1196, 0.0
        %v1229 = vmax.f32 %v1197, 0.0
        %v1230 = vmax.f32 %v1198, 0.0
        %v1231 = vmax.f32 %v1199, 0.0
        %v1232 = vmax.f32 %v1200, 0.0
        %1233 = vst.msk [vmem:[#allocation2] sm:$0xff] %vm472, 0.0
        %1234 = vst.msk [vmem:[#allocation2 + $0x8] sm:$0xff] %vm472, 0.0
        %vm1235 = vcmask 58368
        %1236 = vst.msk [vmem:[#allocation2 + $0x10] sm:$0x3] %vm1235, 0.0
        %1237 = vst.msk [vmem:[#allocation2 + $0x18] sm:$0xff] %vm472, 0.0
        %1238 = vst.msk [vmem:[#allocation2 + $0x20] sm:$0xff] %vm472, 0.0
        %1239 = vst.msk [vmem:[#allocation2 + $0x28] sm:$0x3] %vm1235, 0.0
        %1240 = vst.msk [vmem:[#allocation2 + $0x30] sm:$0xff] %vm472, 0.0
        %1241 = vst.msk [vmem:[#allocation2 + $0x38] sm:$0xff] %vm472, 0.0
        %1242 = vst.msk [vmem:[#allocation2 + $0x40] sm:$0x3] %vm1235, 0.0
        %1243 = vst.msk [vmem:[#allocation2 + $0x48] sm:$0xff] %vm472, 0.0
        %1244 = vst.msk [vmem:[#allocation2 + $0x50] sm:$0xff] %vm472, 0.0
        %1245 = vst.msk [vmem:[#allocation2 + $0x58] sm:$0x3] %vm1235, 0.0
        %1246 = vst.msk [vmem:[#allocation2 + $0x60] sm:$0xff] %vm472, 0.0
        %1247 = vst.msk [vmem:[#allocation2 + $0x68] sm:$0xff] %vm472, 0.0
        %1248 = vst.msk [vmem:[#allocation2 + $0x70] sm:$0x3] %vm1235, 0.0
        %1249 = vst.msk [vmem:[#allocation2 + $0x78] sm:$0xff] %vm472, 0.0
        %1250 = vst.msk [vmem:[#allocation2 + $0x80] sm:$0xff] %vm472, 0.0
        %1251 = vst.msk [vmem:[#allocation2 + $0x88] sm:$0x3] %vm1235, 0.0
        %1252 = vst.msk [vmem:[#allocation2 + $0x90] sm:$0xff] %vm472, 0.0
        %1253 = vst.msk [vmem:[#allocation2 + $0x98] sm:$0xff] %vm472, 0.0
        %1254 = vst.msk [vmem:[#allocation2 + $0xa0] sm:$0x3] %vm1235, 0.0
        %1255 = vst.msk [vmem:[#allocation2 + $0xa8] sm:$0xff] %vm472, 0.0
        %1256 = vst.msk [vmem:[#allocation2 + $0xb0] sm:$0xff] %vm472, 0.0
        %1257 = vst.msk [vmem:[#allocation2 + $0xb8] sm:$0x3] %vm1235, 0.0
        %1258 = vst.msk [vmem:[#allocation2 + $0xc0] sm:$0xff] %vm472, 0.0
        %1259 = vst.msk [vmem:[#allocation2 + $0xc8] sm:$0xff] %vm472, 0.0
        %1260 = vst.msk [vmem:[#allocation2 + $0xd0] sm:$0x3] %vm1235, 0.0
        %1261 = vst.msk [vmem:[#allocation2 + $0xd8] sm:$0xff] %vm472, 0.0
        %1262 = vst.msk [vmem:[#allocation2 + $0xe0] sm:$0xff] %vm472, 0.0
        %1263 = vst.msk [vmem:[#allocation2 + $0xe8] sm:$0x3] %vm1235, 0.0
        %1264 = vst.msk [vmem:[#allocation2 + $0xf0] sm:$0xff] %vm472, 0.0
        %1265 = vst.msk [vmem:[#allocation2 + $0xf8] sm:$0xff] %vm472, 0.0
        %1266 = vst.msk [vmem:[#allocation2 + $0x100] sm:$0x3] %vm1235, 0.0
        %1267 = vst.msk [vmem:[#allocation2 + $0x108] sm:$0xff] %vm472, 0.0
        %1268 = vst.msk [vmem:[#allocation2 + $0x110] sm:$0xff] %vm472, 0.0
        %1269 = vst.msk [vmem:[#allocation2 + $0x118] sm:$0x3] %vm1235, 0.0
        %1270 = vst.msk [vmem:[#allocation2 + $0x120] sm:$0xff] %vm472, 0.0
        %1271 = vst.msk [vmem:[#allocation2 + $0x128] sm:$0xff] %vm472, 0.0
        %1272 = vst.msk [vmem:[#allocation2 + $0x130] sm:$0x3] %vm1235, 0.0
        %1273 = vst.msk [vmem:[#allocation2 + $0x138] sm:$0xff] %vm472, 0.0
        %1274 = vst.msk [vmem:[#allocation2 + $0x140] sm:$0xff] %vm472, 0.0
        %1275 = vst.msk [vmem:[#allocation2 + $0x148] sm:$0x3] %vm1235, 0.0
        %1276 = vst.msk [vmem:[#allocation2 + $0x150] sm:$0xff] %vm472, 0.0
        %1277 = vst.msk [vmem:[#allocation2 + $0x158] sm:$0xff] %vm472, 0.0
        %1278 = vst.msk [vmem:[#allocation2 + $0x160] sm:$0x3] %vm1235, 0.0
        %1279 = vst.msk [vmem:[#allocation2 + $0x168] sm:$0xff] %vm472, 0.0
        %1280 = vst.msk [vmem:[#allocation2 + $0x170] sm:$0xff] %vm472, 0.0
        %1281 = vst.msk [vmem:[#allocation2 + $0x178] sm:$0x3] %vm1235, 0.0
        %1282 = vst.msk [vmem:[#allocation2 + $0x180] sm:$0xff] %vm472, 0.0
        %1283 = vst.msk [vmem:[#allocation2 + $0x188] sm:$0xff] %vm472, 0.0
        %1284 = vst.msk [vmem:[#allocation2 + $0x190] sm:$0x3] %vm1235, 0.0
        %1285 = vst.msk [vmem:[#allocation2 + $0x198] sm:$0xff] %vm472, 0.0
        %1286 = vst.msk [vmem:[#allocation2 + $0x1a0] sm:$0xff] %vm472, 0.0
        %1287 = vst.msk [vmem:[#allocation2 + $0x1a8] sm:$0x3] %vm1235, 0.0
        %s1288 = scalar_lea.vmem [#allocation2], 24
        %1289 = vst.msk [vmem:[%s1288 + $0x1] sm:$0xff] %vm472, %v1201
        %1290 = vst.msk [vmem:[%s1288 + $0x9] sm:$0xff] %vm472, %v1202
        %1291 = vst.msk [vmem:[%s1288 + $0x19] sm:$0xff] %vm472, %v1203
        %1292 = vst.msk [vmem:[%s1288 + $0x21] sm:$0xff] %vm472, %v1204
        %1293 = vst.msk [vmem:[%s1288 + $0x31] sm:$0xff] %vm472, %v1205
        %1294 = vst.msk [vmem:[%s1288 + $0x39] sm:$0xff] %vm472, %v1206
        %1295 = vst.msk [vmem:[%s1288 + $0x49] sm:$0xff] %vm472, %v1207
        %1296 = vst.msk [vmem:[%s1288 + $0x51] sm:$0xff] %vm472, %v1208
        %1297 = vst.msk [vmem:[%s1288 + $0x61] sm:$0xff] %vm472, %v1209
        %1298 = vst.msk [vmem:[%s1288 + $0x69] sm:$0xff] %vm472, %v1210
        %1299 = vst.msk [vmem:[%s1288 + $0x79] sm:$0xff] %vm472, %v1211
        %1300 = vst.msk [vmem:[%s1288 + $0x81] sm:$0xff] %vm472, %v1212
        %1301 = vst.msk [vmem:[%s1288 + $0x91] sm:$0xff] %vm472, %v1213
        %1302 = vst.msk [vmem:[%s1288 + $0x99] sm:$0xff] %vm472, %v1214
        %1303 = vst.msk [vmem:[%s1288 + $0xa9] sm:$0xff] %vm472, %v1215
        %1304 = vst.msk [vmem:[%s1288 + $0xb1] sm:$0xff] %vm472, %v1216
        %1305 = vst.msk [vmem:[%s1288 + $0xc1] sm:$0xff] %vm472, %v1217
        %1306 = vst.msk [vmem:[%s1288 + $0xc9] sm:$0xff] %vm472, %v1218
        %1307 = vst.msk [vmem:[%s1288 + $0xd9] sm:$0xff] %vm472, %v1219
        %1308 = vst.msk [vmem:[%s1288 + $0xe1] sm:$0xff] %vm472, %v1220
        %1309 = vst.msk [vmem:[%s1288 + $0xf1] sm:$0xff] %vm472, %v1221
        %1310 = vst.msk [vmem:[%s1288 + $0xf9] sm:$0xff] %vm472, %v1222
        %1311 = vst.msk [vmem:[%s1288 + $0x109] sm:$0xff] %vm472, %v1223
        %1312 = vst.msk [vmem:[%s1288 + $0x111] sm:$0xff] %vm472, %v1224
        %1313 = vst.msk [vmem:[%s1288 + $0x121] sm:$0xff] %vm472, %v1225
        %1314 = vst.msk [vmem:[%s1288 + $0x129] sm:$0xff] %vm472, %v1226
        %1315 = vst.msk [vmem:[%s1288 + $0x139] sm:$0xff] %vm472, %v1227
        %1316 = vst.msk [vmem:[%s1288 + $0x141] sm:$0xff] %vm472, %v1228
        %1317 = vst.msk [vmem:[%s1288 + $0x151] sm:$0xff] %vm472, %v1229
        %1318 = vst.msk [vmem:[%s1288 + $0x159] sm:$0xff] %vm472, %v1230
        %1319 = vst.msk [vmem:[%s1288 + $0x169] sm:$0xff] %vm472, %v1231
        %1320 = vst.msk [vmem:[%s1288 + $0x171] sm:$0xff] %vm472, %v1232
        %v1321 = vld [vmem:[#allocation2] sm:$0xff]
        %v1322 = vld [vmem:[#allocation2 + $0x8] sm:$0xff]
        %v1323 = vld [vmem:[#allocation2 + $0x10] sm:$0x3]
        %v1324 = vld [vmem:[#allocation2 + $0x18] sm:$0xff]
        %v1325 = vld [vmem:[#allocation2 + $0x20] sm:$0xff]
        %v1326 = vld [vmem:[#allocation2 + $0x28] sm:$0x3]
        %v1327 = vld [vmem:[#allocation2 + $0x30] sm:$0xff]
        %v1328 = vld [vmem:[#allocation2 + $0x38] sm:$0xff]
        %v1329 = vld [vmem:[#allocation2 + $0x40] sm:$0x3]
        %v1330 = vld [vmem:[#allocation2 + $0x48] sm:$0xff]
        %v1331 = vld [vmem:[#allocation2 + $0x50] sm:$0xff]
        %v1332 = vld [vmem:[#allocation2 + $0x58] sm:$0x3]
        %v1333 = vld [vmem:[#allocation2 + $0x60] sm:$0xff]
        %v1334 = vld [vmem:[#allocation2 + $0x68] sm:$0xff]
        %v1335 = vld [vmem:[#allocation2 + $0x70] sm:$0x3]
        %v1336 = vld [vmem:[#allocation2 + $0x78] sm:$0xff]
        %v1337 = vld [vmem:[#allocation2 + $0x80] sm:$0xff]
        %v1338 = vld [vmem:[#allocation2 + $0x88] sm:$0x3]
        %v1339 = vld [vmem:[#allocation2 + $0x90] sm:$0xff]
        %v1340 = vld [vmem:[#allocation2 + $0x98] sm:$0xff]
        %v1341 = vld [vmem:[#allocation2 + $0xa0] sm:$0x3]
        %v1342 = vld [vmem:[#allocation2 + $0xa8] sm:$0xff]
        %v1343 = vld [vmem:[#allocation2 + $0xb0] sm:$0xff]
        %v1344 = vld [vmem:[#allocation2 + $0xb8] sm:$0x3]
        %v1345 = vld [vmem:[#allocation2 + $0xc0] sm:$0xff]
        %v1346 = vld [vmem:[#allocation2 + $0xc8] sm:$0xff]
        %v1347 = vld [vmem:[#allocation2 + $0xd0] sm:$0x3]
        %v1348 = vld [vmem:[#allocation2 + $0xd8] sm:$0xff]
        %v1349 = vld [vmem:[#allocation2 + $0xe0] sm:$0xff]
        %v1350 = vld [vmem:[#allocation2 + $0xe8] sm:$0x3]
        %v1351 = vld [vmem:[#allocation2 + $0xf0] sm:$0xff]
        %v1352 = vld [vmem:[#allocation2 + $0xf8] sm:$0xff]
        %v1353 = vld [vmem:[#allocation2 + $0x100] sm:$0x3]
        %v1354 = vld [vmem:[#allocation2 + $0x108] sm:$0xff]
        %v1355 = vld [vmem:[#allocation2 + $0x110] sm:$0xff]
        %v1356 = vld [vmem:[#allocation2 + $0x118] sm:$0x3]
        %v1357 = vld [vmem:[#allocation2 + $0x120] sm:$0xff]
        %v1358 = vld [vmem:[#allocation2 + $0x128] sm:$0xff]
        %v1359 = vld [vmem:[#allocation2 + $0x130] sm:$0x3]
        %v1360 = vld [vmem:[#allocation2 + $0x138] sm:$0xff]
        %v1361 = vld [vmem:[#allocation2 + $0x140] sm:$0xff]
        %v1362 = vld [vmem:[#allocation2 + $0x148] sm:$0x3]
        %v1363 = vld [vmem:[#allocation2 + $0x150] sm:$0xff]
        %v1364 = vld [vmem:[#allocation2 + $0x158] sm:$0xff]
        %v1365 = vld [vmem:[#allocation2 + $0x160] sm:$0x3]
        %v1366 = vld [vmem:[#allocation2 + $0x168] sm:$0xff]
        %v1367 = vld [vmem:[#allocation2 + $0x170] sm:$0xff]
        %v1368 = vld [vmem:[#allocation2 + $0x178] sm:$0x3]
        %v1369 = vld [vmem:[#allocation2 + $0x180] sm:$0xff]
        %v1370 = vld [vmem:[#allocation2 + $0x188] sm:$0xff]
        %v1371 = vld [vmem:[#allocation2 + $0x190] sm:$0x3]
        %v1372 = vld [vmem:[#allocation2 + $0x198] sm:$0xff]
        %v1373 = vld [vmem:[#allocation2 + $0x1a0] sm:$0xff]
        %v1374 = vld [vmem:[#allocation2 + $0x1a8] sm:$0x3]
        %1375 = vst.msk [vmem:[#allocation3] sm:$0xff] %vm472, %v1321
        %1376 = vst.msk [vmem:[#allocation3 + $0x8] sm:$0xff] %vm472, %v1322
        %1377 = vst.msk [vmem:[#allocation3 + $0x10] sm:$0xff] %vm472, %v1324
        %1378 = vst.msk [vmem:[#allocation3 + $0x18] sm:$0xff] %vm472, %v1325
        %1379 = vst.msk [vmem:[#allocation3 + $0x20] sm:$0xff] %vm472, %v1327
        %1380 = vst.msk [vmem:[#allocation3 + $0x28] sm:$0xff] %vm472, %v1328
        %1381 = vst.msk [vmem:[#allocation3 + $0x30] sm:$0xff] %vm472, %v1330
        %1382 = vst.msk [vmem:[#allocation3 + $0x38] sm:$0xff] %vm472, %v1331
        %1383 = vst.msk [vmem:[#allocation3 + $0x40] sm:$0xff] %vm472, %v1333
        %1384 = vst.msk [vmem:[#allocation3 + $0x48] sm:$0xff] %vm472, %v1334
        %1385 = vst.msk [vmem:[#allocation3 + $0x50] sm:$0xff] %vm472, %v1336
        %1386 = vst.msk [vmem:[#allocation3 + $0x58] sm:$0xff] %vm472, %v1337
        %1387 = vst.msk [vmem:[#allocation3 + $0x60] sm:$0xff] %vm472, %v1339
        %1388 = vst.msk [vmem:[#allocation3 + $0x68] sm:$0xff] %vm472, %v1340
        %1389 = vst.msk [vmem:[#allocation3 + $0x70] sm:$0xff] %vm472, %v1342
        %1390 = vst.msk [vmem:[#allocation3 + $0x78] sm:$0xff] %vm472, %v1343
        %1391 = vst.msk [vmem:[#allocation3 + $0x80] sm:$0xff] %vm472, %v1345
        %1392 = vst.msk [vmem:[#allocation3 + $0x88] sm:$0xff] %vm472, %v1346
        %1393 = vst.msk [vmem:[#allocation3 + $0x90] sm:$0xff] %vm472, %v1348
        %1394 = vst.msk [vmem:[#allocation3 + $0x98] sm:$0xff] %vm472, %v1349
        %1395 = vst.msk [vmem:[#allocation3 + $0xa0] sm:$0xff] %vm472, %v1351
        %1396 = vst.msk [vmem:[#allocation3 + $0xa8] sm:$0xff] %vm472, %v1352
        %1397 = vst.msk [vmem:[#allocation3 + $0xb0] sm:$0xff] %vm472, %v1354
        %1398 = vst.msk [vmem:[#allocation3 + $0xb8] sm:$0xff] %vm472, %v1355
        %1399 = vst.msk [vmem:[#allocation3 + $0xc0] sm:$0xff] %vm472, %v1357
        %1400 = vst.msk [vmem:[#allocation3 + $0xc8] sm:$0xff] %vm472, %v1358
        %1401 = vst.msk [vmem:[#allocation3 + $0xd0] sm:$0xff] %vm472, %v1360
        %1402 = vst.msk [vmem:[#allocation3 + $0xd8] sm:$0xff] %vm472, %v1361
        %1403 = vst.msk [vmem:[#allocation3 + $0xe0] sm:$0xff] %vm472, %v1363
        %1404 = vst.msk [vmem:[#allocation3 + $0xe8] sm:$0xff] %vm472, %v1364
        %1405 = vst.msk [vmem:[#allocation3 + $0xf0] sm:$0xff] %vm472, %v1366
        %1406 = vst.msk [vmem:[#allocation3 + $0xf8] sm:$0xff] %vm472, %v1367
        %vm1455 = vcmask 1046528
        %v1456 = vrot.slane %v1321, 1
        %v1457 = vrot.slane %v1322, 1
        %v1458 = vsel %vm1455, %v1456, %v1457
        %v1459 = vrot.slane %v1323, 1
        %v1460 = vsel %vm1455, %v1457, %v1459
        %v1461 = vrot.slane %v1324, 1
        %v1462 = vrot.slane %v1325, 1
        %v1463 = vsel %vm1455, %v1461, %v1462
        %v1464 = vrot.slane %v1326, 1
        %v1465 = vsel %vm1455, %v1462, %v1464
        %v1466 = vrot.slane %v1327, 1
        %v1467 = vrot.slane %v1328, 1
        %v1468 = vsel %vm1455, %v1466, %v1467
        %v1469 = vrot.slane %v1329, 1
        %v1470 = vsel %vm1455, %v1467, %v1469
        %v1471 = vrot.slane %v1330, 1
        %v1472 = vrot.slane %v1331, 1
        %v1473 = vsel %vm1455, %v1471, %v1472
        %v1474 = vrot.slane %v1332, 1
        %v1475 = vsel %vm1455, %v1472, %v1474
        %v1476 = vrot.slane %v1333, 1
        %v1477 = vrot.slane %v1334, 1
        %v1478 = vsel %vm1455, %v1476, %v1477
        %v1479 = vrot.slane %v1335, 1
        %v1480 = vsel %vm1455, %v1477, %v1479
        %v1481 = vrot.slane %v1336, 1
        %v1482 = vrot.slane %v1337, 1
        %v1483 = vsel %vm1455, %v1481, %v1482
        %v1484 = vrot.slane %v1338, 1
        %v1485 = vsel %vm1455, %v1482, %v1484
        %v1486 = vrot.slane %v1339, 1
        %v1487 = vrot.slane %v1340, 1
        %v1488 = vsel %vm1455, %v1486, %v1487
        %v1489 = vrot.slane %v1341, 1
        %v1490 = vsel %vm1455, %v1487, %v1489
        %v1491 = vrot.slane %v1342, 1
        %v1492 = vrot.slane %v1343, 1
        %v1493 = vsel %vm1455, %v1491, %v1492
        %v1494 = vrot.slane %v1344, 1
        %v1495 = vsel %vm1455, %v1492, %v1494
        %v1496 = vrot.slane %v1345, 1
        %v1497 = vrot.slane %v1346, 1
        %v1498 = vsel %vm1455, %v1496, %v1497
        %v1499 = vrot.slane %v1347, 1
        %v1500 = vsel %vm1455, %v1497, %v1499
        %v1501 = vrot.slane %v1348, 1
        %v1502 = vrot.slane %v1349, 1
        %v1503 = vsel %vm1455, %v1501, %v1502
        %v1504 = vrot.slane %v1350, 1
        %v1505 = vsel %vm1455, %v1502, %v1504
        %v1506 = vrot.slane %v1351, 1
        %v1507 = vrot.slane %v1352, 1
        %v1508 = vsel %vm1455, %v1506, %v1507
        %v1509 = vrot.slane %v1353, 1
        %v1510 = vsel %vm1455, %v1507, %v1509
        %v1511 = vrot.slane %v1354, 1
        %v1512 = vrot.slane %v1355, 1
        %v1513 = vsel %vm1455, %v1511, %v1512
        %v1514 = vrot.slane %v1356, 1
        %v1515 = vsel %vm1455, %v1512, %v1514
        %v1516 = vrot.slane %v1357, 1
        %v1517 = vrot.slane %v1358, 1
        %v1518 = vsel %vm1455, %v1516, %v1517
        %v1519 = vrot.slane %v1359, 1
        %v1520 = vsel %vm1455, %v1517, %v1519
        %v1521 = vrot.slane %v1360, 1
        %v1522 = vrot.slane %v1361, 1
        %v1523 = vsel %vm1455, %v1521, %v1522
        %v1524 = vrot.slane %v1362, 1
        %v1525 = vsel %vm1455, %v1522, %v1524
        %v1526 = vrot.slane %v1363, 1
        %v1527 = vrot.slane %v1364, 1
        %v1528 = vsel %vm1455, %v1526, %v1527
        %v1529 = vrot.slane %v1365, 1
        %v1530 = vsel %vm1455, %v1527, %v1529
        %v1531 = vrot.slane %v1366, 1
        %v1532 = vrot.slane %v1367, 1
        %v1533 = vsel %vm1455, %v1531, %v1532
        %v1534 = vrot.slane %v1368, 1
        %v1535 = vsel %vm1455, %v1532, %v1534
        %1536 = vrot.lane.b32.xlu0 %v1458, 8
        %v1537 = vpop.permute.xlu0 %1536
        %1538 = vrot.lane.b32.xlu0 %v1460, 8
        %v1539 = vpop.permute.xlu0 %1538
        %1540 = vrot.lane.b32.xlu0 %v1463, 8
        %v1541 = vpop.permute.xlu0 %1540
        %1542 = vrot.lane.b32.xlu0 %v1465, 8
        %v1543 = vpop.permute.xlu0 %1542
        %1544 = vrot.lane.b32.xlu0 %v1468, 8
        %v1545 = vpop.permute.xlu0 %1544
        %1546 = vrot.lane.b32.xlu0 %v1470, 8
        %v1547 = vpop.permute.xlu0 %1546
        %1548 = vrot.lane.b32.xlu0 %v1473, 8
        %v1549 = vpop.permute.xlu0 %1548
        %1550 = vrot.lane.b32.xlu0 %v1475, 8
        %v1551 = vpop.permute.xlu0 %1550
        %1552 = vrot.lane.b32.xlu0 %v1478, 8
        %v1553 = vpop.permute.xlu0 %1552
        %1554 = vrot.lane.b32.xlu0 %v1480, 8
        %v1555 = vpop.permute.xlu0 %1554
        %1556 = vrot.lane.b32.xlu0 %v1483, 8
        %v1557 = vpop.permute.xlu0 %1556
        %1558 = vrot.lane.b32.xlu0 %v1485, 8
        %v1559 = vpop.permute.xlu0 %1558
        %1560 = vrot.lane.b32.xlu0 %v1488, 8
        %v1561 = vpop.permute.xlu0 %1560
        %1562 = vrot.lane.b32.xlu0 %v1490, 8
        %v1563 = vpop.permute.xlu0 %1562
        %1564 = vrot.lane.b32.xlu0 %v1493, 8
        %v1565 = vpop.permute.xlu0 %1564
        %1566 = vrot.lane.b32.xlu0 %v1495, 8
        %v1567 = vpop.permute.xlu0 %1566
        %1568 = vrot.lane.b32.xlu0 %v1498, 8
        %v1569 = vpop.permute.xlu0 %1568
        %1570 = vrot.lane.b32.xlu0 %v1500, 8
        %v1571 = vpop.permute.xlu0 %1570
        %1572 = vrot.lane.b32.xlu0 %v1503, 8
        %v1573 = vpop.permute.xlu0 %1572
        %1574 = vrot.lane.b32.xlu0 %v1505, 8
        %v1575 = vpop.permute.xlu0 %1574
        %1576 = vrot.lane.b32.xlu0 %v1508, 8
        %v1577 = vpop.permute.xlu0 %1576
        %1578 = vrot.lane.b32.xlu0 %v1510, 8
        %v1579 = vpop.permute.xlu0 %1578
        %1580 = vrot.lane.b32.xlu0 %v1513, 8
        %v1581 = vpop.permute.xlu0 %1580
        %1582 = vrot.lane.b32.xlu0 %v1515, 8
        %v1583 = vpop.permute.xlu0 %1582
        %1584 = vrot.lane.b32.xlu0 %v1518, 8
        %v1585 = vpop.permute.xlu0 %1584
        %1586 = vrot.lane.b32.xlu0 %v1520, 8
        %v1587 = vpop.permute.xlu0 %1586
        %1588 = vrot.lane.b32.xlu0 %v1523, 8
        %v1589 = vpop.permute.xlu0 %1588
        %1590 = vrot.lane.b32.xlu0 %v1525, 8
        %v1591 = vpop.permute.xlu0 %1590
        %1592 = vrot.lane.b32.xlu0 %v1528, 8
        %v1593 = vpop.permute.xlu0 %1592
        %1594 = vrot.lane.b32.xlu0 %v1530, 8
        %v1595 = vpop.permute.xlu0 %1594
        %1596 = vrot.lane.b32.xlu0 %v1533, 8
        %v1597 = vpop.permute.xlu0 %1596
        %1598 = vrot.lane.b32.xlu0 %v1535, 8
        %v1599 = vpop.permute.xlu0 %1598
        %vm1632 = vcmask 130112
        %1633 = vst.msk [vmem:[#allocation3] sm:$0xff] %vm1632, %v1537
        %1634 = vst.msk [vmem:[#allocation3 + $0x8] sm:$0xff] %vm1632, %v1539
        %1635 = vst.msk [vmem:[#allocation3 + $0x10] sm:$0xff] %vm1632, %v1541
        %1636 = vst.msk [vmem:[#allocation3 + $0x18] sm:$0xff] %vm1632, %v1543
        %1637 = vst.msk [vmem:[#allocation3 + $0x20] sm:$0xff] %vm1632, %v1545
        %1638 = vst.msk [vmem:[#allocation3 + $0x28] sm:$0xff] %vm1632, %v1547
        %1639 = vst.msk [vmem:[#allocation3 + $0x30] sm:$0xff] %vm1632, %v1549
        %1640 = vst.msk [vmem:[#allocation3 + $0x38] sm:$0xff] %vm1632, %v1551
        %1641 = vst.msk [vmem:[#allocation3 + $0x40] sm:$0xff] %vm1632, %v1553
        %1642 = vst.msk [vmem:[#allocation3 + $0x48] sm:$0xff] %vm1632, %v1555
        %1643 = vst.msk [vmem:[#allocation3 + $0x50] sm:$0xff] %vm1632, %v1557
        %1644 = vst.msk [vmem:[#allocation3 + $0x58] sm:$0xff] %vm1632, %v1559
        %1645 = vst.msk [vmem:[#allocation3 + $0x60] sm:$0xff] %vm1632, %v1561
        %1646 = vst.msk [vmem:[#allocation3 + $0x68] sm:$0xff] %vm1632, %v1563
        %1647 = vst.msk [vmem:[#allocation3 + $0x70] sm:$0xff] %vm1632, %v1565
        %1648 = vst.msk [vmem:[#allocation3 + $0x78] sm:$0xff] %vm1632, %v1567
        %1649 = vst.msk [vmem:[#allocation3 + $0x80] sm:$0xff] %vm1632, %v1569
        %1650 = vst.msk [vmem:[#allocation3 + $0x88] sm:$0xff] %vm1632, %v1571
        %1651 = vst.msk [vmem:[#allocation3 + $0x90] sm:$0xff] %vm1632, %v1573
        %1652 = vst.msk [vmem:[#allocation3 + $0x98] sm:$0xff] %vm1632, %v1575
        %1653 = vst.msk [vmem:[#allocation3 + $0xa0] sm:$0xff] %vm1632, %v1577
        %1654 = vst.msk [vmem:[#allocation3 + $0xa8] sm:$0xff] %vm1632, %v1579
        %1655 = vst.msk [vmem:[#allocation3 + $0xb0] sm:$0xff] %vm1632, %v1581
        %1656 = vst.msk [vmem:[#allocation3 + $0xb8] sm:$0xff] %vm1632, %v1583
        %1657 = vst.msk [vmem:[#allocation3 + $0xc0] sm:$0xff] %vm1632, %v1585
        %1658 = vst.msk [vmem:[#allocation3 + $0xc8] sm:$0xff] %vm1632, %v1587
        %1659 = vst.msk [vmem:[#allocation3 + $0xd0] sm:$0xff] %vm1632, %v1589
        %1660 = vst.msk [vmem:[#allocation3 + $0xd8] sm:$0xff] %vm1632, %v1591
        %1661 = vst.msk [vmem:[#allocation3 + $0xe0] sm:$0xff] %vm1632, %v1593
        %1662 = vst.msk [vmem:[#allocation3 + $0xe8] sm:$0xff] %vm1632, %v1595
        %1663 = vst.msk [vmem:[#allocation3 + $0xf0] sm:$0xff] %vm1632, %v1597
        %1664 = vst.msk [vmem:[#allocation3 + $0xf8] sm:$0xff] %vm1632, %v1599
        %vm1665 = vcmask 1045504
        %v1666 = vrot.slane %v1321, 2
        %v1667 = vrot.slane %v1322, 2
        %v1668 = vsel %vm1665, %v1666, %v1667
        %v1669 = vrot.slane %v1323, 2
        %v1670 = vsel %vm1665, %v1667, %v1669
        %v1671 = vrot.slane %v1324, 2
        %v1672 = vrot.slane %v1325, 2
        %v1673 = vsel %vm1665, %v1671, %v1672
        %v1674 = vrot.slane %v1326, 2
        %v1675 = vsel %vm1665, %v1672, %v1674
        %v1676 = vrot.slane %v1327, 2
        %v1677 = vrot.slane %v1328, 2
        %v1678 = vsel %vm1665, %v1676, %v1677
        %v1679 = vrot.slane %v1329, 2
        %v1680 = vsel %vm1665, %v1677, %v1679
        %v1681 = vrot.slane %v1330, 2
        %v1682 = vrot.slane %v1331, 2
        %v1683 = vsel %vm1665, %v1681, %v1682
        %v1684 = vrot.slane %v1332, 2
        %v1685 = vsel %vm1665, %v1682, %v1684
        %v1686 = vrot.slane %v1333, 2
        %v1687 = vrot.slane %v1334, 2
        %v1688 = vsel %vm1665, %v1686, %v1687
        %v1689 = vrot.slane %v1335, 2
        %v1690 = vsel %vm1665, %v1687, %v1689
        %v1691 = vrot.slane %v1336, 2
        %v1692 = vrot.slane %v1337, 2
        %v1693 = vsel %vm1665, %v1691, %v1692
        %v1694 = vrot.slane %v1338, 2
        %v1695 = vsel %vm1665, %v1692, %v1694
        %v1696 = vrot.slane %v1339, 2
        %v1697 = vrot.slane %v1340, 2
        %v1698 = vsel %vm1665, %v1696, %v1697
        %v1699 = vrot.slane %v1341, 2
        %v1700 = vsel %vm1665, %v1697, %v1699
        %v1701 = vrot.slane %v1342, 2
        %v1702 = vrot.slane %v1343, 2
        %v1703 = vsel %vm1665, %v1701, %v1702
        %v1704 = vrot.slane %v1344, 2
        %v1705 = vsel %vm1665, %v1702, %v1704
        %v1706 = vrot.slane %v1345, 2
        %v1707 = vrot.slane %v1346, 2
        %v1708 = vsel %vm1665, %v1706, %v1707
        %v1709 = vrot.slane %v1347, 2
        %v1710 = vsel %vm1665, %v1707, %v1709
        %v1711 = vrot.slane %v1348, 2
        %v1712 = vrot.slane %v1349, 2
        %v1713 = vsel %vm1665, %v1711, %v1712
        %v1714 = vrot.slane %v1350, 2
        %v1715 = vsel %vm1665, %v1712, %v1714
        %v1716 = vrot.slane %v1351, 2
        %v1717 = vrot.slane %v1352, 2
        %v1718 = vsel %vm1665, %v1716, %v1717
        %v1719 = vrot.slane %v1353, 2
        %v1720 = vsel %vm1665, %v1717, %v1719
        %v1721 = vrot.slane %v1354, 2
        %v1722 = vrot.slane %v1355, 2
        %v1723 = vsel %vm1665, %v1721, %v1722
        %v1724 = vrot.slane %v1356, 2
        %v1725 = vsel %vm1665, %v1722, %v1724
        %v1726 = vrot.slane %v1357, 2
        %v1727 = vrot.slane %v1358, 2
        %v1728 = vsel %vm1665, %v1726, %v1727
        %v1729 = vrot.slane %v1359, 2
        %v1730 = vsel %vm1665, %v1727, %v1729
        %v1731 = vrot.slane %v1360, 2
        %v1732 = vrot.slane %v1361, 2
        %v1733 = vsel %vm1665, %v1731, %v1732
        %v1734 = vrot.slane %v1362, 2
        %v1735 = vsel %vm1665, %v1732, %v1734
        %v1736 = vrot.slane %v1363, 2
        %v1737 = vrot.slane %v1364, 2
        %v1738 = vsel %vm1665, %v1736, %v1737
        %v1739 = vrot.slane %v1365, 2
        %v1740 = vsel %vm1665, %v1737, %v1739
        %v1741 = vrot.slane %v1366, 2
        %v1742 = vrot.slane %v1367, 2
        %v1743 = vsel %vm1665, %v1741, %v1742
        %v1744 = vrot.slane %v1368, 2
        %v1745 = vsel %vm1665, %v1742, %v1744
        %1746 = vrot.lane.b32.xlu0 %v1668, 16
        %v1747 = vpop.permute.xlu0 %1746
        %1748 = vrot.lane.b32.xlu0 %v1670, 16
        %v1749 = vpop.permute.xlu0 %1748
        %1750 = vrot.lane.b32.xlu0 %v1673, 16
        %v1751 = vpop.permute.xlu0 %1750
        %1752 = vrot.lane.b32.xlu0 %v1675, 16
        %v1753 = vpop.permute.xlu0 %1752
        %1754 = vrot.lane.b32.xlu0 %v1678, 16
        %v1755 = vpop.permute.xlu0 %1754
        %1756 = vrot.lane.b32.xlu0 %v1680, 16
        %v1757 = vpop.permute.xlu0 %1756
        %1758 = vrot.lane.b32.xlu0 %v1683, 16
        %v1759 = vpop.permute.xlu0 %1758
        %1760 = vrot.lane.b32.xlu0 %v1685, 16
        %v1761 = vpop.permute.xlu0 %1760
        %1762 = vrot.lane.b32.xlu0 %v1688, 16
        %v1763 = vpop.permute.xlu0 %1762
        %1764 = vrot.lane.b32.xlu0 %v1690, 16
        %v1765 = vpop.permute.xlu0 %1764
        %1766 = vrot.lane.b32.xlu0 %v1693, 16
        %v1767 = vpop.permute.xlu0 %1766
        %1768 = vrot.lane.b32.xlu0 %v1695, 16
        %v1769 = vpop.permute.xlu0 %1768
        %1770 = vrot.lane.b32.xlu0 %v1698, 16
        %v1771 = vpop.permute.xlu0 %1770
        %1772 = vrot.lane.b32.xlu0 %v1700, 16
        %v1773 = vpop.permute.xlu0 %1772
        %1774 = vrot.lane.b32.xlu0 %v1703, 16
        %v1775 = vpop.permute.xlu0 %1774
        %1776 = vrot.lane.b32.xlu0 %v1705, 16
        %v1777 = vpop.permute.xlu0 %1776
        %1778 = vrot.lane.b32.xlu0 %v1708, 16
        %v1779 = vpop.permute.xlu0 %1778
        %1780 = vrot.lane.b32.xlu0 %v1710, 16
        %v1781 = vpop.permute.xlu0 %1780
        %1782 = vrot.lane.b32.xlu0 %v1713, 16
        %v1783 = vpop.permute.xlu0 %1782
        %1784 = vrot.lane.b32.xlu0 %v1715, 16
        %v1785 = vpop.permute.xlu0 %1784
        %1786 = vrot.lane.b32.xlu0 %v1718, 16
        %v1787 = vpop.permute.xlu0 %1786
        %1788 = vrot.lane.b32.xlu0 %v1720, 16
        %v1789 = vpop.permute.xlu0 %1788
        %1790 = vrot.lane.b32.xlu0 %v1723, 16
        %v1791 = vpop.permute.xlu0 %1790
        %1792 = vrot.lane.b32.xlu0 %v1725, 16
        %v1793 = vpop.permute.xlu0 %1792
        %1794 = vrot.lane.b32.xlu0 %v1728, 16
        %v1795 = vpop.permute.xlu0 %1794
        %1796 = vrot.lane.b32.xlu0 %v1730, 16
        %v1797 = vpop.permute.xlu0 %1796
        %1798 = vrot.lane.b32.xlu0 %v1733, 16
        %v1799 = vpop.permute.xlu0 %1798
        %1800 = vrot.lane.b32.xlu0 %v1735, 16
        %v1801 = vpop.permute.xlu0 %1800
        %1802 = vrot.lane.b32.xlu0 %v1738, 16
        %v1803 = vpop.permute.xlu0 %1802
        %1804 = vrot.lane.b32.xlu0 %v1740, 16
        %v1805 = vpop.permute.xlu0 %1804
        %1806 = vrot.lane.b32.xlu0 %v1743, 16
        %v1807 = vpop.permute.xlu0 %1806
        %1808 = vrot.lane.b32.xlu0 %v1745, 16
        %v1809 = vpop.permute.xlu0 %1808
        %vm1842 = vcmask 195712
        %1843 = vst.msk [vmem:[#allocation3] sm:$0xff] %vm1842, %v1747
        %1844 = vst.msk [vmem:[#allocation3 + $0x8] sm:$0xff] %vm1842, %v1749
        %1845 = vst.msk [vmem:[#allocation3 + $0x10] sm:$0xff] %vm1842, %v1751
        %1846 = vst.msk [vmem:[#allocation3 + $0x18] sm:$0xff] %vm1842, %v1753
        %1847 = vst.msk [vmem:[#allocation3 + $0x20] sm:$0xff] %vm1842, %v1755
        %1848 = vst.msk [vmem:[#allocation3 + $0x28] sm:$0xff] %vm1842, %v1757
        %1849 = vst.msk [vmem:[#allocation3 + $0x30] sm:$0xff] %vm1842, %v1759
        %1850 = vst.msk [vmem:[#allocation3 + $0x38] sm:$0xff] %vm1842, %v1761
        %1851 = vst.msk [vmem:[#allocation3 + $0x40] sm:$0xff] %vm1842, %v1763
        %1852 = vst.msk [vmem:[#allocation3 + $0x48] sm:$0xff] %vm1842, %v1765
        %1853 = vst.msk [vmem:[#allocation3 + $0x50] sm:$0xff] %vm1842, %v1767
        %1854 = vst.msk [vmem:[#allocation3 + $0x58] sm:$0xff] %vm1842, %v1769
        %1855 = vst.msk [vmem:[#allocation3 + $0x60] sm:$0xff] %vm1842, %v1771
        %1856 = vst.msk [vmem:[#allocation3 + $0x68] sm:$0xff] %vm1842, %v1773
        %1857 = vst.msk [vmem:[#allocation3 + $0x70] sm:$0xff] %vm1842, %v1775
        %1858 = vst.msk [vmem:[#allocation3 + $0x78] sm:$0xff] %vm1842, %v1777
        %1859 = vst.msk [vmem:[#allocation3 + $0x80] sm:$0xff] %vm1842, %v1779
        %1860 = vst.msk [vmem:[#allocation3 + $0x88] sm:$0xff] %vm1842, %v1781
        %1861 = vst.msk [vmem:[#allocation3 + $0x90] sm:$0xff] %vm1842, %v1783
        %1862 = vst.msk [vmem:[#allocation3 + $0x98] sm:$0xff] %vm1842, %v1785
        %1863 = vst.msk [vmem:[#allocation3 + $0xa0] sm:$0xff] %vm1842, %v1787
        %1864 = vst.msk [vmem:[#allocation3 + $0xa8] sm:$0xff] %vm1842, %v1789
        %1865 = vst.msk [vmem:[#allocation3 + $0xb0] sm:$0xff] %vm1842, %v1791
        %1866 = vst.msk [vmem:[#allocation3 + $0xb8] sm:$0xff] %vm1842, %v1793
        %1867 = vst.msk [vmem:[#allocation3 + $0xc0] sm:$0xff] %vm1842, %v1795
        %1868 = vst.msk [vmem:[#allocation3 + $0xc8] sm:$0xff] %vm1842, %v1797
        %1869 = vst.msk [vmem:[#allocation3 + $0xd0] sm:$0xff] %vm1842, %v1799
        %1870 = vst.msk [vmem:[#allocation3 + $0xd8] sm:$0xff] %vm1842, %v1801
        %1871 = vst.msk [vmem:[#allocation3 + $0xe0] sm:$0xff] %vm1842, %v1803
        %1872 = vst.msk [vmem:[#allocation3 + $0xe8] sm:$0xff] %vm1842, %v1805
        %1873 = vst.msk [vmem:[#allocation3 + $0xf0] sm:$0xff] %vm1842, %v1807
        %1874 = vst.msk [vmem:[#allocation3 + $0xf8] sm:$0xff] %vm1842, %v1809
        %1877 = vrot.lane.b32.xlu0 %v1324, 24
        %v1878 = vpop.permute.xlu0 %1877
        %1879 = vrot.lane.b32.xlu0 %v1325, 24
        %v1880 = vpop.permute.xlu0 %1879
        %1881 = vrot.lane.b32.xlu0 %v1327, 24
        %v1882 = vpop.permute.xlu0 %1881
        %1883 = vrot.lane.b32.xlu0 %v1328, 24
        %v1884 = vpop.permute.xlu0 %1883
        %1885 = vrot.lane.b32.xlu0 %v1330, 24
        %v1886 = vpop.permute.xlu0 %1885
        %1887 = vrot.lane.b32.xlu0 %v1331, 24
        %v1888 = vpop.permute.xlu0 %1887
        %1889 = vrot.lane.b32.xlu0 %v1333, 24
        %v1890 = vpop.permute.xlu0 %1889
        %1891 = vrot.lane.b32.xlu0 %v1334, 24
        %v1892 = vpop.permute.xlu0 %1891
        %1893 = vrot.lane.b32.xlu0 %v1336, 24
        %v1894 = vpop.permute.xlu0 %1893
        %1895 = vrot.lane.b32.xlu0 %v1337, 24
        %v1896 = vpop.permute.xlu0 %1895
        %1897 = vrot.lane.b32.xlu0 %v1339, 24
        %v1898 = vpop.permute.xlu0 %1897
        %1899 = vrot.lane.b32.xlu0 %v1340, 24
        %v1900 = vpop.permute.xlu0 %1899
        %1901 = vrot.lane.b32.xlu0 %v1342, 24
        %v1902 = vpop.permute.xlu0 %1901
        %1903 = vrot.lane.b32.xlu0 %v1343, 24
        %v1904 = vpop.permute.xlu0 %1903
        %1905 = vrot.lane.b32.xlu0 %v1345, 24
        %v1906 = vpop.permute.xlu0 %1905
        %1907 = vrot.lane.b32.xlu0 %v1346, 24
        %v1908 = vpop.permute.xlu0 %1907
        %1909 = vrot.lane.b32.xlu0 %v1348, 24
        %v1910 = vpop.permute.xlu0 %1909
        %1911 = vrot.lane.b32.xlu0 %v1349, 24
        %v1912 = vpop.permute.xlu0 %1911
        %1913 = vrot.lane.b32.xlu0 %v1351, 24
        %v1914 = vpop.permute.xlu0 %1913
        %1915 = vrot.lane.b32.xlu0 %v1352, 24
        %v1916 = vpop.permute.xlu0 %1915
        %1917 = vrot.lane.b32.xlu0 %v1354, 24
        %v1918 = vpop.permute.xlu0 %1917
        %1919 = vrot.lane.b32.xlu0 %v1355, 24
        %v1920 = vpop.permute.xlu0 %1919
        %1921 = vrot.lane.b32.xlu0 %v1357, 24
        %v1922 = vpop.permute.xlu0 %1921
        %1923 = vrot.lane.b32.xlu0 %v1358, 24
        %v1924 = vpop.permute.xlu0 %1923
        %1925 = vrot.lane.b32.xlu0 %v1360, 24
        %v1926 = vpop.permute.xlu0 %1925
        %1927 = vrot.lane.b32.xlu0 %v1361, 24
        %v1928 = vpop.permute.xlu0 %1927
        %1929 = vrot.lane.b32.xlu0 %v1363, 24
        %v1930 = vpop.permute.xlu0 %1929
        %1931 = vrot.lane.b32.xlu0 %v1364, 24
        %v1932 = vpop.permute.xlu0 %1931
        %1933 = vrot.lane.b32.xlu0 %v1366, 24
        %v1934 = vpop.permute.xlu0 %1933
        %1935 = vrot.lane.b32.xlu0 %v1367, 24
        %v1936 = vpop.permute.xlu0 %1935
        %1937 = vrot.lane.b32.xlu0 %v1369, 24
        %v1938 = vpop.permute.xlu0 %1937
        %1939 = vrot.lane.b32.xlu0 %v1370, 24
        %v1940 = vpop.permute.xlu0 %1939
        %vm1973 = vcmask 261312
        %1974 = vst.msk [vmem:[#allocation3] sm:$0xff] %vm1973, %v1878
        %1975 = vst.msk [vmem:[#allocation3 + $0x8] sm:$0xff] %vm1973, %v1880
        %1976 = vst.msk [vmem:[#allocation3 + $0x10] sm:$0xff] %vm1973, %v1882
        %1977 = vst.msk [vmem:[#allocation3 + $0x18] sm:$0xff] %vm1973, %v1884
        %1978 = vst.msk [vmem:[#allocation3 + $0x20] sm:$0xff] %vm1973, %v1886
        %1979 = vst.msk [vmem:[#allocation3 + $0x28] sm:$0xff] %vm1973, %v1888
        %1980 = vst.msk [vmem:[#allocation3 + $0x30] sm:$0xff] %vm1973, %v1890
        %1981 = vst.msk [vmem:[#allocation3 + $0x38] sm:$0xff] %vm1973, %v1892
        %1982 = vst.msk [vmem:[#allocation3 + $0x40] sm:$0xff] %vm1973, %v1894
        %1983 = vst.msk [vmem:[#allocation3 + $0x48] sm:$0xff] %vm1973, %v1896
        %1984 = vst.msk [vmem:[#allocation3 + $0x50] sm:$0xff] %vm1973, %v1898
        %1985 = vst.msk [vmem:[#allocation3 + $0x58] sm:$0xff] %vm1973, %v1900
        %1986 = vst.msk [vmem:[#allocation3 + $0x60] sm:$0xff] %vm1973, %v1902
        %1987 = vst.msk [vmem:[#allocation3 + $0x68] sm:$0xff] %vm1973, %v1904
        %1988 = vst.msk [vmem:[#allocation3 + $0x70] sm:$0xff] %vm1973, %v1906
        %1989 = vst.msk [vmem:[#allocation3 + $0x78] sm:$0xff] %vm1973, %v1908
        %1990 = vst.msk [vmem:[#allocation3 + $0x80] sm:$0xff] %vm1973, %v1910
        %1991 = vst.msk [vmem:[#allocation3 + $0x88] sm:$0xff] %vm1973, %v1912
        %1992 = vst.msk [vmem:[#allocation3 + $0x90] sm:$0xff] %vm1973, %v1914
        %1993 = vst.msk [vmem:[#allocation3 + $0x98] sm:$0xff] %vm1973, %v1916
        %1994 = vst.msk [vmem:[#allocation3 + $0xa0] sm:$0xff] %vm1973, %v1918
        %1995 = vst.msk [vmem:[#allocation3 + $0xa8] sm:$0xff] %vm1973, %v1920
        %1996 = vst.msk [vmem:[#allocation3 + $0xb0] sm:$0xff] %vm1973, %v1922
        %1997 = vst.msk [vmem:[#allocation3 + $0xb8] sm:$0xff] %vm1973, %v1924
        %1998 = vst.msk [vmem:[#allocation3 + $0xc0] sm:$0xff] %vm1973, %v1926
        %1999 = vst.msk [vmem:[#allocation3 + $0xc8] sm:$0xff] %vm1973, %v1928
        %2000 = vst.msk [vmem:[#allocation3 + $0xd0] sm:$0xff] %vm1973, %v1930
        %2001 = vst.msk [vmem:[#allocation3 + $0xd8] sm:$0xff] %vm1973, %v1932
        %2002 = vst.msk [vmem:[#allocation3 + $0xe0] sm:$0xff] %vm1973, %v1934
        %2003 = vst.msk [vmem:[#allocation3 + $0xe8] sm:$0xff] %vm1973, %v1936
        %2004 = vst.msk [vmem:[#allocation3 + $0xf0] sm:$0xff] %vm1973, %v1938
        %2005 = vst.msk [vmem:[#allocation3 + $0xf8] sm:$0xff] %vm1973, %v1940
        %v2007 = vrot.slane %v1369, 1
        %v2008 = vrot.slane %v1370, 1
        %v2009 = vsel %vm1455, %v2007, %v2008
        %v2010 = vrot.slane %v1371, 1
        %v2011 = vsel %vm1455, %v2008, %v2010
        %2012 = vrot.lane.b32.xlu0 %v1463, 32
        %v2013 = vpop.permute.xlu0 %2012
        %2014 = vrot.lane.b32.xlu0 %v1465, 32
        %v2015 = vpop.permute.xlu0 %2014
        %2016 = vrot.lane.b32.xlu0 %v1468, 32
        %v2017 = vpop.permute.xlu0 %2016
        %2018 = vrot.lane.b32.xlu0 %v1470, 32
        %v2019 = vpop.permute.xlu0 %2018
        %2020 = vrot.lane.b32.xlu0 %v1473, 32
        %v2021 = vpop.permute.xlu0 %2020
        %2022 = vrot.lane.b32.xlu0 %v1475, 32
        %v2023 = vpop.permute.xlu0 %2022
        %2024 = vrot.lane.b32.xlu0 %v1478, 32
        %v2025 = vpop.permute.xlu0 %2024
        %2026 = vrot.lane.b32.xlu0 %v1480, 32
        %v2027 = vpop.permute.xlu0 %2026
        %2028 = vrot.lane.b32.xlu0 %v1483, 32
        %v2029 = vpop.permute.xlu0 %2028
        %2030 = vrot.lane.b32.xlu0 %v1485, 32
        %v2031 = vpop.permute.xlu0 %2030
        %2032 = vrot.lane.b32.xlu0 %v1488, 32
        %v2033 = vpop.permute.xlu0 %2032
        %2034 = vrot.lane.b32.xlu0 %v1490, 32
        %v2035 = vpop.permute.xlu0 %2034
        %2036 = vrot.lane.b32.xlu0 %v1493, 32
        %v2037 = vpop.permute.xlu0 %2036
        %2038 = vrot.lane.b32.xlu0 %v1495, 32
        %v2039 = vpop.permute.xlu0 %2038
        %2040 = vrot.lane.b32.xlu0 %v1498, 32
        %v2041 = vpop.permute.xlu0 %2040
        %2042 = vrot.lane.b32.xlu0 %v1500, 32
        %v2043 = vpop.permute.xlu0 %2042
        %2044 = vrot.lane.b32.xlu0 %v1503, 32
        %v2045 = vpop.permute.xlu0 %2044
        %2046 = vrot.lane.b32.xlu0 %v1505, 32
        %v2047 = vpop.permute.xlu0 %2046
        %2048 = vrot.lane.b32.xlu0 %v1508, 32
        %v2049 = vpop.permute.xlu0 %2048
        %2050 = vrot.lane.b32.xlu0 %v1510, 32
        %v2051 = vpop.permute.xlu0 %2050
        %2052 = vrot.lane.b32.xlu0 %v1513, 32
        %v2053 = vpop.permute.xlu0 %2052
        %2054 = vrot.lane.b32.xlu0 %v1515, 32
        %v2055 = vpop.permute.xlu0 %2054
        %2056 = vrot.lane.b32.xlu0 %v1518, 32
        %v2057 = vpop.permute.xlu0 %2056
        %2058 = vrot.lane.b32.xlu0 %v1520, 32
        %v2059 = vpop.permute.xlu0 %2058
        %2060 = vrot.lane.b32.xlu0 %v1523, 32
        %v2061 = vpop.permute.xlu0 %2060
        %2062 = vrot.lane.b32.xlu0 %v1525, 32
        %v2063 = vpop.permute.xlu0 %2062
        %2064 = vrot.lane.b32.xlu0 %v1528, 32
        %v2065 = vpop.permute.xlu0 %2064
        %2066 = vrot.lane.b32.xlu0 %v1530, 32
        %v2067 = vpop.permute.xlu0 %2066
        %2068 = vrot.lane.b32.xlu0 %v1533, 32
        %v2069 = vpop.permute.xlu0 %2068
        %2070 = vrot.lane.b32.xlu0 %v1535, 32
        %v2071 = vpop.permute.xlu0 %2070
        %2072 = vrot.lane.b32.xlu0 %v2009, 32
        %v2073 = vpop.permute.xlu0 %2072
        %2074 = vrot.lane.b32.xlu0 %v2011, 32
        %v2075 = vpop.permute.xlu0 %2074
        %vm2108 = vcmask 326912
        %2109 = vst.msk [vmem:[#allocation3] sm:$0xff] %vm2108, %v2013
        %2110 = vst.msk [vmem:[#allocation3 + $0x8] sm:$0xff] %vm2108, %v2015
        %2111 = vst.msk [vmem:[#allocation3 + $0x10] sm:$0xff] %vm2108, %v2017
        %2112 = vst.msk [vmem:[#allocation3 + $0x18] sm:$0xff] %vm2108, %v2019
        %2113 = vst.msk [vmem:[#allocation3 + $0x20] sm:$0xff] %vm2108, %v2021
        %2114 = vst.msk [vmem:[#allocation3 + $0x28] sm:$0xff] %vm2108, %v2023
        %2115 = vst.msk [vmem:[#allocation3 + $0x30] sm:$0xff] %vm2108, %v2025
        %2116 = vst.msk [vmem:[#allocation3 + $0x38] sm:$0xff] %vm2108, %v2027
        %2117 = vst.msk [vmem:[#allocation3 + $0x40] sm:$0xff] %vm2108, %v2029
        %2118 = vst.msk [vmem:[#allocation3 + $0x48] sm:$0xff] %vm2108, %v2031
        %2119 = vst.msk [vmem:[#allocation3 + $0x50] sm:$0xff] %vm2108, %v2033
        %2120 = vst.msk [vmem:[#allocation3 + $0x58] sm:$0xff] %vm2108, %v2035
        %2121 = vst.msk [vmem:[#allocation3 + $0x60] sm:$0xff] %vm2108, %v2037
        %2122 = vst.msk [vmem:[#allocation3 + $0x68] sm:$0xff] %vm2108, %v2039
        %2123 = vst.msk [vmem:[#allocation3 + $0x70] sm:$0xff] %vm2108, %v2041
        %2124 = vst.msk [vmem:[#allocation3 + $0x78] sm:$0xff] %vm2108, %v2043
        %2125 = vst.msk [vmem:[#allocation3 + $0x80] sm:$0xff] %vm2108, %v2045
        %2126 = vst.msk [vmem:[#allocation3 + $0x88] sm:$0xff] %vm2108, %v2047
        %2127 = vst.msk [vmem:[#allocation3 + $0x90] sm:$0xff] %vm2108, %v2049
        %2128 = vst.msk [vmem:[#allocation3 + $0x98] sm:$0xff] %vm2108, %v2051
        %2129 = vst.msk [vmem:[#allocation3 + $0xa0] sm:$0xff] %vm2108, %v2053
        %2130 = vst.msk [vmem:[#allocation3 + $0xa8] sm:$0xff] %vm2108, %v2055
        %2131 = vst.msk [vmem:[#allocation3 + $0xb0] sm:$0xff] %vm2108, %v2057
        %2132 = vst.msk [vmem:[#allocation3 + $0xb8] sm:$0xff] %vm2108, %v2059
        %2133 = vst.msk [vmem:[#allocation3 + $0xc0] sm:$0xff] %vm2108, %v2061
        %2134 = vst.msk [vmem:[#allocation3 + $0xc8] sm:$0xff] %vm2108, %v2063
        %2135 = vst.msk [vmem:[#allocation3 + $0xd0] sm:$0xff] %vm2108, %v2065
        %2136 = vst.msk [vmem:[#allocation3 + $0xd8] sm:$0xff] %vm2108, %v2067
        %2137 = vst.msk [vmem:[#allocation3 + $0xe0] sm:$0xff] %vm2108, %v2069
        %2138 = vst.msk [vmem:[#allocation3 + $0xe8] sm:$0xff] %vm2108, %v2071
        %2139 = vst.msk [vmem:[#allocation3 + $0xf0] sm:$0xff] %vm2108, %v2073
        %2140 = vst.msk [vmem:[#allocation3 + $0xf8] sm:$0xff] %vm2108, %v2075
        %v2141 = vrot.slane %v1369, 2
        %v2142 = vrot.slane %v1370, 2
        %v2143 = vsel %vm1665, %v2141, %v2142
        %v2144 = vrot.slane %v1371, 2
        %v2145 = vsel %vm1665, %v2142, %v2144
        %2146 = vrot.lane.b32.xlu0 %v1673, 40
        %v2147 = vpop.permute.xlu0 %2146
        %2148 = vrot.lane.b32.xlu0 %v1675, 40
        %v2149 = vpop.permute.xlu0 %2148
        %2150 = vrot.lane.b32.xlu0 %v1678, 40
        %v2151 = vpop.permute.xlu0 %2150
        %2152 = vrot.lane.b32.xlu0 %v1680, 40
        %v2153 = vpop.permute.xlu0 %2152
        %2154 = vrot.lane.b32.xlu0 %v1683, 40
        %v2155 = vpop.permute.xlu0 %2154
        %2156 = vrot.lane.b32.xlu0 %v1685, 40
        %v2157 = vpop.permute.xlu0 %2156
        %2158 = vrot.lane.b32.xlu0 %v1688, 40
        %v2159 = vpop.permute.xlu0 %2158
        %2160 = vrot.lane.b32.xlu0 %v1690, 40
        %v2161 = vpop.permute.xlu0 %2160
        %2162 = vrot.lane.b32.xlu0 %v1693, 40
        %v2163 = vpop.permute.xlu0 %2162
        %2164 = vrot.lane.b32.xlu0 %v1695, 40
        %v2165 = vpop.permute.xlu0 %2164
        %2166 = vrot.lane.b32.xlu0 %v1698, 40
        %v2167 = vpop.permute.xlu0 %2166
        %2168 = vrot.lane.b32.xlu0 %v1700, 40
        %v2169 = vpop.permute.xlu0 %2168
        %2170 = vrot.lane.b32.xlu0 %v1703, 40
        %v2171 = vpop.permute.xlu0 %2170
        %2172 = vrot.lane.b32.xlu0 %v1705, 40
        %v2173 = vpop.permute.xlu0 %2172
        %2174 = vrot.lane.b32.xlu0 %v1708, 40
        %v2175 = vpop.permute.xlu0 %2174
        %2176 = vrot.lane.b32.xlu0 %v1710, 40
        %v2177 = vpop.permute.xlu0 %2176
        %2178 = vrot.lane.b32.xlu0 %v1713, 40
        %v2179 = vpop.permute.xlu0 %2178
        %2180 = vrot.lane.b32.xlu0 %v1715, 40
        %v2181 = vpop.permute.xlu0 %2180
        %2182 = vrot.lane.b32.xlu0 %v1718, 40
        %v2183 = vpop.permute.xlu0 %2182
        %2184 = vrot.lane.b32.xlu0 %v1720, 40
        %v2185 = vpop.permute.xlu0 %2184
        %2186 = vrot.lane.b32.xlu0 %v1723, 40
        %v2187 = vpop.permute.xlu0 %2186
        %2188 = vrot.lane.b32.xlu0 %v1725, 40
        %v2189 = vpop.permute.xlu0 %2188
        %2190 = vrot.lane.b32.xlu0 %v1728, 40
        %v2191 = vpop.permute.xlu0 %2190
        %2192 = vrot.lane.b32.xlu0 %v1730, 40
        %v2193 = vpop.permute.xlu0 %2192
        %2194 = vrot.lane.b32.xlu0 %v1733, 40
        %v2195 = vpop.permute.xlu0 %2194
        %2196 = vrot.lane.b32.xlu0 %v1735, 40
        %v2197 = vpop.permute.xlu0 %2196
        %2198 = vrot.lane.b32.xlu0 %v1738, 40
        %v2199 = vpop.permute.xlu0 %2198
        %2200 = vrot.lane.b32.xlu0 %v1740, 40
        %v2201 = vpop.permute.xlu0 %2200
        %2202 = vrot.lane.b32.xlu0 %v1743, 40
        %v2203 = vpop.permute.xlu0 %2202
        %2204 = vrot.lane.b32.xlu0 %v1745, 40
        %v2205 = vpop.permute.xlu0 %2204
        %2206 = vrot.lane.b32.xlu0 %v2143, 40
        %v2207 = vpop.permute.xlu0 %2206
        %2208 = vrot.lane.b32.xlu0 %v2145, 40
        %v2209 = vpop.permute.xlu0 %2208
        %vm2242 = vcmask 392512
        %2243 = vst.msk [vmem:[#allocation3] sm:$0xff] %vm2242, %v2147
        %2244 = vst.msk [vmem:[#allocation3 + $0x8] sm:$0xff] %vm2242, %v2149
        %2245 = vst.msk [vmem:[#allocation3 + $0x10] sm:$0xff] %vm2242, %v2151
        %2246 = vst.msk [vmem:[#allocation3 + $0x18] sm:$0xff] %vm2242, %v2153
        %2247 = vst.msk [vmem:[#allocation3 + $0x20] sm:$0xff] %vm2242, %v2155
        %2248 = vst.msk [vmem:[#allocation3 + $0x28] sm:$0xff] %vm2242, %v2157
        %2249 = vst.msk [vmem:[#allocation3 + $0x30] sm:$0xff] %vm2242, %v2159
        %2250 = vst.msk [vmem:[#allocation3 + $0x38] sm:$0xff] %vm2242, %v2161
        %2251 = vst.msk [vmem:[#allocation3 + $0x40] sm:$0xff] %vm2242, %v2163
        %2252 = vst.msk [vmem:[#allocation3 + $0x48] sm:$0xff] %vm2242, %v2165
        %2253 = vst.msk [vmem:[#allocation3 + $0x50] sm:$0xff] %vm2242, %v2167
        %2254 = vst.msk [vmem:[#allocation3 + $0x58] sm:$0xff] %vm2242, %v2169
        %2255 = vst.msk [vmem:[#allocation3 + $0x60] sm:$0xff] %vm2242, %v2171
        %2256 = vst.msk [vmem:[#allocation3 + $0x68] sm:$0xff] %vm2242, %v2173
        %2257 = vst.msk [vmem:[#allocation3 + $0x70] sm:$0xff] %vm2242, %v2175
        %2258 = vst.msk [vmem:[#allocation3 + $0x78] sm:$0xff] %vm2242, %v2177
        %2259 = vst.msk [vmem:[#allocation3 + $0x80] sm:$0xff] %vm2242, %v2179
        %2260 = vst.msk [vmem:[#allocation3 + $0x88] sm:$0xff] %vm2242, %v2181
        %2261 = vst.msk [vmem:[#allocation3 + $0x90] sm:$0xff] %vm2242, %v2183
        %2262 = vst.msk [vmem:[#allocation3 + $0x98] sm:$0xff] %vm2242, %v2185
        %2263 = vst.msk [vmem:[#allocation3 + $0xa0] sm:$0xff] %vm2242, %v2187
        %2264 = vst.msk [vmem:[#allocation3 + $0xa8] sm:$0xff] %vm2242, %v2189
        %2265 = vst.msk [vmem:[#allocation3 + $0xb0] sm:$0xff] %vm2242, %v2191
        %2266 = vst.msk [vmem:[#allocation3 + $0xb8] sm:$0xff] %vm2242, %v2193
        %2267 = vst.msk [vmem:[#allocation3 + $0xc0] sm:$0xff] %vm2242, %v2195
        %2268 = vst.msk [vmem:[#allocation3 + $0xc8] sm:$0xff] %vm2242, %v2197
        %2269 = vst.msk [vmem:[#allocation3 + $0xd0] sm:$0xff] %vm2242, %v2199
        %2270 = vst.msk [vmem:[#allocation3 + $0xd8] sm:$0xff] %vm2242, %v2201
        %2271 = vst.msk [vmem:[#allocation3 + $0xe0] sm:$0xff] %vm2242, %v2203
        %2272 = vst.msk [vmem:[#allocation3 + $0xe8] sm:$0xff] %vm2242, %v2205
        %2273 = vst.msk [vmem:[#allocation3 + $0xf0] sm:$0xff] %vm2242, %v2207
        %2274 = vst.msk [vmem:[#allocation3 + $0xf8] sm:$0xff] %vm2242, %v2209
        %2277 = vrot.lane.b32.xlu0 %v1327, 48
        %v2278 = vpop.permute.xlu0 %2277
        %2279 = vrot.lane.b32.xlu0 %v1328, 48
        %v2280 = vpop.permute.xlu0 %2279
        %2281 = vrot.lane.b32.xlu0 %v1330, 48
        %v2282 = vpop.permute.xlu0 %2281
        %2283 = vrot.lane.b32.xlu0 %v1331, 48
        %v2284 = vpop.permute.xlu0 %2283
        %2285 = vrot.lane.b32.xlu0 %v1333, 48
        %v2286 = vpop.permute.xlu0 %2285
        %2287 = vrot.lane.b32.xlu0 %v1334, 48
        %v2288 = vpop.permute.xlu0 %2287
        %2289 = vrot.lane.b32.xlu0 %v1336, 48
        %v2290 = vpop.permute.xlu0 %2289
        %2291 = vrot.lane.b32.xlu0 %v1337, 48
        %v2292 = vpop.permute.xlu0 %2291
        %2293 = vrot.lane.b32.xlu0 %v1339, 48
        %v2294 = vpop.permute.xlu0 %2293
        %2295 = vrot.lane.b32.xlu0 %v1340, 48
        %v2296 = vpop.permute.xlu0 %2295
        %2297 = vrot.lane.b32.xlu0 %v1342, 48
        %v2298 = vpop.permute.xlu0 %2297
        %2299 = vrot.lane.b32.xlu0 %v1343, 48
        %v2300 = vpop.permute.xlu0 %2299
        %2301 = vrot.lane.b32.xlu0 %v1345, 48
        %v2302 = vpop.permute.xlu0 %2301
        %2303 = vrot.lane.b32.xlu0 %v1346, 48
        %v2304 = vpop.permute.xlu0 %2303
        %2305 = vrot.lane.b32.xlu0 %v1348, 48
        %v2306 = vpop.permute.xlu0 %2305
        %2307 = vrot.lane.b32.xlu0 %v1349, 48
        %v2308 = vpop.permute.xlu0 %2307
        %2309 = vrot.lane.b32.xlu0 %v1351, 48
        %v2310 = vpop.permute.xlu0 %2309
        %2311 = vrot.lane.b32.xlu0 %v1352, 48
        %v2312 = vpop.permute.xlu0 %2311
        %2313 = vrot.lane.b32.xlu0 %v1354, 48
        %v2314 = vpop.permute.xlu0 %2313
        %2315 = vrot.lane.b32.xlu0 %v1355, 48
        %v2316 = vpop.permute.xlu0 %2315
        %2317 = vrot.lane.b32.xlu0 %v1357, 48
        %v2318 = vpop.permute.xlu0 %2317
        %2319 = vrot.lane.b32.xlu0 %v1358, 48
        %v2320 = vpop.permute.xlu0 %2319
        %2321 = vrot.lane.b32.xlu0 %v1360, 48
        %v2322 = vpop.permute.xlu0 %2321
        %2323 = vrot.lane.b32.xlu0 %v1361, 48
        %v2324 = vpop.permute.xlu0 %2323
        %2325 = vrot.lane.b32.xlu0 %v1363, 48
        %v2326 = vpop.permute.xlu0 %2325
        %2327 = vrot.lane.b32.xlu0 %v1364, 48
        %v2328 = vpop.permute.xlu0 %2327
        %2329 = vrot.lane.b32.xlu0 %v1366, 48
        %v2330 = vpop.permute.xlu0 %2329
        %2331 = vrot.lane.b32.xlu0 %v1367, 48
        %v2332 = vpop.permute.xlu0 %2331
        %2333 = vrot.lane.b32.xlu0 %v1369, 48
        %v2334 = vpop.permute.xlu0 %2333
        %2335 = vrot.lane.b32.xlu0 %v1370, 48
        %v2336 = vpop.permute.xlu0 %2335
        %2337 = vrot.lane.b32.xlu0 %v1372, 48
        %v2338 = vpop.permute.xlu0 %2337
        %2339 = vrot.lane.b32.xlu0 %v1373, 48
        %v2340 = vpop.permute.xlu0 %2339
        %vm2373 = vcmask 458112
        %2374 = vst.msk [vmem:[#allocation3] sm:$0xff] %vm2373, %v2278
        %2375 = vst.msk [vmem:[#allocation3 + $0x8] sm:$0xff] %vm2373, %v2280
        %2376 = vst.msk [vmem:[#allocation3 + $0x10] sm:$0xff] %vm2373, %v2282
        %2377 = vst.msk [vmem:[#allocation3 + $0x18] sm:$0xff] %vm2373, %v2284
        %2378 = vst.msk [vmem:[#allocation3 + $0x20] sm:$0xff] %vm2373, %v2286
        %2379 = vst.msk [vmem:[#allocation3 + $0x28] sm:$0xff] %vm2373, %v2288
        %2380 = vst.msk [vmem:[#allocation3 + $0x30] sm:$0xff] %vm2373, %v2290
        %2381 = vst.msk [vmem:[#allocation3 + $0x38] sm:$0xff] %vm2373, %v2292
        %2382 = vst.msk [vmem:[#allocation3 + $0x40] sm:$0xff] %vm2373, %v2294
        %2383 = vst.msk [vmem:[#allocation3 + $0x48] sm:$0xff] %vm2373, %v2296
        %2384 = vst.msk [vmem:[#allocation3 + $0x50] sm:$0xff] %vm2373, %v2298
        %2385 = vst.msk [vmem:[#allocation3 + $0x58] sm:$0xff] %vm2373, %v2300
        %2386 = vst.msk [vmem:[#allocation3 + $0x60] sm:$0xff] %vm2373, %v2302
        %2387 = vst.msk [vmem:[#allocation3 + $0x68] sm:$0xff] %vm2373, %v2304
        %2388 = vst.msk [vmem:[#allocation3 + $0x70] sm:$0xff] %vm2373, %v2306
        %2389 = vst.msk [vmem:[#allocation3 + $0x78] sm:$0xff] %vm2373, %v2308
        %2390 = vst.msk [vmem:[#allocation3 + $0x80] sm:$0xff] %vm2373, %v2310
        %2391 = vst.msk [vmem:[#allocation3 + $0x88] sm:$0xff] %vm2373, %v2312
        %2392 = vst.msk [vmem:[#allocation3 + $0x90] sm:$0xff] %vm2373, %v2314
        %2393 = vst.msk [vmem:[#allocation3 + $0x98] sm:$0xff] %vm2373, %v2316
        %2394 = vst.msk [vmem:[#allocation3 + $0xa0] sm:$0xff] %vm2373, %v2318
        %2395 = vst.msk [vmem:[#allocation3 + $0xa8] sm:$0xff] %vm2373, %v2320
        %2396 = vst.msk [vmem:[#allocation3 + $0xb0] sm:$0xff] %vm2373, %v2322
        %2397 = vst.msk [vmem:[#allocation3 + $0xb8] sm:$0xff] %vm2373, %v2324
        %2398 = vst.msk [vmem:[#allocation3 + $0xc0] sm:$0xff] %vm2373, %v2326
        %2399 = vst.msk [vmem:[#allocation3 + $0xc8] sm:$0xff] %vm2373, %v2328
        %2400 = vst.msk [vmem:[#allocation3 + $0xd0] sm:$0xff] %vm2373, %v2330
        %2401 = vst.msk [vmem:[#allocation3 + $0xd8] sm:$0xff] %vm2373, %v2332
        %2402 = vst.msk [vmem:[#allocation3 + $0xe0] sm:$0xff] %vm2373, %v2334
        %2403 = vst.msk [vmem:[#allocation3 + $0xe8] sm:$0xff] %vm2373, %v2336
        %2404 = vst.msk [vmem:[#allocation3 + $0xf0] sm:$0xff] %vm2373, %v2338
        %2405 = vst.msk [vmem:[#allocation3 + $0xf8] sm:$0xff] %vm2373, %v2340
        %v2407 = vrot.slane %v1372, 1
        %v2408 = vrot.slane %v1373, 1
        %v2409 = vsel %vm1455, %v2407, %v2408
        %v2410 = vrot.slane %v1374, 1
        %v2411 = vsel %vm1455, %v2408, %v2410
        %2412 = vrot.lane.b32.xlu0 %v1468, 56
        %v2413 = vpop.permute.xlu0 %2412
        %2414 = vrot.lane.b32.xlu0 %v1470, 56
        %v2415 = vpop.permute.xlu0 %2414
        %2416 = vrot.lane.b32.xlu0 %v1473, 56
        %v2417 = vpop.permute.xlu0 %2416
        %2418 = vrot.lane.b32.xlu0 %v1475, 56
        %v2419 = vpop.permute.xlu0 %2418
        %2420 = vrot.lane.b32.xlu0 %v1478, 56
        %v2421 = vpop.permute.xlu0 %2420
        %2422 = vrot.lane.b32.xlu0 %v1480, 56
        %v2423 = vpop.permute.xlu0 %2422
        %2424 = vrot.lane.b32.xlu0 %v1483, 56
        %v2425 = vpop.permute.xlu0 %2424
        %2426 = vrot.lane.b32.xlu0 %v1485, 56
        %v2427 = vpop.permute.xlu0 %2426
        %2428 = vrot.lane.b32.xlu0 %v1488, 56
        %v2429 = vpop.permute.xlu0 %2428
        %2430 = vrot.lane.b32.xlu0 %v1490, 56
        %v2431 = vpop.permute.xlu0 %2430
        %2432 = vrot.lane.b32.xlu0 %v1493, 56
        %v2433 = vpop.permute.xlu0 %2432
        %2434 = vrot.lane.b32.xlu0 %v1495, 56
        %v2435 = vpop.permute.xlu0 %2434
        %2436 = vrot.lane.b32.xlu0 %v1498, 56
        %v2437 = vpop.permute.xlu0 %2436
        %2438 = vrot.lane.b32.xlu0 %v1500, 56
        %v2439 = vpop.permute.xlu0 %2438
        %2440 = vrot.lane.b32.xlu0 %v1503, 56
        %v2441 = vpop.permute.xlu0 %2440
        %2442 = vrot.lane.b32.xlu0 %v1505, 56
        %v2443 = vpop.permute.xlu0 %2442
        %2444 = vrot.lane.b32.xlu0 %v1508, 56
        %v2445 = vpop.permute.xlu0 %2444
        %2446 = vrot.lane.b32.xlu0 %v1510, 56
        %v2447 = vpop.permute.xlu0 %2446
        %2448 = vrot.lane.b32.xlu0 %v1513, 56
        %v2449 = vpop.permute.xlu0 %2448
        %2450 = vrot.lane.b32.xlu0 %v1515, 56
        %v2451 = vpop.permute.xlu0 %2450
        %2452 = vrot.lane.b32.xlu0 %v1518, 56
        %v2453 = vpop.permute.xlu0 %2452
        %2454 = vrot.lane.b32.xlu0 %v1520, 56
        %v2455 = vpop.permute.xlu0 %2454
        %2456 = vrot.lane.b32.xlu0 %v1523, 56
        %v2457 = vpop.permute.xlu0 %2456
        %2458 = vrot.lane.b32.xlu0 %v1525, 56
        %v2459 = vpop.permute.xlu0 %2458
        %2460 = vrot.lane.b32.xlu0 %v1528, 56
        %v2461 = vpop.permute.xlu0 %2460
        %2462 = vrot.lane.b32.xlu0 %v1530, 56
        %v2463 = vpop.permute.xlu0 %2462
        %2464 = vrot.lane.b32.xlu0 %v1533, 56
        %v2465 = vpop.permute.xlu0 %2464
        %2466 = vrot.lane.b32.xlu0 %v1535, 56
        %v2467 = vpop.permute.xlu0 %2466
        %2468 = vrot.lane.b32.xlu0 %v2009, 56
        %v2469 = vpop.permute.xlu0 %2468
        %2470 = vrot.lane.b32.xlu0 %v2011, 56
        %v2471 = vpop.permute.xlu0 %2470
        %2472 = vrot.lane.b32.xlu0 %v2409, 56
        %v2473 = vpop.permute.xlu0 %2472
        %2474 = vrot.lane.b32.xlu0 %v2411, 56
        %v2475 = vpop.permute.xlu0 %2474
        %vm2508 = vcmask 523712
        %2509 = vst.msk [vmem:[#allocation3] sm:$0xff] %vm2508, %v2413
        %2510 = vst.msk [vmem:[#allocation3 + $0x8] sm:$0xff] %vm2508, %v2415
        %2511 = vst.msk [vmem:[#allocation3 + $0x10] sm:$0xff] %vm2508, %v2417
        %2512 = vst.msk [vmem:[#allocation3 + $0x18] sm:$0xff] %vm2508, %v2419
        %2513 = vst.msk [vmem:[#allocation3 + $0x20] sm:$0xff] %vm2508, %v2421
        %2514 = vst.msk [vmem:[#allocation3 + $0x28] sm:$0xff] %vm2508, %v2423
        %2515 = vst.msk [vmem:[#allocation3 + $0x30] sm:$0xff] %vm2508, %v2425
        %2516 = vst.msk [vmem:[#allocation3 + $0x38] sm:$0xff] %vm2508, %v2427
        %2517 = vst.msk [vmem:[#allocation3 + $0x40] sm:$0xff] %vm2508, %v2429
        %2518 = vst.msk [vmem:[#allocation3 + $0x48] sm:$0xff] %vm2508, %v2431
        %2519 = vst.msk [vmem:[#allocation3 + $0x50] sm:$0xff] %vm2508, %v2433
        %2520 = vst.msk [vmem:[#allocation3 + $0x58] sm:$0xff] %vm2508, %v2435
        %2521 = vst.msk [vmem:[#allocation3 + $0x60] sm:$0xff] %vm2508, %v2437
        %2522 = vst.msk [vmem:[#allocation3 + $0x68] sm:$0xff] %vm2508, %v2439
        %2523 = vst.msk [vmem:[#allocation3 + $0x70] sm:$0xff] %vm2508, %v2441
        %2524 = vst.msk [vmem:[#allocation3 + $0x78] sm:$0xff] %vm2508, %v2443
        %2525 = vst.msk [vmem:[#allocation3 + $0x80] sm:$0xff] %vm2508, %v2445
        %2526 = vst.msk [vmem:[#allocation3 + $0x88] sm:$0xff] %vm2508, %v2447
        %2527 = vst.msk [vmem:[#allocation3 + $0x90] sm:$0xff] %vm2508, %v2449
        %2528 = vst.msk [vmem:[#allocation3 + $0x98] sm:$0xff] %vm2508, %v2451
        %2529 = vst.msk [vmem:[#allocation3 + $0xa0] sm:$0xff] %vm2508, %v2453
        %2530 = vst.msk [vmem:[#allocation3 + $0xa8] sm:$0xff] %vm2508, %v2455
        %2531 = vst.msk [vmem:[#allocation3 + $0xb0] sm:$0xff] %vm2508, %v2457
        %2532 = vst.msk [vmem:[#allocation3 + $0xb8] sm:$0xff] %vm2508, %v2459
        %2533 = vst.msk [vmem:[#allocation3 + $0xc0] sm:$0xff] %vm2508, %v2461
        %2534 = vst.msk [vmem:[#allocation3 + $0xc8] sm:$0xff] %vm2508, %v2463
        %2535 = vst.msk [vmem:[#allocation3 + $0xd0] sm:$0xff] %vm2508, %v2465
        %2536 = vst.msk [vmem:[#allocation3 + $0xd8] sm:$0xff] %vm2508, %v2467
        %2537 = vst.msk [vmem:[#allocation3 + $0xe0] sm:$0xff] %vm2508, %v2469
        %2538 = vst.msk [vmem:[#allocation3 + $0xe8] sm:$0xff] %vm2508, %v2471
        %2539 = vst.msk [vmem:[#allocation3 + $0xf0] sm:$0xff] %vm2508, %v2473
        %2540 = vst.msk [vmem:[#allocation3 + $0xf8] sm:$0xff] %vm2508, %v2475
        %v2541 = vrot.slane %v1372, 2
        %v2542 = vrot.slane %v1373, 2
        %v2543 = vsel %vm1665, %v2541, %v2542
        %v2544 = vrot.slane %v1374, 2
        %v2545 = vsel %vm1665, %v2542, %v2544
        %2546 = vrot.lane.b32.xlu0 %v1678, 64
        %v2547 = vpop.permute.xlu0 %2546
        %2548 = vrot.lane.b32.xlu0 %v1680, 64
        %v2549 = vpop.permute.xlu0 %2548
        %2550 = vrot.lane.b32.xlu0 %v1683, 64
        %v2551 = vpop.permute.xlu0 %2550
        %2552 = vrot.lane.b32.xlu0 %v1685, 64
        %v2553 = vpop.permute.xlu0 %2552
        %2554 = vrot.lane.b32.xlu0 %v1688, 64
        %v2555 = vpop.permute.xlu0 %2554
        %2556 = vrot.lane.b32.xlu0 %v1690, 64
        %v2557 = vpop.permute.xlu0 %2556
        %2558 = vrot.lane.b32.xlu0 %v1693, 64
        %v2559 = vpop.permute.xlu0 %2558
        %2560 = vrot.lane.b32.xlu0 %v1695, 64
        %v2561 = vpop.permute.xlu0 %2560
        %2562 = vrot.lane.b32.xlu0 %v1698, 64
        %v2563 = vpop.permute.xlu0 %2562
        %2564 = vrot.lane.b32.xlu0 %v1700, 64
        %v2565 = vpop.permute.xlu0 %2564
        %2566 = vrot.lane.b32.xlu0 %v1703, 64
        %v2567 = vpop.permute.xlu0 %2566
        %2568 = vrot.lane.b32.xlu0 %v1705, 64
        %v2569 = vpop.permute.xlu0 %2568
        %2570 = vrot.lane.b32.xlu0 %v1708, 64
        %v2571 = vpop.permute.xlu0 %2570
        %2572 = vrot.lane.b32.xlu0 %v1710, 64
        %v2573 = vpop.permute.xlu0 %2572
        %2574 = vrot.lane.b32.xlu0 %v1713, 64
        %v2575 = vpop.permute.xlu0 %2574
        %2576 = vrot.lane.b32.xlu0 %v1715, 64
        %v2577 = vpop.permute.xlu0 %2576
        %2578 = vrot.lane.b32.xlu0 %v1718, 64
        %v2579 = vpop.permute.xlu0 %2578
        %2580 = vrot.lane.b32.xlu0 %v1720, 64
        %v2581 = vpop.permute.xlu0 %2580
        %2582 = vrot.lane.b32.xlu0 %v1723, 64
        %v2583 = vpop.permute.xlu0 %2582
        %2584 = vrot.lane.b32.xlu0 %v1725, 64
        %v2585 = vpop.permute.xlu0 %2584
        %2586 = vrot.lane.b32.xlu0 %v1728, 64
        %v2587 = vpop.permute.xlu0 %2586
        %2588 = vrot.lane.b32.xlu0 %v1730, 64
        %v2589 = vpop.permute.xlu0 %2588
        %2590 = vrot.lane.b32.xlu0 %v1733, 64
        %v2591 = vpop.permute.xlu0 %2590
        %2592 = vrot.lane.b32.xlu0 %v1735, 64
        %v2593 = vpop.permute.xlu0 %2592
        %2594 = vrot.lane.b32.xlu0 %v1738, 64
        %v2595 = vpop.permute.xlu0 %2594
        %2596 = vrot.lane.b32.xlu0 %v1740, 64
        %v2597 = vpop.permute.xlu0 %2596
        %2598 = vrot.lane.b32.xlu0 %v1743, 64
        %v2599 = vpop.permute.xlu0 %2598
        %2600 = vrot.lane.b32.xlu0 %v1745, 64
        %v2601 = vpop.permute.xlu0 %2600
        %2602 = vrot.lane.b32.xlu0 %v2143, 64
        %v2603 = vpop.permute.xlu0 %2602
        %2604 = vrot.lane.b32.xlu0 %v2145, 64
        %v2605 = vpop.permute.xlu0 %2604
        %2606 = vrot.lane.b32.xlu0 %v2543, 64
        %v2607 = vpop.permute.xlu0 %2606
        %2608 = vrot.lane.b32.xlu0 %v2545, 64
        %v2609 = vpop.permute.xlu0 %2608
        %vm2642 = vcmask 589312
        %2643 = vst.msk [vmem:[#allocation3] sm:$0xff] %vm2642, %v2547
        %2644 = vst.msk [vmem:[#allocation3 + $0x8] sm:$0xff] %vm2642, %v2549
        %2645 = vst.msk [vmem:[#allocation3 + $0x10] sm:$0xff] %vm2642, %v2551
        %2646 = vst.msk [vmem:[#allocation3 + $0x18] sm:$0xff] %vm2642, %v2553
        %2647 = vst.msk [vmem:[#allocation3 + $0x20] sm:$0xff] %vm2642, %v2555
        %2648 = vst.msk [vmem:[#allocation3 + $0x28] sm:$0xff] %vm2642, %v2557
        %2649 = vst.msk [vmem:[#allocation3 + $0x30] sm:$0xff] %vm2642, %v2559
        %2650 = vst.msk [vmem:[#allocation3 + $0x38] sm:$0xff] %vm2642, %v2561
        %2651 = vst.msk [vmem:[#allocation3 + $0x40] sm:$0xff] %vm2642, %v2563
        %2652 = vst.msk [vmem:[#allocation3 + $0x48] sm:$0xff] %vm2642, %v2565
        %2653 = vst.msk [vmem:[#allocation3 + $0x50] sm:$0xff] %vm2642, %v2567
        %2654 = vst.msk [vmem:[#allocation3 + $0x58] sm:$0xff] %vm2642, %v2569
        %2655 = vst.msk [vmem:[#allocation3 + $0x60] sm:$0xff] %vm2642, %v2571
        %2656 = vst.msk [vmem:[#allocation3 + $0x68] sm:$0xff] %vm2642, %v2573
        %2657 = vst.msk [vmem:[#allocation3 + $0x70] sm:$0xff] %vm2642, %v2575
        %2658 = vst.msk [vmem:[#allocation3 + $0x78] sm:$0xff] %vm2642, %v2577
        %2659 = vst.msk [vmem:[#allocation3 + $0x80] sm:$0xff] %vm2642, %v2579
        %2660 = vst.msk [vmem:[#allocation3 + $0x88] sm:$0xff] %vm2642, %v2581
        %2661 = vst.msk [vmem:[#allocation3 + $0x90] sm:$0xff] %vm2642, %v2583
        %2662 = vst.msk [vmem:[#allocation3 + $0x98] sm:$0xff] %vm2642, %v2585
        %2663 = vst.msk [vmem:[#allocation3 + $0xa0] sm:$0xff] %vm2642, %v2587
        %2664 = vst.msk [vmem:[#allocation3 + $0xa8] sm:$0xff] %vm2642, %v2589
        %2665 = vst.msk [vmem:[#allocation3 + $0xb0] sm:$0xff] %vm2642, %v2591
        %2666 = vst.msk [vmem:[#allocation3 + $0xb8] sm:$0xff] %vm2642, %v2593
        %2667 = vst.msk [vmem:[#allocation3 + $0xc0] sm:$0xff] %vm2642, %v2595
        %2668 = vst.msk [vmem:[#allocation3 + $0xc8] sm:$0xff] %vm2642, %v2597
        %2669 = vst.msk [vmem:[#allocation3 + $0xd0] sm:$0xff] %vm2642, %v2599
        %2670 = vst.msk [vmem:[#allocation3 + $0xd8] sm:$0xff] %vm2642, %v2601
        %2671 = vst.msk [vmem:[#allocation3 + $0xe0] sm:$0xff] %vm2642, %v2603
        %2672 = vst.msk [vmem:[#allocation3 + $0xe8] sm:$0xff] %vm2642, %v2605
        %2673 = vst.msk [vmem:[#allocation3 + $0xf0] sm:$0xff] %vm2642, %v2607
        %2674 = vst.msk [vmem:[#allocation3 + $0xf8] sm:$0xff] %vm2642, %v2609
        %v2675 = vld [vmem:[#allocation3] sm:$0xff]
        %v2676 = vld [vmem:[#allocation3 + $0x8] sm:$0xff]
        %v2677 = vld [vmem:[#allocation3 + $0x10] sm:$0xff]
        %v2678 = vld [vmem:[#allocation3 + $0x18] sm:$0xff]
        %v2679 = vld [vmem:[#allocation3 + $0x20] sm:$0xff]
        %v2680 = vld [vmem:[#allocation3 + $0x28] sm:$0xff]
        %v2681 = vld [vmem:[#allocation3 + $0x30] sm:$0xff]
        %v2682 = vld [vmem:[#allocation3 + $0x38] sm:$0xff]
        %v2683 = vld [vmem:[#allocation3 + $0x40] sm:$0xff]
        %v2684 = vld [vmem:[#allocation3 + $0x48] sm:$0xff]
        %v2685 = vld [vmem:[#allocation3 + $0x50] sm:$0xff]
        %v2686 = vld [vmem:[#allocation3 + $0x58] sm:$0xff]
        %v2687 = vld [vmem:[#allocation3 + $0x60] sm:$0xff]
        %v2688 = vld [vmem:[#allocation3 + $0x68] sm:$0xff]
        %v2689 = vld [vmem:[#allocation3 + $0x70] sm:$0xff]
        %v2690 = vld [vmem:[#allocation3 + $0x78] sm:$0xff]
        %v2691 = vld [vmem:[#allocation3 + $0x80] sm:$0xff]
        %v2692 = vld [vmem:[#allocation3 + $0x88] sm:$0xff]
        %v2693 = vld [vmem:[#allocation3 + $0x90] sm:$0xff]
        %v2694 = vld [vmem:[#allocation3 + $0x98] sm:$0xff]
        %v2695 = vld [vmem:[#allocation3 + $0xa0] sm:$0xff]
        %v2696 = vld [vmem:[#allocation3 + $0xa8] sm:$0xff]
        %v2697 = vld [vmem:[#allocation3 + $0xb0] sm:$0xff]
        %v2698 = vld [vmem:[#allocation3 + $0xb8] sm:$0xff]
        %v2699 = vld [vmem:[#allocation3 + $0xc0] sm:$0xff]
        %v2700 = vld [vmem:[#allocation3 + $0xc8] sm:$0xff]
        %v2701 = vld [vmem:[#allocation3 + $0xd0] sm:$0xff]
        %v2702 = vld [vmem:[#allocation3 + $0xd8] sm:$0xff]
        %v2703 = vld [vmem:[#allocation3 + $0xe0] sm:$0xff]
        %v2704 = vld [vmem:[#allocation3 + $0xe8] sm:$0xff]
        %v2705 = vld [vmem:[#allocation3 + $0xf0] sm:$0xff]
        %v2706 = vld [vmem:[#allocation3 + $0xf8] sm:$0xff]
        %v2707 = vld [vmem:[%s8] sm:$0xff]
        %v2708 = vld [vmem:[%s8 + $0x8] sm:$0xff]
        %v2709 = vld [vmem:[%s8 + $0x10] sm:$0xff]
        %v2710 = vld [vmem:[%s8 + $0x18] sm:$0xff]
        %v2711 = vld [vmem:[%s8 + $0x20] sm:$0xff]
        %v2712 = vld [vmem:[%s8 + $0x28] sm:$0xff]
        %v2713 = vld [vmem:[%s8 + $0x30] sm:$0xff]
        %v2714 = vld [vmem:[%s8 + $0x38] sm:$0xff]
        %v2715 = vld [vmem:[%s8 + $0x40] sm:$0xff]
        %vm2716 = vcmask 588800
        %v2718 = vsel %vm2716, %v2675, 0
        %v2721 = vsel %vm2716, %v2676, 0
        %v2724 = vsel %vm2716, %v2677, 0
        %v2727 = vsel %vm2716, %v2678, 0
        %v2730 = vsel %vm2716, %v2679, 0
        %v2733 = vsel %vm2716, %v2680, 0
        %v2736 = vsel %vm2716, %v2681, 0
        %v2739 = vsel %vm2716, %v2682, 0
        %v2742 = vsel %vm2716, %v2683, 0
        %v2745 = vsel %vm2716, %v2684, 0
        %v2748 = vsel %vm2716, %v2685, 0
        %v2751 = vsel %vm2716, %v2686, 0
        %v2754 = vsel %vm2716, %v2687, 0
        %v2757 = vsel %vm2716, %v2688, 0
        %v2760 = vsel %vm2716, %v2689, 0
        %v2763 = vsel %vm2716, %v2690, 0
        %v2766 = vsel %vm2716, %v2691, 0
        %v2769 = vsel %vm2716, %v2692, 0
        %v2772 = vsel %vm2716, %v2693, 0
        %v2775 = vsel %vm2716, %v2694, 0
        %v2778 = vsel %vm2716, %v2695, 0
        %v2781 = vsel %vm2716, %v2696, 0
        %v2784 = vsel %vm2716, %v2697, 0
        %v2787 = vsel %vm2716, %v2698, 0
        %v2790 = vsel %vm2716, %v2699, 0
        %v2793 = vsel %vm2716, %v2700, 0
        %v2796 = vsel %vm2716, %v2701, 0
        %v2799 = vsel %vm2716, %v2702, 0
        %v2802 = vsel %vm2716, %v2703, 0
        %v2805 = vsel %vm2716, %v2704, 0
        %v2808 = vsel %vm2716, %v2705, 0
        %v2811 = vsel %vm2716, %v2706, 0
        %2813 = vmatpush.msra.mxu0 0.0
        %2814 = vmatpush.msra.mxu0 0.0
        %2815 = vmatpush.msra.mxu0 0.0
        %2816 = vmatpush.msra.mxu0 0.0
        %2817 = vmatpush.msra.mxu0 0.0
        %2818 = vmatpush.msra.mxu0 0.0
        %2819 = vmatpush.msra.mxu0 0.0
        %2820 = vmatpush.msra.mxu0 %v2715
        %2821 = vmatpush.msra.mxu0 %v2714
        %2822 = vmatpush.msra.mxu0 %v2713
        %2823 = vmatpush.msra.mxu0 %v2712
        %2824 = vmatpush.msra.mxu0 %v2711
        %2825 = vmatpush.msra.mxu0 %v2710
        %2826 = vmatpush.msra.mxu0 %v2709
        %2827 = vmatpush.msra.mxu0 %v2708
        %2828 = vmatpush.msra.mxu0 %v2707
        %2829 = vmatmul.f32.gmra.mxu0 %v2718
        %v2830 = vpop.f32.mrf.mxu0
        %v2831 = vadd.f32 0.0, %v2830
        %2832 = vmatmul.f32.gmra.mxu0 %v2721
        %v2833 = vpop.f32.mrf.mxu0
        %v2834 = vadd.f32 0.0, %v2833
        %2835 = vmatmul.f32.gmra.mxu0 %v2724
        %v2836 = vpop.f32.mrf.mxu0
        %v2837 = vadd.f32 0.0, %v2836
        %2838 = vmatmul.f32.gmra.mxu0 %v2727
        %v2839 = vpop.f32.mrf.mxu0
        %v2840 = vadd.f32 0.0, %v2839
        %2841 = vmatmul.f32.gmra.mxu0 %v2730
        %v2842 = vpop.f32.mrf.mxu0
        %v2843 = vadd.f32 0.0, %v2842
        %2844 = vmatmul.f32.gmra.mxu0 %v2733
        %v2845 = vpop.f32.mrf.mxu0
        %v2846 = vadd.f32 0.0, %v2845
        %2847 = vmatmul.f32.gmra.mxu0 %v2736
        %v2848 = vpop.f32.mrf.mxu0
        %v2849 = vadd.f32 0.0, %v2848
        %2850 = vmatmul.f32.gmra.mxu0 %v2739
        %v2851 = vpop.f32.mrf.mxu0
        %v2852 = vadd.f32 0.0, %v2851
        %2853 = vmatmul.f32.gmra.mxu0 %v2742
        %v2854 = vpop.f32.mrf.mxu0
        %v2855 = vadd.f32 0.0, %v2854
        %2856 = vmatmul.f32.gmra.mxu0 %v2745
        %v2857 = vpop.f32.mrf.mxu0
        %v2858 = vadd.f32 0.0, %v2857
        %2859 = vmatmul.f32.gmra.mxu0 %v2748
        %v2860 = vpop.f32.mrf.mxu0
        %v2861 = vadd.f32 0.0, %v2860
        %2862 = vmatmul.f32.gmra.mxu0 %v2751
        %v2863 = vpop.f32.mrf.mxu0
        %v2864 = vadd.f32 0.0, %v2863
        %2865 = vmatmul.f32.gmra.mxu0 %v2754
        %v2866 = vpop.f32.mrf.mxu0
        %v2867 = vadd.f32 0.0, %v2866
        %2868 = vmatmul.f32.gmra.mxu0 %v2757
        %v2869 = vpop.f32.mrf.mxu0
        %v2870 = vadd.f32 0.0, %v2869
        %2871 = vmatmul.f32.gmra.mxu0 %v2760
        %v2872 = vpop.f32.mrf.mxu0
        %v2873 = vadd.f32 0.0, %v2872
        %2874 = vmatmul.f32.gmra.mxu0 %v2763
        %v2875 = vpop.f32.mrf.mxu0
        %v2876 = vadd.f32 0.0, %v2875
        %2877 = vmatmul.f32.gmra.mxu0 %v2766
        %v2878 = vpop.f32.mrf.mxu0
        %v2879 = vadd.f32 0.0, %v2878
        %2880 = vmatmul.f32.gmra.mxu0 %v2769
        %v2881 = vpop.f32.mrf.mxu0
        %v2882 = vadd.f32 0.0, %v2881
        %2883 = vmatmul.f32.gmra.mxu0 %v2772
        %v2884 = vpop.f32.mrf.mxu0
        %v2885 = vadd.f32 0.0, %v2884
        %2886 = vmatmul.f32.gmra.mxu0 %v2775
        %v2887 = vpop.f32.mrf.mxu0
        %v2888 = vadd.f32 0.0, %v2887
        %2889 = vmatmul.f32.gmra.mxu0 %v2778
        %v2890 = vpop.f32.mrf.mxu0
        %v2891 = vadd.f32 0.0, %v2890
        %2892 = vmatmul.f32.gmra.mxu0 %v2781
        %v2893 = vpop.f32.mrf.mxu0
        %v2894 = vadd.f32 0.0, %v2893
        %2895 = vmatmul.f32.gmra.mxu0 %v2784
        %v2896 = vpop.f32.mrf.mxu0
        %v2897 = vadd.f32 0.0, %v2896
        %2898 = vmatmul.f32.gmra.mxu0 %v2787
        %v2899 = vpop.f32.mrf.mxu0
        %v2900 = vadd.f32 0.0, %v2899
        %2901 = vmatmul.f32.gmra.mxu0 %v2790
        %v2902 = vpop.f32.mrf.mxu0
        %v2903 = vadd.f32 0.0, %v2902
        %2904 = vmatmul.f32.gmra.mxu0 %v2793
        %v2905 = vpop.f32.mrf.mxu0
        %v2906 = vadd.f32 0.0, %v2905
        %2907 = vmatmul.f32.gmra.mxu0 %v2796
        %v2908 = vpop.f32.mrf.mxu0
        %v2909 = vadd.f32 0.0, %v2908
        %2910 = vmatmul.f32.gmra.mxu0 %v2799
        %v2911 = vpop.f32.mrf.mxu0
        %v2912 = vadd.f32 0.0, %v2911
        %2913 = vmatmul.f32.gmra.mxu0 %v2802
        %v2914 = vpop.f32.mrf.mxu0
        %v2915 = vadd.f32 0.0, %v2914
        %2916 = vmatmul.f32.gmra.mxu0 %v2805
        %v2917 = vpop.f32.mrf.mxu0
        %v2918 = vadd.f32 0.0, %v2917
        %2919 = vmatmul.f32.gmra.mxu0 %v2808
        %v2920 = vpop.f32.mrf.mxu0
        %v2921 = vadd.f32 0.0, %v2920
        %2922 = vmatmul.f32.gmra.mxu0 %v2811
        %v2923 = vpop.f32.mrf.mxu0
        %v2924 = vadd.f32 0.0, %v2923
        %2925 = vdwg.mxu0
        %v2926 = vld [vmem:[%s6] sm:$0xff]
        %v2927 = vsel %vm472, %v2831, 0.0
        %v2928 = vsel %vm472, %v2834, 0.0
        %v2929 = vadd.f32 %v2927, %v2928
        %v2930 = vsel %vm472, %v2837, 0.0
        %v2931 = vadd.f32 %v2929, %v2930
        %v2932 = vsel %vm472, %v2840, 0.0
        %v2933 = vadd.f32 %v2931, %v2932
        %v2934 = vsel %vm472, %v2843, 0.0
        %v2935 = vadd.f32 %v2933, %v2934
        %v2936 = vsel %vm472, %v2846, 0.0
        %v2937 = vadd.f32 %v2935, %v2936
        %v2938 = vsel %vm472, %v2849, 0.0
        %v2939 = vadd.f32 %v2937, %v2938
        %v2940 = vsel %vm472, %v2852, 0.0
        %v2941 = vadd.f32 %v2939, %v2940
        %v2942 = vsel %vm472, %v2855, 0.0
        %v2943 = vadd.f32 %v2941, %v2942
        %v2944 = vsel %vm472, %v2858, 0.0
        %v2945 = vadd.f32 %v2943, %v2944
        %v2946 = vsel %vm472, %v2861, 0.0
        %v2947 = vadd.f32 %v2945, %v2946
        %v2948 = vsel %vm472, %v2864, 0.0
        %v2949 = vadd.f32 %v2947, %v2948
        %v2950 = vsel %vm472, %v2867, 0.0
        %v2951 = vadd.f32 %v2949, %v2950
        %v2952 = vsel %vm472, %v2870, 0.0
        %v2953 = vadd.f32 %v2951, %v2952
        %v2954 = vsel %vm472, %v2873, 0.0
        %v2955 = vadd.f32 %v2953, %v2954
        %v2956 = vsel %vm472, %v2876, 0.0
        %v2957 = vadd.f32 %v2955, %v2956
        %v2958 = vsel %vm472, %v2879, 0.0
        %v2959 = vadd.f32 %v2957, %v2958
        %v2960 = vsel %vm472, %v2882, 0.0
        %v2961 = vadd.f32 %v2959, %v2960
        %v2962 = vsel %vm472, %v2885, 0.0
        %v2963 = vadd.f32 %v2961, %v2962
        %v2964 = vsel %vm472, %v2888, 0.0
        %v2965 = vadd.f32 %v2963, %v2964
        %v2966 = vsel %vm472, %v2891, 0.0
        %v2967 = vadd.f32 %v2965, %v2966
        %v2968 = vsel %vm472, %v2894, 0.0
        %v2969 = vadd.f32 %v2967, %v2968
        %v2970 = vsel %vm472, %v2897, 0.0
        %v2971 = vadd.f32 %v2969, %v2970
        %v2972 = vsel %vm472, %v2900, 0.0
        %v2973 = vadd.f32 %v2971, %v2972
        %v2974 = vsel %vm472, %v2903, 0.0
        %v2975 = vadd.f32 %v2973, %v2974
        %v2976 = vsel %vm472, %v2906, 0.0
        %v2977 = vadd.f32 %v2975, %v2976
        %v2978 = vsel %vm472, %v2909, 0.0
        %v2979 = vadd.f32 %v2977, %v2978
        %v2980 = vsel %vm472, %v2912, 0.0
        %v2981 = vadd.f32 %v2979, %v2980
        %v2982 = vsel %vm472, %v2915, 0.0
        %v2983 = vadd.f32 %v2981, %v2982
        %v2984 = vsel %vm472, %v2918, 0.0
        %v2985 = vadd.f32 %v2983, %v2984
        %v2986 = vsel %vm472, %v2921, 0.0
        %v2987 = vadd.f32 %v2985, %v2986
        %v2988 = vsel %vm472, %v2924, 0.0
        %v2989 = vadd.f32 %v2987, %v2988
        %v2990 = vrot.slane %v2989, 4
        %v2991 = vadd.f32 %v2989, %v2990
        %v2992 = vrot.slane %v2991, 2
        %v2993 = vadd.f32 %v2991, %v2992
        %v2994 = vrot.slane %v2993, 1
        %v2995 = vadd.f32 %v2993, %v2994
        %v2996 = vmul.f32 %v2831, %v2831
        %v2997 = vmul.f32 %v2834, %v2834
        %v2998 = vmul.f32 %v2837, %v2837
        %v2999 = vmul.f32 %v2840, %v2840
        %v3000 = vmul.f32 %v2843, %v2843
        %v3001 = vmul.f32 %v2846, %v2846
        %v3002 = vmul.f32 %v2849, %v2849
        %v3003 = vmul.f32 %v2852, %v2852
        %v3004 = vmul.f32 %v2855, %v2855
        %v3005 = vmul.f32 %v2858, %v2858
        %v3006 = vmul.f32 %v2861, %v2861
        %v3007 = vmul.f32 %v2864, %v2864
        %v3008 = vmul.f32 %v2867, %v2867
        %v3009 = vmul.f32 %v2870, %v2870
        %v3010 = vmul.f32 %v2873, %v2873
        %v3011 = vmul.f32 %v2876, %v2876
        %v3012 = vmul.f32 %v2879, %v2879
        %v3013 = vmul.f32 %v2882, %v2882
        %v3014 = vmul.f32 %v2885, %v2885
        %v3015 = vmul.f32 %v2888, %v2888
        %v3016 = vmul.f32 %v2891, %v2891
        %v3017 = vmul.f32 %v2894, %v2894
        %v3018 = vmul.f32 %v2897, %v2897
        %v3019 = vmul.f32 %v2900, %v2900
        %v3020 = vmul.f32 %v2903, %v2903
        %v3021 = vmul.f32 %v2906, %v2906
        %v3022 = vmul.f32 %v2909, %v2909
        %v3023 = vmul.f32 %v2912, %v2912
        %v3024 = vmul.f32 %v2915, %v2915
        %v3025 = vmul.f32 %v2918, %v2918
        %v3026 = vmul.f32 %v2921, %v2921
        %v3027 = vmul.f32 %v2924, %v2924
        %v3028 = vsel %vm472, %v2996, 0.0
        %v3029 = vsel %vm472, %v2997, 0.0
        %v3030 = vadd.f32 %v3028, %v3029
        %v3031 = vsel %vm472, %v2998, 0.0
        %v3032 = vadd.f32 %v3030, %v3031
        %v3033 = vsel %vm472, %v2999, 0.0
        %v3034 = vadd.f32 %v3032, %v3033
        %v3035 = vsel %vm472, %v3000, 0.0
        %v3036 = vadd.f32 %v3034, %v3035
        %v3037 = vsel %vm472, %v3001, 0.0
        %v3038 = vadd.f32 %v3036, %v3037
        %v3039 = vsel %vm472, %v3002, 0.0
        %v3040 = vadd.f32 %v3038, %v3039
        %v3041 = vsel %vm472, %v3003, 0.0
        %v3042 = vadd.f32 %v3040, %v3041
        %v3043 = vsel %vm472, %v3004, 0.0
        %v3044 = vadd.f32 %v3042, %v3043
        %v3045 = vsel %vm472, %v3005, 0.0
        %v3046 = vadd.f32 %v3044, %v3045
        %v3047 = vsel %vm472, %v3006, 0.0
        %v3048 = vadd.f32 %v3046, %v3047
        %v3049 = vsel %vm472, %v3007, 0.0
        %v3050 = vadd.f32 %v3048, %v3049
        %v3051 = vsel %vm472, %v3008, 0.0
        %v3052 = vadd.f32 %v3050, %v3051
        %v3053 = vsel %vm472, %v3009, 0.0
        %v3054 = vadd.f32 %v3052, %v3053
        %v3055 = vsel %vm472, %v3010, 0.0
        %v3056 = vadd.f32 %v3054, %v3055
        %v3057 = vsel %vm472, %v3011, 0.0
        %v3058 = vadd.f32 %v3056, %v3057
        %v3059 = vsel %vm472, %v3012, 0.0
        %v3060 = vadd.f32 %v3058, %v3059
        %v3061 = vsel %vm472, %v3013, 0.0
        %v3062 = vadd.f32 %v3060, %v3061
        %v3063 = vsel %vm472, %v3014, 0.0
        %v3064 = vadd.f32 %v3062, %v3063
        %v3065 = vsel %vm472, %v3015, 0.0
        %v3066 = vadd.f32 %v3064, %v3065
        %v3067 = vsel %vm472, %v3016, 0.0
        %v3068 = vadd.f32 %v3066, %v3067
        %v3069 = vsel %vm472, %v3017, 0.0
        %v3070 = vadd.f32 %v3068, %v3069
        %v3071 = vsel %vm472, %v3018, 0.0
        %v3072 = vadd.f32 %v3070, %v3071
        %v3073 = vsel %vm472, %v3019, 0.0
        %v3074 = vadd.f32 %v3072, %v3073
        %v3075 = vsel %vm472, %v3020, 0.0
        %v3076 = vadd.f32 %v3074, %v3075
        %v3077 = vsel %vm472, %v3021, 0.0
        %v3078 = vadd.f32 %v3076, %v3077
        %v3079 = vsel %vm472, %v3022, 0.0
        %v3080 = vadd.f32 %v3078, %v3079
        %v3081 = vsel %vm472, %v3023, 0.0
        %v3082 = vadd.f32 %v3080, %v3081
        %v3083 = vsel %vm472, %v3024, 0.0
        %v3084 = vadd.f32 %v3082, %v3083
        %v3085 = vsel %vm472, %v3025, 0.0
        %v3086 = vadd.f32 %v3084, %v3085
        %v3087 = vsel %vm472, %v3026, 0.0
        %v3088 = vadd.f32 %v3086, %v3087
        %v3089 = vsel %vm472, %v3027, 0.0
        %v3090 = vadd.f32 %v3088, %v3089
        %v3091 = vrot.slane %v3090, 4
        %v3092 = vadd.f32 %v3090, %v3091
        %v3093 = vrot.slane %v3092, 2
        %v3094 = vadd.f32 %v3092, %v3093
        %v3095 = vrot.slane %v3094, 1
        %v3096 = vadd.f32 %v3094, %v3095
        %v3098 = vsel %vm472, %v2995, 0
        %3100 = vmatpush.msra.mxu0 0.0
        %3101 = vmatpush.msra.mxu0 0.0
        %3102 = vmatpush.msra.mxu0 0.0
        %3103 = vmatpush.msra.mxu0 0.0
        %3104 = vmatpush.msra.mxu0 0.0
        %3105 = vmatpush.msra.mxu0 0.0
        %3106 = vmatpush.msra.mxu0 0.0
        %3107 = vmatpush.msra.mxu0 0.0
        %3108 = vmatpush.msra.mxu0 0.0
        %3109 = vmatpush.msra.mxu0 0.0
        %3110 = vmatpush.msra.mxu0 0.0
        %3111 = vmatpush.msra.mxu0 0.0
        %3112 = vmatpush.msra.mxu0 0.0
        %3113 = vmatpush.msra.mxu0 0.0
        %3114 = vmatpush.msra.mxu0 0.0
        %3115 = vmatpush.msra.mxu0 %v2926
        %3116 = vmatmul.f32.gmra.mxu0 %v3098
        %v3117 = vpop.f32.mrf.mxu0
        %v3118 = vadd.f32 0.0, %v3117
        %3119 = vdwg.mxu0
        %v3121 = vsel %vm472, %v3096, 0
        %3123 = vmatpush.msra.mxu0 0.0
        %3124 = vmatpush.msra.mxu0 0.0
        %3125 = vmatpush.msra.mxu0 0.0
        %3126 = vmatpush.msra.mxu0 0.0
        %3127 = vmatpush.msra.mxu0 0.0
        %3128 = vmatpush.msra.mxu0 0.0
        %3129 = vmatpush.msra.mxu0 0.0
        %3130 = vmatpush.msra.mxu0 0.0
        %3131 = vmatpush.msra.mxu0 0.0
        %3132 = vmatpush.msra.mxu0 0.0
        %3133 = vmatpush.msra.mxu0 0.0
        %3134 = vmatpush.msra.mxu0 0.0
        %3135 = vmatpush.msra.mxu0 0.0
        %3136 = vmatpush.msra.mxu0 0.0
        %3137 = vmatpush.msra.mxu0 0.0
        %3138 = vmatpush.msra.mxu0 %v2926
        %3139 = vmatmul.f32.gmra.mxu0 %v3121
        %v3140 = vpop.f32.mrf.mxu0
        %v3141 = vadd.f32 0.0, %v3140
        %3142 = vdwg.mxu0
        %v3144 = vsel %vm689, %v3118, 0
        %v3147 = vsel %vm689, %v2926, 0
        %3149 = vmatpush.xpose.msra.mxu0 0.0
        %3150 = vmatpush.xpose.msra.mxu0 0.0
        %3151 = vmatpush.xpose.msra.mxu0 0.0
        %3152 = vmatpush.xpose.msra.mxu0 0.0
        %3153 = vmatpush.xpose.msra.mxu0 0.0
        %3154 = vmatpush.xpose.msra.mxu0 0.0
        %3155 = vmatpush.xpose.msra.mxu0 0.0
        %3156 = vmatpush.xpose.msra.mxu0 0.0
        %3157 = vmatpush.xpose.msra.mxu0 0.0
        %3158 = vmatpush.xpose.msra.mxu0 0.0
        %3159 = vmatpush.xpose.msra.mxu0 0.0
        %3160 = vmatpush.xpose.msra.mxu0 0.0
        %3161 = vmatpush.xpose.msra.mxu0 0.0
        %3162 = vmatpush.xpose.msra.mxu0 0.0
        %3163 = vmatpush.xpose.msra.mxu0 0.0
        %3164 = vmatpush.xpose.msra.mxu0 %v3147
        %3165 = vmatmul.f32.gmra.mxu0 %v3144
        %v3166 = vpop.f32.mrf.mxu0
        %v3167 = vadd.f32 0.0, %v3166
        %3168 = vdwg.mxu0
        %v3169 = vmul.f32 %v3167, 0.0009765625
        %v3171 = vsel %vm689, %v3141, 0
        %3173 = vmatpush.xpose.msra.mxu0 0.0
        %3174 = vmatpush.xpose.msra.mxu0 0.0
        %3175 = vmatpush.xpose.msra.mxu0 0.0
        %3176 = vmatpush.xpose.msra.mxu0 0.0
        %3177 = vmatpush.xpose.msra.mxu0 0.0
        %3178 = vmatpush.xpose.msra.mxu0 0.0
        %3179 = vmatpush.xpose.msra.mxu0 0.0
        %3180 = vmatpush.xpose.msra.mxu0 0.0
        %3181 = vmatpush.xpose.msra.mxu0 0.0
        %3182 = vmatpush.xpose.msra.mxu0 0.0
        %3183 = vmatpush.xpose.msra.mxu0 0.0
        %3184 = vmatpush.xpose.msra.mxu0 0.0
        %3185 = vmatpush.xpose.msra.mxu0 0.0
        %3186 = vmatpush.xpose.msra.mxu0 0.0
        %3187 = vmatpush.xpose.msra.mxu0 0.0
        %3188 = vmatpush.xpose.msra.mxu0 %v3147
        %3189 = vmatmul.f32.gmra.mxu0 %v3171
        %v3190 = vpop.f32.mrf.mxu0
        %v3191 = vadd.f32 0.0, %v3190
        %3192 = vdwg.mxu0
        %v3193 = vmul.f32 %v3191, 0.0009765625
        %v3194 = vmul.f32 %v3169, %v3169
        %v3195 = vsub.f32 %v3193, %v3194
        %v3196 = vmax.f32 %v3195, 0.0
        %v3197 = vadd.f32 %v3196, 1e-05
        %v3198 = vrsqrt.pop %v3197
        %v3199 = vmul.f32 %v3198, %v3197
        %v3200 = vmul.f32 %v3199, %v3198
        %v3201 = vmul.f32 0.5, %v3200
        %v3202 = vsub.f32 1.5, %v3201
        %v3203 = vmul.f32 %v3198, %v3202
        %vm3204 = vweird.f32 %v3197
        %vm3205 = vweird.f32 %v3198
        %vm3206 = vmor %vm3204, %vm3205
        %v3207 = vsel %vm3206, %v3198, %v3203
        %v3208 = vld [vmem:[%s3] sm:$0x3]
        %v3209 = vperm.slane %v3169, 0
        %v3210 = vsub.f32 %v2831, %v3209
        %v3211 = vsub.f32 %v2834, %v3209
        %v3212 = vsub.f32 %v2837, %v3209
        %v3213 = vsub.f32 %v2840, %v3209
        %v3214 = vsub.f32 %v2843, %v3209
        %v3215 = vsub.f32 %v2846, %v3209
        %v3216 = vsub.f32 %v2849, %v3209
        %v3217 = vsub.f32 %v2852, %v3209
        %v3218 = vsub.f32 %v2855, %v3209
        %v3219 = vsub.f32 %v2858, %v3209
        %v3220 = vsub.f32 %v2861, %v3209
        %v3221 = vsub.f32 %v2864, %v3209
        %v3222 = vsub.f32 %v2867, %v3209
        %v3223 = vsub.f32 %v2870, %v3209
        %v3224 = vsub.f32 %v2873, %v3209
        %v3225 = vsub.f32 %v2876, %v3209
        %v3226 = vsub.f32 %v2879, %v3209
        %v3227 = vsub.f32 %v2882, %v3209
        %v3228 = vsub.f32 %v2885, %v3209
        %v3229 = vsub.f32 %v2888, %v3209
        %v3230 = vsub.f32 %v2891, %v3209
        %v3231 = vsub.f32 %v2894, %v3209
        %v3232 = vsub.f32 %v2897, %v3209
        %v3233 = vsub.f32 %v2900, %v3209
        %v3234 = vsub.f32 %v2903, %v3209
        %v3235 = vsub.f32 %v2906, %v3209
        %v3236 = vsub.f32 %v2909, %v3209
        %v3237 = vsub.f32 %v2912, %v3209
        %v3238 = vsub.f32 %v2915, %v3209
        %v3239 = vsub.f32 %v2918, %v3209
        %v3240 = vsub.f32 %v2921, %v3209
        %v3241 = vsub.f32 %v2924, %v3209
        %v3242 = vperm.slane %v3207, 0
        %v3243 = vmul.f32 %v3210, %v3242
        %v3244 = vmul.f32 %v3211, %v3242
        %v3245 = vmul.f32 %v3212, %v3242
        %v3246 = vmul.f32 %v3213, %v3242
        %v3247 = vmul.f32 %v3214, %v3242
        %v3248 = vmul.f32 %v3215, %v3242
        %v3249 = vmul.f32 %v3216, %v3242
        %v3250 = vmul.f32 %v3217, %v3242
        %v3251 = vmul.f32 %v3218, %v3242
        %v3252 = vmul.f32 %v3219, %v3242
        %v3253 = vmul.f32 %v3220, %v3242
        %v3254 = vmul.f32 %v3221, %v3242
        %v3255 = vmul.f32 %v3222, %v3242
        %v3256 = vmul.f32 %v3223, %v3242
        %v3257 = vmul.f32 %v3224, %v3242
        %v3258 = vmul.f32 %v3225, %v3242
        %v3259 = vmul.f32 %v3226, %v3242
        %v3260 = vmul.f32 %v3227, %v3242
        %v3261 = vmul.f32 %v3228, %v3242
        %v3262 = vmul.f32 %v3229, %v3242
        %v3263 = vmul.f32 %v3230, %v3242
        %v3264 = vmul.f32 %v3231, %v3242
        %v3265 = vmul.f32 %v3232, %v3242
        %v3266 = vmul.f32 %v3233, %v3242
        %v3267 = vmul.f32 %v3234, %v3242
        %v3268 = vmul.f32 %v3235, %v3242
        %v3269 = vmul.f32 %v3236, %v3242
        %v3270 = vmul.f32 %v3237, %v3242
        %v3271 = vmul.f32 %v3238, %v3242
        %v3272 = vmul.f32 %v3239, %v3242
        %v3273 = vmul.f32 %v3240, %v3242
        %v3274 = vmul.f32 %v3241, %v3242
        %v3275 = vperm.slane %v3208, 0
        %v3276 = vmul.f32 %v3243, %v3275
        %v3277 = vmul.f32 %v3244, %v3275
        %v3278 = vmul.f32 %v3245, %v3275
        %v3279 = vmul.f32 %v3246, %v3275
        %v3280 = vmul.f32 %v3247, %v3275
        %v3281 = vmul.f32 %v3248, %v3275
        %v3282 = vmul.f32 %v3249, %v3275
        %v3283 = vmul.f32 %v3250, %v3275
        %v3284 = vmul.f32 %v3251, %v3275
        %v3285 = vmul.f32 %v3252, %v3275
        %v3286 = vmul.f32 %v3253, %v3275
        %v3287 = vmul.f32 %v3254, %v3275
        %v3288 = vmul.f32 %v3255, %v3275
        %v3289 = vmul.f32 %v3256, %v3275
        %v3290 = vmul.f32 %v3257, %v3275
        %v3291 = vmul.f32 %v3258, %v3275
        %v3292 = vmul.f32 %v3259, %v3275
        %v3293 = vmul.f32 %v3260, %v3275
        %v3294 = vmul.f32 %v3261, %v3275
        %v3295 = vmul.f32 %v3262, %v3275
        %v3296 = vmul.f32 %v3263, %v3275
        %v3297 = vmul.f32 %v3264, %v3275
        %v3298 = vmul.f32 %v3265, %v3275
        %v3299 = vmul.f32 %v3266, %v3275
        %v3300 = vmul.f32 %v3267, %v3275
        %v3301 = vmul.f32 %v3268, %v3275
        %v3302 = vmul.f32 %v3269, %v3275
        %v3303 = vmul.f32 %v3270, %v3275
        %v3304 = vmul.f32 %v3271, %v3275
        %v3305 = vmul.f32 %v3272, %v3275
        %v3306 = vmul.f32 %v3273, %v3275
        %v3307 = vmul.f32 %v3274, %v3275
        %v3308 = vperm.slane %v3208, 1
        %v3309 = vadd.f32 %v3276, %v3308
        %v3310 = vadd.f32 %v3277, %v3308
        %v3311 = vadd.f32 %v3278, %v3308
        %v3312 = vadd.f32 %v3279, %v3308
        %v3313 = vadd.f32 %v3280, %v3308
        %v3314 = vadd.f32 %v3281, %v3308
        %v3315 = vadd.f32 %v3282, %v3308
        %v3316 = vadd.f32 %v3283, %v3308
        %v3317 = vadd.f32 %v3284, %v3308
        %v3318 = vadd.f32 %v3285, %v3308
        %v3319 = vadd.f32 %v3286, %v3308
        %v3320 = vadd.f32 %v3287, %v3308
        %v3321 = vadd.f32 %v3288, %v3308
        %v3322 = vadd.f32 %v3289, %v3308
        %v3323 = vadd.f32 %v3290, %v3308
        %v3324 = vadd.f32 %v3291, %v3308
        %v3325 = vadd.f32 %v3292, %v3308
        %v3326 = vadd.f32 %v3293, %v3308
        %v3327 = vadd.f32 %v3294, %v3308
        %v3328 = vadd.f32 %v3295, %v3308
        %v3329 = vadd.f32 %v3296, %v3308
        %v3330 = vadd.f32 %v3297, %v3308
        %v3331 = vadd.f32 %v3298, %v3308
        %v3332 = vadd.f32 %v3299, %v3308
        %v3333 = vadd.f32 %v3300, %v3308
        %v3334 = vadd.f32 %v3301, %v3308
        %v3335 = vadd.f32 %v3302, %v3308
        %v3336 = vadd.f32 %v3303, %v3308
        %v3337 = vadd.f32 %v3304, %v3308
        %v3338 = vadd.f32 %v3305, %v3308
        %v3339 = vadd.f32 %v3306, %v3308
        %v3340 = vadd.f32 %v3307, %v3308
        %v3341 = vmax.f32 %v3309, 0.0
        %v3342 = vmax.f32 %v3310, 0.0
        %v3343 = vmax.f32 %v3311, 0.0
        %v3344 = vmax.f32 %v3312, 0.0
        %v3345 = vmax.f32 %v3313, 0.0
        %v3346 = vmax.f32 %v3314, 0.0
        %v3347 = vmax.f32 %v3315, 0.0
        %v3348 = vmax.f32 %v3316, 0.0
        %v3349 = vmax.f32 %v3317, 0.0
        %v3350 = vmax.f32 %v3318, 0.0
        %v3351 = vmax.f32 %v3319, 0.0
        %v3352 = vmax.f32 %v3320, 0.0
        %v3353 = vmax.f32 %v3321, 0.0
        %v3354 = vmax.f32 %v3322, 0.0
        %v3355 = vmax.f32 %v3323, 0.0
        %v3356 = vmax.f32 %v3324, 0.0
        %v3357 = vmax.f32 %v3325, 0.0
        %v3358 = vmax.f32 %v3326, 0.0
        %v3359 = vmax.f32 %v3327, 0.0
        %v3360 = vmax.f32 %v3328, 0.0
        %v3361 = vmax.f32 %v3329, 0.0
        %v3362 = vmax.f32 %v3330, 0.0
        %v3363 = vmax.f32 %v3331, 0.0
        %v3364 = vmax.f32 %v3332, 0.0
        %v3365 = vmax.f32 %v3333, 0.0
        %v3366 = vmax.f32 %v3334, 0.0
        %v3367 = vmax.f32 %v3335, 0.0
        %v3368 = vmax.f32 %v3336, 0.0
        %v3369 = vmax.f32 %v3337, 0.0
        %v3370 = vmax.f32 %v3338, 0.0
        %v3371 = vmax.f32 %v3339, 0.0
        %v3372 = vmax.f32 %v3340, 0.0
        %3373 = vst.msk [vmem:[#allocation4] sm:$0xff] %vm472, 0.0
        %3374 = vst.msk [vmem:[#allocation4 + $0x8] sm:$0xff] %vm472, 0.0
        %3375 = vst.msk [vmem:[#allocation4 + $0x10] sm:$0x3] %vm1235, 0.0
        %3376 = vst.msk [vmem:[#allocation4 + $0x18] sm:$0xff] %vm472, 0.0
        %3377 = vst.msk [vmem:[#allocation4 + $0x20] sm:$0xff] %vm472, 0.0
        %3378 = vst.msk [vmem:[#allocation4 + $0x28] sm:$0x3] %vm1235, 0.0
        %3379 = vst.msk [vmem:[#allocation4 + $0x30] sm:$0xff] %vm472, 0.0
        %3380 = vst.msk [vmem:[#allocation4 + $0x38] sm:$0xff] %vm472, 0.0
        %3381 = vst.msk [vmem:[#allocation4 + $0x40] sm:$0x3] %vm1235, 0.0
        %3382 = vst.msk [vmem:[#allocation4 + $0x48] sm:$0xff] %vm472, 0.0
        %3383 = vst.msk [vmem:[#allocation4 + $0x50] sm:$0xff] %vm472, 0.0
        %3384 = vst.msk [vmem:[#allocation4 + $0x58] sm:$0x3] %vm1235, 0.0
        %3385 = vst.msk [vmem:[#allocation4 + $0x60] sm:$0xff] %vm472, 0.0
        %3386 = vst.msk [vmem:[#allocation4 + $0x68] sm:$0xff] %vm472, 0.0
        %3387 = vst.msk [vmem:[#allocation4 + $0x70] sm:$0x3] %vm1235, 0.0
        %3388 = vst.msk [vmem:[#allocation4 + $0x78] sm:$0xff] %vm472, 0.0
        %3389 = vst.msk [vmem:[#allocation4 + $0x80] sm:$0xff] %vm472, 0.0
        %3390 = vst.msk [vmem:[#allocation4 + $0x88] sm:$0x3] %vm1235, 0.0
        %3391 = vst.msk [vmem:[#allocation4 + $0x90] sm:$0xff] %vm472, 0.0
        %3392 = vst.msk [vmem:[#allocation4 + $0x98] sm:$0xff] %vm472, 0.0
        %3393 = vst.msk [vmem:[#allocation4 + $0xa0] sm:$0x3] %vm1235, 0.0
        %3394 = vst.msk [vmem:[#allocation4 + $0xa8] sm:$0xff] %vm472, 0.0
        %3395 = vst.msk [vmem:[#allocation4 + $0xb0] sm:$0xff] %vm472, 0.0
        %3396 = vst.msk [vmem:[#allocation4 + $0xb8] sm:$0x3] %vm1235, 0.0
        %3397 = vst.msk [vmem:[#allocation4 + $0xc0] sm:$0xff] %vm472, 0.0
        %3398 = vst.msk [vmem:[#allocation4 + $0xc8] sm:$0xff] %vm472, 0.0
        %3399 = vst.msk [vmem:[#allocation4 + $0xd0] sm:$0x3] %vm1235, 0.0
        %3400 = vst.msk [vmem:[#allocation4 + $0xd8] sm:$0xff] %vm472, 0.0
        %3401 = vst.msk [vmem:[#allocation4 + $0xe0] sm:$0xff] %vm472, 0.0
        %3402 = vst.msk [vmem:[#allocation4 + $0xe8] sm:$0x3] %vm1235, 0.0
        %3403 = vst.msk [vmem:[#allocation4 + $0xf0] sm:$0xff] %vm472, 0.0
        %3404 = vst.msk [vmem:[#allocation4 + $0xf8] sm:$0xff] %vm472, 0.0
        %3405 = vst.msk [vmem:[#allocation4 + $0x100] sm:$0x3] %vm1235, 0.0
        %3406 = vst.msk [vmem:[#allocation4 + $0x108] sm:$0xff] %vm472, 0.0
        %3407 = vst.msk [vmem:[#allocation4 + $0x110] sm:$0xff] %vm472, 0.0
        %3408 = vst.msk [vmem:[#allocation4 + $0x118] sm:$0x3] %vm1235, 0.0
        %3409 = vst.msk [vmem:[#allocation4 + $0x120] sm:$0xff] %vm472, 0.0
        %3410 = vst.msk [vmem:[#allocation4 + $0x128] sm:$0xff] %vm472, 0.0
        %3411 = vst.msk [vmem:[#allocation4 + $0x130] sm:$0x3] %vm1235, 0.0
        %3412 = vst.msk [vmem:[#allocation4 + $0x138] sm:$0xff] %vm472, 0.0
        %3413 = vst.msk [vmem:[#allocation4 + $0x140] sm:$0xff] %vm472, 0.0
        %3414 = vst.msk [vmem:[#allocation4 + $0x148] sm:$0x3] %vm1235, 0.0
        %3415 = vst.msk [vmem:[#allocation4 + $0x150] sm:$0xff] %vm472, 0.0
        %3416 = vst.msk [vmem:[#allocation4 + $0x158] sm:$0xff] %vm472, 0.0
        %3417 = vst.msk [vmem:[#allocation4 + $0x160] sm:$0x3] %vm1235, 0.0
        %3418 = vst.msk [vmem:[#allocation4 + $0x168] sm:$0xff] %vm472, 0.0
        %3419 = vst.msk [vmem:[#allocation4 + $0x170] sm:$0xff] %vm472, 0.0
        %3420 = vst.msk [vmem:[#allocation4 + $0x178] sm:$0x3] %vm1235, 0.0
        %3421 = vst.msk [vmem:[#allocation4 + $0x180] sm:$0xff] %vm472, 0.0
        %3422 = vst.msk [vmem:[#allocation4 + $0x188] sm:$0xff] %vm472, 0.0
        %3423 = vst.msk [vmem:[#allocation4 + $0x190] sm:$0x3] %vm1235, 0.0
        %3424 = vst.msk [vmem:[#allocation4 + $0x198] sm:$0xff] %vm472, 0.0
        %3425 = vst.msk [vmem:[#allocation4 + $0x1a0] sm:$0xff] %vm472, 0.0
        %3426 = vst.msk [vmem:[#allocation4 + $0x1a8] sm:$0x3] %vm1235, 0.0
        %s3427 = scalar_lea.vmem [#allocation4], 24
        %3428 = vst.msk [vmem:[%s3427 + $0x1] sm:$0xff] %vm472, %v3341
        %3429 = vst.msk [vmem:[%s3427 + $0x9] sm:$0xff] %vm472, %v3342
        %3430 = vst.msk [vmem:[%s3427 + $0x19] sm:$0xff] %vm472, %v3343
        %3431 = vst.msk [vmem:[%s3427 + $0x21] sm:$0xff] %vm472, %v3344
        %3432 = vst.msk [vmem:[%s3427 + $0x31] sm:$0xff] %vm472, %v3345
        %3433 = vst.msk [vmem:[%s3427 + $0x39] sm:$0xff] %vm472, %v3346
        %3434 = vst.msk [vmem:[%s3427 + $0x49] sm:$0xff] %vm472, %v3347
        %3435 = vst.msk [vmem:[%s3427 + $0x51] sm:$0xff] %vm472, %v3348
        %3436 = vst.msk [vmem:[%s3427 + $0x61] sm:$0xff] %vm472, %v3349
        %3437 = vst.msk [vmem:[%s3427 + $0x69] sm:$0xff] %vm472, %v3350
        %3438 = vst.msk [vmem:[%s3427 + $0x79] sm:$0xff] %vm472, %v3351
        %3439 = vst.msk [vmem:[%s3427 + $0x81] sm:$0xff] %vm472, %v3352
        %3440 = vst.msk [vmem:[%s3427 + $0x91] sm:$0xff] %vm472, %v3353
        %3441 = vst.msk [vmem:[%s3427 + $0x99] sm:$0xff] %vm472, %v3354
        %3442 = vst.msk [vmem:[%s3427 + $0xa9] sm:$0xff] %vm472, %v3355
        %3443 = vst.msk [vmem:[%s3427 + $0xb1] sm:$0xff] %vm472, %v3356
        %3444 = vst.msk [vmem:[%s3427 + $0xc1] sm:$0xff] %vm472, %v3357
        %3445 = vst.msk [vmem:[%s3427 + $0xc9] sm:$0xff] %vm472, %v3358
        %3446 = vst.msk [vmem:[%s3427 + $0xd9] sm:$0xff] %vm472, %v3359
        %3447 = vst.msk [vmem:[%s3427 + $0xe1] sm:$0xff] %vm472, %v3360
        %3448 = vst.msk [vmem:[%s3427 + $0xf1] sm:$0xff] %vm472, %v3361
        %3449 = vst.msk [vmem:[%s3427 + $0xf9] sm:$0xff] %vm472, %v3362
        %3450 = vst.msk [vmem:[%s3427 + $0x109] sm:$0xff] %vm472, %v3363
        %3451 = vst.msk [vmem:[%s3427 + $0x111] sm:$0xff] %vm472, %v3364
        %3452 = vst.msk [vmem:[%s3427 + $0x121] sm:$0xff] %vm472, %v3365
        %3453 = vst.msk [vmem:[%s3427 + $0x129] sm:$0xff] %vm472, %v3366
        %3454 = vst.msk [vmem:[%s3427 + $0x139] sm:$0xff] %vm472, %v3367
        %3455 = vst.msk [vmem:[%s3427 + $0x141] sm:$0xff] %vm472, %v3368
        %3456 = vst.msk [vmem:[%s3427 + $0x151] sm:$0xff] %vm472, %v3369
        %3457 = vst.msk [vmem:[%s3427 + $0x159] sm:$0xff] %vm472, %v3370
        %3458 = vst.msk [vmem:[%s3427 + $0x169] sm:$0xff] %vm472, %v3371
        %3459 = vst.msk [vmem:[%s3427 + $0x171] sm:$0xff] %vm472, %v3372
        %v3460 = vld [vmem:[#allocation4] sm:$0xff]
        %v3461 = vld [vmem:[#allocation4 + $0x8] sm:$0xff]
        %v3462 = vld [vmem:[#allocation4 + $0x10] sm:$0x3]
        %v3463 = vld [vmem:[#allocation4 + $0x18] sm:$0xff]
        %v3464 = vld [vmem:[#allocation4 + $0x20] sm:$0xff]
        %v3465 = vld [vmem:[#allocation4 + $0x28] sm:$0x3]
        %v3466 = vld [vmem:[#allocation4 + $0x30] sm:$0xff]
        %v3467 = vld [vmem:[#allocation4 + $0x38] sm:$0xff]
        %v3468 = vld [vmem:[#allocation4 + $0x40] sm:$0x3]
        %v3469 = vld [vmem:[#allocation4 + $0x48] sm:$0xff]
        %v3470 = vld [vmem:[#allocation4 + $0x50] sm:$0xff]
        %v3471 = vld [vmem:[#allocation4 + $0x58] sm:$0x3]
        %v3472 = vld [vmem:[#allocation4 + $0x60] sm:$0xff]
        %v3473 = vld [vmem:[#allocation4 + $0x68] sm:$0xff]
        %v3474 = vld [vmem:[#allocation4 + $0x70] sm:$0x3]
        %v3475 = vld [vmem:[#allocation4 + $0x78] sm:$0xff]
        %v3476 = vld [vmem:[#allocation4 + $0x80] sm:$0xff]
        %v3477 = vld [vmem:[#allocation4 + $0x88] sm:$0x3]
        %v3478 = vld [vmem:[#allocation4 + $0x90] sm:$0xff]
        %v3479 = vld [vmem:[#allocation4 + $0x98] sm:$0xff]
        %v3480 = vld [vmem:[#allocation4 + $0xa0] sm:$0x3]
        %v3481 = vld [vmem:[#allocation4 + $0xa8] sm:$0xff]
        %v3482 = vld [vmem:[#allocation4 + $0xb0] sm:$0xff]
        %v3483 = vld [vmem:[#allocation4 + $0xb8] sm:$0x3]
        %v3484 = vld [vmem:[#allocation4 + $0xc0] sm:$0xff]
        %v3485 = vld [vmem:[#allocation4 + $0xc8] sm:$0xff]
        %v3486 = vld [vmem:[#allocation4 + $0xd0] sm:$0x3]
        %v3487 = vld [vmem:[#allocation4 + $0xd8] sm:$0xff]
        %v3488 = vld [vmem:[#allocation4 + $0xe0] sm:$0xff]
        %v3489 = vld [vmem:[#allocation4 + $0xe8] sm:$0x3]
        %v3490 = vld [vmem:[#allocation4 + $0xf0] sm:$0xff]
        %v3491 = vld [vmem:[#allocation4 + $0xf8] sm:$0xff]
        %v3492 = vld [vmem:[#allocation4 + $0x100] sm:$0x3]
        %v3493 = vld [vmem:[#allocation4 + $0x108] sm:$0xff]
        %v3494 = vld [vmem:[#allocation4 + $0x110] sm:$0xff]
        %v3495 = vld [vmem:[#allocation4 + $0x118] sm:$0x3]
        %v3496 = vld [vmem:[#allocation4 + $0x120] sm:$0xff]
        %v3497 = vld [vmem:[#allocation4 + $0x128] sm:$0xff]
        %v3498 = vld [vmem:[#allocation4 + $0x130] sm:$0x3]
        %v3499 = vld [vmem:[#allocation4 + $0x138] sm:$0xff]
        %v3500 = vld [vmem:[#allocation4 + $0x140] sm:$0xff]
        %v3501 = vld [vmem:[#allocation4 + $0x148] sm:$0x3]
        %v3502 = vld [vmem:[#allocation4 + $0x150] sm:$0xff]
        %v3503 = vld [vmem:[#allocation4 + $0x158] sm:$0xff]
        %v3504 = vld [vmem:[#allocation4 + $0x160] sm:$0x3]
        %v3505 = vld [vmem:[#allocation4 + $0x168] sm:$0xff]
        %v3506 = vld [vmem:[#allocation4 + $0x170] sm:$0xff]
        %v3507 = vld [vmem:[#allocation4 + $0x178] sm:$0x3]
        %v3508 = vld [vmem:[#allocation4 + $0x180] sm:$0xff]
        %v3509 = vld [vmem:[#allocation4 + $0x188] sm:$0xff]
        %v3510 = vld [vmem:[#allocation4 + $0x190] sm:$0x3]
        %v3511 = vld [vmem:[#allocation4 + $0x198] sm:$0xff]
        %v3512 = vld [vmem:[#allocation4 + $0x1a0] sm:$0xff]
        %v3513 = vld [vmem:[#allocation4 + $0x1a8] sm:$0x3]
        %3514 = vst.msk [vmem:[#allocation5] sm:$0xff] %vm472, %v3460
        %3515 = vst.msk [vmem:[#allocation5 + $0x8] sm:$0xff] %vm472, %v3461
        %3516 = vst.msk [vmem:[#allocation5 + $0x10] sm:$0xff] %vm472, %v3463
        %3517 = vst.msk [vmem:[#allocation5 + $0x18] sm:$0xff] %vm472, %v3464
        %3518 = vst.msk [vmem:[#allocation5 + $0x20] sm:$0xff] %vm472, %v3466
        %3519 = vst.msk [vmem:[#allocation5 + $0x28] sm:$0xff] %vm472, %v3467
        %3520 = vst.msk [vmem:[#allocation5 + $0x30] sm:$0xff] %vm472, %v3469
        %3521 = vst.msk [vmem:[#allocation5 + $0x38] sm:$0xff] %vm472, %v3470
        %3522 = vst.msk [vmem:[#allocation5 + $0x40] sm:$0xff] %vm472, %v3472
        %3523 = vst.msk [vmem:[#allocation5 + $0x48] sm:$0xff] %vm472, %v3473
        %3524 = vst.msk [vmem:[#allocation5 + $0x50] sm:$0xff] %vm472, %v3475
        %3525 = vst.msk [vmem:[#allocation5 + $0x58] sm:$0xff] %vm472, %v3476
        %3526 = vst.msk [vmem:[#allocation5 + $0x60] sm:$0xff] %vm472, %v3478
        %3527 = vst.msk [vmem:[#allocation5 + $0x68] sm:$0xff] %vm472, %v3479
        %3528 = vst.msk [vmem:[#allocation5 + $0x70] sm:$0xff] %vm472, %v3481
        %3529 = vst.msk [vmem:[#allocation5 + $0x78] sm:$0xff] %vm472, %v3482
        %3530 = vst.msk [vmem:[#allocation5 + $0x80] sm:$0xff] %vm472, %v3484
        %3531 = vst.msk [vmem:[#allocation5 + $0x88] sm:$0xff] %vm472, %v3485
        %3532 = vst.msk [vmem:[#allocation5 + $0x90] sm:$0xff] %vm472, %v3487
        %3533 = vst.msk [vmem:[#allocation5 + $0x98] sm:$0xff] %vm472, %v3488
        %3534 = vst.msk [vmem:[#allocation5 + $0xa0] sm:$0xff] %vm472, %v3490
        %3535 = vst.msk [vmem:[#allocation5 + $0xa8] sm:$0xff] %vm472, %v3491
        %3536 = vst.msk [vmem:[#allocation5 + $0xb0] sm:$0xff] %vm472, %v3493
        %3537 = vst.msk [vmem:[#allocation5 + $0xb8] sm:$0xff] %vm472, %v3494
        %3538 = vst.msk [vmem:[#allocation5 + $0xc0] sm:$0xff] %vm472, %v3496
        %3539 = vst.msk [vmem:[#allocation5 + $0xc8] sm:$0xff] %vm472, %v3497
        %3540 = vst.msk [vmem:[#allocation5 + $0xd0] sm:$0xff] %vm472, %v3499
        %3541 = vst.msk [vmem:[#allocation5 + $0xd8] sm:$0xff] %vm472, %v3500
        %3542 = vst.msk [vmem:[#allocation5 + $0xe0] sm:$0xff] %vm472, %v3502
        %3543 = vst.msk [vmem:[#allocation5 + $0xe8] sm:$0xff] %vm472, %v3503
        %3544 = vst.msk [vmem:[#allocation5 + $0xf0] sm:$0xff] %vm472, %v3505
        %3545 = vst.msk [vmem:[#allocation5 + $0xf8] sm:$0xff] %vm472, %v3506
        %v3594 = vrot.slane %v3460, 1
        %v3595 = vrot.slane %v3461, 1
        %v3596 = vsel %vm1455, %v3594, %v3595
        %v3597 = vrot.slane %v3462, 1
        %v3598 = vsel %vm1455, %v3595, %v3597
        %v3599 = vrot.slane %v3463, 1
        %v3600 = vrot.slane %v3464, 1
        %v3601 = vsel %vm1455, %v3599, %v3600
        %v3602 = vrot.slane %v3465, 1
        %v3603 = vsel %vm1455, %v3600, %v3602
        %v3604 = vrot.slane %v3466, 1
        %v3605 = vrot.slane %v3467, 1
        %v3606 = vsel %vm1455, %v3604, %v3605
        %v3607 = vrot.slane %v3468, 1
        %v3608 = vsel %vm1455, %v3605, %v3607
        %v3609 = vrot.slane %v3469, 1
        %v3610 = vrot.slane %v3470, 1
        %v3611 = vsel %vm1455, %v3609, %v3610
        %v3612 = vrot.slane %v3471, 1
        %v3613 = vsel %vm1455, %v3610, %v3612
        %v3614 = vrot.slane %v3472, 1
        %v3615 = vrot.slane %v3473, 1
        %v3616 = vsel %vm1455, %v3614, %v3615
        %v3617 = vrot.slane %v3474, 1
        %v3618 = vsel %vm1455, %v3615, %v3617
        %v3619 = vrot.slane %v3475, 1
        %v3620 = vrot.slane %v3476, 1
        %v3621 = vsel %vm1455, %v3619, %v3620
        %v3622 = vrot.slane %v3477, 1
        %v3623 = vsel %vm1455, %v3620, %v3622
        %v3624 = vrot.slane %v3478, 1
        %v3625 = vrot.slane %v3479, 1
        %v3626 = vsel %vm1455, %v3624, %v3625
        %v3627 = vrot.slane %v3480, 1
        %v3628 = vsel %vm1455, %v3625, %v3627
        %v3629 = vrot.slane %v3481, 1
        %v3630 = vrot.slane %v3482, 1
        %v3631 = vsel %vm1455, %v3629, %v3630
        %v3632 = vrot.slane %v3483, 1
        %v3633 = vsel %vm1455, %v3630, %v3632
        %v3634 = vrot.slane %v3484, 1
        %v3635 = vrot.slane %v3485, 1
        %v3636 = vsel %vm1455, %v3634, %v3635
        %v3637 = vrot.slane %v3486, 1
        %v3638 = vsel %vm1455, %v3635, %v3637
        %v3639 = vrot.slane %v3487, 1
        %v3640 = vrot.slane %v3488, 1
        %v3641 = vsel %vm1455, %v3639, %v3640
        %v3642 = vrot.slane %v3489, 1
        %v3643 = vsel %vm1455, %v3640, %v3642
        %v3644 = vrot.slane %v3490, 1
        %v3645 = vrot.slane %v3491, 1
        %v3646 = vsel %vm1455, %v3644, %v3645
        %v3647 = vrot.slane %v3492, 1
        %v3648 = vsel %vm1455, %v3645, %v3647
        %v3649 = vrot.slane %v3493, 1
        %v3650 = vrot.slane %v3494, 1
        %v3651 = vsel %vm1455, %v3649, %v3650
        %v3652 = vrot.slane %v3495, 1
        %v3653 = vsel %vm1455, %v3650, %v3652
        %v3654 = vrot.slane %v3496, 1
        %v3655 = vrot.slane %v3497, 1
        %v3656 = vsel %vm1455, %v3654, %v3655
        %v3657 = vrot.slane %v3498, 1
        %v3658 = vsel %vm1455, %v3655, %v3657
        %v3659 = vrot.slane %v3499, 1
        %v3660 = vrot.slane %v3500, 1
        %v3661 = vsel %vm1455, %v3659, %v3660
        %v3662 = vrot.slane %v3501, 1
        %v3663 = vsel %vm1455, %v3660, %v3662
        %v3664 = vrot.slane %v3502, 1
        %v3665 = vrot.slane %v3503, 1
        %v3666 = vsel %vm1455, %v3664, %v3665
        %v3667 = vrot.slane %v3504, 1
        %v3668 = vsel %vm1455, %v3665, %v3667
        %v3669 = vrot.slane %v3505, 1
        %v3670 = vrot.slane %v3506, 1
        %v3671 = vsel %vm1455, %v3669, %v3670
        %v3672 = vrot.slane %v3507, 1
        %v3673 = vsel %vm1455, %v3670, %v3672
        %3674 = vrot.lane.b32.xlu0 %v3596, 8
        %v3675 = vpop.permute.xlu0 %3674
        %3676 = vrot.lane.b32.xlu0 %v3598, 8
        %v3677 = vpop.permute.xlu0 %3676
        %3678 = vrot.lane.b32.xlu0 %v3601, 8
        %v3679 = vpop.permute.xlu0 %3678
        %3680 = vrot.lane.b32.xlu0 %v3603, 8
        %v3681 = vpop.permute.xlu0 %3680
        %3682 = vrot.lane.b32.xlu0 %v3606, 8
        %v3683 = vpop.permute.xlu0 %3682
        %3684 = vrot.lane.b32.xlu0 %v3608, 8
        %v3685 = vpop.permute.xlu0 %3684
        %3686 = vrot.lane.b32.xlu0 %v3611, 8
        %v3687 = vpop.permute.xlu0 %3686
        %3688 = vrot.lane.b32.xlu0 %v3613, 8
        %v3689 = vpop.permute.xlu0 %3688
        %3690 = vrot.lane.b32.xlu0 %v3616, 8
        %v3691 = vpop.permute.xlu0 %3690
        %3692 = vrot.lane.b32.xlu0 %v3618, 8
        %v3693 = vpop.permute.xlu0 %3692
        %3694 = vrot.lane.b32.xlu0 %v3621, 8
        %v3695 = vpop.permute.xlu0 %3694
        %3696 = vrot.lane.b32.xlu0 %v3623, 8
        %v3697 = vpop.permute.xlu0 %3696
        %3698 = vrot.lane.b32.xlu0 %v3626, 8
        %v3699 = vpop.permute.xlu0 %3698
        %3700 = vrot.lane.b32.xlu0 %v3628, 8
        %v3701 = vpop.permute.xlu0 %3700
        %3702 = vrot.lane.b32.xlu0 %v3631, 8
        %v3703 = vpop.permute.xlu0 %3702
        %3704 = vrot.lane.b32.xlu0 %v3633, 8
        %v3705 = vpop.permute.xlu0 %3704
        %3706 = vrot.lane.b32.xlu0 %v3636, 8
        %v3707 = vpop.permute.xlu0 %3706
        %3708 = vrot.lane.b32.xlu0 %v3638, 8
        %v3709 = vpop.permute.xlu0 %3708
        %3710 = vrot.lane.b32.xlu0 %v3641, 8
        %v3711 = vpop.permute.xlu0 %3710
        %3712 = vrot.lane.b32.xlu0 %v3643, 8
        %v3713 = vpop.permute.xlu0 %3712
        %3714 = vrot.lane.b32.xlu0 %v3646, 8
        %v3715 = vpop.permute.xlu0 %3714
        %3716 = vrot.lane.b32.xlu0 %v3648, 8
        %v3717 = vpop.permute.xlu0 %3716
        %3718 = vrot.lane.b32.xlu0 %v3651, 8
        %v3719 = vpop.permute.xlu0 %3718
        %3720 = vrot.lane.b32.xlu0 %v3653, 8
        %v3721 = vpop.permute.xlu0 %3720
        %3722 = vrot.lane.b32.xlu0 %v3656, 8
        %v3723 = vpop.permute.xlu0 %3722
        %3724 = vrot.lane.b32.xlu0 %v3658, 8
        %v3725 = vpop.permute.xlu0 %3724
        %3726 = vrot.lane.b32.xlu0 %v3661, 8
        %v3727 = vpop.permute.xlu0 %3726
        %3728 = vrot.lane.b32.xlu0 %v3663, 8
        %v3729 = vpop.permute.xlu0 %3728
        %3730 = vrot.lane.b32.xlu0 %v3666, 8
        %v3731 = vpop.permute.xlu0 %3730
        %3732 = vrot.lane.b32.xlu0 %v3668, 8
        %v3733 = vpop.permute.xlu0 %3732
        %3734 = vrot.lane.b32.xlu0 %v3671, 8
        %v3735 = vpop.permute.xlu0 %3734
        %3736 = vrot.lane.b32.xlu0 %v3673, 8
        %v3737 = vpop.permute.xlu0 %3736
        %3770 = vst.msk [vmem:[#allocation5] sm:$0xff] %vm1632, %v3675
        %3771 = vst.msk [vmem:[#allocation5 + $0x8] sm:$0xff] %vm1632, %v3677
        %3772 = vst.msk [vmem:[#allocation5 + $0x10] sm:$0xff] %vm1632, %v3679
        %3773 = vst.msk [vmem:[#allocation5 + $0x18] sm:$0xff] %vm1632, %v3681
        %3774 = vst.msk [vmem:[#allocation5 + $0x20] sm:$0xff] %vm1632, %v3683
        %3775 = vst.msk [vmem:[#allocation5 + $0x28] sm:$0xff] %vm1632, %v3685
        %3776 = vst.msk [vmem:[#allocation5 + $0x30] sm:$0xff] %vm1632, %v3687
        %3777 = vst.msk [vmem:[#allocation5 + $0x38] sm:$0xff] %vm1632, %v3689
        %3778 = vst.msk [vmem:[#allocation5 + $0x40] sm:$0xff] %vm1632, %v3691
        %3779 = vst.msk [vmem:[#allocation5 + $0x48] sm:$0xff] %vm1632, %v3693
        %3780 = vst.msk [vmem:[#allocation5 + $0x50] sm:$0xff] %vm1632, %v3695
        %3781 = vst.msk [vmem:[#allocation5 + $0x58] sm:$0xff] %vm1632, %v3697
        %3782 = vst.msk [vmem:[#allocation5 + $0x60] sm:$0xff] %vm1632, %v3699
        %3783 = vst.msk [vmem:[#allocation5 + $0x68] sm:$0xff] %vm1632, %v3701
        %3784 = vst.msk [vmem:[#allocation5 + $0x70] sm:$0xff] %vm1632, %v3703
        %3785 = vst.msk [vmem:[#allocation5 + $0x78] sm:$0xff] %vm1632, %v3705
        %3786 = vst.msk [vmem:[#allocation5 + $0x80] sm:$0xff] %vm1632, %v3707
        %3787 = vst.msk [vmem:[#allocation5 + $0x88] sm:$0xff] %vm1632, %v3709
        %3788 = vst.msk [vmem:[#allocation5 + $0x90] sm:$0xff] %vm1632, %v3711
        %3789 = vst.msk [vmem:[#allocation5 + $0x98] sm:$0xff] %vm1632, %v3713
        %3790 = vst.msk [vmem:[#allocation5 + $0xa0] sm:$0xff] %vm1632, %v3715
        %3791 = vst.msk [vmem:[#allocation5 + $0xa8] sm:$0xff] %vm1632, %v3717
        %3792 = vst.msk [vmem:[#allocation5 + $0xb0] sm:$0xff] %vm1632, %v3719
        %3793 = vst.msk [vmem:[#allocation5 + $0xb8] sm:$0xff] %vm1632, %v3721
        %3794 = vst.msk [vmem:[#allocation5 + $0xc0] sm:$0xff] %vm1632, %v3723
        %3795 = vst.msk [vmem:[#allocation5 + $0xc8] sm:$0xff] %vm1632, %v3725
        %3796 = vst.msk [vmem:[#allocation5 + $0xd0] sm:$0xff] %vm1632, %v3727
        %3797 = vst.msk [vmem:[#allocation5 + $0xd8] sm:$0xff] %vm1632, %v3729
        %3798 = vst.msk [vmem:[#allocation5 + $0xe0] sm:$0xff] %vm1632, %v3731
        %3799 = vst.msk [vmem:[#allocation5 + $0xe8] sm:$0xff] %vm1632, %v3733
        %3800 = vst.msk [vmem:[#allocation5 + $0xf0] sm:$0xff] %vm1632, %v3735
        %3801 = vst.msk [vmem:[#allocation5 + $0xf8] sm:$0xff] %vm1632, %v3737
        %v3802 = vrot.slane %v3460, 2
        %v3803 = vrot.slane %v3461, 2
        %v3804 = vsel %vm1665, %v3802, %v3803
        %v3805 = vrot.slane %v3462, 2
        %v3806 = vsel %vm1665, %v3803, %v3805
        %v3807 = vrot.slane %v3463, 2
        %v3808 = vrot.slane %v3464, 2
        %v3809 = vsel %vm1665, %v3807, %v3808
        %v3810 = vrot.slane %v3465, 2
        %v3811 = vsel %vm1665, %v3808, %v3810
        %v3812 = vrot.slane %v3466, 2
        %v3813 = vrot.slane %v3467, 2
        %v3814 = vsel %vm1665, %v3812, %v3813
        %v3815 = vrot.slane %v3468, 2
        %v3816 = vsel %vm1665, %v3813, %v3815
        %v3817 = vrot.slane %v3469, 2
        %v3818 = vrot.slane %v3470, 2
        %v3819 = vsel %vm1665, %v3817, %v3818
        %v3820 = vrot.slane %v3471, 2
        %v3821 = vsel %vm1665, %v3818, %v3820
        %v3822 = vrot.slane %v3472, 2
        %v3823 = vrot.slane %v3473, 2
        %v3824 = vsel %vm1665, %v3822, %v3823
        %v3825 = vrot.slane %v3474, 2
        %v3826 = vsel %vm1665, %v3823, %v3825
        %v3827 = vrot.slane %v3475, 2
        %v3828 = vrot.slane %v3476, 2
        %v3829 = vsel %vm1665, %v3827, %v3828
        %v3830 = vrot.slane %v3477, 2
        %v3831 = vsel %vm1665, %v3828, %v3830
        %v3832 = vrot.slane %v3478, 2
        %v3833 = vrot.slane %v3479, 2
        %v3834 = vsel %vm1665, %v3832, %v3833
        %v3835 = vrot.slane %v3480, 2
        %v3836 = vsel %vm1665, %v3833, %v3835
        %v3837 = vrot.slane %v3481, 2
        %v3838 = vrot.slane %v3482, 2
        %v3839 = vsel %vm1665, %v3837, %v3838
        %v3840 = vrot.slane %v3483, 2
        %v3841 = vsel %vm1665, %v3838, %v3840
        %v3842 = vrot.slane %v3484, 2
        %v3843 = vrot.slane %v3485, 2
        %v3844 = vsel %vm1665, %v3842, %v3843
        %v3845 = vrot.slane %v3486, 2
        %v3846 = vsel %vm1665, %v3843, %v3845
        %v3847 = vrot.slane %v3487, 2
        %v3848 = vrot.slane %v3488, 2
        %v3849 = vsel %vm1665, %v3847, %v3848
        %v3850 = vrot.slane %v3489, 2
        %v3851 = vsel %vm1665, %v3848, %v3850
        %v3852 = vrot.slane %v3490, 2
        %v3853 = vrot.slane %v3491, 2
        %v3854 = vsel %vm1665, %v3852, %v3853
        %v3855 = vrot.slane %v3492, 2
        %v3856 = vsel %vm1665, %v3853, %v3855
        %v3857 = vrot.slane %v3493, 2
        %v3858 = vrot.slane %v3494, 2
        %v3859 = vsel %vm1665, %v3857, %v3858
        %v3860 = vrot.slane %v3495, 2
        %v3861 = vsel %vm1665, %v3858, %v3860
        %v3862 = vrot.slane %v3496, 2
        %v3863 = vrot.slane %v3497, 2
        %v3864 = vsel %vm1665, %v3862, %v3863
        %v3865 = vrot.slane %v3498, 2
        %v3866 = vsel %vm1665, %v3863, %v3865
        %v3867 = vrot.slane %v3499, 2
        %v3868 = vrot.slane %v3500, 2
        %v3869 = vsel %vm1665, %v3867, %v3868
        %v3870 = vrot.slane %v3501, 2
        %v3871 = vsel %vm1665, %v3868, %v3870
        %v3872 = vrot.slane %v3502, 2
        %v3873 = vrot.slane %v3503, 2
        %v3874 = vsel %vm1665, %v3872, %v3873
        %v3875 = vrot.slane %v3504, 2
        %v3876 = vsel %vm1665, %v3873, %v3875
        %v3877 = vrot.slane %v3505, 2
        %v3878 = vrot.slane %v3506, 2
        %v3879 = vsel %vm1665, %v3877, %v3878
        %v3880 = vrot.slane %v3507, 2
        %v3881 = vsel %vm1665, %v3878, %v3880
        %3882 = vrot.lane.b32.xlu0 %v3804, 16
        %v3883 = vpop.permute.xlu0 %3882
        %3884 = vrot.lane.b32.xlu0 %v3806, 16
        %v3885 = vpop.permute.xlu0 %3884
        %3886 = vrot.lane.b32.xlu0 %v3809, 16
        %v3887 = vpop.permute.xlu0 %3886
        %3888 = vrot.lane.b32.xlu0 %v3811, 16
        %v3889 = vpop.permute.xlu0 %3888
        %3890 = vrot.lane.b32.xlu0 %v3814, 16
        %v3891 = vpop.permute.xlu0 %3890
        %3892 = vrot.lane.b32.xlu0 %v3816, 16
        %v3893 = vpop.permute.xlu0 %3892
        %3894 = vrot.lane.b32.xlu0 %v3819, 16
        %v3895 = vpop.permute.xlu0 %3894
        %3896 = vrot.lane.b32.xlu0 %v3821, 16
        %v3897 = vpop.permute.xlu0 %3896
        %3898 = vrot.lane.b32.xlu0 %v3824, 16
        %v3899 = vpop.permute.xlu0 %3898
        %3900 = vrot.lane.b32.xlu0 %v3826, 16
        %v3901 = vpop.permute.xlu0 %3900
        %3902 = vrot.lane.b32.xlu0 %v3829, 16
        %v3903 = vpop.permute.xlu0 %3902
        %3904 = vrot.lane.b32.xlu0 %v3831, 16
        %v3905 = vpop.permute.xlu0 %3904
        %3906 = vrot.lane.b32.xlu0 %v3834, 16
        %v3907 = vpop.permute.xlu0 %3906
        %3908 = vrot.lane.b32.xlu0 %v3836, 16
        %v3909 = vpop.permute.xlu0 %3908
        %3910 = vrot.lane.b32.xlu0 %v3839, 16
        %v3911 = vpop.permute.xlu0 %3910
        %3912 = vrot.lane.b32.xlu0 %v3841, 16
        %v3913 = vpop.permute.xlu0 %3912
        %3914 = vrot.lane.b32.xlu0 %v3844, 16
        %v3915 = vpop.permute.xlu0 %3914
        %3916 = vrot.lane.b32.xlu0 %v3846, 16
        %v3917 = vpop.permute.xlu0 %3916
        %3918 = vrot.lane.b32.xlu0 %v3849, 16
        %v3919 = vpop.permute.xlu0 %3918
        %3920 = vrot.lane.b32.xlu0 %v3851, 16
        %v3921 = vpop.permute.xlu0 %3920
        %3922 = vrot.lane.b32.xlu0 %v3854, 16
        %v3923 = vpop.permute.xlu0 %3922
        %3924 = vrot.lane.b32.xlu0 %v3856, 16
        %v3925 = vpop.permute.xlu0 %3924
        %3926 = vrot.lane.b32.xlu0 %v3859, 16
        %v3927 = vpop.permute.xlu0 %3926
        %3928 = vrot.lane.b32.xlu0 %v3861, 16
        %v3929 = vpop.permute.xlu0 %3928
        %3930 = vrot.lane.b32.xlu0 %v3864, 16
        %v3931 = vpop.permute.xlu0 %3930
        %3932 = vrot.lane.b32.xlu0 %v3866, 16
        %v3933 = vpop.permute.xlu0 %3932
        %3934 = vrot.lane.b32.xlu0 %v3869, 16
        %v3935 = vpop.permute.xlu0 %3934
        %3936 = vrot.lane.b32.xlu0 %v3871, 16
        %v3937 = vpop.permute.xlu0 %3936
        %3938 = vrot.lane.b32.xlu0 %v3874, 16
        %v3939 = vpop.permute.xlu0 %3938
        %3940 = vrot.lane.b32.xlu0 %v3876, 16
        %v3941 = vpop.permute.xlu0 %3940
        %3942 = vrot.lane.b32.xlu0 %v3879, 16
        %v3943 = vpop.permute.xlu0 %3942
        %3944 = vrot.lane.b32.xlu0 %v3881, 16
        %v3945 = vpop.permute.xlu0 %3944
        %3978 = vst.msk [vmem:[#allocation5] sm:$0xff] %vm1842, %v3883
        %3979 = vst.msk [vmem:[#allocation5 + $0x8] sm:$0xff] %vm1842, %v3885
        %3980 = vst.msk [vmem:[#allocation5 + $0x10] sm:$0xff] %vm1842, %v3887
        %3981 = vst.msk [vmem:[#allocation5 + $0x18] sm:$0xff] %vm1842, %v3889
        %3982 = vst.msk [vmem:[#allocation5 + $0x20] sm:$0xff] %vm1842, %v3891
        %3983 = vst.msk [vmem:[#allocation5 + $0x28] sm:$0xff] %vm1842, %v3893
        %3984 = vst.msk [vmem:[#allocation5 + $0x30] sm:$0xff] %vm1842, %v3895
        %3985 = vst.msk [vmem:[#allocation5 + $0x38] sm:$0xff] %vm1842, %v3897
        %3986 = vst.msk [vmem:[#allocation5 + $0x40] sm:$0xff] %vm1842, %v3899
        %3987 = vst.msk [vmem:[#allocation5 + $0x48] sm:$0xff] %vm1842, %v3901
        %3988 = vst.msk [vmem:[#allocation5 + $0x50] sm:$0xff] %vm1842, %v3903
        %3989 = vst.msk [vmem:[#allocation5 + $0x58] sm:$0xff] %vm1842, %v3905
        %3990 = vst.msk [vmem:[#allocation5 + $0x60] sm:$0xff] %vm1842, %v3907
        %3991 = vst.msk [vmem:[#allocation5 + $0x68] sm:$0xff] %vm1842, %v3909
        %3992 = vst.msk [vmem:[#allocation5 + $0x70] sm:$0xff] %vm1842, %v3911
        %3993 = vst.msk [vmem:[#allocation5 + $0x78] sm:$0xff] %vm1842, %v3913
        %3994 = vst.msk [vmem:[#allocation5 + $0x80] sm:$0xff] %vm1842, %v3915
        %3995 = vst.msk [vmem:[#allocation5 + $0x88] sm:$0xff] %vm1842, %v3917
        %3996 = vst.msk [vmem:[#allocation5 + $0x90] sm:$0xff] %vm1842, %v3919
        %3997 = vst.msk [vmem:[#allocation5 + $0x98] sm:$0xff] %vm1842, %v3921
        %3998 = vst.msk [vmem:[#allocation5 + $0xa0] sm:$0xff] %vm1842, %v3923
        %3999 = vst.msk [vmem:[#allocation5 + $0xa8] sm:$0xff] %vm1842, %v3925
        %4000 = vst.msk [vmem:[#allocation5 + $0xb0] sm:$0xff] %vm1842, %v3927
        %4001 = vst.msk [vmem:[#allocation5 + $0xb8] sm:$0xff] %vm1842, %v3929
        %4002 = vst.msk [vmem:[#allocation5 + $0xc0] sm:$0xff] %vm1842, %v3931
        %4003 = vst.msk [vmem:[#allocation5 + $0xc8] sm:$0xff] %vm1842, %v3933
        %4004 = vst.msk [vmem:[#allocation5 + $0xd0] sm:$0xff] %vm1842, %v3935
        %4005 = vst.msk [vmem:[#allocation5 + $0xd8] sm:$0xff] %vm1842, %v3937
        %4006 = vst.msk [vmem:[#allocation5 + $0xe0] sm:$0xff] %vm1842, %v3939
        %4007 = vst.msk [vmem:[#allocation5 + $0xe8] sm:$0xff] %vm1842, %v3941
        %4008 = vst.msk [vmem:[#allocation5 + $0xf0] sm:$0xff] %vm1842, %v3943
        %4009 = vst.msk [vmem:[#allocation5 + $0xf8] sm:$0xff] %vm1842, %v3945
        %4012 = vrot.lane.b32.xlu0 %v3463, 24
        %v4013 = vpop.permute.xlu0 %4012
        %4014 = vrot.lane.b32.xlu0 %v3464, 24
        %v4015 = vpop.permute.xlu0 %4014
        %4016 = vrot.lane.b32.xlu0 %v3466, 24
        %v4017 = vpop.permute.xlu0 %4016
        %4018 = vrot.lane.b32.xlu0 %v3467, 24
        %v4019 = vpop.permute.xlu0 %4018
        %4020 = vrot.lane.b32.xlu0 %v3469, 24
        %v4021 = vpop.permute.xlu0 %4020
        %4022 = vrot.lane.b32.xlu0 %v3470, 24
        %v4023 = vpop.permute.xlu0 %4022
        %4024 = vrot.lane.b32.xlu0 %v3472, 24
        %v4025 = vpop.permute.xlu0 %4024
        %4026 = vrot.lane.b32.xlu0 %v3473, 24
        %v4027 = vpop.permute.xlu0 %4026
        %4028 = vrot.lane.b32.xlu0 %v3475, 24
        %v4029 = vpop.permute.xlu0 %4028
        %4030 = vrot.lane.b32.xlu0 %v3476, 24
        %v4031 = vpop.permute.xlu0 %4030
        %4032 = vrot.lane.b32.xlu0 %v3478, 24
        %v4033 = vpop.permute.xlu0 %4032
        %4034 = vrot.lane.b32.xlu0 %v3479, 24
        %v4035 = vpop.permute.xlu0 %4034
        %4036 = vrot.lane.b32.xlu0 %v3481, 24
        %v4037 = vpop.permute.xlu0 %4036
        %4038 = vrot.lane.b32.xlu0 %v3482, 24
        %v4039 = vpop.permute.xlu0 %4038
        %4040 = vrot.lane.b32.xlu0 %v3484, 24
        %v4041 = vpop.permute.xlu0 %4040
        %4042 = vrot.lane.b32.xlu0 %v3485, 24
        %v4043 = vpop.permute.xlu0 %4042
        %4044 = vrot.lane.b32.xlu0 %v3487, 24
        %v4045 = vpop.permute.xlu0 %4044
        %4046 = vrot.lane.b32.xlu0 %v3488, 24
        %v4047 = vpop.permute.xlu0 %4046
        %4048 = vrot.lane.b32.xlu0 %v3490, 24
        %v4049 = vpop.permute.xlu0 %4048
        %4050 = vrot.lane.b32.xlu0 %v3491, 24
        %v4051 = vpop.permute.xlu0 %4050
        %4052 = vrot.lane.b32.xlu0 %v3493, 24
        %v4053 = vpop.permute.xlu0 %4052
        %4054 = vrot.lane.b32.xlu0 %v3494, 24
        %v4055 = vpop.permute.xlu0 %4054
        %4056 = vrot.lane.b32.xlu0 %v3496, 24
        %v4057 = vpop.permute.xlu0 %4056
        %4058 = vrot.lane.b32.xlu0 %v3497, 24
        %v4059 = vpop.permute.xlu0 %4058
        %4060 = vrot.lane.b32.xlu0 %v3499, 24
        %v4061 = vpop.permute.xlu0 %4060
        %4062 = vrot.lane.b32.xlu0 %v3500, 24
        %v4063 = vpop.permute.xlu0 %4062
        %4064 = vrot.lane.b32.xlu0 %v3502, 24
        %v4065 = vpop.permute.xlu0 %4064
        %4066 = vrot.lane.b32.xlu0 %v3503, 24
        %v4067 = vpop.permute.xlu0 %4066
        %4068 = vrot.lane.b32.xlu0 %v3505, 24
        %v4069 = vpop.permute.xlu0 %4068
        %4070 = vrot.lane.b32.xlu0 %v3506, 24
        %v4071 = vpop.permute.xlu0 %4070
        %4072 = vrot.lane.b32.xlu0 %v3508, 24
        %v4073 = vpop.permute.xlu0 %4072
        %4074 = vrot.lane.b32.xlu0 %v3509, 24
        %v4075 = vpop.permute.xlu0 %4074
        %4108 = vst.msk [vmem:[#allocation5] sm:$0xff] %vm1973, %v4013
        %4109 = vst.msk [vmem:[#allocation5 + $0x8] sm:$0xff] %vm1973, %v4015
        %4110 = vst.msk [vmem:[#allocation5 + $0x10] sm:$0xff] %vm1973, %v4017
        %4111 = vst.msk [vmem:[#allocation5 + $0x18] sm:$0xff] %vm1973, %v4019
        %4112 = vst.msk [vmem:[#allocation5 + $0x20] sm:$0xff] %vm1973, %v4021
        %4113 = vst.msk [vmem:[#allocation5 + $0x28] sm:$0xff] %vm1973, %v4023
        %4114 = vst.msk [vmem:[#allocation5 + $0x30] sm:$0xff] %vm1973, %v4025
        %4115 = vst.msk [vmem:[#allocation5 + $0x38] sm:$0xff] %vm1973, %v4027
        %4116 = vst.msk [vmem:[#allocation5 + $0x40] sm:$0xff] %vm1973, %v4029
        %4117 = vst.msk [vmem:[#allocation5 + $0x48] sm:$0xff] %vm1973, %v4031
        %4118 = vst.msk [vmem:[#allocation5 + $0x50] sm:$0xff] %vm1973, %v4033
        %4119 = vst.msk [vmem:[#allocation5 + $0x58] sm:$0xff] %vm1973, %v4035
        %4120 = vst.msk [vmem:[#allocation5 + $0x60] sm:$0xff] %vm1973, %v4037
        %4121 = vst.msk [vmem:[#allocation5 + $0x68] sm:$0xff] %vm1973, %v4039
        %4122 = vst.msk [vmem:[#allocation5 + $0x70] sm:$0xff] %vm1973, %v4041
        %4123 = vst.msk [vmem:[#allocation5 + $0x78] sm:$0xff] %vm1973, %v4043
        %4124 = vst.msk [vmem:[#allocation5 + $0x80] sm:$0xff] %vm1973, %v4045
        %4125 = vst.msk [vmem:[#allocation5 + $0x88] sm:$0xff] %vm1973, %v4047
        %4126 = vst.msk [vmem:[#allocation5 + $0x90] sm:$0xff] %vm1973, %v4049
        %4127 = vst.msk [vmem:[#allocation5 + $0x98] sm:$0xff] %vm1973, %v4051
        %4128 = vst.msk [vmem:[#allocation5 + $0xa0] sm:$0xff] %vm1973, %v4053
        %4129 = vst.msk [vmem:[#allocation5 + $0xa8] sm:$0xff] %vm1973, %v4055
        %4130 = vst.msk [vmem:[#allocation5 + $0xb0] sm:$0xff] %vm1973, %v4057
        %4131 = vst.msk [vmem:[#allocation5 + $0xb8] sm:$0xff] %vm1973, %v4059
        %4132 = vst.msk [vmem:[#allocation5 + $0xc0] sm:$0xff] %vm1973, %v4061
        %4133 = vst.msk [vmem:[#allocation5 + $0xc8] sm:$0xff] %vm1973, %v4063
        %4134 = vst.msk [vmem:[#allocation5 + $0xd0] sm:$0xff] %vm1973, %v4065
        %4135 = vst.msk [vmem:[#allocation5 + $0xd8] sm:$0xff] %vm1973, %v4067
        %4136 = vst.msk [vmem:[#allocation5 + $0xe0] sm:$0xff] %vm1973, %v4069
        %4137 = vst.msk [vmem:[#allocation5 + $0xe8] sm:$0xff] %vm1973, %v4071
        %4138 = vst.msk [vmem:[#allocation5 + $0xf0] sm:$0xff] %vm1973, %v4073
        %4139 = vst.msk [vmem:[#allocation5 + $0xf8] sm:$0xff] %vm1973, %v4075
        %v4141 = vrot.slane %v3508, 1
        %v4142 = vrot.slane %v3509, 1
        %v4143 = vsel %vm1455, %v4141, %v4142
        %v4144 = vrot.slane %v3510, 1
        %v4145 = vsel %vm1455, %v4142, %v4144
        %4146 = vrot.lane.b32.xlu0 %v3601, 32
        %v4147 = vpop.permute.xlu0 %4146
        %4148 = vrot.lane.b32.xlu0 %v3603, 32
        %v4149 = vpop.permute.xlu0 %4148
        %4150 = vrot.lane.b32.xlu0 %v3606, 32
        %v4151 = vpop.permute.xlu0 %4150
        %4152 = vrot.lane.b32.xlu0 %v3608, 32
        %v4153 = vpop.permute.xlu0 %4152
        %4154 = vrot.lane.b32.xlu0 %v3611, 32
        %v4155 = vpop.permute.xlu0 %4154
        %4156 = vrot.lane.b32.xlu0 %v3613, 32
        %v4157 = vpop.permute.xlu0 %4156
        %4158 = vrot.lane.b32.xlu0 %v3616, 32
        %v4159 = vpop.permute.xlu0 %4158
        %4160 = vrot.lane.b32.xlu0 %v3618, 32
        %v4161 = vpop.permute.xlu0 %4160
        %4162 = vrot.lane.b32.xlu0 %v3621, 32
        %v4163 = vpop.permute.xlu0 %4162
        %4164 = vrot.lane.b32.xlu0 %v3623, 32
        %v4165 = vpop.permute.xlu0 %4164
        %4166 = vrot.lane.b32.xlu0 %v3626, 32
        %v4167 = vpop.permute.xlu0 %4166
        %4168 = vrot.lane.b32.xlu0 %v3628, 32
        %v4169 = vpop.permute.xlu0 %4168
        %4170 = vrot.lane.b32.xlu0 %v3631, 32
        %v4171 = vpop.permute.xlu0 %4170
        %4172 = vrot.lane.b32.xlu0 %v3633, 32
        %v4173 = vpop.permute.xlu0 %4172
        %4174 = vrot.lane.b32.xlu0 %v3636, 32
        %v4175 = vpop.permute.xlu0 %4174
        %4176 = vrot.lane.b32.xlu0 %v3638, 32
        %v4177 = vpop.permute.xlu0 %4176
        %4178 = vrot.lane.b32.xlu0 %v3641, 32
        %v4179 = vpop.permute.xlu0 %4178
        %4180 = vrot.lane.b32.xlu0 %v3643, 32
        %v4181 = vpop.permute.xlu0 %4180
        %4182 = vrot.lane.b32.xlu0 %v3646, 32
        %v4183 = vpop.permute.xlu0 %4182
        %4184 = vrot.lane.b32.xlu0 %v3648, 32
        %v4185 = vpop.permute.xlu0 %4184
        %4186 = vrot.lane.b32.xlu0 %v3651, 32
        %v4187 = vpop.permute.xlu0 %4186
        %4188 = vrot.lane.b32.xlu0 %v3653, 32
        %v4189 = vpop.permute.xlu0 %4188
        %4190 = vrot.lane.b32.xlu0 %v3656, 32
        %v4191 = vpop.permute.xlu0 %4190
        %4192 = vrot.lane.b32.xlu0 %v3658, 32
        %v4193 = vpop.permute.xlu0 %4192
        %4194 = vrot.lane.b32.xlu0 %v3661, 32
        %v4195 = vpop.permute.xlu0 %4194
        %4196 = vrot.lane.b32.xlu0 %v3663, 32
        %v4197 = vpop.permute.xlu0 %4196
        %4198 = vrot.lane.b32.xlu0 %v3666, 32
        %v4199 = vpop.permute.xlu0 %4198
        %4200 = vrot.lane.b32.xlu0 %v3668, 32
        %v4201 = vpop.permute.xlu0 %4200
        %4202 = vrot.lane.b32.xlu0 %v3671, 32
        %v4203 = vpop.permute.xlu0 %4202
        %4204 = vrot.lane.b32.xlu0 %v3673, 32
        %v4205 = vpop.permute.xlu0 %4204
        %4206 = vrot.lane.b32.xlu0 %v4143, 32
        %v4207 = vpop.permute.xlu0 %4206
        %4208 = vrot.lane.b32.xlu0 %v4145, 32
        %v4209 = vpop.permute.xlu0 %4208
        %4242 = vst.msk [vmem:[#allocation5] sm:$0xff] %vm2108, %v4147
        %4243 = vst.msk [vmem:[#allocation5 + $0x8] sm:$0xff] %vm2108, %v4149
        %4244 = vst.msk [vmem:[#allocation5 + $0x10] sm:$0xff] %vm2108, %v4151
        %4245 = vst.msk [vmem:[#allocation5 + $0x18] sm:$0xff] %vm2108, %v4153
        %4246 = vst.msk [vmem:[#allocation5 + $0x20] sm:$0xff] %vm2108, %v4155
        %4247 = vst.msk [vmem:[#allocation5 + $0x28] sm:$0xff] %vm2108, %v4157
        %4248 = vst.msk [vmem:[#allocation5 + $0x30] sm:$0xff] %vm2108, %v4159
        %4249 = vst.msk [vmem:[#allocation5 + $0x38] sm:$0xff] %vm2108, %v4161
        %4250 = vst.msk [vmem:[#allocation5 + $0x40] sm:$0xff] %vm2108, %v4163
        %4251 = vst.msk [vmem:[#allocation5 + $0x48] sm:$0xff] %vm2108, %v4165
        %4252 = vst.msk [vmem:[#allocation5 + $0x50] sm:$0xff] %vm2108, %v4167
        %4253 = vst.msk [vmem:[#allocation5 + $0x58] sm:$0xff] %vm2108, %v4169
        %4254 = vst.msk [vmem:[#allocation5 + $0x60] sm:$0xff] %vm2108, %v4171
        %4255 = vst.msk [vmem:[#allocation5 + $0x68] sm:$0xff] %vm2108, %v4173
        %4256 = vst.msk [vmem:[#allocation5 + $0x70] sm:$0xff] %vm2108, %v4175
        %4257 = vst.msk [vmem:[#allocation5 + $0x78] sm:$0xff] %vm2108, %v4177
        %4258 = vst.msk [vmem:[#allocation5 + $0x80] sm:$0xff] %vm2108, %v4179
        %4259 = vst.msk [vmem:[#allocation5 + $0x88] sm:$0xff] %vm2108, %v4181
        %4260 = vst.msk [vmem:[#allocation5 + $0x90] sm:$0xff] %vm2108, %v4183
        %4261 = vst.msk [vmem:[#allocation5 + $0x98] sm:$0xff] %vm2108, %v4185
        %4262 = vst.msk [vmem:[#allocation5 + $0xa0] sm:$0xff] %vm2108, %v4187
        %4263 = vst.msk [vmem:[#allocation5 + $0xa8] sm:$0xff] %vm2108, %v4189
        %4264 = vst.msk [vmem:[#allocation5 + $0xb0] sm:$0xff] %vm2108, %v4191
        %4265 = vst.msk [vmem:[#allocation5 + $0xb8] sm:$0xff] %vm2108, %v4193
        %4266 = vst.msk [vmem:[#allocation5 + $0xc0] sm:$0xff] %vm2108, %v4195
        %4267 = vst.msk [vmem:[#allocation5 + $0xc8] sm:$0xff] %vm2108, %v4197
        %4268 = vst.msk [vmem:[#allocation5 + $0xd0] sm:$0xff] %vm2108, %v4199
        %4269 = vst.msk [vmem:[#allocation5 + $0xd8] sm:$0xff] %vm2108, %v4201
        %4270 = vst.msk [vmem:[#allocation5 + $0xe0] sm:$0xff] %vm2108, %v4203
        %4271 = vst.msk [vmem:[#allocation5 + $0xe8] sm:$0xff] %vm2108, %v4205
        %4272 = vst.msk [vmem:[#allocation5 + $0xf0] sm:$0xff] %vm2108, %v4207
        %4273 = vst.msk [vmem:[#allocation5 + $0xf8] sm:$0xff] %vm2108, %v4209
        %v4274 = vrot.slane %v3508, 2
        %v4275 = vrot.slane %v3509, 2
        %v4276 = vsel %vm1665, %v4274, %v4275
        %v4277 = vrot.slane %v3510, 2
        %v4278 = vsel %vm1665, %v4275, %v4277
        %4279 = vrot.lane.b32.xlu0 %v3809, 40
        %v4280 = vpop.permute.xlu0 %4279
        %4281 = vrot.lane.b32.xlu0 %v3811, 40
        %v4282 = vpop.permute.xlu0 %4281
        %4283 = vrot.lane.b32.xlu0 %v3814, 40
        %v4284 = vpop.permute.xlu0 %4283
        %4285 = vrot.lane.b32.xlu0 %v3816, 40
        %v4286 = vpop.permute.xlu0 %4285
        %4287 = vrot.lane.b32.xlu0 %v3819, 40
        %v4288 = vpop.permute.xlu0 %4287
        %4289 = vrot.lane.b32.xlu0 %v3821, 40
        %v4290 = vpop.permute.xlu0 %4289
        %4291 = vrot.lane.b32.xlu0 %v3824, 40
        %v4292 = vpop.permute.xlu0 %4291
        %4293 = vrot.lane.b32.xlu0 %v3826, 40
        %v4294 = vpop.permute.xlu0 %4293
        %4295 = vrot.lane.b32.xlu0 %v3829, 40
        %v4296 = vpop.permute.xlu0 %4295
        %4297 = vrot.lane.b32.xlu0 %v3831, 40
        %v4298 = vpop.permute.xlu0 %4297
        %4299 = vrot.lane.b32.xlu0 %v3834, 40
        %v4300 = vpop.permute.xlu0 %4299
        %4301 = vrot.lane.b32.xlu0 %v3836, 40
        %v4302 = vpop.permute.xlu0 %4301
        %4303 = vrot.lane.b32.xlu0 %v3839, 40
        %v4304 = vpop.permute.xlu0 %4303
        %4305 = vrot.lane.b32.xlu0 %v3841, 40
        %v4306 = vpop.permute.xlu0 %4305
        %4307 = vrot.lane.b32.xlu0 %v3844, 40
        %v4308 = vpop.permute.xlu0 %4307
        %4309 = vrot.lane.b32.xlu0 %v3846, 40
        %v4310 = vpop.permute.xlu0 %4309
        %4311 = vrot.lane.b32.xlu0 %v3849, 40
        %v4312 = vpop.permute.xlu0 %4311
        %4313 = vrot.lane.b32.xlu0 %v3851, 40
        %v4314 = vpop.permute.xlu0 %4313
        %4315 = vrot.lane.b32.xlu0 %v3854, 40
        %v4316 = vpop.permute.xlu0 %4315
        %4317 = vrot.lane.b32.xlu0 %v3856, 40
        %v4318 = vpop.permute.xlu0 %4317
        %4319 = vrot.lane.b32.xlu0 %v3859, 40
        %v4320 = vpop.permute.xlu0 %4319
        %4321 = vrot.lane.b32.xlu0 %v3861, 40
        %v4322 = vpop.permute.xlu0 %4321
        %4323 = vrot.lane.b32.xlu0 %v3864, 40
        %v4324 = vpop.permute.xlu0 %4323
        %4325 = vrot.lane.b32.xlu0 %v3866, 40
        %v4326 = vpop.permute.xlu0 %4325
        %4327 = vrot.lane.b32.xlu0 %v3869, 40
        %v4328 = vpop.permute.xlu0 %4327
        %4329 = vrot.lane.b32.xlu0 %v3871, 40
        %v4330 = vpop.permute.xlu0 %4329
        %4331 = vrot.lane.b32.xlu0 %v3874, 40
        %v4332 = vpop.permute.xlu0 %4331
        %4333 = vrot.lane.b32.xlu0 %v3876, 40
        %v4334 = vpop.permute.xlu0 %4333
        %4335 = vrot.lane.b32.xlu0 %v3879, 40
        %v4336 = vpop.permute.xlu0 %4335
        %4337 = vrot.lane.b32.xlu0 %v3881, 40
        %v4338 = vpop.permute.xlu0 %4337
        %4339 = vrot.lane.b32.xlu0 %v4276, 40
        %v4340 = vpop.permute.xlu0 %4339
        %4341 = vrot.lane.b32.xlu0 %v4278, 40
        %v4342 = vpop.permute.xlu0 %4341
        %4375 = vst.msk [vmem:[#allocation5] sm:$0xff] %vm2242, %v4280
        %4376 = vst.msk [vmem:[#allocation5 + $0x8] sm:$0xff] %vm2242, %v4282
        %4377 = vst.msk [vmem:[#allocation5 + $0x10] sm:$0xff] %vm2242, %v4284
        %4378 = vst.msk [vmem:[#allocation5 + $0x18] sm:$0xff] %vm2242, %v4286
        %4379 = vst.msk [vmem:[#allocation5 + $0x20] sm:$0xff] %vm2242, %v4288
        %4380 = vst.msk [vmem:[#allocation5 + $0x28] sm:$0xff] %vm2242, %v4290
        %4381 = vst.msk [vmem:[#allocation5 + $0x30] sm:$0xff] %vm2242, %v4292
        %4382 = vst.msk [vmem:[#allocation5 + $0x38] sm:$0xff] %vm2242, %v4294
        %4383 = vst.msk [vmem:[#allocation5 + $0x40] sm:$0xff] %vm2242, %v4296
        %4384 = vst.msk [vmem:[#allocation5 + $0x48] sm:$0xff] %vm2242, %v4298
        %4385 = vst.msk [vmem:[#allocation5 + $0x50] sm:$0xff] %vm2242, %v4300
        %4386 = vst.msk [vmem:[#allocation5 + $0x58] sm:$0xff] %vm2242, %v4302
        %4387 = vst.msk [vmem:[#allocation5 + $0x60] sm:$0xff] %vm2242, %v4304
        %4388 = vst.msk [vmem:[#allocation5 + $0x68] sm:$0xff] %vm2242, %v4306
        %4389 = vst.msk [vmem:[#allocation5 + $0x70] sm:$0xff] %vm2242, %v4308
        %4390 = vst.msk [vmem:[#allocation5 + $0x78] sm:$0xff] %vm2242, %v4310
        %4391 = vst.msk [vmem:[#allocation5 + $0x80] sm:$0xff] %vm2242, %v4312
        %4392 = vst.msk [vmem:[#allocation5 + $0x88] sm:$0xff] %vm2242, %v4314
        %4393 = vst.msk [vmem:[#allocation5 + $0x90] sm:$0xff] %vm2242, %v4316
        %4394 = vst.msk [vmem:[#allocation5 + $0x98] sm:$0xff] %vm2242, %v4318
        %4395 = vst.msk [vmem:[#allocation5 + $0xa0] sm:$0xff] %vm2242, %v4320
        %4396 = vst.msk [vmem:[#allocation5 + $0xa8] sm:$0xff] %vm2242, %v4322
        %4397 = vst.msk [vmem:[#allocation5 + $0xb0] sm:$0xff] %vm2242, %v4324
        %4398 = vst.msk [vmem:[#allocation5 + $0xb8] sm:$0xff] %vm2242, %v4326
        %4399 = vst.msk [vmem:[#allocation5 + $0xc0] sm:$0xff] %vm2242, %v4328
        %4400 = vst.msk [vmem:[#allocation5 + $0xc8] sm:$0xff] %vm2242, %v4330
        %4401 = vst.msk [vmem:[#allocation5 + $0xd0] sm:$0xff] %vm2242, %v4332
        %4402 = vst.msk [vmem:[#allocation5 + $0xd8] sm:$0xff] %vm2242, %v4334
        %4403 = vst.msk [vmem:[#allocation5 + $0xe0] sm:$0xff] %vm2242, %v4336
        %4404 = vst.msk [vmem:[#allocation5 + $0xe8] sm:$0xff] %vm2242, %v4338
        %4405 = vst.msk [vmem:[#allocation5 + $0xf0] sm:$0xff] %vm2242, %v4340
        %4406 = vst.msk [vmem:[#allocation5 + $0xf8] sm:$0xff] %vm2242, %v4342
        %4409 = vrot.lane.b32.xlu0 %v3466, 48
        %v4410 = vpop.permute.xlu0 %4409
        %4411 = vrot.lane.b32.xlu0 %v3467, 48
        %v4412 = vpop.permute.xlu0 %4411
        %4413 = vrot.lane.b32.xlu0 %v3469, 48
        %v4414 = vpop.permute.xlu0 %4413
        %4415 = vrot.lane.b32.xlu0 %v3470, 48
        %v4416 = vpop.permute.xlu0 %4415
        %4417 = vrot.lane.b32.xlu0 %v3472, 48
        %v4418 = vpop.permute.xlu0 %4417
        %4419 = vrot.lane.b32.xlu0 %v3473, 48
        %v4420 = vpop.permute.xlu0 %4419
        %4421 = vrot.lane.b32.xlu0 %v3475, 48
        %v4422 = vpop.permute.xlu0 %4421
        %4423 = vrot.lane.b32.xlu0 %v3476, 48
        %v4424 = vpop.permute.xlu0 %4423
        %4425 = vrot.lane.b32.xlu0 %v3478, 48
        %v4426 = vpop.permute.xlu0 %4425
        %4427 = vrot.lane.b32.xlu0 %v3479, 48
        %v4428 = vpop.permute.xlu0 %4427
        %4429 = vrot.lane.b32.xlu0 %v3481, 48
        %v4430 = vpop.permute.xlu0 %4429
        %4431 = vrot.lane.b32.xlu0 %v3482, 48
        %v4432 = vpop.permute.xlu0 %4431
        %4433 = vrot.lane.b32.xlu0 %v3484, 48
        %v4434 = vpop.permute.xlu0 %4433
        %4435 = vrot.lane.b32.xlu0 %v3485, 48
        %v4436 = vpop.permute.xlu0 %4435
        %4437 = vrot.lane.b32.xlu0 %v3487, 48
        %v4438 = vpop.permute.xlu0 %4437
        %4439 = vrot.lane.b32.xlu0 %v3488, 48
        %v4440 = vpop.permute.xlu0 %4439
        %4441 = vrot.lane.b32.xlu0 %v3490, 48
        %v4442 = vpop.permute.xlu0 %4441
        %4443 = vrot.lane.b32.xlu0 %v3491, 48
        %v4444 = vpop.permute.xlu0 %4443
        %4445 = vrot.lane.b32.xlu0 %v3493, 48
        %v4446 = vpop.permute.xlu0 %4445
        %4447 = vrot.lane.b32.xlu0 %v3494, 48
        %v4448 = vpop.permute.xlu0 %4447
        %4449 = vrot.lane.b32.xlu0 %v3496, 48
        %v4450 = vpop.permute.xlu0 %4449
        %4451 = vrot.lane.b32.xlu0 %v3497, 48
        %v4452 = vpop.permute.xlu0 %4451
        %4453 = vrot.lane.b32.xlu0 %v3499, 48
        %v4454 = vpop.permute.xlu0 %4453
        %4455 = vrot.lane.b32.xlu0 %v3500, 48
        %v4456 = vpop.permute.xlu0 %4455
        %4457 = vrot.lane.b32.xlu0 %v3502, 48
        %v4458 = vpop.permute.xlu0 %4457
        %4459 = vrot.lane.b32.xlu0 %v3503, 48
        %v4460 = vpop.permute.xlu0 %4459
        %4461 = vrot.lane.b32.xlu0 %v3505, 48
        %v4462 = vpop.permute.xlu0 %4461
        %4463 = vrot.lane.b32.xlu0 %v3506, 48
        %v4464 = vpop.permute.xlu0 %4463
        %4465 = vrot.lane.b32.xlu0 %v3508, 48
        %v4466 = vpop.permute.xlu0 %4465
        %4467 = vrot.lane.b32.xlu0 %v3509, 48
        %v4468 = vpop.permute.xlu0 %4467
        %4469 = vrot.lane.b32.xlu0 %v3511, 48
        %v4470 = vpop.permute.xlu0 %4469
        %4471 = vrot.lane.b32.xlu0 %v3512, 48
        %v4472 = vpop.permute.xlu0 %4471
        %4505 = vst.msk [vmem:[#allocation5] sm:$0xff] %vm2373, %v4410
        %4506 = vst.msk [vmem:[#allocation5 + $0x8] sm:$0xff] %vm2373, %v4412
        %4507 = vst.msk [vmem:[#allocation5 + $0x10] sm:$0xff] %vm2373, %v4414
        %4508 = vst.msk [vmem:[#allocation5 + $0x18] sm:$0xff] %vm2373, %v4416
        %4509 = vst.msk [vmem:[#allocation5 + $0x20] sm:$0xff] %vm2373, %v4418
        %4510 = vst.msk [vmem:[#allocation5 + $0x28] sm:$0xff] %vm2373, %v4420
        %4511 = vst.msk [vmem:[#allocation5 + $0x30] sm:$0xff] %vm2373, %v4422
        %4512 = vst.msk [vmem:[#allocation5 + $0x38] sm:$0xff] %vm2373, %v4424
        %4513 = vst.msk [vmem:[#allocation5 + $0x40] sm:$0xff] %vm2373, %v4426
        %4514 = vst.msk [vmem:[#allocation5 + $0x48] sm:$0xff] %vm2373, %v4428
        %4515 = vst.msk [vmem:[#allocation5 + $0x50] sm:$0xff] %vm2373, %v4430
        %4516 = vst.msk [vmem:[#allocation5 + $0x58] sm:$0xff] %vm2373, %v4432
        %4517 = vst.msk [vmem:[#allocation5 + $0x60] sm:$0xff] %vm2373, %v4434
        %4518 = vst.msk [vmem:[#allocation5 + $0x68] sm:$0xff] %vm2373, %v4436
        %4519 = vst.msk [vmem:[#allocation5 + $0x70] sm:$0xff] %vm2373, %v4438
        %4520 = vst.msk [vmem:[#allocation5 + $0x78] sm:$0xff] %vm2373, %v4440
        %4521 = vst.msk [vmem:[#allocation5 + $0x80] sm:$0xff] %vm2373, %v4442
        %4522 = vst.msk [vmem:[#allocation5 + $0x88] sm:$0xff] %vm2373, %v4444
        %4523 = vst.msk [vmem:[#allocation5 + $0x90] sm:$0xff] %vm2373, %v4446
        %4524 = vst.msk [vmem:[#allocation5 + $0x98] sm:$0xff] %vm2373, %v4448
        %4525 = vst.msk [vmem:[#allocation5 + $0xa0] sm:$0xff] %vm2373, %v4450
        %4526 = vst.msk [vmem:[#allocation5 + $0xa8] sm:$0xff] %vm2373, %v4452
        %4527 = vst.msk [vmem:[#allocation5 + $0xb0] sm:$0xff] %vm2373, %v4454
        %4528 = vst.msk [vmem:[#allocation5 + $0xb8] sm:$0xff] %vm2373, %v4456
        %4529 = vst.msk [vmem:[#allocation5 + $0xc0] sm:$0xff] %vm2373, %v4458
        %4530 = vst.msk [vmem:[#allocation5 + $0xc8] sm:$0xff] %vm2373, %v4460
        %4531 = vst.msk [vmem:[#allocation5 + $0xd0] sm:$0xff] %vm2373, %v4462
        %4532 = vst.msk [vmem:[#allocation5 + $0xd8] sm:$0xff] %vm2373, %v4464
        %4533 = vst.msk [vmem:[#allocation5 + $0xe0] sm:$0xff] %vm2373, %v4466
        %4534 = vst.msk [vmem:[#allocation5 + $0xe8] sm:$0xff] %vm2373, %v4468
        %4535 = vst.msk [vmem:[#allocation5 + $0xf0] sm:$0xff] %vm2373, %v4470
        %4536 = vst.msk [vmem:[#allocation5 + $0xf8] sm:$0xff] %vm2373, %v4472
        %v4538 = vrot.slane %v3511, 1
        %v4539 = vrot.slane %v3512, 1
        %v4540 = vsel %vm1455, %v4538, %v4539
        %v4541 = vrot.slane %v3513, 1
        %v4542 = vsel %vm1455, %v4539, %v4541
        %4543 = vrot.lane.b32.xlu0 %v3606, 56
        %v4544 = vpop.permute.xlu0 %4543
        %4545 = vrot.lane.b32.xlu0 %v3608, 56
        %v4546 = vpop.permute.xlu0 %4545
        %4547 = vrot.lane.b32.xlu0 %v3611, 56
        %v4548 = vpop.permute.xlu0 %4547
        %4549 = vrot.lane.b32.xlu0 %v3613, 56
        %v4550 = vpop.permute.xlu0 %4549
        %4551 = vrot.lane.b32.xlu0 %v3616, 56
        %v4552 = vpop.permute.xlu0 %4551
        %4553 = vrot.lane.b32.xlu0 %v3618, 56
        %v4554 = vpop.permute.xlu0 %4553
        %4555 = vrot.lane.b32.xlu0 %v3621, 56
        %v4556 = vpop.permute.xlu0 %4555
        %4557 = vrot.lane.b32.xlu0 %v3623, 56
        %v4558 = vpop.permute.xlu0 %4557
        %4559 = vrot.lane.b32.xlu0 %v3626, 56
        %v4560 = vpop.permute.xlu0 %4559
        %4561 = vrot.lane.b32.xlu0 %v3628, 56
        %v4562 = vpop.permute.xlu0 %4561
        %4563 = vrot.lane.b32.xlu0 %v3631, 56
        %v4564 = vpop.permute.xlu0 %4563
        %4565 = vrot.lane.b32.xlu0 %v3633, 56
        %v4566 = vpop.permute.xlu0 %4565
        %4567 = vrot.lane.b32.xlu0 %v3636, 56
        %v4568 = vpop.permute.xlu0 %4567
        %4569 = vrot.lane.b32.xlu0 %v3638, 56
        %v4570 = vpop.permute.xlu0 %4569
        %4571 = vrot.lane.b32.xlu0 %v3641, 56
        %v4572 = vpop.permute.xlu0 %4571
        %4573 = vrot.lane.b32.xlu0 %v3643, 56
        %v4574 = vpop.permute.xlu0 %4573
        %4575 = vrot.lane.b32.xlu0 %v3646, 56
        %v4576 = vpop.permute.xlu0 %4575
        %4577 = vrot.lane.b32.xlu0 %v3648, 56
        %v4578 = vpop.permute.xlu0 %4577
        %4579 = vrot.lane.b32.xlu0 %v3651, 56
        %v4580 = vpop.permute.xlu0 %4579
        %4581 = vrot.lane.b32.xlu0 %v3653, 56
        %v4582 = vpop.permute.xlu0 %4581
        %4583 = vrot.lane.b32.xlu0 %v3656, 56
        %v4584 = vpop.permute.xlu0 %4583
        %4585 = vrot.lane.b32.xlu0 %v3658, 56
        %v4586 = vpop.permute.xlu0 %4585
        %4587 = vrot.lane.b32.xlu0 %v3661, 56
        %v4588 = vpop.permute.xlu0 %4587
        %4589 = vrot.lane.b32.xlu0 %v3663, 56
        %v4590 = vpop.permute.xlu0 %4589
        %4591 = vrot.lane.b32.xlu0 %v3666, 56
        %v4592 = vpop.permute.xlu0 %4591
        %4593 = vrot.lane.b32.xlu0 %v3668, 56
        %v4594 = vpop.permute.xlu0 %4593
        %4595 = vrot.lane.b32.xlu0 %v3671, 56
        %v4596 = vpop.permute.xlu0 %4595
        %4597 = vrot.lane.b32.xlu0 %v3673, 56
        %v4598 = vpop.permute.xlu0 %4597
        %4599 = vrot.lane.b32.xlu0 %v4143, 56
        %v4600 = vpop.permute.xlu0 %4599
        %4601 = vrot.lane.b32.xlu0 %v4145, 56
        %v4602 = vpop.permute.xlu0 %4601
        %4603 = vrot.lane.b32.xlu0 %v4540, 56
        %v4604 = vpop.permute.xlu0 %4603
        %4605 = vrot.lane.b32.xlu0 %v4542, 56
        %v4606 = vpop.permute.xlu0 %4605
        %4639 = vst.msk [vmem:[#allocation5] sm:$0xff] %vm2508, %v4544
        %4640 = vst.msk [vmem:[#allocation5 + $0x8] sm:$0xff] %vm2508, %v4546
        %4641 = vst.msk [vmem:[#allocation5 + $0x10] sm:$0xff] %vm2508, %v4548
        %4642 = vst.msk [vmem:[#allocation5 + $0x18] sm:$0xff] %vm2508, %v4550
        %4643 = vst.msk [vmem:[#allocation5 + $0x20] sm:$0xff] %vm2508, %v4552
        %4644 = vst.msk [vmem:[#allocation5 + $0x28] sm:$0xff] %vm2508, %v4554
        %4645 = vst.msk [vmem:[#allocation5 + $0x30] sm:$0xff] %vm2508, %v4556
        %4646 = vst.msk [vmem:[#allocation5 + $0x38] sm:$0xff] %vm2508, %v4558
        %4647 = vst.msk [vmem:[#allocation5 + $0x40] sm:$0xff] %vm2508, %v4560
        %4648 = vst.msk [vmem:[#allocation5 + $0x48] sm:$0xff] %vm2508, %v4562
        %4649 = vst.msk [vmem:[#allocation5 + $0x50] sm:$0xff] %vm2508, %v4564
        %4650 = vst.msk [vmem:[#allocation5 + $0x58] sm:$0xff] %vm2508, %v4566
        %4651 = vst.msk [vmem:[#allocation5 + $0x60] sm:$0xff] %vm2508, %v4568
        %4652 = vst.msk [vmem:[#allocation5 + $0x68] sm:$0xff] %vm2508, %v4570
        %4653 = vst.msk [vmem:[#allocation5 + $0x70] sm:$0xff] %vm2508, %v4572
        %4654 = vst.msk [vmem:[#allocation5 + $0x78] sm:$0xff] %vm2508, %v4574
        %4655 = vst.msk [vmem:[#allocation5 + $0x80] sm:$0xff] %vm2508, %v4576
        %4656 = vst.msk [vmem:[#allocation5 + $0x88] sm:$0xff] %vm2508, %v4578
        %4657 = vst.msk [vmem:[#allocation5 + $0x90] sm:$0xff] %vm2508, %v4580
        %4658 = vst.msk [vmem:[#allocation5 + $0x98] sm:$0xff] %vm2508, %v4582
        %4659 = vst.msk [vmem:[#allocation5 + $0xa0] sm:$0xff] %vm2508, %v4584
        %4660 = vst.msk [vmem:[#allocation5 + $0xa8] sm:$0xff] %vm2508, %v4586
        %4661 = vst.msk [vmem:[#allocation5 + $0xb0] sm:$0xff] %vm2508, %v4588
        %4662 = vst.msk [vmem:[#allocation5 + $0xb8] sm:$0xff] %vm2508, %v4590
        %4663 = vst.msk [vmem:[#allocation5 + $0xc0] sm:$0xff] %vm2508, %v4592
        %4664 = vst.msk [vmem:[#allocation5 + $0xc8] sm:$0xff] %vm2508, %v4594
        %4665 = vst.msk [vmem:[#allocation5 + $0xd0] sm:$0xff] %vm2508, %v4596
        %4666 = vst.msk [vmem:[#allocation5 + $0xd8] sm:$0xff] %vm2508, %v4598
        %4667 = vst.msk [vmem:[#allocation5 + $0xe0] sm:$0xff] %vm2508, %v4600
        %4668 = vst.msk [vmem:[#allocation5 + $0xe8] sm:$0xff] %vm2508, %v4602
        %4669 = vst.msk [vmem:[#allocation5 + $0xf0] sm:$0xff] %vm2508, %v4604
        %4670 = vst.msk [vmem:[#allocation5 + $0xf8] sm:$0xff] %vm2508, %v4606
        %v4671 = vrot.slane %v3511, 2
        %v4672 = vrot.slane %v3512, 2
        %v4673 = vsel %vm1665, %v4671, %v4672
        %v4674 = vrot.slane %v3513, 2
        %v4675 = vsel %vm1665, %v4672, %v4674
        %4676 = vrot.lane.b32.xlu0 %v3814, 64
        %v4677 = vpop.permute.xlu0 %4676
        %4678 = vrot.lane.b32.xlu0 %v3816, 64
        %v4679 = vpop.permute.xlu0 %4678
        %4680 = vrot.lane.b32.xlu0 %v3819, 64
        %v4681 = vpop.permute.xlu0 %4680
        %4682 = vrot.lane.b32.xlu0 %v3821, 64
        %v4683 = vpop.permute.xlu0 %4682
        %4684 = vrot.lane.b32.xlu0 %v3824, 64
        %v4685 = vpop.permute.xlu0 %4684
        %4686 = vrot.lane.b32.xlu0 %v3826, 64
        %v4687 = vpop.permute.xlu0 %4686
        %4688 = vrot.lane.b32.xlu0 %v3829, 64
        %v4689 = vpop.permute.xlu0 %4688
        %4690 = vrot.lane.b32.xlu0 %v3831, 64
        %v4691 = vpop.permute.xlu0 %4690
        %4692 = vrot.lane.b32.xlu0 %v3834, 64
        %v4693 = vpop.permute.xlu0 %4692
        %4694 = vrot.lane.b32.xlu0 %v3836, 64
        %v4695 = vpop.permute.xlu0 %4694
        %4696 = vrot.lane.b32.xlu0 %v3839, 64
        %v4697 = vpop.permute.xlu0 %4696
        %4698 = vrot.lane.b32.xlu0 %v3841, 64
        %v4699 = vpop.permute.xlu0 %4698
        %4700 = vrot.lane.b32.xlu0 %v3844, 64
        %v4701 = vpop.permute.xlu0 %4700
        %4702 = vrot.lane.b32.xlu0 %v3846, 64
        %v4703 = vpop.permute.xlu0 %4702
        %4704 = vrot.lane.b32.xlu0 %v3849, 64
        %v4705 = vpop.permute.xlu0 %4704
        %4706 = vrot.lane.b32.xlu0 %v3851, 64
        %v4707 = vpop.permute.xlu0 %4706
        %4708 = vrot.lane.b32.xlu0 %v3854, 64
        %v4709 = vpop.permute.xlu0 %4708
        %4710 = vrot.lane.b32.xlu0 %v3856, 64
        %v4711 = vpop.permute.xlu0 %4710
        %4712 = vrot.lane.b32.xlu0 %v3859, 64
        %v4713 = vpop.permute.xlu0 %4712
        %4714 = vrot.lane.b32.xlu0 %v3861, 64
        %v4715 = vpop.permute.xlu0 %4714
        %4716 = vrot.lane.b32.xlu0 %v3864, 64
        %v4717 = vpop.permute.xlu0 %4716
        %4718 = vrot.lane.b32.xlu0 %v3866, 64
        %v4719 = vpop.permute.xlu0 %4718
        %4720 = vrot.lane.b32.xlu0 %v3869, 64
        %v4721 = vpop.permute.xlu0 %4720
        %4722 = vrot.lane.b32.xlu0 %v3871, 64
        %v4723 = vpop.permute.xlu0 %4722
        %4724 = vrot.lane.b32.xlu0 %v3874, 64
        %v4725 = vpop.permute.xlu0 %4724
        %4726 = vrot.lane.b32.xlu0 %v3876, 64
        %v4727 = vpop.permute.xlu0 %4726
        %4728 = vrot.lane.b32.xlu0 %v3879, 64
        %v4729 = vpop.permute.xlu0 %4728
        %4730 = vrot.lane.b32.xlu0 %v3881, 64
        %v4731 = vpop.permute.xlu0 %4730
        %4732 = vrot.lane.b32.xlu0 %v4276, 64
        %v4733 = vpop.permute.xlu0 %4732
        %4734 = vrot.lane.b32.xlu0 %v4278, 64
        %v4735 = vpop.permute.xlu0 %4734
        %4736 = vrot.lane.b32.xlu0 %v4673, 64
        %v4737 = vpop.permute.xlu0 %4736
        %4738 = vrot.lane.b32.xlu0 %v4675, 64
        %v4739 = vpop.permute.xlu0 %4738
        %4772 = vst.msk [vmem:[#allocation5] sm:$0xff] %vm2642, %v4677
        %4773 = vst.msk [vmem:[#allocation5 + $0x8] sm:$0xff] %vm2642, %v4679
        %4774 = vst.msk [vmem:[#allocation5 + $0x10] sm:$0xff] %vm2642, %v4681
        %4775 = vst.msk [vmem:[#allocation5 + $0x18] sm:$0xff] %vm2642, %v4683
        %4776 = vst.msk [vmem:[#allocation5 + $0x20] sm:$0xff] %vm2642, %v4685
        %4777 = vst.msk [vmem:[#allocation5 + $0x28] sm:$0xff] %vm2642, %v4687
        %4778 = vst.msk [vmem:[#allocation5 + $0x30] sm:$0xff] %vm2642, %v4689
        %4779 = vst.msk [vmem:[#allocation5 + $0x38] sm:$0xff] %vm2642, %v4691
        %4780 = vst.msk [vmem:[#allocation5 + $0x40] sm:$0xff] %vm2642, %v4693
        %4781 = vst.msk [vmem:[#allocation5 + $0x48] sm:$0xff] %vm2642, %v4695
        %4782 = vst.msk [vmem:[#allocation5 + $0x50] sm:$0xff] %vm2642, %v4697
        %4783 = vst.msk [vmem:[#allocation5 + $0x58] sm:$0xff] %vm2642, %v4699
        %4784 = vst.msk [vmem:[#allocation5 + $0x60] sm:$0xff] %vm2642, %v4701
        %4785 = vst.msk [vmem:[#allocation5 + $0x68] sm:$0xff] %vm2642, %v4703
        %4786 = vst.msk [vmem:[#allocation5 + $0x70] sm:$0xff] %vm2642, %v4705
        %4787 = vst.msk [vmem:[#allocation5 + $0x78] sm:$0xff] %vm2642, %v4707
        %4788 = vst.msk [vmem:[#allocation5 + $0x80] sm:$0xff] %vm2642, %v4709
        %4789 = vst.msk [vmem:[#allocation5 + $0x88] sm:$0xff] %vm2642, %v4711
        %4790 = vst.msk [vmem:[#allocation5 + $0x90] sm:$0xff] %vm2642, %v4713
        %4791 = vst.msk [vmem:[#allocation5 + $0x98] sm:$0xff] %vm2642, %v4715
        %4792 = vst.msk [vmem:[#allocation5 + $0xa0] sm:$0xff] %vm2642, %v4717
        %4793 = vst.msk [vmem:[#allocation5 + $0xa8] sm:$0xff] %vm2642, %v4719
        %4794 = vst.msk [vmem:[#allocation5 + $0xb0] sm:$0xff] %vm2642, %v4721
        %4795 = vst.msk [vmem:[#allocation5 + $0xb8] sm:$0xff] %vm2642, %v4723
        %4796 = vst.msk [vmem:[#allocation5 + $0xc0] sm:$0xff] %vm2642, %v4725
        %4797 = vst.msk [vmem:[#allocation5 + $0xc8] sm:$0xff] %vm2642, %v4727
        %4798 = vst.msk [vmem:[#allocation5 + $0xd0] sm:$0xff] %vm2642, %v4729
        %4799 = vst.msk [vmem:[#allocation5 + $0xd8] sm:$0xff] %vm2642, %v4731
        %4800 = vst.msk [vmem:[#allocation5 + $0xe0] sm:$0xff] %vm2642, %v4733
        %4801 = vst.msk [vmem:[#allocation5 + $0xe8] sm:$0xff] %vm2642, %v4735
        %4802 = vst.msk [vmem:[#allocation5 + $0xf0] sm:$0xff] %vm2642, %v4737
        %4803 = vst.msk [vmem:[#allocation5 + $0xf8] sm:$0xff] %vm2642, %v4739
        %v4804 = vld [vmem:[#allocation5] sm:$0xff]
        %v4805 = vld [vmem:[#allocation5 + $0x8] sm:$0xff]
        %v4806 = vld [vmem:[#allocation5 + $0x10] sm:$0xff]
        %v4807 = vld [vmem:[#allocation5 + $0x18] sm:$0xff]
        %v4808 = vld [vmem:[#allocation5 + $0x20] sm:$0xff]
        %v4809 = vld [vmem:[#allocation5 + $0x28] sm:$0xff]
        %v4810 = vld [vmem:[#allocation5 + $0x30] sm:$0xff]
        %v4811 = vld [vmem:[#allocation5 + $0x38] sm:$0xff]
        %v4812 = vld [vmem:[#allocation5 + $0x40] sm:$0xff]
        %v4813 = vld [vmem:[#allocation5 + $0x48] sm:$0xff]
        %v4814 = vld [vmem:[#allocation5 + $0x50] sm:$0xff]
        %v4815 = vld [vmem:[#allocation5 + $0x58] sm:$0xff]
        %v4816 = vld [vmem:[#allocation5 + $0x60] sm:$0xff]
        %v4817 = vld [vmem:[#allocation5 + $0x68] sm:$0xff]
        %v4818 = vld [vmem:[#allocation5 + $0x70] sm:$0xff]
        %v4819 = vld [vmem:[#allocation5 + $0x78] sm:$0xff]
        %v4820 = vld [vmem:[#allocation5 + $0x80] sm:$0xff]
        %v4821 = vld [vmem:[#allocation5 + $0x88] sm:$0xff]
        %v4822 = vld [vmem:[#allocation5 + $0x90] sm:$0xff]
        %v4823 = vld [vmem:[#allocation5 + $0x98] sm:$0xff]
        %v4824 = vld [vmem:[#allocation5 + $0xa0] sm:$0xff]
        %v4825 = vld [vmem:[#allocation5 + $0xa8] sm:$0xff]
        %v4826 = vld [vmem:[#allocation5 + $0xb0] sm:$0xff]
        %v4827 = vld [vmem:[#allocation5 + $0xb8] sm:$0xff]
        %v4828 = vld [vmem:[#allocation5 + $0xc0] sm:$0xff]
        %v4829 = vld [vmem:[#allocation5 + $0xc8] sm:$0xff]
        %v4830 = vld [vmem:[#allocation5 + $0xd0] sm:$0xff]
        %v4831 = vld [vmem:[#allocation5 + $0xd8] sm:$0xff]
        %v4832 = vld [vmem:[#allocation5 + $0xe0] sm:$0xff]
        %v4833 = vld [vmem:[#allocation5 + $0xe8] sm:$0xff]
        %v4834 = vld [vmem:[#allocation5 + $0xf0] sm:$0xff]
        %v4835 = vld [vmem:[#allocation5 + $0xf8] sm:$0xff]
        %v4836 = vld [vmem:[%s9] sm:$0xff]
        %v4837 = vld [vmem:[%s9 + $0x8] sm:$0xff]
        %v4838 = vld [vmem:[%s9 + $0x10] sm:$0xff]
        %v4839 = vld [vmem:[%s9 + $0x18] sm:$0xff]
        %v4840 = vld [vmem:[%s9 + $0x20] sm:$0xff]
        %v4841 = vld [vmem:[%s9 + $0x28] sm:$0xff]
        %v4842 = vld [vmem:[%s9 + $0x30] sm:$0xff]
        %v4843 = vld [vmem:[%s9 + $0x38] sm:$0xff]
        %v4844 = vld [vmem:[%s9 + $0x40] sm:$0xff]
        %v4846 = vsel %vm2716, %v4804, 0
        %v4849 = vsel %vm2716, %v4805, 0
        %v4852 = vsel %vm2716, %v4806, 0
        %v4855 = vsel %vm2716, %v4807, 0
        %v4858 = vsel %vm2716, %v4808, 0
        %v4861 = vsel %vm2716, %v4809, 0
        %v4864 = vsel %vm2716, %v4810, 0
        %v4867 = vsel %vm2716, %v4811, 0
        %v4870 = vsel %vm2716, %v4812, 0
        %v4873 = vsel %vm2716, %v4813, 0
        %v4876 = vsel %vm2716, %v4814, 0
        %v4879 = vsel %vm2716, %v4815, 0
        %v4882 = vsel %vm2716, %v4816, 0
        %v4885 = vsel %vm2716, %v4817, 0
        %v4888 = vsel %vm2716, %v4818, 0
        %v4891 = vsel %vm2716, %v4819, 0
        %v4894 = vsel %vm2716, %v4820, 0
        %v4897 = vsel %vm2716, %v4821, 0
        %v4900 = vsel %vm2716, %v4822, 0
        %v4903 = vsel %vm2716, %v4823, 0
        %v4906 = vsel %vm2716, %v4824, 0
        %v4909 = vsel %vm2716, %v4825, 0
        %v4912 = vsel %vm2716, %v4826, 0
        %v4915 = vsel %vm2716, %v4827, 0
        %v4918 = vsel %vm2716, %v4828, 0
        %v4921 = vsel %vm2716, %v4829, 0
        %v4924 = vsel %vm2716, %v4830, 0
        %v4927 = vsel %vm2716, %v4831, 0
        %v4930 = vsel %vm2716, %v4832, 0
        %v4933 = vsel %vm2716, %v4833, 0
        %v4936 = vsel %vm2716, %v4834, 0
        %v4939 = vsel %vm2716, %v4835, 0
        %4941 = vmatpush.msra.mxu0 0.0
        %4942 = vmatpush.msra.mxu0 0.0
        %4943 = vmatpush.msra.mxu0 0.0
        %4944 = vmatpush.msra.mxu0 0.0
        %4945 = vmatpush.msra.mxu0 0.0
        %4946 = vmatpush.msra.mxu0 0.0
        %4947 = vmatpush.msra.mxu0 0.0
        %4948 = vmatpush.msra.mxu0 %v4844
        %4949 = vmatpush.msra.mxu0 %v4843
        %4950 = vmatpush.msra.mxu0 %v4842
        %4951 = vmatpush.msra.mxu0 %v4841
        %4952 = vmatpush.msra.mxu0 %v4840
        %4953 = vmatpush.msra.mxu0 %v4839
        %4954 = vmatpush.msra.mxu0 %v4838
        %4955 = vmatpush.msra.mxu0 %v4837
        %4956 = vmatpush.msra.mxu0 %v4836
        %4957 = vmatmul.f32.gmra.mxu0 %v4846
        %v4958 = vpop.f32.mrf.mxu0
        %v4959 = vadd.f32 0.0, %v4958
        %4960 = vmatmul.f32.gmra.mxu0 %v4849
        %v4961 = vpop.f32.mrf.mxu0
        %v4962 = vadd.f32 0.0, %v4961
        %4963 = vmatmul.f32.gmra.mxu0 %v4852
        %v4964 = vpop.f32.mrf.mxu0
        %v4965 = vadd.f32 0.0, %v4964
        %4966 = vmatmul.f32.gmra.mxu0 %v4855
        %v4967 = vpop.f32.mrf.mxu0
        %v4968 = vadd.f32 0.0, %v4967
        %4969 = vmatmul.f32.gmra.mxu0 %v4858
        %v4970 = vpop.f32.mrf.mxu0
        %v4971 = vadd.f32 0.0, %v4970
        %4972 = vmatmul.f32.gmra.mxu0 %v4861
        %v4973 = vpop.f32.mrf.mxu0
        %v4974 = vadd.f32 0.0, %v4973
        %4975 = vmatmul.f32.gmra.mxu0 %v4864
        %v4976 = vpop.f32.mrf.mxu0
        %v4977 = vadd.f32 0.0, %v4976
        %4978 = vmatmul.f32.gmra.mxu0 %v4867
        %v4979 = vpop.f32.mrf.mxu0
        %v4980 = vadd.f32 0.0, %v4979
        %4981 = vmatmul.f32.gmra.mxu0 %v4870
        %v4982 = vpop.f32.mrf.mxu0
        %v4983 = vadd.f32 0.0, %v4982
        %4984 = vmatmul.f32.gmra.mxu0 %v4873
        %v4985 = vpop.f32.mrf.mxu0
        %v4986 = vadd.f32 0.0, %v4985
        %4987 = vmatmul.f32.gmra.mxu0 %v4876
        %v4988 = vpop.f32.mrf.mxu0
        %v4989 = vadd.f32 0.0, %v4988
        %4990 = vmatmul.f32.gmra.mxu0 %v4879
        %v4991 = vpop.f32.mrf.mxu0
        %v4992 = vadd.f32 0.0, %v4991
        %4993 = vmatmul.f32.gmra.mxu0 %v4882
        %v4994 = vpop.f32.mrf.mxu0
        %v4995 = vadd.f32 0.0, %v4994
        %4996 = vmatmul.f32.gmra.mxu0 %v4885
        %v4997 = vpop.f32.mrf.mxu0
        %v4998 = vadd.f32 0.0, %v4997
        %4999 = vmatmul.f32.gmra.mxu0 %v4888
        %v5000 = vpop.f32.mrf.mxu0
        %v5001 = vadd.f32 0.0, %v5000
        %5002 = vmatmul.f32.gmra.mxu0 %v4891
        %v5003 = vpop.f32.mrf.mxu0
        %v5004 = vadd.f32 0.0, %v5003
        %5005 = vmatmul.f32.gmra.mxu0 %v4894
        %v5006 = vpop.f32.mrf.mxu0
        %v5007 = vadd.f32 0.0, %v5006
        %5008 = vmatmul.f32.gmra.mxu0 %v4897
        %v5009 = vpop.f32.mrf.mxu0
        %v5010 = vadd.f32 0.0, %v5009
        %5011 = vmatmul.f32.gmra.mxu0 %v4900
        %v5012 = vpop.f32.mrf.mxu0
        %v5013 = vadd.f32 0.0, %v5012
        %5014 = vmatmul.f32.gmra.mxu0 %v4903
        %v5015 = vpop.f32.mrf.mxu0
        %v5016 = vadd.f32 0.0, %v5015
        %5017 = vmatmul.f32.gmra.mxu0 %v4906
        %v5018 = vpop.f32.mrf.mxu0
        %v5019 = vadd.f32 0.0, %v5018
        %5020 = vmatmul.f32.gmra.mxu0 %v4909
        %v5021 = vpop.f32.mrf.mxu0
        %v5022 = vadd.f32 0.0, %v5021
        %5023 = vmatmul.f32.gmra.mxu0 %v4912
        %v5024 = vpop.f32.mrf.mxu0
        %v5025 = vadd.f32 0.0, %v5024
        %5026 = vmatmul.f32.gmra.mxu0 %v4915
        %v5027 = vpop.f32.mrf.mxu0
        %v5028 = vadd.f32 0.0, %v5027
        %5029 = vmatmul.f32.gmra.mxu0 %v4918
        %v5030 = vpop.f32.mrf.mxu0
        %v5031 = vadd.f32 0.0, %v5030
        %5032 = vmatmul.f32.gmra.mxu0 %v4921
        %v5033 = vpop.f32.mrf.mxu0
        %v5034 = vadd.f32 0.0, %v5033
        %5035 = vmatmul.f32.gmra.mxu0 %v4924
        %v5036 = vpop.f32.mrf.mxu0
        %v5037 = vadd.f32 0.0, %v5036
        %5038 = vmatmul.f32.gmra.mxu0 %v4927
        %v5039 = vpop.f32.mrf.mxu0
        %v5040 = vadd.f32 0.0, %v5039
        %5041 = vmatmul.f32.gmra.mxu0 %v4930
        %v5042 = vpop.f32.mrf.mxu0
        %v5043 = vadd.f32 0.0, %v5042
        %5044 = vmatmul.f32.gmra.mxu0 %v4933
        %v5045 = vpop.f32.mrf.mxu0
        %v5046 = vadd.f32 0.0, %v5045
        %5047 = vmatmul.f32.gmra.mxu0 %v4936
        %v5048 = vpop.f32.mrf.mxu0
        %v5049 = vadd.f32 0.0, %v5048
        %5050 = vmatmul.f32.gmra.mxu0 %v4939
        %v5051 = vpop.f32.mrf.mxu0
        %v5052 = vadd.f32 0.0, %v5051
        %5053 = vdwg.mxu0
        %v5054 = vld [vmem:[%s7] sm:$0xff]
        %v5055 = vsel %vm472, %v4959, 0.0
        %v5056 = vsel %vm472, %v4962, 0.0
        %v5057 = vadd.f32 %v5055, %v5056
        %v5058 = vsel %vm472, %v4965, 0.0
        %v5059 = vadd.f32 %v5057, %v5058
        %v5060 = vsel %vm472, %v4968, 0.0
        %v5061 = vadd.f32 %v5059, %v5060
        %v5062 = vsel %vm472, %v4971, 0.0
        %v5063 = vadd.f32 %v5061, %v5062
        %v5064 = vsel %vm472, %v4974, 0.0
        %v5065 = vadd.f32 %v5063, %v5064
        %v5066 = vsel %vm472, %v4977, 0.0
        %v5067 = vadd.f32 %v5065, %v5066
        %v5068 = vsel %vm472, %v4980, 0.0
        %v5069 = vadd.f32 %v5067, %v5068
        %v5070 = vsel %vm472, %v4983, 0.0
        %v5071 = vadd.f32 %v5069, %v5070
        %v5072 = vsel %vm472, %v4986, 0.0
        %v5073 = vadd.f32 %v5071, %v5072
        %v5074 = vsel %vm472, %v4989, 0.0
        %v5075 = vadd.f32 %v5073, %v5074
        %v5076 = vsel %vm472, %v4992, 0.0
        %v5077 = vadd.f32 %v5075, %v5076
        %v5078 = vsel %vm472, %v4995, 0.0
        %v5079 = vadd.f32 %v5077, %v5078
        %v5080 = vsel %vm472, %v4998, 0.0
        %v5081 = vadd.f32 %v5079, %v5080
        %v5082 = vsel %vm472, %v5001, 0.0
        %v5083 = vadd.f32 %v5081, %v5082
        %v5084 = vsel %vm472, %v5004, 0.0
        %v5085 = vadd.f32 %v5083, %v5084
        %v5086 = vsel %vm472, %v5007, 0.0
        %v5087 = vadd.f32 %v5085, %v5086
        %v5088 = vsel %vm472, %v5010, 0.0
        %v5089 = vadd.f32 %v5087, %v5088
        %v5090 = vsel %vm472, %v5013, 0.0
        %v5091 = vadd.f32 %v5089, %v5090
        %v5092 = vsel %vm472, %v5016, 0.0
        %v5093 = vadd.f32 %v5091, %v5092
        %v5094 = vsel %vm472, %v5019, 0.0
        %v5095 = vadd.f32 %v5093, %v5094
        %v5096 = vsel %vm472, %v5022, 0.0
        %v5097 = vadd.f32 %v5095, %v5096
        %v5098 = vsel %vm472, %v5025, 0.0
        %v5099 = vadd.f32 %v5097, %v5098
        %v5100 = vsel %vm472, %v5028, 0.0
        %v5101 = vadd.f32 %v5099, %v5100
        %v5102 = vsel %vm472, %v5031, 0.0
        %v5103 = vadd.f32 %v5101, %v5102
        %v5104 = vsel %vm472, %v5034, 0.0
        %v5105 = vadd.f32 %v5103, %v5104
        %v5106 = vsel %vm472, %v5037, 0.0
        %v5107 = vadd.f32 %v5105, %v5106
        %v5108 = vsel %vm472, %v5040, 0.0
        %v5109 = vadd.f32 %v5107, %v5108
        %v5110 = vsel %vm472, %v5043, 0.0
        %v5111 = vadd.f32 %v5109, %v5110
        %v5112 = vsel %vm472, %v5046, 0.0
        %v5113 = vadd.f32 %v5111, %v5112
        %v5114 = vsel %vm472, %v5049, 0.0
        %v5115 = vadd.f32 %v5113, %v5114
        %v5116 = vsel %vm472, %v5052, 0.0
        %v5117 = vadd.f32 %v5115, %v5116
        %v5118 = vrot.slane %v5117, 4
        %v5119 = vadd.f32 %v5117, %v5118
        %v5120 = vrot.slane %v5119, 2
        %v5121 = vadd.f32 %v5119, %v5120
        %v5122 = vrot.slane %v5121, 1
        %v5123 = vadd.f32 %v5121, %v5122
        %v5124 = vmul.f32 %v4959, %v4959
        %v5125 = vmul.f32 %v4962, %v4962
        %v5126 = vmul.f32 %v4965, %v4965
        %v5127 = vmul.f32 %v4968, %v4968
        %v5128 = vmul.f32 %v4971, %v4971
        %v5129 = vmul.f32 %v4974, %v4974
        %v5130 = vmul.f32 %v4977, %v4977
        %v5131 = vmul.f32 %v4980, %v4980
        %v5132 = vmul.f32 %v4983, %v4983
        %v5133 = vmul.f32 %v4986, %v4986
        %v5134 = vmul.f32 %v4989, %v4989
        %v5135 = vmul.f32 %v4992, %v4992
        %v5136 = vmul.f32 %v4995, %v4995
        %v5137 = vmul.f32 %v4998, %v4998
        %v5138 = vmul.f32 %v5001, %v5001
        %v5139 = vmul.f32 %v5004, %v5004
        %v5140 = vmul.f32 %v5007, %v5007
        %v5141 = vmul.f32 %v5010, %v5010
        %v5142 = vmul.f32 %v5013, %v5013
        %v5143 = vmul.f32 %v5016, %v5016
        %v5144 = vmul.f32 %v5019, %v5019
        %v5145 = vmul.f32 %v5022, %v5022
        %v5146 = vmul.f32 %v5025, %v5025
        %v5147 = vmul.f32 %v5028, %v5028
        %v5148 = vmul.f32 %v5031, %v5031
        %v5149 = vmul.f32 %v5034, %v5034
        %v5150 = vmul.f32 %v5037, %v5037
        %v5151 = vmul.f32 %v5040, %v5040
        %v5152 = vmul.f32 %v5043, %v5043
        %v5153 = vmul.f32 %v5046, %v5046
        %v5154 = vmul.f32 %v5049, %v5049
        %v5155 = vmul.f32 %v5052, %v5052
        %v5156 = vsel %vm472, %v5124, 0.0
        %v5157 = vsel %vm472, %v5125, 0.0
        %v5158 = vadd.f32 %v5156, %v5157
        %v5159 = vsel %vm472, %v5126, 0.0
        %v5160 = vadd.f32 %v5158, %v5159
        %v5161 = vsel %vm472, %v5127, 0.0
        %v5162 = vadd.f32 %v5160, %v5161
        %v5163 = vsel %vm472, %v5128, 0.0
        %v5164 = vadd.f32 %v5162, %v5163
        %v5165 = vsel %vm472, %v5129, 0.0
        %v5166 = vadd.f32 %v5164, %v5165
        %v5167 = vsel %vm472, %v5130, 0.0
        %v5168 = vadd.f32 %v5166, %v5167
        %v5169 = vsel %vm472, %v5131, 0.0
        %v5170 = vadd.f32 %v5168, %v5169
        %v5171 = vsel %vm472, %v5132, 0.0
        %v5172 = vadd.f32 %v5170, %v5171
        %v5173 = vsel %vm472, %v5133, 0.0
        %v5174 = vadd.f32 %v5172, %v5173
        %v5175 = vsel %vm472, %v5134, 0.0
        %v5176 = vadd.f32 %v5174, %v5175
        %v5177 = vsel %vm472, %v5135, 0.0
        %v5178 = vadd.f32 %v5176, %v5177
        %v5179 = vsel %vm472, %v5136, 0.0
        %v5180 = vadd.f32 %v5178, %v5179
        %v5181 = vsel %vm472, %v5137, 0.0
        %v5182 = vadd.f32 %v5180, %v5181
        %v5183 = vsel %vm472, %v5138, 0.0
        %v5184 = vadd.f32 %v5182, %v5183
        %v5185 = vsel %vm472, %v5139, 0.0
        %v5186 = vadd.f32 %v5184, %v5185
        %v5187 = vsel %vm472, %v5140, 0.0
        %v5188 = vadd.f32 %v5186, %v5187
        %v5189 = vsel %vm472, %v5141, 0.0
        %v5190 = vadd.f32 %v5188, %v5189
        %v5191 = vsel %vm472, %v5142, 0.0
        %v5192 = vadd.f32 %v5190, %v5191
        %v5193 = vsel %vm472, %v5143, 0.0
        %v5194 = vadd.f32 %v5192, %v5193
        %v5195 = vsel %vm472, %v5144, 0.0
        %v5196 = vadd.f32 %v5194, %v5195
        %v5197 = vsel %vm472, %v5145, 0.0
        %v5198 = vadd.f32 %v5196, %v5197
        %v5199 = vsel %vm472, %v5146, 0.0
        %v5200 = vadd.f32 %v5198, %v5199
        %v5201 = vsel %vm472, %v5147, 0.0
        %v5202 = vadd.f32 %v5200, %v5201
        %v5203 = vsel %vm472, %v5148, 0.0
        %v5204 = vadd.f32 %v5202, %v5203
        %v5205 = vsel %vm472, %v5149, 0.0
        %v5206 = vadd.f32 %v5204, %v5205
        %v5207 = vsel %vm472, %v5150, 0.0
        %v5208 = vadd.f32 %v5206, %v5207
        %v5209 = vsel %vm472, %v5151, 0.0
        %v5210 = vadd.f32 %v5208, %v5209
        %v5211 = vsel %vm472, %v5152, 0.0
        %v5212 = vadd.f32 %v5210, %v5211
        %v5213 = vsel %vm472, %v5153, 0.0
        %v5214 = vadd.f32 %v5212, %v5213
        %v5215 = vsel %vm472, %v5154, 0.0
        %v5216 = vadd.f32 %v5214, %v5215
        %v5217 = vsel %vm472, %v5155, 0.0
        %v5218 = vadd.f32 %v5216, %v5217
        %v5219 = vrot.slane %v5218, 4
        %v5220 = vadd.f32 %v5218, %v5219
        %v5221 = vrot.slane %v5220, 2
        %v5222 = vadd.f32 %v5220, %v5221
        %v5223 = vrot.slane %v5222, 1
        %v5224 = vadd.f32 %v5222, %v5223
        %v5226 = vsel %vm472, %v5123, 0
        %5228 = vmatpush.msra.mxu0 0.0
        %5229 = vmatpush.msra.mxu0 0.0
        %5230 = vmatpush.msra.mxu0 0.0
        %5231 = vmatpush.msra.mxu0 0.0
        %5232 = vmatpush.msra.mxu0 0.0
        %5233 = vmatpush.msra.mxu0 0.0
        %5234 = vmatpush.msra.mxu0 0.0
        %5235 = vmatpush.msra.mxu0 0.0
        %5236 = vmatpush.msra.mxu0 0.0
        %5237 = vmatpush.msra.mxu0 0.0
        %5238 = vmatpush.msra.mxu0 0.0
        %5239 = vmatpush.msra.mxu0 0.0
        %5240 = vmatpush.msra.mxu0 0.0
        %5241 = vmatpush.msra.mxu0 0.0
        %5242 = vmatpush.msra.mxu0 0.0
        %5243 = vmatpush.msra.mxu0 %v5054
        %5244 = vmatmul.f32.gmra.mxu0 %v5226
        %v5245 = vpop.f32.mrf.mxu0
        %v5246 = vadd.f32 0.0, %v5245
        %5247 = vdwg.mxu0
        %v5249 = vsel %vm472, %v5224, 0
        %5251 = vmatpush.msra.mxu0 0.0
        %5252 = vmatpush.msra.mxu0 0.0
        %5253 = vmatpush.msra.mxu0 0.0
        %5254 = vmatpush.msra.mxu0 0.0
        %5255 = vmatpush.msra.mxu0 0.0
        %5256 = vmatpush.msra.mxu0 0.0
        %5257 = vmatpush.msra.mxu0 0.0
        %5258 = vmatpush.msra.mxu0 0.0
        %5259 = vmatpush.msra.mxu0 0.0
        %5260 = vmatpush.msra.mxu0 0.0
        %5261 = vmatpush.msra.mxu0 0.0
        %5262 = vmatpush.msra.mxu0 0.0
        %5263 = vmatpush.msra.mxu0 0.0
        %5264 = vmatpush.msra.mxu0 0.0
        %5265 = vmatpush.msra.mxu0 0.0
        %5266 = vmatpush.msra.mxu0 %v5054
        %5267 = vmatmul.f32.gmra.mxu0 %v5249
        %v5268 = vpop.f32.mrf.mxu0
        %v5269 = vadd.f32 0.0, %v5268
        %5270 = vdwg.mxu0
        %v5272 = vsel %vm689, %v5246, 0
        %v5275 = vsel %vm689, %v5054, 0
        %5277 = vmatpush.xpose.msra.mxu0 0.0
        %5278 = vmatpush.xpose.msra.mxu0 0.0
        %5279 = vmatpush.xpose.msra.mxu0 0.0
        %5280 = vmatpush.xpose.msra.mxu0 0.0
        %5281 = vmatpush.xpose.msra.mxu0 0.0
        %5282 = vmatpush.xpose.msra.mxu0 0.0
        %5283 = vmatpush.xpose.msra.mxu0 0.0
        %5284 = vmatpush.xpose.msra.mxu0 0.0
        %5285 = vmatpush.xpose.msra.mxu0 0.0
        %5286 = vmatpush.xpose.msra.mxu0 0.0
        %5287 = vmatpush.xpose.msra.mxu0 0.0
        %5288 = vmatpush.xpose.msra.mxu0 0.0
        %5289 = vmatpush.xpose.msra.mxu0 0.0
        %5290 = vmatpush.xpose.msra.mxu0 0.0
        %5291 = vmatpush.xpose.msra.mxu0 0.0
        %5292 = vmatpush.xpose.msra.mxu0 %v5275
        %5293 = vmatmul.f32.gmra.mxu0 %v5272
        %v5294 = vpop.f32.mrf.mxu0
        %v5295 = vadd.f32 0.0, %v5294
        %5296 = vdwg.mxu0
        %v5297 = vmul.f32 %v5295, 0.0009765625
        %v5299 = vsel %vm689, %v5269, 0
        %5301 = vmatpush.xpose.msra.mxu0 0.0
        %5302 = vmatpush.xpose.msra.mxu0 0.0
        %5303 = vmatpush.xpose.msra.mxu0 0.0
        %5304 = vmatpush.xpose.msra.mxu0 0.0
        %5305 = vmatpush.xpose.msra.mxu0 0.0
        %5306 = vmatpush.xpose.msra.mxu0 0.0
        %5307 = vmatpush.xpose.msra.mxu0 0.0
        %5308 = vmatpush.xpose.msra.mxu0 0.0
        %5309 = vmatpush.xpose.msra.mxu0 0.0
        %5310 = vmatpush.xpose.msra.mxu0 0.0
        %5311 = vmatpush.xpose.msra.mxu0 0.0
        %5312 = vmatpush.xpose.msra.mxu0 0.0
        %5313 = vmatpush.xpose.msra.mxu0 0.0
        %5314 = vmatpush.xpose.msra.mxu0 0.0
        %5315 = vmatpush.xpose.msra.mxu0 0.0
        %5316 = vmatpush.xpose.msra.mxu0 %v5275
        %5317 = vmatmul.f32.gmra.mxu0 %v5299
        %v5318 = vpop.f32.mrf.mxu0
        %v5319 = vadd.f32 0.0, %v5318
        %5320 = vdwg.mxu0
        %v5321 = vmul.f32 %v5319, 0.0009765625
        %v5322 = vmul.f32 %v5297, %v5297
        %v5323 = vsub.f32 %v5321, %v5322
        %v5324 = vmax.f32 %v5323, 0.0
        %v5325 = vadd.f32 %v5324, 1e-05
        %v5326 = vrsqrt.pop %v5325
        %v5327 = vmul.f32 %v5326, %v5325
        %v5328 = vmul.f32 %v5327, %v5326
        %v5329 = vmul.f32 0.5, %v5328
        %v5330 = vsub.f32 1.5, %v5329
        %v5331 = vmul.f32 %v5326, %v5330
        %vm5332 = vweird.f32 %v5325
        %vm5333 = vweird.f32 %v5326
        %vm5334 = vmor %vm5332, %vm5333
        %v5335 = vsel %vm5334, %v5326, %v5331
        %v5336 = vld [vmem:[%s4] sm:$0x3]
        %v5337 = vperm.slane %v5297, 0
        %v5338 = vsub.f32 %v4959, %v5337
        %v5339 = vsub.f32 %v4962, %v5337
        %v5340 = vsub.f32 %v4965, %v5337
        %v5341 = vsub.f32 %v4968, %v5337
        %v5342 = vsub.f32 %v4971, %v5337
        %v5343 = vsub.f32 %v4974, %v5337
        %v5344 = vsub.f32 %v4977, %v5337
        %v5345 = vsub.f32 %v4980, %v5337
        %v5346 = vsub.f32 %v4983, %v5337
        %v5347 = vsub.f32 %v4986, %v5337
        %v5348 = vsub.f32 %v4989, %v5337
        %v5349 = vsub.f32 %v4992, %v5337
        %v5350 = vsub.f32 %v4995, %v5337
        %v5351 = vsub.f32 %v4998, %v5337
        %v5352 = vsub.f32 %v5001, %v5337
        %v5353 = vsub.f32 %v5004, %v5337
        %v5354 = vsub.f32 %v5007, %v5337
        %v5355 = vsub.f32 %v5010, %v5337
        %v5356 = vsub.f32 %v5013, %v5337
        %v5357 = vsub.f32 %v5016, %v5337
        %v5358 = vsub.f32 %v5019, %v5337
        %v5359 = vsub.f32 %v5022, %v5337
        %v5360 = vsub.f32 %v5025, %v5337
        %v5361 = vsub.f32 %v5028, %v5337
        %v5362 = vsub.f32 %v5031, %v5337
        %v5363 = vsub.f32 %v5034, %v5337
        %v5364 = vsub.f32 %v5037, %v5337
        %v5365 = vsub.f32 %v5040, %v5337
        %v5366 = vsub.f32 %v5043, %v5337
        %v5367 = vsub.f32 %v5046, %v5337
        %v5368 = vsub.f32 %v5049, %v5337
        %v5369 = vsub.f32 %v5052, %v5337
        %v5370 = vperm.slane %v5335, 0
        %v5371 = vmul.f32 %v5338, %v5370
        %v5372 = vmul.f32 %v5339, %v5370
        %v5373 = vmul.f32 %v5340, %v5370
        %v5374 = vmul.f32 %v5341, %v5370
        %v5375 = vmul.f32 %v5342, %v5370
        %v5376 = vmul.f32 %v5343, %v5370
        %v5377 = vmul.f32 %v5344, %v5370
        %v5378 = vmul.f32 %v5345, %v5370
        %v5379 = vmul.f32 %v5346, %v5370
        %v5380 = vmul.f32 %v5347, %v5370
        %v5381 = vmul.f32 %v5348, %v5370
        %v5382 = vmul.f32 %v5349, %v5370
        %v5383 = vmul.f32 %v5350, %v5370
        %v5384 = vmul.f32 %v5351, %v5370
        %v5385 = vmul.f32 %v5352, %v5370
        %v5386 = vmul.f32 %v5353, %v5370
        %v5387 = vmul.f32 %v5354, %v5370
        %v5388 = vmul.f32 %v5355, %v5370
        %v5389 = vmul.f32 %v5356, %v5370
        %v5390 = vmul.f32 %v5357, %v5370
        %v5391 = vmul.f32 %v5358, %v5370
        %v5392 = vmul.f32 %v5359, %v5370
        %v5393 = vmul.f32 %v5360, %v5370
        %v5394 = vmul.f32 %v5361, %v5370
        %v5395 = vmul.f32 %v5362, %v5370
        %v5396 = vmul.f32 %v5363, %v5370
        %v5397 = vmul.f32 %v5364, %v5370
        %v5398 = vmul.f32 %v5365, %v5370
        %v5399 = vmul.f32 %v5366, %v5370
        %v5400 = vmul.f32 %v5367, %v5370
        %v5401 = vmul.f32 %v5368, %v5370
        %v5402 = vmul.f32 %v5369, %v5370
        %v5403 = vperm.slane %v5336, 0
        %v5404 = vmul.f32 %v5371, %v5403
        %v5405 = vmul.f32 %v5372, %v5403
        %v5406 = vmul.f32 %v5373, %v5403
        %v5407 = vmul.f32 %v5374, %v5403
        %v5408 = vmul.f32 %v5375, %v5403
        %v5409 = vmul.f32 %v5376, %v5403
        %v5410 = vmul.f32 %v5377, %v5403
        %v5411 = vmul.f32 %v5378, %v5403
        %v5412 = vmul.f32 %v5379, %v5403
        %v5413 = vmul.f32 %v5380, %v5403
        %v5414 = vmul.f32 %v5381, %v5403
        %v5415 = vmul.f32 %v5382, %v5403
        %v5416 = vmul.f32 %v5383, %v5403
        %v5417 = vmul.f32 %v5384, %v5403
        %v5418 = vmul.f32 %v5385, %v5403
        %v5419 = vmul.f32 %v5386, %v5403
        %v5420 = vmul.f32 %v5387, %v5403
        %v5421 = vmul.f32 %v5388, %v5403
        %v5422 = vmul.f32 %v5389, %v5403
        %v5423 = vmul.f32 %v5390, %v5403
        %v5424 = vmul.f32 %v5391, %v5403
        %v5425 = vmul.f32 %v5392, %v5403
        %v5426 = vmul.f32 %v5393, %v5403
        %v5427 = vmul.f32 %v5394, %v5403
        %v5428 = vmul.f32 %v5395, %v5403
        %v5429 = vmul.f32 %v5396, %v5403
        %v5430 = vmul.f32 %v5397, %v5403
        %v5431 = vmul.f32 %v5398, %v5403
        %v5432 = vmul.f32 %v5399, %v5403
        %v5433 = vmul.f32 %v5400, %v5403
        %v5434 = vmul.f32 %v5401, %v5403
        %v5435 = vmul.f32 %v5402, %v5403
        %v5436 = vperm.slane %v5336, 1
        %v5437 = vadd.f32 %v5404, %v5436
        %v5438 = vadd.f32 %v5405, %v5436
        %v5439 = vadd.f32 %v5406, %v5436
        %v5440 = vadd.f32 %v5407, %v5436
        %v5441 = vadd.f32 %v5408, %v5436
        %v5442 = vadd.f32 %v5409, %v5436
        %v5443 = vadd.f32 %v5410, %v5436
        %v5444 = vadd.f32 %v5411, %v5436
        %v5445 = vadd.f32 %v5412, %v5436
        %v5446 = vadd.f32 %v5413, %v5436
        %v5447 = vadd.f32 %v5414, %v5436
        %v5448 = vadd.f32 %v5415, %v5436
        %v5449 = vadd.f32 %v5416, %v5436
        %v5450 = vadd.f32 %v5417, %v5436
        %v5451 = vadd.f32 %v5418, %v5436
        %v5452 = vadd.f32 %v5419, %v5436
        %v5453 = vadd.f32 %v5420, %v5436
        %v5454 = vadd.f32 %v5421, %v5436
        %v5455 = vadd.f32 %v5422, %v5436
        %v5456 = vadd.f32 %v5423, %v5436
        %v5457 = vadd.f32 %v5424, %v5436
        %v5458 = vadd.f32 %v5425, %v5436
        %v5459 = vadd.f32 %v5426, %v5436
        %v5460 = vadd.f32 %v5427, %v5436
        %v5461 = vadd.f32 %v5428, %v5436
        %v5462 = vadd.f32 %v5429, %v5436
        %v5463 = vadd.f32 %v5430, %v5436
        %v5464 = vadd.f32 %v5431, %v5436
        %v5465 = vadd.f32 %v5432, %v5436
        %v5466 = vadd.f32 %v5433, %v5436
        %v5467 = vadd.f32 %v5434, %v5436
        %v5468 = vadd.f32 %v5435, %v5436
        %v5469 = vmax.f32 %v5437, 0.0
        %v5470 = vmax.f32 %v5438, 0.0
        %v5471 = vmax.f32 %v5439, 0.0
        %v5472 = vmax.f32 %v5440, 0.0
        %v5473 = vmax.f32 %v5441, 0.0
        %v5474 = vmax.f32 %v5442, 0.0
        %v5475 = vmax.f32 %v5443, 0.0
        %v5476 = vmax.f32 %v5444, 0.0
        %v5477 = vmax.f32 %v5445, 0.0
        %v5478 = vmax.f32 %v5446, 0.0
        %v5479 = vmax.f32 %v5447, 0.0
        %v5480 = vmax.f32 %v5448, 0.0
        %v5481 = vmax.f32 %v5449, 0.0
        %v5482 = vmax.f32 %v5450, 0.0
        %v5483 = vmax.f32 %v5451, 0.0
        %v5484 = vmax.f32 %v5452, 0.0
        %v5485 = vmax.f32 %v5453, 0.0
        %v5486 = vmax.f32 %v5454, 0.0
        %v5487 = vmax.f32 %v5455, 0.0
        %v5488 = vmax.f32 %v5456, 0.0
        %v5489 = vmax.f32 %v5457, 0.0
        %v5490 = vmax.f32 %v5458, 0.0
        %v5491 = vmax.f32 %v5459, 0.0
        %v5492 = vmax.f32 %v5460, 0.0
        %v5493 = vmax.f32 %v5461, 0.0
        %v5494 = vmax.f32 %v5462, 0.0
        %v5495 = vmax.f32 %v5463, 0.0
        %v5496 = vmax.f32 %v5464, 0.0
        %v5497 = vmax.f32 %v5465, 0.0
        %v5498 = vmax.f32 %v5466, 0.0
        %v5499 = vmax.f32 %v5467, 0.0
        %v5500 = vmax.f32 %v5468, 0.0
        %5501 = vst.msk [vmem:[#allocation6] sm:$0xff] %vm472, 0.0
        %5502 = vst.msk [vmem:[#allocation6 + $0x8] sm:$0xff] %vm472, 0.0
        %5503 = vst.msk [vmem:[#allocation6 + $0x10] sm:$0x3] %vm1235, 0.0
        %5504 = vst.msk [vmem:[#allocation6 + $0x18] sm:$0xff] %vm472, 0.0
        %5505 = vst.msk [vmem:[#allocation6 + $0x20] sm:$0xff] %vm472, 0.0
        %5506 = vst.msk [vmem:[#allocation6 + $0x28] sm:$0x3] %vm1235, 0.0
        %5507 = vst.msk [vmem:[#allocation6 + $0x30] sm:$0xff] %vm472, 0.0
        %5508 = vst.msk [vmem:[#allocation6 + $0x38] sm:$0xff] %vm472, 0.0
        %5509 = vst.msk [vmem:[#allocation6 + $0x40] sm:$0x3] %vm1235, 0.0
        %5510 = vst.msk [vmem:[#allocation6 + $0x48] sm:$0xff] %vm472, 0.0
        %5511 = vst.msk [vmem:[#allocation6 + $0x50] sm:$0xff] %vm472, 0.0
        %5512 = vst.msk [vmem:[#allocation6 + $0x58] sm:$0x3] %vm1235, 0.0
        %5513 = vst.msk [vmem:[#allocation6 + $0x60] sm:$0xff] %vm472, 0.0
        %5514 = vst.msk [vmem:[#allocation6 + $0x68] sm:$0xff] %vm472, 0.0
        %5515 = vst.msk [vmem:[#allocation6 + $0x70] sm:$0x3] %vm1235, 0.0
        %5516 = vst.msk [vmem:[#allocation6 + $0x78] sm:$0xff] %vm472, 0.0
        %5517 = vst.msk [vmem:[#allocation6 + $0x80] sm:$0xff] %vm472, 0.0
        %5518 = vst.msk [vmem:[#allocation6 + $0x88] sm:$0x3] %vm1235, 0.0
        %5519 = vst.msk [vmem:[#allocation6 + $0x90] sm:$0xff] %vm472, 0.0
        %5520 = vst.msk [vmem:[#allocation6 + $0x98] sm:$0xff] %vm472, 0.0
        %5521 = vst.msk [vmem:[#allocation6 + $0xa0] sm:$0x3] %vm1235, 0.0
        %5522 = vst.msk [vmem:[#allocation6 + $0xa8] sm:$0xff] %vm472, 0.0
        %5523 = vst.msk [vmem:[#allocation6 + $0xb0] sm:$0xff] %vm472, 0.0
        %5524 = vst.msk [vmem:[#allocation6 + $0xb8] sm:$0x3] %vm1235, 0.0
        %5525 = vst.msk [vmem:[#allocation6 + $0xc0] sm:$0xff] %vm472, 0.0
        %5526 = vst.msk [vmem:[#allocation6 + $0xc8] sm:$0xff] %vm472, 0.0
        %5527 = vst.msk [vmem:[#allocation6 + $0xd0] sm:$0x3] %vm1235, 0.0
        %5528 = vst.msk [vmem:[#allocation6 + $0xd8] sm:$0xff] %vm472, 0.0
        %5529 = vst.msk [vmem:[#allocation6 + $0xe0] sm:$0xff] %vm472, 0.0
        %5530 = vst.msk [vmem:[#allocation6 + $0xe8] sm:$0x3] %vm1235, 0.0
        %5531 = vst.msk [vmem:[#allocation6 + $0xf0] sm:$0xff] %vm472, 0.0
        %5532 = vst.msk [vmem:[#allocation6 + $0xf8] sm:$0xff] %vm472, 0.0
        %5533 = vst.msk [vmem:[#allocation6 + $0x100] sm:$0x3] %vm1235, 0.0
        %5534 = vst.msk [vmem:[#allocation6 + $0x108] sm:$0xff] %vm472, 0.0
        %5535 = vst.msk [vmem:[#allocation6 + $0x110] sm:$0xff] %vm472, 0.0
        %5536 = vst.msk [vmem:[#allocation6 + $0x118] sm:$0x3] %vm1235, 0.0
        %5537 = vst.msk [vmem:[#allocation6 + $0x120] sm:$0xff] %vm472, 0.0
        %5538 = vst.msk [vmem:[#allocation6 + $0x128] sm:$0xff] %vm472, 0.0
        %5539 = vst.msk [vmem:[#allocation6 + $0x130] sm:$0x3] %vm1235, 0.0
        %5540 = vst.msk [vmem:[#allocation6 + $0x138] sm:$0xff] %vm472, 0.0
        %5541 = vst.msk [vmem:[#allocation6 + $0x140] sm:$0xff] %vm472, 0.0
        %5542 = vst.msk [vmem:[#allocation6 + $0x148] sm:$0x3] %vm1235, 0.0
        %5543 = vst.msk [vmem:[#allocation6 + $0x150] sm:$0xff] %vm472, 0.0
        %5544 = vst.msk [vmem:[#allocation6 + $0x158] sm:$0xff] %vm472, 0.0
        %5545 = vst.msk [vmem:[#allocation6 + $0x160] sm:$0x3] %vm1235, 0.0
        %5546 = vst.msk [vmem:[#allocation6 + $0x168] sm:$0xff] %vm472, 0.0
        %5547 = vst.msk [vmem:[#allocation6 + $0x170] sm:$0xff] %vm472, 0.0
        %5548 = vst.msk [vmem:[#allocation6 + $0x178] sm:$0x3] %vm1235, 0.0
        %5549 = vst.msk [vmem:[#allocation6 + $0x180] sm:$0xff] %vm472, 0.0
        %5550 = vst.msk [vmem:[#allocation6 + $0x188] sm:$0xff] %vm472, 0.0
        %5551 = vst.msk [vmem:[#allocation6 + $0x190] sm:$0x3] %vm1235, 0.0
        %5552 = vst.msk [vmem:[#allocation6 + $0x198] sm:$0xff] %vm472, 0.0
        %5553 = vst.msk [vmem:[#allocation6 + $0x1a0] sm:$0xff] %vm472, 0.0
        %5554 = vst.msk [vmem:[#allocation6 + $0x1a8] sm:$0x3] %vm1235, 0.0
        %s5555 = scalar_lea.vmem [#allocation6], 24
        %5556 = vst.msk [vmem:[%s5555 + $0x1] sm:$0xff] %vm472, %v5469
        %5557 = vst.msk [vmem:[%s5555 + $0x9] sm:$0xff] %vm472, %v5470
        %5558 = vst.msk [vmem:[%s5555 + $0x19] sm:$0xff] %vm472, %v5471
        %5559 = vst.msk [vmem:[%s5555 + $0x21] sm:$0xff] %vm472, %v5472
        %5560 = vst.msk [vmem:[%s5555 + $0x31] sm:$0xff] %vm472, %v5473
        %5561 = vst.msk [vmem:[%s5555 + $0x39] sm:$0xff] %vm472, %v5474
        %5562 = vst.msk [vmem:[%s5555 + $0x49] sm:$0xff] %vm472, %v5475
        %5563 = vst.msk [vmem:[%s5555 + $0x51] sm:$0xff] %vm472, %v5476
        %5564 = vst.msk [vmem:[%s5555 + $0x61] sm:$0xff] %vm472, %v5477
        %5565 = vst.msk [vmem:[%s5555 + $0x69] sm:$0xff] %vm472, %v5478
        %5566 = vst.msk [vmem:[%s5555 + $0x79] sm:$0xff] %vm472, %v5479
        %5567 = vst.msk [vmem:[%s5555 + $0x81] sm:$0xff] %vm472, %v5480
        %5568 = vst.msk [vmem:[%s5555 + $0x91] sm:$0xff] %vm472, %v5481
        %5569 = vst.msk [vmem:[%s5555 + $0x99] sm:$0xff] %vm472, %v5482
        %5570 = vst.msk [vmem:[%s5555 + $0xa9] sm:$0xff] %vm472, %v5483
        %5571 = vst.msk [vmem:[%s5555 + $0xb1] sm:$0xff] %vm472, %v5484
        %5572 = vst.msk [vmem:[%s5555 + $0xc1] sm:$0xff] %vm472, %v5485
        %5573 = vst.msk [vmem:[%s5555 + $0xc9] sm:$0xff] %vm472, %v5486
        %5574 = vst.msk [vmem:[%s5555 + $0xd9] sm:$0xff] %vm472, %v5487
        %5575 = vst.msk [vmem:[%s5555 + $0xe1] sm:$0xff] %vm472, %v5488
        %5576 = vst.msk [vmem:[%s5555 + $0xf1] sm:$0xff] %vm472, %v5489
        %5577 = vst.msk [vmem:[%s5555 + $0xf9] sm:$0xff] %vm472, %v5490
        %5578 = vst.msk [vmem:[%s5555 + $0x109] sm:$0xff] %vm472, %v5491
        %5579 = vst.msk [vmem:[%s5555 + $0x111] sm:$0xff] %vm472, %v5492
        %5580 = vst.msk [vmem:[%s5555 + $0x121] sm:$0xff] %vm472, %v5493
        %5581 = vst.msk [vmem:[%s5555 + $0x129] sm:$0xff] %vm472, %v5494
        %5582 = vst.msk [vmem:[%s5555 + $0x139] sm:$0xff] %vm472, %v5495
        %5583 = vst.msk [vmem:[%s5555 + $0x141] sm:$0xff] %vm472, %v5496
        %5584 = vst.msk [vmem:[%s5555 + $0x151] sm:$0xff] %vm472, %v5497
        %5585 = vst.msk [vmem:[%s5555 + $0x159] sm:$0xff] %vm472, %v5498
        %5586 = vst.msk [vmem:[%s5555 + $0x169] sm:$0xff] %vm472, %v5499
        %5587 = vst.msk [vmem:[%s5555 + $0x171] sm:$0xff] %vm472, %v5500
        %v5588 = vld [vmem:[#allocation6] sm:$0xff]
        %v5589 = vld [vmem:[#allocation6 + $0x8] sm:$0xff]
        %v5590 = vld [vmem:[#allocation6 + $0x10] sm:$0x3]
        %v5591 = vld [vmem:[#allocation6 + $0x18] sm:$0xff]
        %v5592 = vld [vmem:[#allocation6 + $0x20] sm:$0xff]
        %v5593 = vld [vmem:[#allocation6 + $0x28] sm:$0x3]
        %v5594 = vld [vmem:[#allocation6 + $0x30] sm:$0xff]
        %v5595 = vld [vmem:[#allocation6 + $0x38] sm:$0xff]
        %v5596 = vld [vmem:[#allocation6 + $0x40] sm:$0x3]
        %v5597 = vld [vmem:[#allocation6 + $0x48] sm:$0xff]
        %v5598 = vld [vmem:[#allocation6 + $0x50] sm:$0xff]
        %v5599 = vld [vmem:[#allocation6 + $0x58] sm:$0x3]
        %v5600 = vld [vmem:[#allocation6 + $0x60] sm:$0xff]
        %v5601 = vld [vmem:[#allocation6 + $0x68] sm:$0xff]
        %v5602 = vld [vmem:[#allocation6 + $0x70] sm:$0x3]
        %v5603 = vld [vmem:[#allocation6 + $0x78] sm:$0xff]
        %v5604 = vld [vmem:[#allocation6 + $0x80] sm:$0xff]
        %v5605 = vld [vmem:[#allocation6 + $0x88] sm:$0x3]
        %v5606 = vld [vmem:[#allocation6 + $0x90] sm:$0xff]
        %v5607 = vld [vmem:[#allocation6 + $0x98] sm:$0xff]
        %v5608 = vld [vmem:[#allocation6 + $0xa0] sm:$0x3]
        %v5609 = vld [vmem:[#allocation6 + $0xa8] sm:$0xff]
        %v5610 = vld [vmem:[#allocation6 + $0xb0] sm:$0xff]
        %v5611 = vld [vmem:[#allocation6 + $0xb8] sm:$0x3]
        %v5612 = vld [vmem:[#allocation6 + $0xc0] sm:$0xff]
        %v5613 = vld [vmem:[#allocation6 + $0xc8] sm:$0xff]
        %v5614 = vld [vmem:[#allocation6 + $0xd0] sm:$0x3]
        %v5615 = vld [vmem:[#allocation6 + $0xd8] sm:$0xff]
        %v5616 = vld [vmem:[#allocation6 + $0xe0] sm:$0xff]
        %v5617 = vld [vmem:[#allocation6 + $0xe8] sm:$0x3]
        %v5618 = vld [vmem:[#allocation6 + $0xf0] sm:$0xff]
        %v5619 = vld [vmem:[#allocation6 + $0xf8] sm:$0xff]
        %v5620 = vld [vmem:[#allocation6 + $0x100] sm:$0x3]
        %v5621 = vld [vmem:[#allocation6 + $0x108] sm:$0xff]
        %v5622 = vld [vmem:[#allocation6 + $0x110] sm:$0xff]
        %v5623 = vld [vmem:[#allocation6 + $0x118] sm:$0x3]
        %v5624 = vld [vmem:[#allocation6 + $0x120] sm:$0xff]
        %v5625 = vld [vmem:[#allocation6 + $0x128] sm:$0xff]
        %v5626 = vld [vmem:[#allocation6 + $0x130] sm:$0x3]
        %v5627 = vld [vmem:[#allocation6 + $0x138] sm:$0xff]
        %v5628 = vld [vmem:[#allocation6 + $0x140] sm:$0xff]
        %v5629 = vld [vmem:[#allocation6 + $0x148] sm:$0x3]
        %v5630 = vld [vmem:[#allocation6 + $0x150] sm:$0xff]
        %v5631 = vld [vmem:[#allocation6 + $0x158] sm:$0xff]
        %v5632 = vld [vmem:[#allocation6 + $0x160] sm:$0x3]
        %v5633 = vld [vmem:[#allocation6 + $0x168] sm:$0xff]
        %v5634 = vld [vmem:[#allocation6 + $0x170] sm:$0xff]
        %v5635 = vld [vmem:[#allocation6 + $0x178] sm:$0x3]
        %v5636 = vld [vmem:[#allocation6 + $0x180] sm:$0xff]
        %v5637 = vld [vmem:[#allocation6 + $0x188] sm:$0xff]
        %v5638 = vld [vmem:[#allocation6 + $0x190] sm:$0x3]
        %v5639 = vld [vmem:[#allocation6 + $0x198] sm:$0xff]
        %v5640 = vld [vmem:[#allocation6 + $0x1a0] sm:$0xff]
        %v5641 = vld [vmem:[#allocation6 + $0x1a8] sm:$0x3]
        %5642 = vst.msk [vmem:[#allocation7] sm:$0xff] %vm472, %v5588
        %5643 = vst.msk [vmem:[#allocation7 + $0x8] sm:$0xff] %vm472, %v5589
        %5644 = vst.msk [vmem:[#allocation7 + $0x10] sm:$0xff] %vm472, %v5591
        %5645 = vst.msk [vmem:[#allocation7 + $0x18] sm:$0xff] %vm472, %v5592
        %5646 = vst.msk [vmem:[#allocation7 + $0x20] sm:$0xff] %vm472, %v5594
        %5647 = vst.msk [vmem:[#allocation7 + $0x28] sm:$0xff] %vm472, %v5595
        %5648 = vst.msk [vmem:[#allocation7 + $0x30] sm:$0xff] %vm472, %v5597
        %5649 = vst.msk [vmem:[#allocation7 + $0x38] sm:$0xff] %vm472, %v5598
        %5650 = vst.msk [vmem:[#allocation7 + $0x40] sm:$0xff] %vm472, %v5600
        %5651 = vst.msk [vmem:[#allocation7 + $0x48] sm:$0xff] %vm472, %v5601
        %5652 = vst.msk [vmem:[#allocation7 + $0x50] sm:$0xff] %vm472, %v5603
        %5653 = vst.msk [vmem:[#allocation7 + $0x58] sm:$0xff] %vm472, %v5604
        %5654 = vst.msk [vmem:[#allocation7 + $0x60] sm:$0xff] %vm472, %v5606
        %5655 = vst.msk [vmem:[#allocation7 + $0x68] sm:$0xff] %vm472, %v5607
        %5656 = vst.msk [vmem:[#allocation7 + $0x70] sm:$0xff] %vm472, %v5609
        %5657 = vst.msk [vmem:[#allocation7 + $0x78] sm:$0xff] %vm472, %v5610
        %5658 = vst.msk [vmem:[#allocation7 + $0x80] sm:$0xff] %vm472, %v5612
        %5659 = vst.msk [vmem:[#allocation7 + $0x88] sm:$0xff] %vm472, %v5613
        %5660 = vst.msk [vmem:[#allocation7 + $0x90] sm:$0xff] %vm472, %v5615
        %5661 = vst.msk [vmem:[#allocation7 + $0x98] sm:$0xff] %vm472, %v5616
        %5662 = vst.msk [vmem:[#allocation7 + $0xa0] sm:$0xff] %vm472, %v5618
        %5663 = vst.msk [vmem:[#allocation7 + $0xa8] sm:$0xff] %vm472, %v5619
        %5664 = vst.msk [vmem:[#allocation7 + $0xb0] sm:$0xff] %vm472, %v5621
        %5665 = vst.msk [vmem:[#allocation7 + $0xb8] sm:$0xff] %vm472, %v5622
        %5666 = vst.msk [vmem:[#allocation7 + $0xc0] sm:$0xff] %vm472, %v5624
        %5667 = vst.msk [vmem:[#allocation7 + $0xc8] sm:$0xff] %vm472, %v5625
        %5668 = vst.msk [vmem:[#allocation7 + $0xd0] sm:$0xff] %vm472, %v5627
        %5669 = vst.msk [vmem:[#allocation7 + $0xd8] sm:$0xff] %vm472, %v5628
        %5670 = vst.msk [vmem:[#allocation7 + $0xe0] sm:$0xff] %vm472, %v5630
        %5671 = vst.msk [vmem:[#allocation7 + $0xe8] sm:$0xff] %vm472, %v5631
        %5672 = vst.msk [vmem:[#allocation7 + $0xf0] sm:$0xff] %vm472, %v5633
        %5673 = vst.msk [vmem:[#allocation7 + $0xf8] sm:$0xff] %vm472, %v5634
        %v5722 = vrot.slane %v5588, 1
        %v5723 = vrot.slane %v5589, 1
        %v5724 = vsel %vm1455, %v5722, %v5723
        %v5725 = vrot.slane %v5590, 1
        %v5726 = vsel %vm1455, %v5723, %v5725
        %v5727 = vrot.slane %v5591, 1
        %v5728 = vrot.slane %v5592, 1
        %v5729 = vsel %vm1455, %v5727, %v5728
        %v5730 = vrot.slane %v5593, 1
        %v5731 = vsel %vm1455, %v5728, %v5730
        %v5732 = vrot.slane %v5594, 1
        %v5733 = vrot.slane %v5595, 1
        %v5734 = vsel %vm1455, %v5732, %v5733
        %v5735 = vrot.slane %v5596, 1
        %v5736 = vsel %vm1455, %v5733, %v5735
        %v5737 = vrot.slane %v5597, 1
        %v5738 = vrot.slane %v5598, 1
        %v5739 = vsel %vm1455, %v5737, %v5738
        %v5740 = vrot.slane %v5599, 1
        %v5741 = vsel %vm1455, %v5738, %v5740
        %v5742 = vrot.slane %v5600, 1
        %v5743 = vrot.slane %v5601, 1
        %v5744 = vsel %vm1455, %v5742, %v5743
        %v5745 = vrot.slane %v5602, 1
        %v5746 = vsel %vm1455, %v5743, %v5745
        %v5747 = vrot.slane %v5603, 1
        %v5748 = vrot.slane %v5604, 1
        %v5749 = vsel %vm1455, %v5747, %v5748
        %v5750 = vrot.slane %v5605, 1
        %v5751 = vsel %vm1455, %v5748, %v5750
        %v5752 = vrot.slane %v5606, 1
        %v5753 = vrot.slane %v5607, 1
        %v5754 = vsel %vm1455, %v5752, %v5753
        %v5755 = vrot.slane %v5608, 1
        %v5756 = vsel %vm1455, %v5753, %v5755
        %v5757 = vrot.slane %v5609, 1
        %v5758 = vrot.slane %v5610, 1
        %v5759 = vsel %vm1455, %v5757, %v5758
        %v5760 = vrot.slane %v5611, 1
        %v5761 = vsel %vm1455, %v5758, %v5760
        %v5762 = vrot.slane %v5612, 1
        %v5763 = vrot.slane %v5613, 1
        %v5764 = vsel %vm1455, %v5762, %v5763
        %v5765 = vrot.slane %v5614, 1
        %v5766 = vsel %vm1455, %v5763, %v5765
        %v5767 = vrot.slane %v5615, 1
        %v5768 = vrot.slane %v5616, 1
        %v5769 = vsel %vm1455, %v5767, %v5768
        %v5770 = vrot.slane %v5617, 1
        %v5771 = vsel %vm1455, %v5768, %v5770
        %v5772 = vrot.slane %v5618, 1
        %v5773 = vrot.slane %v5619, 1
        %v5774 = vsel %vm1455, %v5772, %v5773
        %v5775 = vrot.slane %v5620, 1
        %v5776 = vsel %vm1455, %v5773, %v5775
        %v5777 = vrot.slane %v5621, 1
        %v5778 = vrot.slane %v5622, 1
        %v5779 = vsel %vm1455, %v5777, %v5778
        %v5780 = vrot.slane %v5623, 1
        %v5781 = vsel %vm1455, %v5778, %v5780
        %v5782 = vrot.slane %v5624, 1
        %v5783 = vrot.slane %v5625, 1
        %v5784 = vsel %vm1455, %v5782, %v5783
        %v5785 = vrot.slane %v5626, 1
        %v5786 = vsel %vm1455, %v5783, %v5785
        %v5787 = vrot.slane %v5627, 1
        %v5788 = vrot.slane %v5628, 1
        %v5789 = vsel %vm1455, %v5787, %v5788
        %v5790 = vrot.slane %v5629, 1
        %v5791 = vsel %vm1455, %v5788, %v5790
        %v5792 = vrot.slane %v5630, 1
        %v5793 = vrot.slane %v5631, 1
        %v5794 = vsel %vm1455, %v5792, %v5793
        %v5795 = vrot.slane %v5632, 1
        %v5796 = vsel %vm1455, %v5793, %v5795
        %v5797 = vrot.slane %v5633, 1
        %v5798 = vrot.slane %v5634, 1
        %v5799 = vsel %vm1455, %v5797, %v5798
        %v5800 = vrot.slane %v5635, 1
        %v5801 = vsel %vm1455, %v5798, %v5800
        %5802 = vrot.lane.b32.xlu0 %v5724, 8
        %v5803 = vpop.permute.xlu0 %5802
        %5804 = vrot.lane.b32.xlu0 %v5726, 8
        %v5805 = vpop.permute.xlu0 %5804
        %5806 = vrot.lane.b32.xlu0 %v5729, 8
        %v5807 = vpop.permute.xlu0 %5806
        %5808 = vrot.lane.b32.xlu0 %v5731, 8
        %v5809 = vpop.permute.xlu0 %5808
        %5810 = vrot.lane.b32.xlu0 %v5734, 8
        %v5811 = vpop.permute.xlu0 %5810
        %5812 = vrot.lane.b32.xlu0 %v5736, 8
        %v5813 = vpop.permute.xlu0 %5812
        %5814 = vrot.lane.b32.xlu0 %v5739, 8
        %v5815 = vpop.permute.xlu0 %5814
        %5816 = vrot.lane.b32.xlu0 %v5741, 8
        %v5817 = vpop.permute.xlu0 %5816
        %5818 = vrot.lane.b32.xlu0 %v5744, 8
        %v5819 = vpop.permute.xlu0 %5818
        %5820 = vrot.lane.b32.xlu0 %v5746, 8
        %v5821 = vpop.permute.xlu0 %5820
        %5822 = vrot.lane.b32.xlu0 %v5749, 8
        %v5823 = vpop.permute.xlu0 %5822
        %5824 = vrot.lane.b32.xlu0 %v5751, 8
        %v5825 = vpop.permute.xlu0 %5824
        %5826 = vrot.lane.b32.xlu0 %v5754, 8
        %v5827 = vpop.permute.xlu0 %5826
        %5828 = vrot.lane.b32.xlu0 %v5756, 8
        %v5829 = vpop.permute.xlu0 %5828
        %5830 = vrot.lane.b32.xlu0 %v5759, 8
        %v5831 = vpop.permute.xlu0 %5830
        %5832 = vrot.lane.b32.xlu0 %v5761, 8
        %v5833 = vpop.permute.xlu0 %5832
        %5834 = vrot.lane.b32.xlu0 %v5764, 8
        %v5835 = vpop.permute.xlu0 %5834
        %5836 = vrot.lane.b32.xlu0 %v5766, 8
        %v5837 = vpop.permute.xlu0 %5836
        %5838 = vrot.lane.b32.xlu0 %v5769, 8
        %v5839 = vpop.permute.xlu0 %5838
        %5840 = vrot.lane.b32.xlu0 %v5771, 8
        %v5841 = vpop.permute.xlu0 %5840
        %5842 = vrot.lane.b32.xlu0 %v5774, 8
        %v5843 = vpop.permute.xlu0 %5842
        %5844 = vrot.lane.b32.xlu0 %v5776, 8
        %v5845 = vpop.permute.xlu0 %5844
        %5846 = vrot.lane.b32.xlu0 %v5779, 8
        %v5847 = vpop.permute.xlu0 %5846
        %5848 = vrot.lane.b32.xlu0 %v5781, 8
        %v5849 = vpop.permute.xlu0 %5848
        %5850 = vrot.lane.b32.xlu0 %v5784, 8
        %v5851 = vpop.permute.xlu0 %5850
        %5852 = vrot.lane.b32.xlu0 %v5786, 8
        %v5853 = vpop.permute.xlu0 %5852
        %5854 = vrot.lane.b32.xlu0 %v5789, 8
        %v5855 = vpop.permute.xlu0 %5854
        %5856 = vrot.lane.b32.xlu0 %v5791, 8
        %v5857 = vpop.permute.xlu0 %5856
        %5858 = vrot.lane.b32.xlu0 %v5794, 8
        %v5859 = vpop.permute.xlu0 %5858
        %5860 = vrot.lane.b32.xlu0 %v5796, 8
        %v5861 = vpop.permute.xlu0 %5860
        %5862 = vrot.lane.b32.xlu0 %v5799, 8
        %v5863 = vpop.permute.xlu0 %5862
        %5864 = vrot.lane.b32.xlu0 %v5801, 8
        %v5865 = vpop.permute.xlu0 %5864
        %5898 = vst.msk [vmem:[#allocation7] sm:$0xff] %vm1632, %v5803
        %5899 = vst.msk [vmem:[#allocation7 + $0x8] sm:$0xff] %vm1632, %v5805
        %5900 = vst.msk [vmem:[#allocation7 + $0x10] sm:$0xff] %vm1632, %v5807
        %5901 = vst.msk [vmem:[#allocation7 + $0x18] sm:$0xff] %vm1632, %v5809
        %5902 = vst.msk [vmem:[#allocation7 + $0x20] sm:$0xff] %vm1632, %v5811
        %5903 = vst.msk [vmem:[#allocation7 + $0x28] sm:$0xff] %vm1632, %v5813
        %5904 = vst.msk [vmem:[#allocation7 + $0x30] sm:$0xff] %vm1632, %v5815
        %5905 = vst.msk [vmem:[#allocation7 + $0x38] sm:$0xff] %vm1632, %v5817
        %5906 = vst.msk [vmem:[#allocation7 + $0x40] sm:$0xff] %vm1632, %v5819
        %5907 = vst.msk [vmem:[#allocation7 + $0x48] sm:$0xff] %vm1632, %v5821
        %5908 = vst.msk [vmem:[#allocation7 + $0x50] sm:$0xff] %vm1632, %v5823
        %5909 = vst.msk [vmem:[#allocation7 + $0x58] sm:$0xff] %vm1632, %v5825
        %5910 = vst.msk [vmem:[#allocation7 + $0x60] sm:$0xff] %vm1632, %v5827
        %5911 = vst.msk [vmem:[#allocation7 + $0x68] sm:$0xff] %vm1632, %v5829
        %5912 = vst.msk [vmem:[#allocation7 + $0x70] sm:$0xff] %vm1632, %v5831
        %5913 = vst.msk [vmem:[#allocation7 + $0x78] sm:$0xff] %vm1632, %v5833
        %5914 = vst.msk [vmem:[#allocation7 + $0x80] sm:$0xff] %vm1632, %v5835
        %5915 = vst.msk [vmem:[#allocation7 + $0x88] sm:$0xff] %vm1632, %v5837
        %5916 = vst.msk [vmem:[#allocation7 + $0x90] sm:$0xff] %vm1632, %v5839
        %5917 = vst.msk [vmem:[#allocation7 + $0x98] sm:$0xff] %vm1632, %v5841
        %5918 = vst.msk [vmem:[#allocation7 + $0xa0] sm:$0xff] %vm1632, %v5843
        %5919 = vst.msk [vmem:[#allocation7 + $0xa8] sm:$0xff] %vm1632, %v5845
        %5920 = vst.msk [vmem:[#allocation7 + $0xb0] sm:$0xff] %vm1632, %v5847
        %5921 = vst.msk [vmem:[#allocation7 + $0xb8] sm:$0xff] %vm1632, %v5849
        %5922 = vst.msk [vmem:[#allocation7 + $0xc0] sm:$0xff] %vm1632, %v5851
        %5923 = vst.msk [vmem:[#allocation7 + $0xc8] sm:$0xff] %vm1632, %v5853
        %5924 = vst.msk [vmem:[#allocation7 + $0xd0] sm:$0xff] %vm1632, %v5855
        %5925 = vst.msk [vmem:[#allocation7 + $0xd8] sm:$0xff] %vm1632, %v5857
        %5926 = vst.msk [vmem:[#allocation7 + $0xe0] sm:$0xff] %vm1632, %v5859
        %5927 = vst.msk [vmem:[#allocation7 + $0xe8] sm:$0xff] %vm1632, %v5861
        %5928 = vst.msk [vmem:[#allocation7 + $0xf0] sm:$0xff] %vm1632, %v5863
        %5929 = vst.msk [vmem:[#allocation7 + $0xf8] sm:$0xff] %vm1632, %v5865
        %v5930 = vrot.slane %v5588, 2
        %v5931 = vrot.slane %v5589, 2
        %v5932 = vsel %vm1665, %v5930, %v5931
        %v5933 = vrot.slane %v5590, 2
        %v5934 = vsel %vm1665, %v5931, %v5933
        %v5935 = vrot.slane %v5591, 2
        %v5936 = vrot.slane %v5592, 2
        %v5937 = vsel %vm1665, %v5935, %v5936
        %v5938 = vrot.slane %v5593, 2
        %v5939 = vsel %vm1665, %v5936, %v5938
        %v5940 = vrot.slane %v5594, 2
        %v5941 = vrot.slane %v5595, 2
        %v5942 = vsel %vm1665, %v5940, %v5941
        %v5943 = vrot.slane %v5596, 2
        %v5944 = vsel %vm1665, %v5941, %v5943
        %v5945 = vrot.slane %v5597, 2
        %v5946 = vrot.slane %v5598, 2
        %v5947 = vsel %vm1665, %v5945, %v5946
        %v5948 = vrot.slane %v5599, 2
        %v5949 = vsel %vm1665, %v5946, %v5948
        %v5950 = vrot.slane %v5600, 2
        %v5951 = vrot.slane %v5601, 2
        %v5952 = vsel %vm1665, %v5950, %v5951
        %v5953 = vrot.slane %v5602, 2
        %v5954 = vsel %vm1665, %v5951, %v5953
        %v5955 = vrot.slane %v5603, 2
        %v5956 = vrot.slane %v5604, 2
        %v5957 = vsel %vm1665, %v5955, %v5956
        %v5958 = vrot.slane %v5605, 2
        %v5959 = vsel %vm1665, %v5956, %v5958
        %v5960 = vrot.slane %v5606, 2
        %v5961 = vrot.slane %v5607, 2
        %v5962 = vsel %vm1665, %v5960, %v5961
        %v5963 = vrot.slane %v5608, 2
        %v5964 = vsel %vm1665, %v5961, %v5963
        %v5965 = vrot.slane %v5609, 2
        %v5966 = vrot.slane %v5610, 2
        %v5967 = vsel %vm1665, %v5965, %v5966
        %v5968 = vrot.slane %v5611, 2
        %v5969 = vsel %vm1665, %v5966, %v5968
        %v5970 = vrot.slane %v5612, 2
        %v5971 = vrot.slane %v5613, 2
        %v5972 = vsel %vm1665, %v5970, %v5971
        %v5973 = vrot.slane %v5614, 2
        %v5974 = vsel %vm1665, %v5971, %v5973
        %v5975 = vrot.slane %v5615, 2
        %v5976 = vrot.slane %v5616, 2
        %v5977 = vsel %vm1665, %v5975, %v5976
        %v5978 = vrot.slane %v5617, 2
        %v5979 = vsel %vm1665, %v5976, %v5978
        %v5980 = vrot.slane %v5618, 2
        %v5981 = vrot.slane %v5619, 2
        %v5982 = vsel %vm1665, %v5980, %v5981
        %v5983 = vrot.slane %v5620, 2
        %v5984 = vsel %vm1665, %v5981, %v5983
        %v5985 = vrot.slane %v5621, 2
        %v5986 = vrot.slane %v5622, 2
        %v5987 = vsel %vm1665, %v5985, %v5986
        %v5988 = vrot.slane %v5623, 2
        %v5989 = vsel %vm1665, %v5986, %v5988
        %v5990 = vrot.slane %v5624, 2
        %v5991 = vrot.slane %v5625, 2
        %v5992 = vsel %vm1665, %v5990, %v5991
        %v5993 = vrot.slane %v5626, 2
        %v5994 = vsel %vm1665, %v5991, %v5993
        %v5995 = vrot.slane %v5627, 2
        %v5996 = vrot.slane %v5628, 2
        %v5997 = vsel %vm1665, %v5995, %v5996
        %v5998 = vrot.slane %v5629, 2
        %v5999 = vsel %vm1665, %v5996, %v5998
        %v6000 = vrot.slane %v5630, 2
        %v6001 = vrot.slane %v5631, 2
        %v6002 = vsel %vm1665, %v6000, %v6001
        %v6003 = vrot.slane %v5632, 2
        %v6004 = vsel %vm1665, %v6001, %v6003
        %v6005 = vrot.slane %v5633, 2
        %v6006 = vrot.slane %v5634, 2
        %v6007 = vsel %vm1665, %v6005, %v6006
        %v6008 = vrot.slane %v5635, 2
        %v6009 = vsel %vm1665, %v6006, %v6008
        %6010 = vrot.lane.b32.xlu0 %v5932, 16
        %v6011 = vpop.permute.xlu0 %6010
        %6012 = vrot.lane.b32.xlu0 %v5934, 16
        %v6013 = vpop.permute.xlu0 %6012
        %6014 = vrot.lane.b32.xlu0 %v5937, 16
        %v6015 = vpop.permute.xlu0 %6014
        %6016 = vrot.lane.b32.xlu0 %v5939, 16
        %v6017 = vpop.permute.xlu0 %6016
        %6018 = vrot.lane.b32.xlu0 %v5942, 16
        %v6019 = vpop.permute.xlu0 %6018
        %6020 = vrot.lane.b32.xlu0 %v5944, 16
        %v6021 = vpop.permute.xlu0 %6020
        %6022 = vrot.lane.b32.xlu0 %v5947, 16
        %v6023 = vpop.permute.xlu0 %6022
        %6024 = vrot.lane.b32.xlu0 %v5949, 16
        %v6025 = vpop.permute.xlu0 %6024
        %6026 = vrot.lane.b32.xlu0 %v5952, 16
        %v6027 = vpop.permute.xlu0 %6026
        %6028 = vrot.lane.b32.xlu0 %v5954, 16
        %v6029 = vpop.permute.xlu0 %6028
        %6030 = vrot.lane.b32.xlu0 %v5957, 16
        %v6031 = vpop.permute.xlu0 %6030
        %6032 = vrot.lane.b32.xlu0 %v5959, 16
        %v6033 = vpop.permute.xlu0 %6032
        %6034 = vrot.lane.b32.xlu0 %v5962, 16
        %v6035 = vpop.permute.xlu0 %6034
        %6036 = vrot.lane.b32.xlu0 %v5964, 16
        %v6037 = vpop.permute.xlu0 %6036
        %6038 = vrot.lane.b32.xlu0 %v5967, 16
        %v6039 = vpop.permute.xlu0 %6038
        %6040 = vrot.lane.b32.xlu0 %v5969, 16
        %v6041 = vpop.permute.xlu0 %6040
        %6042 = vrot.lane.b32.xlu0 %v5972, 16
        %v6043 = vpop.permute.xlu0 %6042
        %6044 = vrot.lane.b32.xlu0 %v5974, 16
        %v6045 = vpop.permute.xlu0 %6044
        %6046 = vrot.lane.b32.xlu0 %v5977, 16
        %v6047 = vpop.permute.xlu0 %6046
        %6048 = vrot.lane.b32.xlu0 %v5979, 16
        %v6049 = vpop.permute.xlu0 %6048
        %6050 = vrot.lane.b32.xlu0 %v5982, 16
        %v6051 = vpop.permute.xlu0 %6050
        %6052 = vrot.lane.b32.xlu0 %v5984, 16
        %v6053 = vpop.permute.xlu0 %6052
        %6054 = vrot.lane.b32.xlu0 %v5987, 16
        %v6055 = vpop.permute.xlu0 %6054
        %6056 = vrot.lane.b32.xlu0 %v5989, 16
        %v6057 = vpop.permute.xlu0 %6056
        %6058 = vrot.lane.b32.xlu0 %v5992, 16
        %v6059 = vpop.permute.xlu0 %6058
        %6060 = vrot.lane.b32.xlu0 %v5994, 16
        %v6061 = vpop.permute.xlu0 %6060
        %6062 = vrot.lane.b32.xlu0 %v5997, 16
        %v6063 = vpop.permute.xlu0 %6062
        %6064 = vrot.lane.b32.xlu0 %v5999, 16
        %v6065 = vpop.permute.xlu0 %6064
        %6066 = vrot.lane.b32.xlu0 %v6002, 16
        %v6067 = vpop.permute.xlu0 %6066
        %6068 = vrot.lane.b32.xlu0 %v6004, 16
        %v6069 = vpop.permute.xlu0 %6068
        %6070 = vrot.lane.b32.xlu0 %v6007, 16
        %v6071 = vpop.permute.xlu0 %6070
        %6072 = vrot.lane.b32.xlu0 %v6009, 16
        %v6073 = vpop.permute.xlu0 %6072
        %6106 = vst.msk [vmem:[#allocation7] sm:$0xff] %vm1842, %v6011
        %6107 = vst.msk [vmem:[#allocation7 + $0x8] sm:$0xff] %vm1842, %v6013
        %6108 = vst.msk [vmem:[#allocation7 + $0x10] sm:$0xff] %vm1842, %v6015
        %6109 = vst.msk [vmem:[#allocation7 + $0x18] sm:$0xff] %vm1842, %v6017
        %6110 = vst.msk [vmem:[#allocation7 + $0x20] sm:$0xff] %vm1842, %v6019
        %6111 = vst.msk [vmem:[#allocation7 + $0x28] sm:$0xff] %vm1842, %v6021
        %6112 = vst.msk [vmem:[#allocation7 + $0x30] sm:$0xff] %vm1842, %v6023
        %6113 = vst.msk [vmem:[#allocation7 + $0x38] sm:$0xff] %vm1842, %v6025
        %6114 = vst.msk [vmem:[#allocation7 + $0x40] sm:$0xff] %vm1842, %v6027
        %6115 = vst.msk [vmem:[#allocation7 + $0x48] sm:$0xff] %vm1842, %v6029
        %6116 = vst.msk [vmem:[#allocation7 + $0x50] sm:$0xff] %vm1842, %v6031
        %6117 = vst.msk [vmem:[#allocation7 + $0x58] sm:$0xff] %vm1842, %v6033
        %6118 = vst.msk [vmem:[#allocation7 + $0x60] sm:$0xff] %vm1842, %v6035
        %6119 = vst.msk [vmem:[#allocation7 + $0x68] sm:$0xff] %vm1842, %v6037
        %6120 = vst.msk [vmem:[#allocation7 + $0x70] sm:$0xff] %vm1842, %v6039
        %6121 = vst.msk [vmem:[#allocation7 + $0x78] sm:$0xff] %vm1842, %v6041
        %6122 = vst.msk [vmem:[#allocation7 + $0x80] sm:$0xff] %vm1842, %v6043
        %6123 = vst.msk [vmem:[#allocation7 + $0x88] sm:$0xff] %vm1842, %v6045
        %6124 = vst.msk [vmem:[#allocation7 + $0x90] sm:$0xff] %vm1842, %v6047
        %6125 = vst.msk [vmem:[#allocation7 + $0x98] sm:$0xff] %vm1842, %v6049
        %6126 = vst.msk [vmem:[#allocation7 + $0xa0] sm:$0xff] %vm1842, %v6051
        %6127 = vst.msk [vmem:[#allocation7 + $0xa8] sm:$0xff] %vm1842, %v6053
        %6128 = vst.msk [vmem:[#allocation7 + $0xb0] sm:$0xff] %vm1842, %v6055
        %6129 = vst.msk [vmem:[#allocation7 + $0xb8] sm:$0xff] %vm1842, %v6057
        %6130 = vst.msk [vmem:[#allocation7 + $0xc0] sm:$0xff] %vm1842, %v6059
        %6131 = vst.msk [vmem:[#allocation7 + $0xc8] sm:$0xff] %vm1842, %v6061
        %6132 = vst.msk [vmem:[#allocation7 + $0xd0] sm:$0xff] %vm1842, %v6063
        %6133 = vst.msk [vmem:[#allocation7 + $0xd8] sm:$0xff] %vm1842, %v6065
        %6134 = vst.msk [vmem:[#allocation7 + $0xe0] sm:$0xff] %vm1842, %v6067
        %6135 = vst.msk [vmem:[#allocation7 + $0xe8] sm:$0xff] %vm1842, %v6069
        %6136 = vst.msk [vmem:[#allocation7 + $0xf0] sm:$0xff] %vm1842, %v6071
        %6137 = vst.msk [vmem:[#allocation7 + $0xf8] sm:$0xff] %vm1842, %v6073
        %6140 = vrot.lane.b32.xlu0 %v5591, 24
        %v6141 = vpop.permute.xlu0 %6140
        %6142 = vrot.lane.b32.xlu0 %v5592, 24
        %v6143 = vpop.permute.xlu0 %6142
        %6144 = vrot.lane.b32.xlu0 %v5594, 24
        %v6145 = vpop.permute.xlu0 %6144
        %6146 = vrot.lane.b32.xlu0 %v5595, 24
        %v6147 = vpop.permute.xlu0 %6146
        %6148 = vrot.lane.b32.xlu0 %v5597, 24
        %v6149 = vpop.permute.xlu0 %6148
        %6150 = vrot.lane.b32.xlu0 %v5598, 24
        %v6151 = vpop.permute.xlu0 %6150
        %6152 = vrot.lane.b32.xlu0 %v5600, 24
        %v6153 = vpop.permute.xlu0 %6152
        %6154 = vrot.lane.b32.xlu0 %v5601, 24
        %v6155 = vpop.permute.xlu0 %6154
        %6156 = vrot.lane.b32.xlu0 %v5603, 24
        %v6157 = vpop.permute.xlu0 %6156
        %6158 = vrot.lane.b32.xlu0 %v5604, 24
        %v6159 = vpop.permute.xlu0 %6158
        %6160 = vrot.lane.b32.xlu0 %v5606, 24
        %v6161 = vpop.permute.xlu0 %6160
        %6162 = vrot.lane.b32.xlu0 %v5607, 24
        %v6163 = vpop.permute.xlu0 %6162
        %6164 = vrot.lane.b32.xlu0 %v5609, 24
        %v6165 = vpop.permute.xlu0 %6164
        %6166 = vrot.lane.b32.xlu0 %v5610, 24
        %v6167 = vpop.permute.xlu0 %6166
        %6168 = vrot.lane.b32.xlu0 %v5612, 24
        %v6169 = vpop.permute.xlu0 %6168
        %6170 = vrot.lane.b32.xlu0 %v5613, 24
        %v6171 = vpop.permute.xlu0 %6170
        %6172 = vrot.lane.b32.xlu0 %v5615, 24
        %v6173 = vpop.permute.xlu0 %6172
        %6174 = vrot.lane.b32.xlu0 %v5616, 24
        %v6175 = vpop.permute.xlu0 %6174
        %6176 = vrot.lane.b32.xlu0 %v5618, 24
        %v6177 = vpop.permute.xlu0 %6176
        %6178 = vrot.lane.b32.xlu0 %v5619, 24
        %v6179 = vpop.permute.xlu0 %6178
        %6180 = vrot.lane.b32.xlu0 %v5621, 24
        %v6181 = vpop.permute.xlu0 %6180
        %6182 = vrot.lane.b32.xlu0 %v5622, 24
        %v6183 = vpop.permute.xlu0 %6182
        %6184 = vrot.lane.b32.xlu0 %v5624, 24
        %v6185 = vpop.permute.xlu0 %6184
        %6186 = vrot.lane.b32.xlu0 %v5625, 24
        %v6187 = vpop.permute.xlu0 %6186
        %6188 = vrot.lane.b32.xlu0 %v5627, 24
        %v6189 = vpop.permute.xlu0 %6188
        %6190 = vrot.lane.b32.xlu0 %v5628, 24
        %v6191 = vpop.permute.xlu0 %6190
        %6192 = vrot.lane.b32.xlu0 %v5630, 24
        %v6193 = vpop.permute.xlu0 %6192
        %6194 = vrot.lane.b32.xlu0 %v5631, 24
        %v6195 = vpop.permute.xlu0 %6194
        %6196 = vrot.lane.b32.xlu0 %v5633, 24
        %v6197 = vpop.permute.xlu0 %6196
        %6198 = vrot.lane.b32.xlu0 %v5634, 24
        %v6199 = vpop.permute.xlu0 %6198
        %6200 = vrot.lane.b32.xlu0 %v5636, 24
        %v6201 = vpop.permute.xlu0 %6200
        %6202 = vrot.lane.b32.xlu0 %v5637, 24
        %v6203 = vpop.permute.xlu0 %6202
        %6236 = vst.msk [vmem:[#allocation7] sm:$0xff] %vm1973, %v6141
        %6237 = vst.msk [vmem:[#allocation7 + $0x8] sm:$0xff] %vm1973, %v6143
        %6238 = vst.msk [vmem:[#allocation7 + $0x10] sm:$0xff] %vm1973, %v6145
        %6239 = vst.msk [vmem:[#allocation7 + $0x18] sm:$0xff] %vm1973, %v6147
        %6240 = vst.msk [vmem:[#allocation7 + $0x20] sm:$0xff] %vm1973, %v6149
        %6241 = vst.msk [vmem:[#allocation7 + $0x28] sm:$0xff] %vm1973, %v6151
        %6242 = vst.msk [vmem:[#allocation7 + $0x30] sm:$0xff] %vm1973, %v6153
        %6243 = vst.msk [vmem:[#allocation7 + $0x38] sm:$0xff] %vm1973, %v6155
        %6244 = vst.msk [vmem:[#allocation7 + $0x40] sm:$0xff] %vm1973, %v6157
        %6245 = vst.msk [vmem:[#allocation7 + $0x48] sm:$0xff] %vm1973, %v6159
        %6246 = vst.msk [vmem:[#allocation7 + $0x50] sm:$0xff] %vm1973, %v6161
        %6247 = vst.msk [vmem:[#allocation7 + $0x58] sm:$0xff] %vm1973, %v6163
        %6248 = vst.msk [vmem:[#allocation7 + $0x60] sm:$0xff] %vm1973, %v6165
        %6249 = vst.msk [vmem:[#allocation7 + $0x68] sm:$0xff] %vm1973, %v6167
        %6250 = vst.msk [vmem:[#allocation7 + $0x70] sm:$0xff] %vm1973, %v6169
        %6251 = vst.msk [vmem:[#allocation7 + $0x78] sm:$0xff] %vm1973, %v6171
        %6252 = vst.msk [vmem:[#allocation7 + $0x80] sm:$0xff] %vm1973, %v6173
        %6253 = vst.msk [vmem:[#allocation7 + $0x88] sm:$0xff] %vm1973, %v6175
        %6254 = vst.msk [vmem:[#allocation7 + $0x90] sm:$0xff] %vm1973, %v6177
        %6255 = vst.msk [vmem:[#allocation7 + $0x98] sm:$0xff] %vm1973, %v6179
        %6256 = vst.msk [vmem:[#allocation7 + $0xa0] sm:$0xff] %vm1973, %v6181
        %6257 = vst.msk [vmem:[#allocation7 + $0xa8] sm:$0xff] %vm1973, %v6183
        %6258 = vst.msk [vmem:[#allocation7 + $0xb0] sm:$0xff] %vm1973, %v6185
        %6259 = vst.msk [vmem:[#allocation7 + $0xb8] sm:$0xff] %vm1973, %v6187
        %6260 = vst.msk [vmem:[#allocation7 + $0xc0] sm:$0xff] %vm1973, %v6189
        %6261 = vst.msk [vmem:[#allocation7 + $0xc8] sm:$0xff] %vm1973, %v6191
        %6262 = vst.msk [vmem:[#allocation7 + $0xd0] sm:$0xff] %vm1973, %v6193
        %6263 = vst.msk [vmem:[#allocation7 + $0xd8] sm:$0xff] %vm1973, %v6195
        %6264 = vst.msk [vmem:[#allocation7 + $0xe0] sm:$0xff] %vm1973, %v6197
        %6265 = vst.msk [vmem:[#allocation7 + $0xe8] sm:$0xff] %vm1973, %v6199
        %6266 = vst.msk [vmem:[#allocation7 + $0xf0] sm:$0xff] %vm1973, %v6201
        %6267 = vst.msk [vmem:[#allocation7 + $0xf8] sm:$0xff] %vm1973, %v6203
        %v6269 = vrot.slane %v5636, 1
        %v6270 = vrot.slane %v5637, 1
        %v6271 = vsel %vm1455, %v6269, %v6270
        %v6272 = vrot.slane %v5638, 1
        %v6273 = vsel %vm1455, %v6270, %v6272
        %6274 = vrot.lane.b32.xlu0 %v5729, 32
        %v6275 = vpop.permute.xlu0 %6274
        %6276 = vrot.lane.b32.xlu0 %v5731, 32
        %v6277 = vpop.permute.xlu0 %6276
        %6278 = vrot.lane.b32.xlu0 %v5734, 32
        %v6279 = vpop.permute.xlu0 %6278
        %6280 = vrot.lane.b32.xlu0 %v5736, 32
        %v6281 = vpop.permute.xlu0 %6280
        %6282 = vrot.lane.b32.xlu0 %v5739, 32
        %v6283 = vpop.permute.xlu0 %6282
        %6284 = vrot.lane.b32.xlu0 %v5741, 32
        %v6285 = vpop.permute.xlu0 %6284
        %6286 = vrot.lane.b32.xlu0 %v5744, 32
        %v6287 = vpop.permute.xlu0 %6286
        %6288 = vrot.lane.b32.xlu0 %v5746, 32
        %v6289 = vpop.permute.xlu0 %6288
        %6290 = vrot.lane.b32.xlu0 %v5749, 32
        %v6291 = vpop.permute.xlu0 %6290
        %6292 = vrot.lane.b32.xlu0 %v5751, 32
        %v6293 = vpop.permute.xlu0 %6292
        %6294 = vrot.lane.b32.xlu0 %v5754, 32
        %v6295 = vpop.permute.xlu0 %6294
        %6296 = vrot.lane.b32.xlu0 %v5756, 32
        %v6297 = vpop.permute.xlu0 %6296
        %6298 = vrot.lane.b32.xlu0 %v5759, 32
        %v6299 = vpop.permute.xlu0 %6298
        %6300 = vrot.lane.b32.xlu0 %v5761, 32
        %v6301 = vpop.permute.xlu0 %6300
        %6302 = vrot.lane.b32.xlu0 %v5764, 32
        %v6303 = vpop.permute.xlu0 %6302
        %6304 = vrot.lane.b32.xlu0 %v5766, 32
        %v6305 = vpop.permute.xlu0 %6304
        %6306 = vrot.lane.b32.xlu0 %v5769, 32
        %v6307 = vpop.permute.xlu0 %6306
        %6308 = vrot.lane.b32.xlu0 %v5771, 32
        %v6309 = vpop.permute.xlu0 %6308
        %6310 = vrot.lane.b32.xlu0 %v5774, 32
        %v6311 = vpop.permute.xlu0 %6310
        %6312 = vrot.lane.b32.xlu0 %v5776, 32
        %v6313 = vpop.permute.xlu0 %6312
        %6314 = vrot.lane.b32.xlu0 %v5779, 32
        %v6315 = vpop.permute.xlu0 %6314
        %6316 = vrot.lane.b32.xlu0 %v5781, 32
        %v6317 = vpop.permute.xlu0 %6316
        %6318 = vrot.lane.b32.xlu0 %v5784, 32
        %v6319 = vpop.permute.xlu0 %6318
        %6320 = vrot.lane.b32.xlu0 %v5786, 32
        %v6321 = vpop.permute.xlu0 %6320
        %6322 = vrot.lane.b32.xlu0 %v5789, 32
        %v6323 = vpop.permute.xlu0 %6322
        %6324 = vrot.lane.b32.xlu0 %v5791, 32
        %v6325 = vpop.permute.xlu0 %6324
        %6326 = vrot.lane.b32.xlu0 %v5794, 32
        %v6327 = vpop.permute.xlu0 %6326
        %6328 = vrot.lane.b32.xlu0 %v5796, 32
        %v6329 = vpop.permute.xlu0 %6328
        %6330 = vrot.lane.b32.xlu0 %v5799, 32
        %v6331 = vpop.permute.xlu0 %6330
        %6332 = vrot.lane.b32.xlu0 %v5801, 32
        %v6333 = vpop.permute.xlu0 %6332
        %6334 = vrot.lane.b32.xlu0 %v6271, 32
        %v6335 = vpop.permute.xlu0 %6334
        %6336 = vrot.lane.b32.xlu0 %v6273, 32
        %v6337 = vpop.permute.xlu0 %6336
        %6370 = vst.msk [vmem:[#allocation7] sm:$0xff] %vm2108, %v6275
        %6371 = vst.msk [vmem:[#allocation7 + $0x8] sm:$0xff] %vm2108, %v6277
        %6372 = vst.msk [vmem:[#allocation7 + $0x10] sm:$0xff] %vm2108, %v6279
        %6373 = vst.msk [vmem:[#allocation7 + $0x18] sm:$0xff] %vm2108, %v6281
        %6374 = vst.msk [vmem:[#allocation7 + $0x20] sm:$0xff] %vm2108, %v6283
        %6375 = vst.msk [vmem:[#allocation7 + $0x28] sm:$0xff] %vm2108, %v6285
        %6376 = vst.msk [vmem:[#allocation7 + $0x30] sm:$0xff] %vm2108, %v6287
        %6377 = vst.msk [vmem:[#allocation7 + $0x38] sm:$0xff] %vm2108, %v6289
        %6378 = vst.msk [vmem:[#allocation7 + $0x40] sm:$0xff] %vm2108, %v6291
        %6379 = vst.msk [vmem:[#allocation7 + $0x48] sm:$0xff] %vm2108, %v6293
        %6380 = vst.msk [vmem:[#allocation7 + $0x50] sm:$0xff] %vm2108, %v6295
        %6381 = vst.msk [vmem:[#allocation7 + $0x58] sm:$0xff] %vm2108, %v6297
        %6382 = vst.msk [vmem:[#allocation7 + $0x60] sm:$0xff] %vm2108, %v6299
        %6383 = vst.msk [vmem:[#allocation7 + $0x68] sm:$0xff] %vm2108, %v6301
        %6384 = vst.msk [vmem:[#allocation7 + $0x70] sm:$0xff] %vm2108, %v6303
        %6385 = vst.msk [vmem:[#allocation7 + $0x78] sm:$0xff] %vm2108, %v6305
        %6386 = vst.msk [vmem:[#allocation7 + $0x80] sm:$0xff] %vm2108, %v6307
        %6387 = vst.msk [vmem:[#allocation7 + $0x88] sm:$0xff] %vm2108, %v6309
        %6388 = vst.msk [vmem:[#allocation7 + $0x90] sm:$0xff] %vm2108, %v6311
        %6389 = vst.msk [vmem:[#allocation7 + $0x98] sm:$0xff] %vm2108, %v6313
        %6390 = vst.msk [vmem:[#allocation7 + $0xa0] sm:$0xff] %vm2108, %v6315
        %6391 = vst.msk [vmem:[#allocation7 + $0xa8] sm:$0xff] %vm2108, %v6317
        %6392 = vst.msk [vmem:[#allocation7 + $0xb0] sm:$0xff] %vm2108, %v6319
        %6393 = vst.msk [vmem:[#allocation7 + $0xb8] sm:$0xff] %vm2108, %v6321
        %6394 = vst.msk [vmem:[#allocation7 + $0xc0] sm:$0xff] %vm2108, %v6323
        %6395 = vst.msk [vmem:[#allocation7 + $0xc8] sm:$0xff] %vm2108, %v6325
        %6396 = vst.msk [vmem:[#allocation7 + $0xd0] sm:$0xff] %vm2108, %v6327
        %6397 = vst.msk [vmem:[#allocation7 + $0xd8] sm:$0xff] %vm2108, %v6329
        %6398 = vst.msk [vmem:[#allocation7 + $0xe0] sm:$0xff] %vm2108, %v6331
        %6399 = vst.msk [vmem:[#allocation7 + $0xe8] sm:$0xff] %vm2108, %v6333
        %6400 = vst.msk [vmem:[#allocation7 + $0xf0] sm:$0xff] %vm2108, %v6335
        %6401 = vst.msk [vmem:[#allocation7 + $0xf8] sm:$0xff] %vm2108, %v6337
        %v6402 = vrot.slane %v5636, 2
        %v6403 = vrot.slane %v5637, 2
        %v6404 = vsel %vm1665, %v6402, %v6403
        %v6405 = vrot.slane %v5638, 2
        %v6406 = vsel %vm1665, %v6403, %v6405
        %6407 = vrot.lane.b32.xlu0 %v5937, 40
        %v6408 = vpop.permute.xlu0 %6407
        %6409 = vrot.lane.b32.xlu0 %v5939, 40
        %v6410 = vpop.permute.xlu0 %6409
        %6411 = vrot.lane.b32.xlu0 %v5942, 40
        %v6412 = vpop.permute.xlu0 %6411
        %6413 = vrot.lane.b32.xlu0 %v5944, 40
        %v6414 = vpop.permute.xlu0 %6413
        %6415 = vrot.lane.b32.xlu0 %v5947, 40
        %v6416 = vpop.permute.xlu0 %6415
        %6417 = vrot.lane.b32.xlu0 %v5949, 40
        %v6418 = vpop.permute.xlu0 %6417
        %6419 = vrot.lane.b32.xlu0 %v5952, 40
        %v6420 = vpop.permute.xlu0 %6419
        %6421 = vrot.lane.b32.xlu0 %v5954, 40
        %v6422 = vpop.permute.xlu0 %6421
        %6423 = vrot.lane.b32.xlu0 %v5957, 40
        %v6424 = vpop.permute.xlu0 %6423
        %6425 = vrot.lane.b32.xlu0 %v5959, 40
        %v6426 = vpop.permute.xlu0 %6425
        %6427 = vrot.lane.b32.xlu0 %v5962, 40
        %v6428 = vpop.permute.xlu0 %6427
        %6429 = vrot.lane.b32.xlu0 %v5964, 40
        %v6430 = vpop.permute.xlu0 %6429
        %6431 = vrot.lane.b32.xlu0 %v5967, 40
        %v6432 = vpop.permute.xlu0 %6431
        %6433 = vrot.lane.b32.xlu0 %v5969, 40
        %v6434 = vpop.permute.xlu0 %6433
        %6435 = vrot.lane.b32.xlu0 %v5972, 40
        %v6436 = vpop.permute.xlu0 %6435
        %6437 = vrot.lane.b32.xlu0 %v5974, 40
        %v6438 = vpop.permute.xlu0 %6437
        %6439 = vrot.lane.b32.xlu0 %v5977, 40
        %v6440 = vpop.permute.xlu0 %6439
        %6441 = vrot.lane.b32.xlu0 %v5979, 40
        %v6442 = vpop.permute.xlu0 %6441
        %6443 = vrot.lane.b32.xlu0 %v5982, 40
        %v6444 = vpop.permute.xlu0 %6443
        %6445 = vrot.lane.b32.xlu0 %v5984, 40
        %v6446 = vpop.permute.xlu0 %6445
        %6447 = vrot.lane.b32.xlu0 %v5987, 40
        %v6448 = vpop.permute.xlu0 %6447
        %6449 = vrot.lane.b32.xlu0 %v5989, 40
        %v6450 = vpop.permute.xlu0 %6449
        %6451 = vrot.lane.b32.xlu0 %v5992, 40
        %v6452 = vpop.permute.xlu0 %6451
        %6453 = vrot.lane.b32.xlu0 %v5994, 40
        %v6454 = vpop.permute.xlu0 %6453
        %6455 = vrot.lane.b32.xlu0 %v5997, 40
        %v6456 = vpop.permute.xlu0 %6455
        %6457 = vrot.lane.b32.xlu0 %v5999, 40
        %v6458 = vpop.permute.xlu0 %6457
        %6459 = vrot.lane.b32.xlu0 %v6002, 40
        %v6460 = vpop.permute.xlu0 %6459
        %6461 = vrot.lane.b32.xlu0 %v6004, 40
        %v6462 = vpop.permute.xlu0 %6461
        %6463 = vrot.lane.b32.xlu0 %v6007, 40
        %v6464 = vpop.permute.xlu0 %6463
        %6465 = vrot.lane.b32.xlu0 %v6009, 40
        %v6466 = vpop.permute.xlu0 %6465
        %6467 = vrot.lane.b32.xlu0 %v6404, 40
        %v6468 = vpop.permute.xlu0 %6467
        %6469 = vrot.lane.b32.xlu0 %v6406, 40
        %v6470 = vpop.permute.xlu0 %6469
        %6503 = vst.msk [vmem:[#allocation7] sm:$0xff] %vm2242, %v6408
        %6504 = vst.msk [vmem:[#allocation7 + $0x8] sm:$0xff] %vm2242, %v6410
        %6505 = vst.msk [vmem:[#allocation7 + $0x10] sm:$0xff] %vm2242, %v6412
        %6506 = vst.msk [vmem:[#allocation7 + $0x18] sm:$0xff] %vm2242, %v6414
        %6507 = vst.msk [vmem:[#allocation7 + $0x20] sm:$0xff] %vm2242, %v6416
        %6508 = vst.msk [vmem:[#allocation7 + $0x28] sm:$0xff] %vm2242, %v6418
        %6509 = vst.msk [vmem:[#allocation7 + $0x30] sm:$0xff] %vm2242, %v6420
        %6510 = vst.msk [vmem:[#allocation7 + $0x38] sm:$0xff] %vm2242, %v6422
        %6511 = vst.msk [vmem:[#allocation7 + $0x40] sm:$0xff] %vm2242, %v6424
        %6512 = vst.msk [vmem:[#allocation7 + $0x48] sm:$0xff] %vm2242, %v6426
        %6513 = vst.msk [vmem:[#allocation7 + $0x50] sm:$0xff] %vm2242, %v6428
        %6514 = vst.msk [vmem:[#allocation7 + $0x58] sm:$0xff] %vm2242, %v6430
        %6515 = vst.msk [vmem:[#allocation7 + $0x60] sm:$0xff] %vm2242, %v6432
        %6516 = vst.msk [vmem:[#allocation7 + $0x68] sm:$0xff] %vm2242, %v6434
        %6517 = vst.msk [vmem:[#allocation7 + $0x70] sm:$0xff] %vm2242, %v6436
        %6518 = vst.msk [vmem:[#allocation7 + $0x78] sm:$0xff] %vm2242, %v6438
        %6519 = vst.msk [vmem:[#allocation7 + $0x80] sm:$0xff] %vm2242, %v6440
        %6520 = vst.msk [vmem:[#allocation7 + $0x88] sm:$0xff] %vm2242, %v6442
        %6521 = vst.msk [vmem:[#allocation7 + $0x90] sm:$0xff] %vm2242, %v6444
        %6522 = vst.msk [vmem:[#allocation7 + $0x98] sm:$0xff] %vm2242, %v6446
        %6523 = vst.msk [vmem:[#allocation7 + $0xa0] sm:$0xff] %vm2242, %v6448
        %6524 = vst.msk [vmem:[#allocation7 + $0xa8] sm:$0xff] %vm2242, %v6450
        %6525 = vst.msk [vmem:[#allocation7 + $0xb0] sm:$0xff] %vm2242, %v6452
        %6526 = vst.msk [vmem:[#allocation7 + $0xb8] sm:$0xff] %vm2242, %v6454
        %6527 = vst.msk [vmem:[#allocation7 + $0xc0] sm:$0xff] %vm2242, %v6456
        %6528 = vst.msk [vmem:[#allocation7 + $0xc8] sm:$0xff] %vm2242, %v6458
        %6529 = vst.msk [vmem:[#allocation7 + $0xd0] sm:$0xff] %vm2242, %v6460
        %6530 = vst.msk [vmem:[#allocation7 + $0xd8] sm:$0xff] %vm2242, %v6462
        %6531 = vst.msk [vmem:[#allocation7 + $0xe0] sm:$0xff] %vm2242, %v6464
        %6532 = vst.msk [vmem:[#allocation7 + $0xe8] sm:$0xff] %vm2242, %v6466
        %6533 = vst.msk [vmem:[#allocation7 + $0xf0] sm:$0xff] %vm2242, %v6468
        %6534 = vst.msk [vmem:[#allocation7 + $0xf8] sm:$0xff] %vm2242, %v6470
        %6537 = vrot.lane.b32.xlu0 %v5594, 48
        %v6538 = vpop.permute.xlu0 %6537
        %6539 = vrot.lane.b32.xlu0 %v5595, 48
        %v6540 = vpop.permute.xlu0 %6539
        %6541 = vrot.lane.b32.xlu0 %v5597, 48
        %v6542 = vpop.permute.xlu0 %6541
        %6543 = vrot.lane.b32.xlu0 %v5598, 48
        %v6544 = vpop.permute.xlu0 %6543
        %6545 = vrot.lane.b32.xlu0 %v5600, 48
        %v6546 = vpop.permute.xlu0 %6545
        %6547 = vrot.lane.b32.xlu0 %v5601, 48
        %v6548 = vpop.permute.xlu0 %6547
        %6549 = vrot.lane.b32.xlu0 %v5603, 48
        %v6550 = vpop.permute.xlu0 %6549
        %6551 = vrot.lane.b32.xlu0 %v5604, 48
        %v6552 = vpop.permute.xlu0 %6551
        %6553 = vrot.lane.b32.xlu0 %v5606, 48
        %v6554 = vpop.permute.xlu0 %6553
        %6555 = vrot.lane.b32.xlu0 %v5607, 48
        %v6556 = vpop.permute.xlu0 %6555
        %6557 = vrot.lane.b32.xlu0 %v5609, 48
        %v6558 = vpop.permute.xlu0 %6557
        %6559 = vrot.lane.b32.xlu0 %v5610, 48
        %v6560 = vpop.permute.xlu0 %6559
        %6561 = vrot.lane.b32.xlu0 %v5612, 48
        %v6562 = vpop.permute.xlu0 %6561
        %6563 = vrot.lane.b32.xlu0 %v5613, 48
        %v6564 = vpop.permute.xlu0 %6563
        %6565 = vrot.lane.b32.xlu0 %v5615, 48
        %v6566 = vpop.permute.xlu0 %6565
        %6567 = vrot.lane.b32.xlu0 %v5616, 48
        %v6568 = vpop.permute.xlu0 %6567
        %6569 = vrot.lane.b32.xlu0 %v5618, 48
        %v6570 = vpop.permute.xlu0 %6569
        %6571 = vrot.lane.b32.xlu0 %v5619, 48
        %v6572 = vpop.permute.xlu0 %6571
        %6573 = vrot.lane.b32.xlu0 %v5621, 48
        %v6574 = vpop.permute.xlu0 %6573
        %6575 = vrot.lane.b32.xlu0 %v5622, 48
        %v6576 = vpop.permute.xlu0 %6575
        %6577 = vrot.lane.b32.xlu0 %v5624, 48
        %v6578 = vpop.permute.xlu0 %6577
        %6579 = vrot.lane.b32.xlu0 %v5625, 48
        %v6580 = vpop.permute.xlu0 %6579
        %6581 = vrot.lane.b32.xlu0 %v5627, 48
        %v6582 = vpop.permute.xlu0 %6581
        %6583 = vrot.lane.b32.xlu0 %v5628, 48
        %v6584 = vpop.permute.xlu0 %6583
        %6585 = vrot.lane.b32.xlu0 %v5630, 48
        %v6586 = vpop.permute.xlu0 %6585
        %6587 = vrot.lane.b32.xlu0 %v5631, 48
        %v6588 = vpop.permute.xlu0 %6587
        %6589 = vrot.lane.b32.xlu0 %v5633, 48
        %v6590 = vpop.permute.xlu0 %6589
        %6591 = vrot.lane.b32.xlu0 %v5634, 48
        %v6592 = vpop.permute.xlu0 %6591
        %6593 = vrot.lane.b32.xlu0 %v5636, 48
        %v6594 = vpop.permute.xlu0 %6593
        %6595 = vrot.lane.b32.xlu0 %v5637, 48
        %v6596 = vpop.permute.xlu0 %6595
        %6597 = vrot.lane.b32.xlu0 %v5639, 48
        %v6598 = vpop.permute.xlu0 %6597
        %6599 = vrot.lane.b32.xlu0 %v5640, 48
        %v6600 = vpop.permute.xlu0 %6599
        %6633 = vst.msk [vmem:[#allocation7] sm:$0xff] %vm2373, %v6538
        %6634 = vst.msk [vmem:[#allocation7 + $0x8] sm:$0xff] %vm2373, %v6540
        %6635 = vst.msk [vmem:[#allocation7 + $0x10] sm:$0xff] %vm2373, %v6542
        %6636 = vst.msk [vmem:[#allocation7 + $0x18] sm:$0xff] %vm2373, %v6544
        %6637 = vst.msk [vmem:[#allocation7 + $0x20] sm:$0xff] %vm2373, %v6546
        %6638 = vst.msk [vmem:[#allocation7 + $0x28] sm:$0xff] %vm2373, %v6548
        %6639 = vst.msk [vmem:[#allocation7 + $0x30] sm:$0xff] %vm2373, %v6550
        %6640 = vst.msk [vmem:[#allocation7 + $0x38] sm:$0xff] %vm2373, %v6552
        %6641 = vst.msk [vmem:[#allocation7 + $0x40] sm:$0xff] %vm2373, %v6554
        %6642 = vst.msk [vmem:[#allocation7 + $0x48] sm:$0xff] %vm2373, %v6556
        %6643 = vst.msk [vmem:[#allocation7 + $0x50] sm:$0xff] %vm2373, %v6558
        %6644 = vst.msk [vmem:[#allocation7 + $0x58] sm:$0xff] %vm2373, %v6560
        %6645 = vst.msk [vmem:[#allocation7 + $0x60] sm:$0xff] %vm2373, %v6562
        %6646 = vst.msk [vmem:[#allocation7 + $0x68] sm:$0xff] %vm2373, %v6564
        %6647 = vst.msk [vmem:[#allocation7 + $0x70] sm:$0xff] %vm2373, %v6566
        %6648 = vst.msk [vmem:[#allocation7 + $0x78] sm:$0xff] %vm2373, %v6568
        %6649 = vst.msk [vmem:[#allocation7 + $0x80] sm:$0xff] %vm2373, %v6570
        %6650 = vst.msk [vmem:[#allocation7 + $0x88] sm:$0xff] %vm2373, %v6572
        %6651 = vst.msk [vmem:[#allocation7 + $0x90] sm:$0xff] %vm2373, %v6574
        %6652 = vst.msk [vmem:[#allocation7 + $0x98] sm:$0xff] %vm2373, %v6576
        %6653 = vst.msk [vmem:[#allocation7 + $0xa0] sm:$0xff] %vm2373, %v6578
        %6654 = vst.msk [vmem:[#allocation7 + $0xa8] sm:$0xff] %vm2373, %v6580
        %6655 = vst.msk [vmem:[#allocation7 + $0xb0] sm:$0xff] %vm2373, %v6582
        %6656 = vst.msk [vmem:[#allocation7 + $0xb8] sm:$0xff] %vm2373, %v6584
        %6657 = vst.msk [vmem:[#allocation7 + $0xc0] sm:$0xff] %vm2373, %v6586
        %6658 = vst.msk [vmem:[#allocation7 + $0xc8] sm:$0xff] %vm2373, %v6588
        %6659 = vst.msk [vmem:[#allocation7 + $0xd0] sm:$0xff] %vm2373, %v6590
        %6660 = vst.msk [vmem:[#allocation7 + $0xd8] sm:$0xff] %vm2373, %v6592
        %6661 = vst.msk [vmem:[#allocation7 + $0xe0] sm:$0xff] %vm2373, %v6594
        %6662 = vst.msk [vmem:[#allocation7 + $0xe8] sm:$0xff] %vm2373, %v6596
        %6663 = vst.msk [vmem:[#allocation7 + $0xf0] sm:$0xff] %vm2373, %v6598
        %6664 = vst.msk [vmem:[#allocation7 + $0xf8] sm:$0xff] %vm2373, %v6600
        %v6666 = vrot.slane %v5639, 1
        %v6667 = vrot.slane %v5640, 1
        %v6668 = vsel %vm1455, %v6666, %v6667
        %v6669 = vrot.slane %v5641, 1
        %v6670 = vsel %vm1455, %v6667, %v6669
        %6671 = vrot.lane.b32.xlu0 %v5734, 56
        %v6672 = vpop.permute.xlu0 %6671
        %6673 = vrot.lane.b32.xlu0 %v5736, 56
        %v6674 = vpop.permute.xlu0 %6673
        %6675 = vrot.lane.b32.xlu0 %v5739, 56
        %v6676 = vpop.permute.xlu0 %6675
        %6677 = vrot.lane.b32.xlu0 %v5741, 56
        %v6678 = vpop.permute.xlu0 %6677
        %6679 = vrot.lane.b32.xlu0 %v5744, 56
        %v6680 = vpop.permute.xlu0 %6679
        %6681 = vrot.lane.b32.xlu0 %v5746, 56
        %v6682 = vpop.permute.xlu0 %6681
        %6683 = vrot.lane.b32.xlu0 %v5749, 56
        %v6684 = vpop.permute.xlu0 %6683
        %6685 = vrot.lane.b32.xlu0 %v5751, 56
        %v6686 = vpop.permute.xlu0 %6685
        %6687 = vrot.lane.b32.xlu0 %v5754, 56
        %v6688 = vpop.permute.xlu0 %6687
        %6689 = vrot.lane.b32.xlu0 %v5756, 56
        %v6690 = vpop.permute.xlu0 %6689
        %6691 = vrot.lane.b32.xlu0 %v5759, 56
        %v6692 = vpop.permute.xlu0 %6691
        %6693 = vrot.lane.b32.xlu0 %v5761, 56
        %v6694 = vpop.permute.xlu0 %6693
        %6695 = vrot.lane.b32.xlu0 %v5764, 56
        %v6696 = vpop.permute.xlu0 %6695
        %6697 = vrot.lane.b32.xlu0 %v5766, 56
        %v6698 = vpop.permute.xlu0 %6697
        %6699 = vrot.lane.b32.xlu0 %v5769, 56
        %v6700 = vpop.permute.xlu0 %6699
        %6701 = vrot.lane.b32.xlu0 %v5771, 56
        %v6702 = vpop.permute.xlu0 %6701
        %6703 = vrot.lane.b32.xlu0 %v5774, 56
        %v6704 = vpop.permute.xlu0 %6703
        %6705 = vrot.lane.b32.xlu0 %v5776, 56
        %v6706 = vpop.permute.xlu0 %6705
        %6707 = vrot.lane.b32.xlu0 %v5779, 56
        %v6708 = vpop.permute.xlu0 %6707
        %6709 = vrot.lane.b32.xlu0 %v5781, 56
        %v6710 = vpop.permute.xlu0 %6709
        %6711 = vrot.lane.b32.xlu0 %v5784, 56
        %v6712 = vpop.permute.xlu0 %6711
        %6713 = vrot.lane.b32.xlu0 %v5786, 56
        %v6714 = vpop.permute.xlu0 %6713
        %6715 = vrot.lane.b32.xlu0 %v5789, 56
        %v6716 = vpop.permute.xlu0 %6715
        %6717 = vrot.lane.b32.xlu0 %v5791, 56
        %v6718 = vpop.permute.xlu0 %6717
        %6719 = vrot.lane.b32.xlu0 %v5794, 56
        %v6720 = vpop.permute.xlu0 %6719
        %6721 = vrot.lane.b32.xlu0 %v5796, 56
        %v6722 = vpop.permute.xlu0 %6721
        %6723 = vrot.lane.b32.xlu0 %v5799, 56
        %v6724 = vpop.permute.xlu0 %6723
        %6725 = vrot.lane.b32.xlu0 %v5801, 56
        %v6726 = vpop.permute.xlu0 %6725
        %6727 = vrot.lane.b32.xlu0 %v6271, 56
        %v6728 = vpop.permute.xlu0 %6727
        %6729 = vrot.lane.b32.xlu0 %v6273, 56
        %v6730 = vpop.permute.xlu0 %6729
        %6731 = vrot.lane.b32.xlu0 %v6668, 56
        %v6732 = vpop.permute.xlu0 %6731
        %6733 = vrot.lane.b32.xlu0 %v6670, 56
        %v6734 = vpop.permute.xlu0 %6733
        %6767 = vst.msk [vmem:[#allocation7] sm:$0xff] %vm2508, %v6672
        %6768 = vst.msk [vmem:[#allocation7 + $0x8] sm:$0xff] %vm2508, %v6674
        %6769 = vst.msk [vmem:[#allocation7 + $0x10] sm:$0xff] %vm2508, %v6676
        %6770 = vst.msk [vmem:[#allocation7 + $0x18] sm:$0xff] %vm2508, %v6678
        %6771 = vst.msk [vmem:[#allocation7 + $0x20] sm:$0xff] %vm2508, %v6680
        %6772 = vst.msk [vmem:[#allocation7 + $0x28] sm:$0xff] %vm2508, %v6682
        %6773 = vst.msk [vmem:[#allocation7 + $0x30] sm:$0xff] %vm2508, %v6684
        %6774 = vst.msk [vmem:[#allocation7 + $0x38] sm:$0xff] %vm2508, %v6686
        %6775 = vst.msk [vmem:[#allocation7 + $0x40] sm:$0xff] %vm2508, %v6688
        %6776 = vst.msk [vmem:[#allocation7 + $0x48] sm:$0xff] %vm2508, %v6690
        %6777 = vst.msk [vmem:[#allocation7 + $0x50] sm:$0xff] %vm2508, %v6692
        %6778 = vst.msk [vmem:[#allocation7 + $0x58] sm:$0xff] %vm2508, %v6694
        %6779 = vst.msk [vmem:[#allocation7 + $0x60] sm:$0xff] %vm2508, %v6696
        %6780 = vst.msk [vmem:[#allocation7 + $0x68] sm:$0xff] %vm2508, %v6698
        %6781 = vst.msk [vmem:[#allocation7 + $0x70] sm:$0xff] %vm2508, %v6700
        %6782 = vst.msk [vmem:[#allocation7 + $0x78] sm:$0xff] %vm2508, %v6702
        %6783 = vst.msk [vmem:[#allocation7 + $0x80] sm:$0xff] %vm2508, %v6704
        %6784 = vst.msk [vmem:[#allocation7 + $0x88] sm:$0xff] %vm2508, %v6706
        %6785 = vst.msk [vmem:[#allocation7 + $0x90] sm:$0xff] %vm2508, %v6708
        %6786 = vst.msk [vmem:[#allocation7 + $0x98] sm:$0xff] %vm2508, %v6710
        %6787 = vst.msk [vmem:[#allocation7 + $0xa0] sm:$0xff] %vm2508, %v6712
        %6788 = vst.msk [vmem:[#allocation7 + $0xa8] sm:$0xff] %vm2508, %v6714
        %6789 = vst.msk [vmem:[#allocation7 + $0xb0] sm:$0xff] %vm2508, %v6716
        %6790 = vst.msk [vmem:[#allocation7 + $0xb8] sm:$0xff] %vm2508, %v6718
        %6791 = vst.msk [vmem:[#allocation7 + $0xc0] sm:$0xff] %vm2508, %v6720
        %6792 = vst.msk [vmem:[#allocation7 + $0xc8] sm:$0xff] %vm2508, %v6722
        %6793 = vst.msk [vmem:[#allocation7 + $0xd0] sm:$0xff] %vm2508, %v6724
        %6794 = vst.msk [vmem:[#allocation7 + $0xd8] sm:$0xff] %vm2508, %v6726
        %6795 = vst.msk [vmem:[#allocation7 + $0xe0] sm:$0xff] %vm2508, %v6728
        %6796 = vst.msk [vmem:[#allocation7 + $0xe8] sm:$0xff] %vm2508, %v6730
        %6797 = vst.msk [vmem:[#allocation7 + $0xf0] sm:$0xff] %vm2508, %v6732
        %6798 = vst.msk [vmem:[#allocation7 + $0xf8] sm:$0xff] %vm2508, %v6734
        %v6799 = vrot.slane %v5639, 2
        %v6800 = vrot.slane %v5640, 2
        %v6801 = vsel %vm1665, %v6799, %v6800
        %v6802 = vrot.slane %v5641, 2
        %v6803 = vsel %vm1665, %v6800, %v6802
        %6804 = vrot.lane.b32.xlu0 %v5942, 64
        %v6805 = vpop.permute.xlu0 %6804
        %6806 = vrot.lane.b32.xlu0 %v5944, 64
        %v6807 = vpop.permute.xlu0 %6806
        %6808 = vrot.lane.b32.xlu0 %v5947, 64
        %v6809 = vpop.permute.xlu0 %6808
        %6810 = vrot.lane.b32.xlu0 %v5949, 64
        %v6811 = vpop.permute.xlu0 %6810
        %6812 = vrot.lane.b32.xlu0 %v5952, 64
        %v6813 = vpop.permute.xlu0 %6812
        %6814 = vrot.lane.b32.xlu0 %v5954, 64
        %v6815 = vpop.permute.xlu0 %6814
        %6816 = vrot.lane.b32.xlu0 %v5957, 64
        %v6817 = vpop.permute.xlu0 %6816
        %6818 = vrot.lane.b32.xlu0 %v5959, 64
        %v6819 = vpop.permute.xlu0 %6818
        %6820 = vrot.lane.b32.xlu0 %v5962, 64
        %v6821 = vpop.permute.xlu0 %6820
        %6822 = vrot.lane.b32.xlu0 %v5964, 64
        %v6823 = vpop.permute.xlu0 %6822
        %6824 = vrot.lane.b32.xlu0 %v5967, 64
        %v6825 = vpop.permute.xlu0 %6824
        %6826 = vrot.lane.b32.xlu0 %v5969, 64
        %v6827 = vpop.permute.xlu0 %6826
        %6828 = vrot.lane.b32.xlu0 %v5972, 64
        %v6829 = vpop.permute.xlu0 %6828
        %6830 = vrot.lane.b32.xlu0 %v5974, 64
        %v6831 = vpop.permute.xlu0 %6830
        %6832 = vrot.lane.b32.xlu0 %v5977, 64
        %v6833 = vpop.permute.xlu0 %6832
        %6834 = vrot.lane.b32.xlu0 %v5979, 64
        %v6835 = vpop.permute.xlu0 %6834
        %6836 = vrot.lane.b32.xlu0 %v5982, 64
        %v6837 = vpop.permute.xlu0 %6836
        %6838 = vrot.lane.b32.xlu0 %v5984, 64
        %v6839 = vpop.permute.xlu0 %6838
        %6840 = vrot.lane.b32.xlu0 %v5987, 64
        %v6841 = vpop.permute.xlu0 %6840
        %6842 = vrot.lane.b32.xlu0 %v5989, 64
        %v6843 = vpop.permute.xlu0 %6842
        %6844 = vrot.lane.b32.xlu0 %v5992, 64
        %v6845 = vpop.permute.xlu0 %6844
        %6846 = vrot.lane.b32.xlu0 %v5994, 64
        %v6847 = vpop.permute.xlu0 %6846
        %6848 = vrot.lane.b32.xlu0 %v5997, 64
        %v6849 = vpop.permute.xlu0 %6848
        %6850 = vrot.lane.b32.xlu0 %v5999, 64
        %v6851 = vpop.permute.xlu0 %6850
        %6852 = vrot.lane.b32.xlu0 %v6002, 64
        %v6853 = vpop.permute.xlu0 %6852
        %6854 = vrot.lane.b32.xlu0 %v6004, 64
        %v6855 = vpop.permute.xlu0 %6854
        %6856 = vrot.lane.b32.xlu0 %v6007, 64
        %v6857 = vpop.permute.xlu0 %6856
        %6858 = vrot.lane.b32.xlu0 %v6009, 64
        %v6859 = vpop.permute.xlu0 %6858
        %6860 = vrot.lane.b32.xlu0 %v6404, 64
        %v6861 = vpop.permute.xlu0 %6860
        %6862 = vrot.lane.b32.xlu0 %v6406, 64
        %v6863 = vpop.permute.xlu0 %6862
        %6864 = vrot.lane.b32.xlu0 %v6801, 64
        %v6865 = vpop.permute.xlu0 %6864
        %6866 = vrot.lane.b32.xlu0 %v6803, 64
        %v6867 = vpop.permute.xlu0 %6866
        %6900 = vst.msk [vmem:[#allocation7] sm:$0xff] %vm2642, %v6805
        %6901 = vst.msk [vmem:[#allocation7 + $0x8] sm:$0xff] %vm2642, %v6807
        %6902 = vst.msk [vmem:[#allocation7 + $0x10] sm:$0xff] %vm2642, %v6809
        %6903 = vst.msk [vmem:[#allocation7 + $0x18] sm:$0xff] %vm2642, %v6811
        %6904 = vst.msk [vmem:[#allocation7 + $0x20] sm:$0xff] %vm2642, %v6813
        %6905 = vst.msk [vmem:[#allocation7 + $0x28] sm:$0xff] %vm2642, %v6815
        %6906 = vst.msk [vmem:[#allocation7 + $0x30] sm:$0xff] %vm2642, %v6817
        %6907 = vst.msk [vmem:[#allocation7 + $0x38] sm:$0xff] %vm2642, %v6819
        %6908 = vst.msk [vmem:[#allocation7 + $0x40] sm:$0xff] %vm2642, %v6821
        %6909 = vst.msk [vmem:[#allocation7 + $0x48] sm:$0xff] %vm2642, %v6823
        %6910 = vst.msk [vmem:[#allocation7 + $0x50] sm:$0xff] %vm2642, %v6825
        %6911 = vst.msk [vmem:[#allocation7 + $0x58] sm:$0xff] %vm2642, %v6827
        %6912 = vst.msk [vmem:[#allocation7 + $0x60] sm:$0xff] %vm2642, %v6829
        %6913 = vst.msk [vmem:[#allocation7 + $0x68] sm:$0xff] %vm2642, %v6831
        %6914 = vst.msk [vmem:[#allocation7 + $0x70] sm:$0xff] %vm2642, %v6833
        %6915 = vst.msk [vmem:[#allocation7 + $0x78] sm:$0xff] %vm2642, %v6835
        %6916 = vst.msk [vmem:[#allocation7 + $0x80] sm:$0xff] %vm2642, %v6837
        %6917 = vst.msk [vmem:[#allocation7 + $0x88] sm:$0xff] %vm2642, %v6839
        %6918 = vst.msk [vmem:[#allocation7 + $0x90] sm:$0xff] %vm2642, %v6841
        %6919 = vst.msk [vmem:[#allocation7 + $0x98] sm:$0xff] %vm2642, %v6843
        %6920 = vst.msk [vmem:[#allocation7 + $0xa0] sm:$0xff] %vm2642, %v6845
        %6921 = vst.msk [vmem:[#allocation7 + $0xa8] sm:$0xff] %vm2642, %v6847
        %6922 = vst.msk [vmem:[#allocation7 + $0xb0] sm:$0xff] %vm2642, %v6849
        %6923 = vst.msk [vmem:[#allocation7 + $0xb8] sm:$0xff] %vm2642, %v6851
        %6924 = vst.msk [vmem:[#allocation7 + $0xc0] sm:$0xff] %vm2642, %v6853
        %6925 = vst.msk [vmem:[#allocation7 + $0xc8] sm:$0xff] %vm2642, %v6855
        %6926 = vst.msk [vmem:[#allocation7 + $0xd0] sm:$0xff] %vm2642, %v6857
        %6927 = vst.msk [vmem:[#allocation7 + $0xd8] sm:$0xff] %vm2642, %v6859
        %6928 = vst.msk [vmem:[#allocation7 + $0xe0] sm:$0xff] %vm2642, %v6861
        %6929 = vst.msk [vmem:[#allocation7 + $0xe8] sm:$0xff] %vm2642, %v6863
        %6930 = vst.msk [vmem:[#allocation7 + $0xf0] sm:$0xff] %vm2642, %v6865
        %6931 = vst.msk [vmem:[#allocation7 + $0xf8] sm:$0xff] %vm2642, %v6867
        %v6932 = vld [vmem:[#allocation7] sm:$0xff]
        %v6933 = vld [vmem:[#allocation7 + $0x8] sm:$0xff]
        %v6934 = vld [vmem:[#allocation7 + $0x10] sm:$0xff]
        %v6935 = vld [vmem:[#allocation7 + $0x18] sm:$0xff]
        %v6936 = vld [vmem:[#allocation7 + $0x20] sm:$0xff]
        %v6937 = vld [vmem:[#allocation7 + $0x28] sm:$0xff]
        %v6938 = vld [vmem:[#allocation7 + $0x30] sm:$0xff]
        %v6939 = vld [vmem:[#allocation7 + $0x38] sm:$0xff]
        %v6940 = vld [vmem:[#allocation7 + $0x40] sm:$0xff]
        %v6941 = vld [vmem:[#allocation7 + $0x48] sm:$0xff]
        %v6942 = vld [vmem:[#allocation7 + $0x50] sm:$0xff]
        %v6943 = vld [vmem:[#allocation7 + $0x58] sm:$0xff]
        %v6944 = vld [vmem:[#allocation7 + $0x60] sm:$0xff]
        %v6945 = vld [vmem:[#allocation7 + $0x68] sm:$0xff]
        %v6946 = vld [vmem:[#allocation7 + $0x70] sm:$0xff]
        %v6947 = vld [vmem:[#allocation7 + $0x78] sm:$0xff]
        %v6948 = vld [vmem:[#allocation7 + $0x80] sm:$0xff]
        %v6949 = vld [vmem:[#allocation7 + $0x88] sm:$0xff]
        %v6950 = vld [vmem:[#allocation7 + $0x90] sm:$0xff]
        %v6951 = vld [vmem:[#allocation7 + $0x98] sm:$0xff]
        %v6952 = vld [vmem:[#allocation7 + $0xa0] sm:$0xff]
        %v6953 = vld [vmem:[#allocation7 + $0xa8] sm:$0xff]
        %v6954 = vld [vmem:[#allocation7 + $0xb0] sm:$0xff]
        %v6955 = vld [vmem:[#allocation7 + $0xb8] sm:$0xff]
        %v6956 = vld [vmem:[#allocation7 + $0xc0] sm:$0xff]
        %v6957 = vld [vmem:[#allocation7 + $0xc8] sm:$0xff]
        %v6958 = vld [vmem:[#allocation7 + $0xd0] sm:$0xff]
        %v6959 = vld [vmem:[#allocation7 + $0xd8] sm:$0xff]
        %v6960 = vld [vmem:[#allocation7 + $0xe0] sm:$0xff]
        %v6961 = vld [vmem:[#allocation7 + $0xe8] sm:$0xff]
        %v6962 = vld [vmem:[#allocation7 + $0xf0] sm:$0xff]
        %v6963 = vld [vmem:[#allocation7 + $0xf8] sm:$0xff]
        %v6964 = vld [vmem:[%s10] sm:$0xff]
        %v6965 = vld [vmem:[%s10 + $0x8] sm:$0xff]
        %v6966 = vld [vmem:[%s10 + $0x10] sm:$0xff]
        %v6967 = vld [vmem:[%s10 + $0x18] sm:$0xff]
        %v6968 = vld [vmem:[%s10 + $0x20] sm:$0xff]
        %v6969 = vld [vmem:[%s10 + $0x28] sm:$0xff]
        %v6970 = vld [vmem:[%s10 + $0x30] sm:$0xff]
        %v6971 = vld [vmem:[%s10 + $0x38] sm:$0xff]
        %v6972 = vld [vmem:[%s10 + $0x40] sm:$0xff]
        %v6974 = vsel %vm2716, %v6932, 0
        %v6977 = vsel %vm2716, %v6933, 0
        %v6980 = vsel %vm2716, %v6934, 0
        %v6983 = vsel %vm2716, %v6935, 0
        %v6986 = vsel %vm2716, %v6936, 0
        %v6989 = vsel %vm2716, %v6937, 0
        %v6992 = vsel %vm2716, %v6938, 0
        %v6995 = vsel %vm2716, %v6939, 0
        %v6998 = vsel %vm2716, %v6940, 0
        %v7001 = vsel %vm2716, %v6941, 0
        %v7004 = vsel %vm2716, %v6942, 0
        %v7007 = vsel %vm2716, %v6943, 0
        %v7010 = vsel %vm2716, %v6944, 0
        %v7013 = vsel %vm2716, %v6945, 0
        %v7016 = vsel %vm2716, %v6946, 0
        %v7019 = vsel %vm2716, %v6947, 0
        %v7022 = vsel %vm2716, %v6948, 0
        %v7025 = vsel %vm2716, %v6949, 0
        %v7028 = vsel %vm2716, %v6950, 0
        %v7031 = vsel %vm2716, %v6951, 0
        %v7034 = vsel %vm2716, %v6952, 0
        %v7037 = vsel %vm2716, %v6953, 0
        %v7040 = vsel %vm2716, %v6954, 0
        %v7043 = vsel %vm2716, %v6955, 0
        %v7046 = vsel %vm2716, %v6956, 0
        %v7049 = vsel %vm2716, %v6957, 0
        %v7052 = vsel %vm2716, %v6958, 0
        %v7055 = vsel %vm2716, %v6959, 0
        %v7058 = vsel %vm2716, %v6960, 0
        %v7061 = vsel %vm2716, %v6961, 0
        %v7064 = vsel %vm2716, %v6962, 0
        %v7067 = vsel %vm2716, %v6963, 0
        %7069 = vmatpush.msra.mxu0 0.0
        %7070 = vmatpush.msra.mxu0 0.0
        %7071 = vmatpush.msra.mxu0 0.0
        %7072 = vmatpush.msra.mxu0 0.0
        %7073 = vmatpush.msra.mxu0 0.0
        %7074 = vmatpush.msra.mxu0 0.0
        %7075 = vmatpush.msra.mxu0 0.0
        %7076 = vmatpush.msra.mxu0 %v6972
        %7077 = vmatpush.msra.mxu0 %v6971
        %7078 = vmatpush.msra.mxu0 %v6970
        %7079 = vmatpush.msra.mxu0 %v6969
        %7080 = vmatpush.msra.mxu0 %v6968
        %7081 = vmatpush.msra.mxu0 %v6967
        %7082 = vmatpush.msra.mxu0 %v6966
        %7083 = vmatpush.msra.mxu0 %v6965
        %7084 = vmatpush.msra.mxu0 %v6964
        %7085 = vmatmul.f32.gmra.mxu0 %v6974
        %v7086 = vpop.f32.mrf.mxu0
        %v7087 = vadd.f32 %v1039, %v7086
        %7088 = vmatmul.f32.gmra.mxu0 %v6977
        %v7089 = vpop.f32.mrf.mxu0
        %v7090 = vadd.f32 %v1042, %v7089
        %7091 = vmatmul.f32.gmra.mxu0 %v6980
        %v7092 = vpop.f32.mrf.mxu0
        %v7093 = vadd.f32 %v1045, %v7092
        %7094 = vmatmul.f32.gmra.mxu0 %v6983
        %v7095 = vpop.f32.mrf.mxu0
        %v7096 = vadd.f32 %v1048, %v7095
        %7097 = vmatmul.f32.gmra.mxu0 %v6986
        %v7098 = vpop.f32.mrf.mxu0
        %v7099 = vadd.f32 %v1051, %v7098
        %7100 = vmatmul.f32.gmra.mxu0 %v6989
        %v7101 = vpop.f32.mrf.mxu0
        %v7102 = vadd.f32 %v1054, %v7101
        %7103 = vmatmul.f32.gmra.mxu0 %v6992
        %v7104 = vpop.f32.mrf.mxu0
        %v7105 = vadd.f32 %v1057, %v7104
        %7106 = vmatmul.f32.gmra.mxu0 %v6995
        %v7107 = vpop.f32.mrf.mxu0
        %v7108 = vadd.f32 %v1060, %v7107
        %7109 = vmatmul.f32.gmra.mxu0 %v6998
        %v7110 = vpop.f32.mrf.mxu0
        %v7111 = vadd.f32 %v1063, %v7110
        %7112 = vmatmul.f32.gmra.mxu0 %v7001
        %v7113 = vpop.f32.mrf.mxu0
        %v7114 = vadd.f32 %v1066, %v7113
        %7115 = vmatmul.f32.gmra.mxu0 %v7004
        %v7116 = vpop.f32.mrf.mxu0
        %v7117 = vadd.f32 %v1069, %v7116
        %7118 = vmatmul.f32.gmra.mxu0 %v7007
        %v7119 = vpop.f32.mrf.mxu0
        %v7120 = vadd.f32 %v1072, %v7119
        %7121 = vmatmul.f32.gmra.mxu0 %v7010
        %v7122 = vpop.f32.mrf.mxu0
        %v7123 = vadd.f32 %v1075, %v7122
        %7124 = vmatmul.f32.gmra.mxu0 %v7013
        %v7125 = vpop.f32.mrf.mxu0
        %v7126 = vadd.f32 %v1078, %v7125
        %7127 = vmatmul.f32.gmra.mxu0 %v7016
        %v7128 = vpop.f32.mrf.mxu0
        %v7129 = vadd.f32 %v1081, %v7128
        %7130 = vmatmul.f32.gmra.mxu0 %v7019
        %v7131 = vpop.f32.mrf.mxu0
        %v7132 = vadd.f32 %v1084, %v7131
        %7133 = vmatmul.f32.gmra.mxu0 %v7022
        %v7134 = vpop.f32.mrf.mxu0
        %v7135 = vadd.f32 %v1087, %v7134
        %7136 = vmatmul.f32.gmra.mxu0 %v7025
        %v7137 = vpop.f32.mrf.mxu0
        %v7138 = vadd.f32 %v1090, %v7137
        %7139 = vmatmul.f32.gmra.mxu0 %v7028
        %v7140 = vpop.f32.mrf.mxu0
        %v7141 = vadd.f32 %v1093, %v7140
        %7142 = vmatmul.f32.gmra.mxu0 %v7031
        %v7143 = vpop.f32.mrf.mxu0
        %v7144 = vadd.f32 %v1096, %v7143
        %7145 = vmatmul.f32.gmra.mxu0 %v7034
        %v7146 = vpop.f32.mrf.mxu0
        %v7147 = vadd.f32 %v1099, %v7146
        %7148 = vmatmul.f32.gmra.mxu0 %v7037
        %v7149 = vpop.f32.mrf.mxu0
        %v7150 = vadd.f32 %v1102, %v7149
        %7151 = vmatmul.f32.gmra.mxu0 %v7040
        %v7152 = vpop.f32.mrf.mxu0
        %v7153 = vadd.f32 %v1105, %v7152
        %7154 = vmatmul.f32.gmra.mxu0 %v7043
        %v7155 = vpop.f32.mrf.mxu0
        %v7156 = vadd.f32 %v1108, %v7155
        %7157 = vmatmul.f32.gmra.mxu0 %v7046
        %v7158 = vpop.f32.mrf.mxu0
        %v7159 = vadd.f32 %v1111, %v7158
        %7160 = vmatmul.f32.gmra.mxu0 %v7049
        %v7161 = vpop.f32.mrf.mxu0
        %v7162 = vadd.f32 %v1114, %v7161
        %7163 = vmatmul.f32.gmra.mxu0 %v7052
        %v7164 = vpop.f32.mrf.mxu0
        %v7165 = vadd.f32 %v1117, %v7164
        %7166 = vmatmul.f32.gmra.mxu0 %v7055
        %v7167 = vpop.f32.mrf.mxu0
        %v7168 = vadd.f32 %v1120, %v7167
        %7169 = vmatmul.f32.gmra.mxu0 %v7058
        %v7170 = vpop.f32.mrf.mxu0
        %v7171 = vadd.f32 %v1123, %v7170
        %7172 = vmatmul.f32.gmra.mxu0 %v7061
        %v7173 = vpop.f32.mrf.mxu0
        %v7174 = vadd.f32 %v1126, %v7173
        %7175 = vmatmul.f32.gmra.mxu0 %v7064
        %v7176 = vpop.f32.mrf.mxu0
        %v7177 = vadd.f32 %v1129, %v7176
        %7178 = vmatmul.f32.gmra.mxu0 %v7067
        %v7179 = vpop.f32.mrf.mxu0
        %v7180 = vadd.f32 %v1132, %v7179
        %7181 = vdwg.mxu0
        %vm7182 = vcmask 130048
        %7183 = vst.msk [vmem:[%s433] sm:$0xff] %vm7182, %v7087
        %7184 = vst.msk [vmem:[%s433 + $0x8] sm:$0xff] %vm7182, %v7090
        %7185 = vst.msk [vmem:[%s433 + $0x10] sm:$0xff] %vm7182, %v7093
        %7186 = vst.msk [vmem:[%s433 + $0x18] sm:$0xff] %vm7182, %v7096
        %7187 = vst.msk [vmem:[%s433 + $0x20] sm:$0xff] %vm7182, %v7099
        %7188 = vst.msk [vmem:[%s433 + $0x28] sm:$0xff] %vm7182, %v7102
        %7189 = vst.msk [vmem:[%s433 + $0x30] sm:$0xff] %vm7182, %v7105
        %7190 = vst.msk [vmem:[%s433 + $0x38] sm:$0xff] %vm7182, %v7108
        %7191 = vst.msk [vmem:[%s433 + $0x40] sm:$0xff] %vm7182, %v7111
        %7192 = vst.msk [vmem:[%s433 + $0x48] sm:$0xff] %vm7182, %v7114
        %7193 = vst.msk [vmem:[%s433 + $0x50] sm:$0xff] %vm7182, %v7117
        %7194 = vst.msk [vmem:[%s433 + $0x58] sm:$0xff] %vm7182, %v7120
        %7195 = vst.msk [vmem:[%s433 + $0x60] sm:$0xff] %vm7182, %v7123
        %7196 = vst.msk [vmem:[%s433 + $0x68] sm:$0xff] %vm7182, %v7126
        %7197 = vst.msk [vmem:[%s433 + $0x70] sm:$0xff] %vm7182, %v7129
        %7198 = vst.msk [vmem:[%s433 + $0x78] sm:$0xff] %vm7182, %v7132
        %7199 = vst.msk [vmem:[%s433 + $0x80] sm:$0xff] %vm7182, %v7135
        %7200 = vst.msk [vmem:[%s433 + $0x88] sm:$0xff] %vm7182, %v7138
        %7201 = vst.msk [vmem:[%s433 + $0x90] sm:$0xff] %vm7182, %v7141
        %7202 = vst.msk [vmem:[%s433 + $0x98] sm:$0xff] %vm7182, %v7144
        %7203 = vst.msk [vmem:[%s433 + $0xa0] sm:$0xff] %vm7182, %v7147
        %7204 = vst.msk [vmem:[%s433 + $0xa8] sm:$0xff] %vm7182, %v7150
        %7205 = vst.msk [vmem:[%s433 + $0xb0] sm:$0xff] %vm7182, %v7153
        %7206 = vst.msk [vmem:[%s433 + $0xb8] sm:$0xff] %vm7182, %v7156
        %7207 = vst.msk [vmem:[%s433 + $0xc0] sm:$0xff] %vm7182, %v7159
        %7208 = vst.msk [vmem:[%s433 + $0xc8] sm:$0xff] %vm7182, %v7162
        %7209 = vst.msk [vmem:[%s433 + $0xd0] sm:$0xff] %vm7182, %v7165
        %7210 = vst.msk [vmem:[%s433 + $0xd8] sm:$0xff] %vm7182, %v7168
        %7211 = vst.msk [vmem:[%s433 + $0xe0] sm:$0xff] %vm7182, %v7171
        %7212 = vst.msk [vmem:[%s433 + $0xe8] sm:$0xff] %vm7182, %v7174
        %7213 = vst.msk [vmem:[%s433 + $0xf0] sm:$0xff] %vm7182, %v7177
        %7214 = vst.msk [vmem:[%s433 + $0xf8] sm:$0xff] %vm7182, %v7180
        %s7215 = sand.u32 %s313, 1
        %s7216 = scalar_lea.sflag [#allocation9], %s7215
        %s7217 = sand.u32 %s313, 1
        %s7218 = smul.addr %s7217, 256
        %s7219 = scalar_lea.vmem [#allocation8], %s7218
        // Predicated region
        $region73: #{tpu_custom_call.1} parent=71 // pred_check
          %p7220 = pneg %p323
        $region74: #{tpu_custom_call.1} parent=71 // pred_check_branch
          %7222 = sbr.rel (%p7220) target = $region76
        $region75: #{tpu_custom_call.1} parent=71 // pred_region
          %7224 = vsyncadd %s7216, 0
          %s7225 = smul.addr %s27, 32
          %s7226 = smul.addr %s7225, 8
          %s7227 = scalar_lea.hbm %s13, %s7226
          %s7228 = sshll.u32 %s7219, 4
          %s7229 = int_to_ptr.vmem [resolvable:$true] %s7228
          %s7230 = sshll.u32 %s7227, 4
          %s7231 = int_to_ptr.hbm [resolvable:$true] %s7230
          %7236 = dma.vmem_to_hbm [thread:$0]  %s7229, 4096, %s7231, %s7216, 128, 128, 8
        $region76: #{tpu_custom_call.1} parent=71 // pred_fallthru
          _
      $region72: #{tpu_custom_call.1} parent=5 // pred_fallthru
        _
      %p7237 = scmp.le.s32.totalorder 2, %s22
      // Predicated region
      $region77: #{tpu_custom_call.1} parent=5 // pred_check
        %p7238 = pneg %p7237
      $region78: #{tpu_custom_call.1} parent=5 // pred_check_branch
        %7240 = sbr.rel (%p7238) target = $region80
      $region79: #{tpu_custom_call.1} parent=5 // pred_region
        %s7241 = ssub.s32 %s22, 2
        // Predicated region
        $region81: #{tpu_custom_call.1} parent=79 // pred_check
          %p7242 = pneg %p329
        $region82: #{tpu_custom_call.1} parent=79 // pred_check_branch
          %7244 = sbr.rel (%p7242) target = $region84
        $region83: #{tpu_custom_call.1} parent=79 // pred_region
          %s7245 = sand.u32 %s314, 1
          %s7246 = scalar_lea.sflag [#allocation9], %s7245
          %s7247 = sand.u32 %s314, 1
          %s7248 = smul.addr %s7247, 256
          %s7249 = scalar_lea.vmem [#allocation8], %s7248
          %7251 = dma.done %s7246, 4096
        $region84: #{tpu_custom_call.1} parent=79 // pred_fallthru
          _
      $region80: #{tpu_custom_call.1} parent=5 // pred_fallthru
        _
    $region6: #{tpu_custom_call.1} parent=1 // loop_footer
      %s26 = sadd.s32 1, %s22
    $region7: #{tpu_custom_call.1} parent=1 // loop_footer_branch
      %21 = sbr.rel target = $region3
    $region8: #{tpu_custom_call.1} parent=1 // loop_exit
      _
    %7252 = vsyncpa [#allocation9], 1
    %s7253 = scalar_lea.sflag [#allocation9], 1
    %7254 = vsyncpa %s7253, 1

</llo_original>
